<compile_context>
chip_gen: v6e
topology: v6e:2x2x1
jax: 0.10.0
libtpu: 0.0.40
codegen_flags: <defaults>
</compile_context>

<pallas_src>
import math
from functools import partial

import jax
import jax.numpy as jnp
from jax import lax
from jax.experimental import pallas as pl
from jax.experimental.pallas import tpu as pltpu  # noqa: F401  (TPU backend)

# Model hyper-parameters (small, consistent with the PyTorch module).
D_MODEL = 32
NUM_HEADS = 4
D_K = D_MODEL // NUM_HEADS
D_FF = 64
NUM_LAYERS = 2
SRC_VOCAB = 128
TGT_VOCAB = 128           # multiple of 128 -> lane-dense final store
MAX_SEQ = 16
NEG_INF = -1e9            # in-block masked_fill value (matches the PyTorch module)
CROSS_FILL = -2e9         # cross-batch fill: strictly below NEG_INF so padded rows
                          # softmax uniformly over their own batch block only
LN_EPS = 1e-5


# ----------------------------------------------------------------------------
# In-kernel helpers
# ----------------------------------------------------------------------------
def _layer_norm(x, g, b):
    mu = jnp.mean(x, axis=-1, keepdims=True)
    xc = x - mu
    var = jnp.mean(xc * xc, axis=-1, keepdims=True)
    return xc * lax.rsqrt(var + LN_EPS) * g + b


def _mha(x_q, x_kv, keep, fill, wqkv, bqkv, wo, bo, *, self_attention):
    """Multi-head attention on flattened (B*S, D) activations.

    wqkv : (D, 3*D) pre-transposed [Q|K|V] projection (1/sqrt(d_k) folded into Q).
    keep : (BS, BS) float slab, >0 where attention is allowed (block-diagonal).
    fill : (BS, BS) float slab of masked-score values (-1e9 in-block, -2e9 cross-block).
    Head recombination: lane-concat of per-head contexts + one Wo matmul.
    """
    if self_attention:
        qkv = jnp.dot(x_q, wqkv, preferred_element_type=jnp.float32) + bqkv
        q_all = qkv[:, :D_MODEL]
        k_all = qkv[:, D_MODEL:2 * D_MODEL]
        v_all = qkv[:, 2 * D_MODEL:]
    else:
        q_all = (jnp.dot(x_q, wqkv[:, :D_MODEL],
                         preferred_element_type=jnp.float32) + bqkv[:, :D_MODEL])
        kv = (jnp.dot(x_kv, wqkv[:, D_MODEL:],
                      preferred_element_type=jnp.float32) + bqkv[:, D_MODEL:])
        k_all = kv[:, :D_MODEL]
        v_all = kv[:, D_MODEL:]

    ctx_heads = []
    for h in range(NUM_HEADS):
        sl = slice(h * D_K, (h + 1) * D_K)
        s = lax.dot_general(q_all[:, sl], k_all[:, sl],
                            dimension_numbers=(((1,), (1,)), ((), ())),
                            preferred_element_type=jnp.float32)          # (BS, BS)
        s = jnp.where(keep > 0.0, s, fill)
        m = jnp.max(s, axis=-1, keepdims=True)
        e = jnp.exp(s - m)
        p = e / jnp.sum(e, axis=-1, keepdims=True)
        ctx_heads.append(jnp.dot(p, v_all[:, sl],
                                 preferred_element_type=jnp.float32))    # (BS, d_k)
    ctx = jnp.concatenate(ctx_heads, axis=1)                             # (BS, D)
    return jnp.dot(ctx, wo, preferred_element_type=jnp.float32) + bo


# ----------------------------------------------------------------------------
# The single fused kernel: full Transformer forward, VMEM-resident, grid=()
# ----------------------------------------------------------------------------
def transformer_kernel(src_ids_ref, tgt_ids_ref, src_emb_ref, tgt_emb_ref, pe_ref,
                       enc_keep_ref, dec_keep_ref, fill_ref,
                       enc_wqkv_ref, enc_bqkv_ref, enc_wo_ref, enc_bo_ref,
                       enc_lng_ref, enc_lnb_ref,
                       enc_w1_ref, enc_b1_ref, enc_w2_ref, enc_b2_ref,
                       dsw_ref, dsb_ref, dswo_ref, dsbo_ref,
                       dcw_ref, dcb_ref, dcwo_ref, dcbo_ref,
                       dec_lng_ref, dec_lnb_ref,
                       dec_w1_ref, dec_b1_ref, dec_w2_ref, dec_b2_ref,
                       wf_ref, bf_ref, o_ref, *, num_layers):
    pe = pe_ref[...]
    enc_keep = enc_keep_ref[...]
    dec_keep = dec_keep_ref[...]
    fill = fill_ref[...]

    def embed(ids_ref, emb_ref):
        ids = ids_ref[...]                                               # (BS, 1) int32
        hot = (lax.broadcasted_iota(jnp.int32,
                                    (ids.shape[0], emb_ref.shape[0]), 1) == ids)
        return jnp.dot(hot.astype(jnp.float32), emb_ref[...],
                       preferred_element_type=jnp.float32) + pe          # (BS, D)

    def ffn(x, w1, b1, w2, b2):
        h = jnp.maximum(jnp.dot(x, w1, preferred_element_type=jnp.float32) + b1, 0.0)
        return jnp.dot(h, w2, preferred_element_type=jnp.float32) + b2

    x_src = embed(src_ids_ref, src_emb_ref)
    x_tgt = embed(tgt_ids_ref, tgt_emb_ref)

    # ------------------------- encoder stack (unrolled) -------------------------
    for l in range(num_layers):
        attn = _mha(x_src, x_src, enc_keep, fill,
                    enc_wqkv_ref[l], enc_bqkv_ref[l], enc_wo_ref[l], enc_bo_ref[l],
                    self_attention=True)
        x_src = _layer_norm(x_src + attn, enc_lng_ref[2 * l], enc_lnb_ref[2 * l])
        ff = ffn(x_src, enc_w1_ref[l], enc_b1_ref[l], enc_w2_ref[l], enc_b2_ref[l])
        x_src = _layer_norm(x_src + ff, enc_lng_ref[2 * l + 1], enc_lnb_ref[2 * l + 1])

    # ------------------------- decoder stack (unrolled) -------------------------
    for l in range(num_layers):
        a1 = _mha(x_tgt, x_tgt, dec_keep, fill,
                  dsw_ref[l], dsb_ref[l], dswo_ref[l], dsbo_ref[l],
                  self_attention=True)
        x_tgt = _layer_norm(x_tgt + a1, dec_lng_ref[3 * l], dec_lnb_ref[3 * l])
        a2 = _mha(x_tgt, x_src, enc_keep, fill,
                  dcw_ref[l], dcb_ref[l], dcwo_ref[l], dcbo_ref[l],
                  self_attention=False)
        x_tgt = _layer_norm(x_tgt + a2, dec_lng_ref[3 * l + 1], dec_lnb_ref[3 * l + 1])
        ff = ffn(x_tgt, dec_w1_ref[l], dec_b1_ref[l], dec_w2_ref[l], dec_b2_ref[l])
        x_tgt = _layer_norm(x_tgt + ff, dec_lng_ref[3 * l + 2], dec_lnb_ref[3 * l + 2])

    # Final projection to the target vocabulary; (BS, 128) lane-dense store.
    o_ref[...] = (jnp.dot(x_tgt, wf_ref[...], preferred_element_type=jnp.float32)
                  + bf_ref[...]).astype(o_ref.dtype)


# ----------------------------------------------------------------------------
# Wrapper: mask slabs + the single pallas_call
# ----------------------------------------------------------------------------
def transformer_forward(src, tgt, kp):
    B, S = src.shape
    BS = B * S

    # Block-diagonal batch structure for the flattened (B*S, B*S) attention.
    row_b = jnp.repeat(jnp.arange(B, dtype=jnp.int32), S)
    same_batch = (row_b[:, None] == row_b[None, :]).astype(jnp.float32)     # (BS, BS)
    fill_slab = jnp.where(same_batch > 0.0, NEG_INF, CROSS_FILL).astype(jnp.float32)

    # generate_mask semantics (1.0 = attend).
    src_key = (src != 0).astype(jnp.float32).reshape(BS)
    enc_keep = same_batch * src_key[None, :]                                # key padding

    tgt_q = (tgt != 0).astype(jnp.float32).reshape(BS)
    pos = jnp.tile(jnp.arange(S, dtype=jnp.int32), B)
    causal = (pos[None, :] <= pos[:, None]).astype(jnp.float32)
    dec_keep = same_batch * causal * tgt_q[:, None]                         # causal + q padding

    pe_flat = jnp.tile(kp["pe"][:S], (B, 1))                                # (BS, D)

    logits = pl.pallas_call(
        partial(transformer_kernel, num_layers=NUM_LAYERS),
        out_shape=jax.ShapeDtypeStruct((BS, TGT_VOCAB), jnp.float32),
    )(src.reshape(BS, 1).astype(jnp.int32), tgt.reshape(BS, 1).astype(jnp.int32),
      kp["src_emb"], kp["tgt_emb"], pe_flat,
      enc_keep, dec_keep, fill_slab,
      kp["enc_wqkv"], kp["enc_bqkv"], kp["enc_wo"], kp["enc_bo"],
      kp["enc_lng"], kp["enc_lnb"], kp["enc_w1"], kp["enc_b1"], kp["enc_w2"], kp["enc_b2"],
      kp["dec_sw"], kp["dec_sb"], kp["dec_swo"], kp["dec_sbo"],
      kp["dec_cw"], kp["dec_cb"], kp["dec_cwo"], kp["dec_cbo"],
      kp["dec_lng"], kp["dec_lnb"], kp["dec_w1"], kp["dec_b1"], kp["dec_w2"], kp["dec_b2"],
      kp["wf"], kp["bf"])

    return logits.reshape(B, S, TGT_VOCAB)


# ----------------------------------------------------------------------------
# Parameter construction (PyTorch layout) and packing (kernel layout)
# ----------------------------------------------------------------------------
def make_positional_encoding(max_len, d_model):
    position = jnp.arange(max_len, dtype=jnp.float32)[:, None]
    div_term = jnp.exp(jnp.arange(0, d_model, 2, dtype=jnp.float32)
                       * -(math.log(10000.0) / d_model))
    pe = jnp.zeros((max_len, d_model), jnp.float32)
    pe = pe.at[:, 0::2].set(jnp.sin(position * div_term))
    pe = pe.at[:, 1::2].set(jnp.cos(position * div_term))
    return pe


def init_raw_params(key):
    keys = iter(jax.random.split(key, 256))
    nk = lambda: next(keys)

    def linear(out_dim, in_dim):
        bound = 1.0 / math.sqrt(in_dim)
        w = jax.random.uniform(nk(), (out_dim, in_dim), jnp.float32, -bound, bound)
        b = jax.random.uniform(nk(), (out_dim,), jnp.float32, -bound, bound)
        return w, b

    def attention():
        wq, bq = linear(D_MODEL, D_MODEL)
        wk, bk = linear(D_MODEL, D_MODEL)
        wv, bv = linear(D_MODEL, D_MODEL)
        wo, bo = linear(D_MODEL, D_MODEL)
        return dict(wq=wq, bq=bq, wk=wk, bk=bk, wv=wv, bv=bv, wo=wo, bo=bo)

    def layer_norm_params():
        g = jax.random.uniform(nk(), (D_MODEL,), jnp.float32, 0.8, 1.2)
        b = jax.random.uniform(nk(), (D_MODEL,), jnp.float32, -0.1, 0.1)
        return g, b

    def ffn():
        w1, b1 = linear(D_FF, D_MODEL)
        w2, b2 = linear(D_MODEL, D_FF)
        return dict(w1=w1, b1=b1, w2=w2, b2=b2)

    enc_layers, dec_layers = [], []
    for _ in range(NUM_LAYERS):
        g1, be1 = layer_norm_params()
        g2, be2 = layer_norm_params()
        enc_layers.append(dict(attn=attention(), ffn=ffn(),
                               ln1_g=g1, ln1_b=be1, ln2_g=g2, ln2_b=be2))
    for _ in range(NUM_LAYERS):
        g1, be1 = layer_norm_params()
        g2, be2 = layer_norm_params()
        g3, be3 = layer_norm_params()
        dec_layers.append(dict(self_attn=attention(), cross_attn=attention(), ffn=ffn(),
                               ln1_g=g1, ln1_b=be1, ln2_g=g2, ln2_b=be2,
                               ln3_g=g3, ln3_b=be3))

    wf, bf = linear(TGT_VOCAB, D_MODEL)
    return dict(src_emb=jax.random.normal(nk(), (SRC_VOCAB, D_MODEL), jnp.float32),
                tgt_emb=jax.random.normal(nk(), (TGT_VOCAB, D_MODEL), jnp.float32),
                pe=make_positional_encoding(MAX_SEQ, D_MODEL),
                enc_layers=enc_layers, dec_layers=dec_layers, wf=wf, bf=bf)


def pack_params(raw):
    """Host-side layout plumbing: pre-transpose to (in, out), merge Q|K|V along the
    output (lane) axis, fold 1/sqrt(d_k) into Q, and stack per-layer weights with a
    leading layer axis for static ref[l] indexing inside the fused kernel."""
    scale = 1.0 / math.sqrt(D_K)

    def pack_attn(p):
        wqkv = jnp.concatenate([(p["wq"] * scale).T, p["wk"].T, p["wv"].T], axis=1)
        bqkv = jnp.concatenate([p["bq"] * scale, p["bk"], p["bv"]]).reshape(1, 3 * D_MODEL)
        return wqkv, bqkv, p["wo"].T, p["bo"].reshape(1, D_MODEL)

    enc_wqkv, enc_bqkv, enc_wo, enc_bo = [], [], [], []
    enc_lng, enc_lnb = [], []
    enc_w1, enc_b1, enc_w2, enc_b2 = [], [], [], []
    for lp in raw["enc_layers"]:
        w, b, wo, bo = pack_attn(lp["attn"])
        enc_wqkv.append(w); enc_bqkv.append(b); enc_wo.append(wo); enc_bo.append(bo)
        enc_lng += [lp["ln1_g"].reshape(1, D_MODEL), lp["ln2_g"].reshape(1, D_MODEL)]
        enc_lnb += [lp["ln1_b"].reshape(1, D_MODEL), lp["ln2_b"].reshape(1, D_MODEL)]
        f = lp["ffn"]
        enc_w1.append(f["w1"].T); enc_b1.append(f["b1"].reshape(1, D_FF))
        enc_w2.append(f["w2"].T); enc_b2.append(f["b2"].reshape(1, D_MODEL))

    dec_sw, dec_sb, dec_swo, dec_sbo = [], [], [], []
    dec_cw, dec_cb, dec_cwo, dec_cbo = [], [], [], []
    dec_lng, dec_lnb = [], []
    dec_w1, dec_b1, dec_w2, dec_b2 = [], [], [], []
    for lp in raw["dec_layers"]:
        w, b, wo, bo = pack_attn(lp["self_attn"])
        dec_sw.append(w); dec_sb.append(b); dec_swo.append(wo); dec_sbo.append(bo)
        w, b, wo, bo = pack_attn(lp["cross_attn"])
        dec_cw.append(w); dec_cb.append(b); dec_cwo.append(wo); dec_cbo.append(bo)
        dec_lng += [lp["ln1_g"].reshape(1, D_MODEL), lp["ln2_g"].reshape(1, D_MODEL),
                    lp["ln3_g"].reshape(1, D_MODEL)]
        dec_lnb += [lp["ln1_b"].reshape(1, D_MODEL), lp["ln2_b"].reshape(1, D_MODEL),
                    lp["ln3_b"].reshape(1, D_MODEL)]
        f = lp["ffn"]
        dec_w1.append(f["w1"].T); dec_b1.append(f["b1"].reshape(1, D_FF))
        dec_w2.append(f["w2"].T); dec_b2.append(f["b2"].reshape(1, D_MODEL))

    st = lambda xs: jnp.stack(xs, axis=0)
    return dict(
        src_emb=raw["src_emb"], tgt_emb=raw["tgt_emb"], pe=raw["pe"],
        enc_wqkv=st(enc_wqkv), enc_bqkv=st(enc_bqkv), enc_wo=st(enc_wo), enc_bo=st(enc_bo),
        enc_lng=st(enc_lng), enc_lnb=st(enc_lnb),
        enc_w1=st(enc_w1), enc_b1=st(enc_b1), enc_w2=st(enc_w2), enc_b2=st(enc_b2),
        dec_sw=st(dec_sw), dec_sb=st(dec_sb), dec_swo=st(dec_swo), dec_sbo=st(dec_sbo),
        dec_cw=st(dec_cw), dec_cb=st(dec_cb), dec_cwo=st(dec_cwo), dec_cbo=st(dec_cbo),
        dec_lng=st(dec_lng), dec_lnb=st(dec_lnb),
        dec_w1=st(dec_w1), dec_b1=st(dec_b1), dec_w2=st(dec_w2), dec_b2=st(dec_b2),
        wf=raw["wf"].T, bf=raw["bf"].reshape(1, TGT_VOCAB))


# ----------------------------------------------------------------------------
# Pure-JAX reference (matches the PyTorch forward, dropout = eval identity)
# ----------------------------------------------------------------------------
def reference_forward(src, tgt, raw):
    B, S = src.shape
    src_mask = (src != 0)[:, None, None, :]                                  # (B,1,1,S)
    nopeak = jnp.tril(jnp.ones((S, S), jnp.float32)) > 0
    tgt_mask = (tgt != 0)[:, None, :, None] & nopeak[None, None]             # (B,1,S,S)

    def mha(q, k, v, p, mask):
        Q = q @ p["wq"].T + p["bq"]
        K = k @ p["wk"].T + p["bk"]
        V = v @ p["wv"].T + p["bv"]
        split = lambda x: x.reshape(B, S, NUM_HEADS, D_K).transpose(0, 2, 1, 3)
        Qh, Kh, Vh = split(Q), split(K), split(V)
        scores = jnp.einsum("bhqd,bhkd->bhqk", Qh, Kh) / math.sqrt(D_K)
        scores = jnp.where(mask, scores, NEG_INF)
        attn = jax.nn.softmax(scores, axis=-1)
        ctx = jnp.einsum("bhqk,bhkd->bhqd", attn, Vh)
        ctx = ctx.transpose(0, 2, 1, 3).reshape(B, S, D_MODEL)
        return ctx @ p["wo"].T + p["bo"]

    def layer_norm(x, g, b):
        mu = x.mean(-1, keepdims=True)
        var = ((x - mu) ** 2).mean(-1, keepdims=True)
        return (x - mu) * lax.rsqrt(var + LN_EPS) * g + b

    def ffn(x, p):
        return jnp.maximum(x @ p["w1"].T + p["b1"], 0.0) @ p["w2"].T + p["b2"]

    x_src = raw["src_emb"][src] + raw["pe"][:S][None]
    x_tgt = raw["tgt_emb"][tgt] + raw["pe"][:S][None]

    for lp in raw["enc_layers"]:
        a = mha(x_src, x_src, x_src, lp["attn"], src_mask)
        x_src = layer_norm(x_src + a, lp["ln1_g"], lp["ln1_b"])
        f = ffn(x_src, lp["ffn"])
        x_src = layer_norm(x_src + f, lp["ln2_g"], lp["ln2_b"])

    for lp in raw["dec_layers"]:
        a = mha(x_tgt, x_tgt, x_tgt, lp["self_attn"], tgt_mask)
        x_tgt = layer_norm(x_tgt + a, lp["ln1_g"], lp["ln1_b"])
        a = mha(x_tgt, x_src, x_src, lp["cross_attn"], src_mask)
        x_tgt = layer_norm(x_tgt + a, lp["ln2_g"], lp["ln2_b"])
        f = ffn(x_tgt, lp["ffn"])
        x_tgt = layer_norm(x_tgt + f, lp["ln3_g"], lp["ln3_b"])

    return x_tgt @ raw["wf"].T + raw["bf"]


# ----------------------------------------------------------------------------
if __name__ == "__main__":
    B, S = 2, 8
    key = jax.random.PRNGKey(0)
    k_src, k_tgt, k_par = jax.random.split(key, 3)

    src = jax.random.randint(k_src, (B, S), 1, SRC_VOCAB, dtype=jnp.int32)
    tgt = jax.random.randint(k_tgt, (B, S), 1, TGT_VOCAB, dtype=jnp.int32)
    # Some padding tokens (id 0) so the src/tgt masks are exercised.
    src = src.at[0, S - 2:].set(0)
    tgt = tgt.at[1, S - 1:].set(0)

    raw = init_raw_params(k_par)
    packed = pack_params(raw)

    fwd = jax.jit(transformer_forward)
    out = jax.block_until_ready(fwd(src, tgt, packed))

    ref = reference_forward(src, tgt, raw)
    assert out.shape == (B, S, TGT_VOCAB)
    max_err = jnp.max(jnp.abs(out - ref))
    assert jnp.allclose(out, ref, atol=2e-3, rtol=2e-3), \
        f"mismatch vs reference (max abs err {max_err})"

    print("KERNEL_OK")
</pallas_src>

<mosaic_0001>
module attributes {stable_mosaic.version = 11 : i64} {
  func.func @transformer_kernel(%arg0: memref<16x1xi32, #tpu.memory_space<vmem>>, %arg1: memref<16x1xi32, #tpu.memory_space<vmem>>, %arg2: memref<128x32xf32, #tpu.memory_space<vmem>>, %arg3: memref<128x32xf32, #tpu.memory_space<vmem>>, %arg4: memref<16x32xf32, #tpu.memory_space<vmem>>, %arg5: memref<16x16xf32, #tpu.memory_space<vmem>>, %arg6: memref<16x16xf32, #tpu.memory_space<vmem>>, %arg7: memref<16x16xf32, #tpu.memory_space<vmem>>, %arg8: memref<2x32x96xf32, #tpu.memory_space<vmem>>, %arg9: memref<2x1x96xf32, #tpu.memory_space<vmem>>, %arg10: memref<2x32x32xf32, #tpu.memory_space<vmem>>, %arg11: memref<2x1x32xf32, #tpu.memory_space<vmem>>, %arg12: memref<4x1x32xf32, #tpu.memory_space<vmem>>, %arg13: memref<4x1x32xf32, #tpu.memory_space<vmem>>, %arg14: memref<2x32x64xf32, #tpu.memory_space<vmem>>, %arg15: memref<2x1x64xf32, #tpu.memory_space<vmem>>, %arg16: memref<2x64x32xf32, #tpu.memory_space<vmem>>, %arg17: memref<2x1x32xf32, #tpu.memory_space<vmem>>, %arg18: memref<2x32x96xf32, #tpu.memory_space<vmem>>, %arg19: memref<2x1x96xf32, #tpu.memory_space<vmem>>, %arg20: memref<2x32x32xf32, #tpu.memory_space<vmem>>, %arg21: memref<2x1x32xf32, #tpu.memory_space<vmem>>, %arg22: memref<2x32x96xf32, #tpu.memory_space<vmem>>, %arg23: memref<2x1x96xf32, #tpu.memory_space<vmem>>, %arg24: memref<2x32x32xf32, #tpu.memory_space<vmem>>, %arg25: memref<2x1x32xf32, #tpu.memory_space<vmem>>, %arg26: memref<6x1x32xf32, #tpu.memory_space<vmem>>, %arg27: memref<6x1x32xf32, #tpu.memory_space<vmem>>, %arg28: memref<2x32x64xf32, #tpu.memory_space<vmem>>, %arg29: memref<2x1x64xf32, #tpu.memory_space<vmem>>, %arg30: memref<2x64x32xf32, #tpu.memory_space<vmem>>, %arg31: memref<2x1x32xf32, #tpu.memory_space<vmem>>, %arg32: memref<32x128xf32, #tpu.memory_space<vmem>>, %arg33: memref<1x128xf32, #tpu.memory_space<vmem>>, %arg34: memref<16x128xf32, #tpu.memory_space<vmem>>) attributes {dimension_semantics = [], scalar_prefetch = 0 : i64, scratch_operands = 0 : i64, tpu.core_type = #tpu.core_type<tc>} {
    %c0 = arith.constant 0 : index
    %c0_0 = arith.constant 0 : index
    %0 = vector.load %arg4[%c0, %c0_0] : memref<16x32xf32, #tpu.memory_space<vmem>>, vector<16x32xf32>
    %c0_1 = arith.constant 0 : index
    %c0_2 = arith.constant 0 : index
    %1 = vector.load %arg5[%c0_1, %c0_2] : memref<16x16xf32, #tpu.memory_space<vmem>>, vector<16x16xf32>
    %c0_3 = arith.constant 0 : index
    %c0_4 = arith.constant 0 : index
    %2 = vector.load %arg6[%c0_3, %c0_4] : memref<16x16xf32, #tpu.memory_space<vmem>>, vector<16x16xf32>
    %c0_5 = arith.constant 0 : index
    %c0_6 = arith.constant 0 : index
    %3 = vector.load %arg7[%c0_5, %c0_6] : memref<16x16xf32, #tpu.memory_space<vmem>>, vector<16x16xf32>
    %c0_7 = arith.constant 0 : index
    %c0_8 = arith.constant 0 : index
    %4 = vector.load %arg0[%c0_7, %c0_8] : memref<16x1xi32, #tpu.memory_space<vmem>>, vector<16x1xi32>
    %5 = tpu.iota {dimensions = array<i32: 1>} : vector<16x128xi32>
    %6 = vector.broadcast %4 : vector<16x1xi32> to vector<16x128xi32>
    %7 = arith.cmpi eq, %5, %6 : vector<16x128xi32>
    %8 = arith.extui %7 : vector<16x128xi1> to vector<16x128xi32>
    %9 = arith.sitofp %8 : vector<16x128xi32> to vector<16x128xf32>
    %c0_9 = arith.constant 0 : index
    %c0_10 = arith.constant 0 : index
    %10 = vector.load %arg2[%c0_9, %c0_10] : memref<128x32xf32, #tpu.memory_space<vmem>>, vector<128x32xf32>
    %cst = arith.constant dense<0.000000e+00> : vector<16x32xf32>
    %11 = tpu.matmul %9, %10, %cst {dimension_numbers = #tpu.dot_dimension_numbers<[1], [0], [0], [1], [0, 0, 1, 1], [], []>} : vector<16x128xf32>, vector<128x32xf32>, vector<16x32xf32> -> vector<16x32xf32>
    %12 = arith.addf %11, %0 : vector<16x32xf32>
    %c0_11 = arith.constant 0 : index
    %c0_12 = arith.constant 0 : index
    %13 = vector.load %arg1[%c0_11, %c0_12] : memref<16x1xi32, #tpu.memory_space<vmem>>, vector<16x1xi32>
    %14 = tpu.iota {dimensions = array<i32: 1>} : vector<16x128xi32>
    %15 = vector.broadcast %13 : vector<16x1xi32> to vector<16x128xi32>
    %16 = arith.cmpi eq, %14, %15 : vector<16x128xi32>
    %17 = arith.extui %16 : vector<16x128xi1> to vector<16x128xi32>
    %18 = arith.sitofp %17 : vector<16x128xi32> to vector<16x128xf32>
    %c0_13 = arith.constant 0 : index
    %c0_14 = arith.constant 0 : index
    %19 = vector.load %arg3[%c0_13, %c0_14] : memref<128x32xf32, #tpu.memory_space<vmem>>, vector<128x32xf32>
    %cst_15 = arith.constant dense<0.000000e+00> : vector<16x32xf32>
    %20 = tpu.matmul %18, %19, %cst_15 {dimension_numbers = #tpu.dot_dimension_numbers<[1], [0], [0], [1], [0, 0, 1, 1], [], []>} : vector<16x128xf32>, vector<128x32xf32>, vector<16x32xf32> -> vector<16x32xf32>
    %21 = arith.addf %20, %0 : vector<16x32xf32>
    %c0_16 = arith.constant 0 : index
    %c0_17 = arith.constant 0 : index
    %c0_18 = arith.constant 0 : index
    %22 = vector.load %arg8[%c0_16, %c0_17, %c0_18] : memref<2x32x96xf32, #tpu.memory_space<vmem>>, vector<1x32x96xf32>
    %23 = vector.shape_cast %22 : vector<1x32x96xf32> to vector<32x96xf32>
    %c0_19 = arith.constant 0 : index
    %c0_20 = arith.constant 0 : index
    %c0_21 = arith.constant 0 : index
    %24 = vector.load %arg9[%c0_19, %c0_20, %c0_21] : memref<2x1x96xf32, #tpu.memory_space<vmem>>, vector<1x1x96xf32>
    %25 = vector.shape_cast %24 : vector<1x1x96xf32> to vector<1x96xf32>
    %c0_22 = arith.constant 0 : index
    %c0_23 = arith.constant 0 : index
    %c0_24 = arith.constant 0 : index
    %26 = vector.load %arg10[%c0_22, %c0_23, %c0_24] : memref<2x32x32xf32, #tpu.memory_space<vmem>>, vector<1x32x32xf32>
    %27 = vector.shape_cast %26 : vector<1x32x32xf32> to vector<32x32xf32>
    %c0_25 = arith.constant 0 : index
    %c0_26 = arith.constant 0 : index
    %c0_27 = arith.constant 0 : index
    %28 = vector.load %arg11[%c0_25, %c0_26, %c0_27] : memref<2x1x32xf32, #tpu.memory_space<vmem>>, vector<1x1x32xf32>
    %29 = vector.shape_cast %28 : vector<1x1x32xf32> to vector<1x32xf32>
    %cst_28 = arith.constant dense<0.000000e+00> : vector<16x96xf32>
    %30 = tpu.matmul %12, %23, %cst_28 {dimension_numbers = #tpu.dot_dimension_numbers<[1], [0], [0], [1], [0, 0, 1, 1], [], []>} : vector<16x32xf32>, vector<32x96xf32>, vector<16x96xf32> -> vector<16x96xf32>
    %31 = vector.broadcast %25 : vector<1x96xf32> to vector<16x96xf32>
    %32 = arith.addf %30, %31 : vector<16x96xf32>
    %33 = vector.extract_strided_slice %32 {offsets = [0, 0], sizes = [16, 32], strides = [1, 1]} : vector<16x96xf32> to vector<16x32xf32>
    %34 = vector.extract_strided_slice %32 {offsets = [0, 32], sizes = [16, 32], strides = [1, 1]} : vector<16x96xf32> to vector<16x32xf32>
    %35 = vector.extract_strided_slice %32 {offsets = [0, 64], sizes = [16, 32], strides = [1, 1]} : vector<16x96xf32> to vector<16x32xf32>
    %36 = vector.extract_strided_slice %33 {offsets = [0, 0], sizes = [16, 8], strides = [1, 1]} : vector<16x32xf32> to vector<16x8xf32>
    %37 = vector.extract_strided_slice %34 {offsets = [0, 0], sizes = [16, 8], strides = [1, 1]} : vector<16x32xf32> to vector<16x8xf32>
    %cst_29 = arith.constant dense<0.000000e+00> : vector<16x16xf32>
    %38 = tpu.matmul %36, %37, %cst_29 {dimension_numbers = #tpu.dot_dimension_numbers<[1], [1], [0], [0], [0, 0, 1, 0], [], []>} : vector<16x8xf32>, vector<16x8xf32>, vector<16x16xf32> -> vector<16x16xf32>
    %cst_30 = arith.constant 0.000000e+00 : f32
    %39 = vector.broadcast %cst_30 : f32 to vector<16x16xf32>
    %40 = arith.cmpf ogt, %1, %39 : vector<16x16xf32>
    %41 = arith.select %40, %38, %3 : vector<16x16xi1>, vector<16x16xf32>
    %cst_31 = arith.constant dense<0xFF800000> : vector<16xf32>
    %42 = vector.multi_reduction <maximumf>, %41, %cst_31 [1] : vector<16x16xf32> to vector<16xf32>
    %43 = vector.shape_cast %42 : vector<16xf32> to vector<16x1xf32>
    %44 = vector.broadcast %43 : vector<16x1xf32> to vector<16x16xf32>
    %45 = arith.subf %41, %44 : vector<16x16xf32>
    %46 = math.exp %45 : vector<16x16xf32>
    %cst_32 = arith.constant dense<0.000000e+00> : vector<16xf32>
    %47 = vector.multi_reduction <add>, %46, %cst_32 [1] : vector<16x16xf32> to vector<16xf32>
    %48 = vector.shape_cast %47 : vector<16xf32> to vector<16x1xf32>
    %49 = vector.broadcast %48 : vector<16x1xf32> to vector<16x16xf32>
    %50 = arith.divf %46, %49 : vector<16x16xf32>
    %51 = vector.extract_strided_slice %35 {offsets = [0, 0], sizes = [16, 8], strides = [1, 1]} : vector<16x32xf32> to vector<16x8xf32>
    %cst_33 = arith.constant dense<0.000000e+00> : vector<16x8xf32>
    %52 = tpu.matmul %50, %51, %cst_33 {dimension_numbers = #tpu.dot_dimension_numbers<[1], [0], [0], [1], [0, 0, 1, 1], [], []>} : vector<16x16xf32>, vector<16x8xf32>, vector<16x8xf32> -> vector<16x8xf32>
    %53 = vector.extract_strided_slice %33 {offsets = [0, 8], sizes = [16, 8], strides = [1, 1]} : vector<16x32xf32> to vector<16x8xf32>
    %54 = vector.extract_strided_slice %34 {offsets = [0, 8], sizes = [16, 8], strides = [1, 1]} : vector<16x32xf32> to vector<16x8xf32>
    %cst_34 = arith.constant dense<0.000000e+00> : vector<16x16xf32>
    %55 = tpu.matmul %53, %54, %cst_34 {dimension_numbers = #tpu.dot_dimension_numbers<[1], [1], [0], [0], [0, 0, 1, 0], [], []>} : vector<16x8xf32>, vector<16x8xf32>, vector<16x16xf32> -> vector<16x16xf32>
    %cst_35 = arith.constant 0.000000e+00 : f32
    %56 = vector.broadcast %cst_35 : f32 to vector<16x16xf32>
    %57 = arith.cmpf ogt, %1, %56 : vector<16x16xf32>
    %58 = arith.select %57, %55, %3 : vector<16x16xi1>, vector<16x16xf32>
    %cst_36 = arith.constant dense<0xFF800000> : vector<16xf32>
    %59 = vector.multi_reduction <maximumf>, %58, %cst_36 [1] : vector<16x16xf32> to vector<16xf32>
    %60 = vector.shape_cast %59 : vector<16xf32> to vector<16x1xf32>
    %61 = vector.broadcast %60 : vector<16x1xf32> to vector<16x16xf32>
    %62 = arith.subf %58, %61 : vector<16x16xf32>
    %63 = math.exp %62 : vector<16x16xf32>
    %cst_37 = arith.constant dense<0.000000e+00> : vector<16xf32>
    %64 = vector.multi_reduction <add>, %63, %cst_37 [1] : vector<16x16xf32> to vector<16xf32>
    %65 = vector.shape_cast %64 : vector<16xf32> to vector<16x1xf32>
    %66 = vector.broadcast %65 : vector<16x1xf32> to vector<16x16xf32>
    %67 = arith.divf %63, %66 : vector<16x16xf32>
    %68 = vector.extract_strided_slice %35 {offsets = [0, 8], sizes = [16, 8], strides = [1, 1]} : vector<16x32xf32> to vector<16x8xf32>
    %cst_38 = arith.constant dense<0.000000e+00> : vector<16x8xf32>
    %69 = tpu.matmul %67, %68, %cst_38 {dimension_numbers = #tpu.dot_dimension_numbers<[1], [0], [0], [1], [0, 0, 1, 1], [], []>} : vector<16x16xf32>, vector<16x8xf32>, vector<16x8xf32> -> vector<16x8xf32>
    %70 = vector.extract_strided_slice %33 {offsets = [0, 16], sizes = [16, 8], strides = [1, 1]} : vector<16x32xf32> to vector<16x8xf32>
    %71 = vector.extract_strided_slice %34 {offsets = [0, 16], sizes = [16, 8], strides = [1, 1]} : vector<16x32xf32> to vector<16x8xf32>
    %cst_39 = arith.constant dense<0.000000e+00> : vector<16x16xf32>
    %72 = tpu.matmul %70, %71, %cst_39 {dimension_numbers = #tpu.dot_dimension_numbers<[1], [1], [0], [0], [0, 0, 1, 0], [], []>} : vector<16x8xf32>, vector<16x8xf32>, vector<16x16xf32> -> vector<16x16xf32>
    %cst_40 = arith.constant 0.000000e+00 : f32
    %73 = vector.broadcast %cst_40 : f32 to vector<16x16xf32>
    %74 = arith.cmpf ogt, %1, %73 : vector<16x16xf32>
    %75 = arith.select %74, %72, %3 : vector<16x16xi1>, vector<16x16xf32>
    %cst_41 = arith.constant dense<0xFF800000> : vector<16xf32>
    %76 = vector.multi_reduction <maximumf>, %75, %cst_41 [1] : vector<16x16xf32> to vector<16xf32>
    %77 = vector.shape_cast %76 : vector<16xf32> to vector<16x1xf32>
    %78 = vector.broadcast %77 : vector<16x1xf32> to vector<16x16xf32>
    %79 = arith.subf %75, %78 : vector<16x16xf32>
    %80 = math.exp %79 : vector<16x16xf32>
    %cst_42 = arith.constant dense<0.000000e+00> : vector<16xf32>
    %81 = vector.multi_reduction <add>, %80, %cst_42 [1] : vector<16x16xf32> to vector<16xf32>
    %82 = vector.shape_cast %81 : vector<16xf32> to vector<16x1xf32>
    %83 = vector.broadcast %82 : vector<16x1xf32> to vector<16x16xf32>
    %84 = arith.divf %80, %83 : vector<16x16xf32>
    %85 = vector.extract_strided_slice %35 {offsets = [0, 16], sizes = [16, 8], strides = [1, 1]} : vector<16x32xf32> to vector<16x8xf32>
    %cst_43 = arith.constant dense<0.000000e+00> : vector<16x8xf32>
    %86 = tpu.matmul %84, %85, %cst_43 {dimension_numbers = #tpu.dot_dimension_numbers<[1], [0], [0], [1], [0, 0, 1, 1], [], []>} : vector<16x16xf32>, vector<16x8xf32>, vector<16x8xf32> -> vector<16x8xf32>
    %87 = vector.extract_strided_slice %33 {offsets = [0, 24], sizes = [16, 8], strides = [1, 1]} : vector<16x32xf32> to vector<16x8xf32>
    %88 = vector.extract_strided_slice %34 {offsets = [0, 24], sizes = [16, 8], strides = [1, 1]} : vector<16x32xf32> to vector<16x8xf32>
    %cst_44 = arith.constant dense<0.000000e+00> : vector<16x16xf32>
    %89 = tpu.matmul %87, %88, %cst_44 {dimension_numbers = #tpu.dot_dimension_numbers<[1], [1], [0], [0], [0, 0, 1, 0], [], []>} : vector<16x8xf32>, vector<16x8xf32>, vector<16x16xf32> -> vector<16x16xf32>
    %cst_45 = arith.constant 0.000000e+00 : f32
    %90 = vector.broadcast %cst_45 : f32 to vector<16x16xf32>
    %91 = arith.cmpf ogt, %1, %90 : vector<16x16xf32>
    %92 = arith.select %91, %89, %3 : vector<16x16xi1>, vector<16x16xf32>
    %cst_46 = arith.constant dense<0xFF800000> : vector<16xf32>
    %93 = vector.multi_reduction <maximumf>, %92, %cst_46 [1] : vector<16x16xf32> to vector<16xf32>
    %94 = vector.shape_cast %93 : vector<16xf32> to vector<16x1xf32>
    %95 = vector.broadcast %94 : vector<16x1xf32> to vector<16x16xf32>
    %96 = arith.subf %92, %95 : vector<16x16xf32>
    %97 = math.exp %96 : vector<16x16xf32>
    %cst_47 = arith.constant dense<0.000000e+00> : vector<16xf32>
    %98 = vector.multi_reduction <add>, %97, %cst_47 [1] : vector<16x16xf32> to vector<16xf32>
    %99 = vector.shape_cast %98 : vector<16xf32> to vector<16x1xf32>
    %100 = vector.broadcast %99 : vector<16x1xf32> to vector<16x16xf32>
    %101 = arith.divf %97, %100 : vector<16x16xf32>
    %102 = vector.extract_strided_slice %35 {offsets = [0, 24], sizes = [16, 8], strides = [1, 1]} : vector<16x32xf32> to vector<16x8xf32>
    %cst_48 = arith.constant dense<0.000000e+00> : vector<16x8xf32>
    %103 = tpu.matmul %101, %102, %cst_48 {dimension_numbers = #tpu.dot_dimension_numbers<[1], [0], [0], [1], [0, 0, 1, 1], [], []>} : vector<16x16xf32>, vector<16x8xf32>, vector<16x8xf32> -> vector<16x8xf32>
    %104 = tpu.concatenate %52, %69, %86, %103 in 1 : vector<16x8xf32>, vector<16x8xf32>, vector<16x8xf32>, vector<16x8xf32> -> vector<16x32xf32>
    %cst_49 = arith.constant dense<0.000000e+00> : vector<16x32xf32>
    %105 = tpu.matmul %104, %27, %cst_49 {dimension_numbers = #tpu.dot_dimension_numbers<[1], [0], [0], [1], [0, 0, 1, 1], [], []>} : vector<16x32xf32>, vector<32x32xf32>, vector<16x32xf32> -> vector<16x32xf32>
    %106 = vector.broadcast %29 : vector<1x32xf32> to vector<16x32xf32>
    %107 = arith.addf %105, %106 : vector<16x32xf32>
    %108 = arith.addf %12, %107 : vector<16x32xf32>
    %c0_50 = arith.constant 0 : index
    %c0_51 = arith.constant 0 : index
    %c0_52 = arith.constant 0 : index
    %109 = vector.load %arg12[%c0_50, %c0_51, %c0_52] : memref<4x1x32xf32, #tpu.memory_space<vmem>>, vector<1x1x32xf32>
    %110 = vector.shape_cast %109 : vector<1x1x32xf32> to vector<1x32xf32>
    %c0_53 = arith.constant 0 : index
    %c0_54 = arith.constant 0 : index
    %c0_55 = arith.constant 0 : index
    %111 = vector.load %arg13[%c0_53, %c0_54, %c0_55] : memref<4x1x32xf32, #tpu.memory_space<vmem>>, vector<1x1x32xf32>
    %112 = vector.shape_cast %111 : vector<1x1x32xf32> to vector<1x32xf32>
    %cst_56 = arith.constant dense<0.000000e+00> : vector<16xf32>
    %113 = vector.multi_reduction <add>, %108, %cst_56 [1] : vector<16x32xf32> to vector<16xf32>
    %114 = vector.shape_cast %113 : vector<16xf32> to vector<16x1xf32>
    %cst_57 = arith.constant 3.200000e+01 : f32
    %115 = vector.broadcast %cst_57 : f32 to vector<16x1xf32>
    %116 = arith.divf %114, %115 : vector<16x1xf32>
    %117 = vector.broadcast %116 : vector<16x1xf32> to vector<16x32xf32>
    %118 = arith.subf %108, %117 : vector<16x32xf32>
    %119 = arith.mulf %118, %118 : vector<16x32xf32>
    %cst_58 = arith.constant dense<0.000000e+00> : vector<16xf32>
    %120 = vector.multi_reduction <add>, %119, %cst_58 [1] : vector<16x32xf32> to vector<16xf32>
    %121 = vector.shape_cast %120 : vector<16xf32> to vector<16x1xf32>
    %cst_59 = arith.constant 3.200000e+01 : f32
    %122 = vector.broadcast %cst_59 : f32 to vector<16x1xf32>
    %123 = arith.divf %121, %122 : vector<16x1xf32>
    %cst_60 = arith.constant 9.99999974E-6 : f32
    %124 = vector.broadcast %cst_60 : f32 to vector<16x1xf32>
    %125 = arith.addf %123, %124 : vector<16x1xf32>
    %126 = math.rsqrt %125 : vector<16x1xf32>
    %127 = vector.broadcast %126 : vector<16x1xf32> to vector<16x32xf32>
    %128 = arith.mulf %118, %127 : vector<16x32xf32>
    %129 = vector.broadcast %110 : vector<1x32xf32> to vector<16x32xf32>
    %130 = arith.mulf %128, %129 : vector<16x32xf32>
    %131 = vector.broadcast %112 : vector<1x32xf32> to vector<16x32xf32>
    %132 = arith.addf %130, %131 : vector<16x32xf32>
    %c0_61 = arith.constant 0 : index
    %c0_62 = arith.constant 0 : index
    %c0_63 = arith.constant 0 : index
    %133 = vector.load %arg14[%c0_61, %c0_62, %c0_63] : memref<2x32x64xf32, #tpu.memory_space<vmem>>, vector<1x32x64xf32>
    %134 = vector.shape_cast %133 : vector<1x32x64xf32> to vector<32x64xf32>
    %c0_64 = arith.constant 0 : index
    %c0_65 = arith.constant 0 : index
    %c0_66 = arith.constant 0 : index
    %135 = vector.load %arg15[%c0_64, %c0_65, %c0_66] : memref<2x1x64xf32, #tpu.memory_space<vmem>>, vector<1x1x64xf32>
    %136 = vector.shape_cast %135 : vector<1x1x64xf32> to vector<1x64xf32>
    %c0_67 = arith.constant 0 : index
    %c0_68 = arith.constant 0 : index
    %c0_69 = arith.constant 0 : index
    %137 = vector.load %arg16[%c0_67, %c0_68, %c0_69] : memref<2x64x32xf32, #tpu.memory_space<vmem>>, vector<1x64x32xf32>
    %138 = vector.shape_cast %137 : vector<1x64x32xf32> to vector<64x32xf32>
    %c0_70 = arith.constant 0 : index
    %c0_71 = arith.constant 0 : index
    %c0_72 = arith.constant 0 : index
    %139 = vector.load %arg17[%c0_70, %c0_71, %c0_72] : memref<2x1x32xf32, #tpu.memory_space<vmem>>, vector<1x1x32xf32>
    %140 = vector.shape_cast %139 : vector<1x1x32xf32> to vector<1x32xf32>
    %cst_73 = arith.constant dense<0.000000e+00> : vector<16x64xf32>
    %141 = tpu.matmul %132, %134, %cst_73 {dimension_numbers = #tpu.dot_dimension_numbers<[1], [0], [0], [1], [0, 0, 1, 1], [], []>} : vector<16x32xf32>, vector<32x64xf32>, vector<16x64xf32> -> vector<16x64xf32>
    %142 = vector.broadcast %136 : vector<1x64xf32> to vector<16x64xf32>
    %143 = arith.addf %141, %142 : vector<16x64xf32>
    %cst_74 = arith.constant 0.000000e+00 : f32
    %144 = vector.broadcast %cst_74 : f32 to vector<16x64xf32>
    %145 = arith.maximumf %143, %144 : vector<16x64xf32>
    %cst_75 = arith.constant dense<0.000000e+00> : vector<16x32xf32>
    %146 = tpu.matmul %145, %138, %cst_75 {dimension_numbers = #tpu.dot_dimension_numbers<[1], [0], [0], [1], [0, 0, 1, 1], [], []>} : vector<16x64xf32>, vector<64x32xf32>, vector<16x32xf32> -> vector<16x32xf32>
    %147 = vector.broadcast %140 : vector<1x32xf32> to vector<16x32xf32>
    %148 = arith.addf %146, %147 : vector<16x32xf32>
    %149 = arith.addf %132, %148 : vector<16x32xf32>
    %c1 = arith.constant 1 : index
    %c0_76 = arith.constant 0 : index
    %c0_77 = arith.constant 0 : index
    %150 = vector.load %arg12[%c1, %c0_76, %c0_77] : memref<4x1x32xf32, #tpu.memory_space<vmem>>, vector<1x1x32xf32>
    %151 = vector.shape_cast %150 : vector<1x1x32xf32> to vector<1x32xf32>
    %c1_78 = arith.constant 1 : index
    %c0_79 = arith.constant 0 : index
    %c0_80 = arith.constant 0 : index
    %152 = vector.load %arg13[%c1_78, %c0_79, %c0_80] : memref<4x1x32xf32, #tpu.memory_space<vmem>>, vector<1x1x32xf32>
    %153 = vector.shape_cast %152 : vector<1x1x32xf32> to vector<1x32xf32>
    %cst_81 = arith.constant dense<0.000000e+00> : vector<16xf32>
    %154 = vector.multi_reduction <add>, %149, %cst_81 [1] : vector<16x32xf32> to vector<16xf32>
    %155 = vector.shape_cast %154 : vector<16xf32> to vector<16x1xf32>
    %cst_82 = arith.constant 3.200000e+01 : f32
    %156 = vector.broadcast %cst_82 : f32 to vector<16x1xf32>
    %157 = arith.divf %155, %156 : vector<16x1xf32>
    %158 = vector.broadcast %157 : vector<16x1xf32> to vector<16x32xf32>
    %159 = arith.subf %149, %158 : vector<16x32xf32>
    %160 = arith.mulf %159, %159 : vector<16x32xf32>
    %cst_83 = arith.constant dense<0.000000e+00> : vector<16xf32>
    %161 = vector.multi_reduction <add>, %160, %cst_83 [1] : vector<16x32xf32> to vector<16xf32>
    %162 = vector.shape_cast %161 : vector<16xf32> to vector<16x1xf32>
    %cst_84 = arith.constant 3.200000e+01 : f32
    %163 = vector.broadcast %cst_84 : f32 to vector<16x1xf32>
    %164 = arith.divf %162, %163 : vector<16x1xf32>
    %cst_85 = arith.constant 9.99999974E-6 : f32
    %165 = vector.broadcast %cst_85 : f32 to vector<16x1xf32>
    %166 = arith.addf %164, %165 : vector<16x1xf32>
    %167 = math.rsqrt %166 : vector<16x1xf32>
    %168 = vector.broadcast %167 : vector<16x1xf32> to vector<16x32xf32>
    %169 = arith.mulf %159, %168 : vector<16x32xf32>
    %170 = vector.broadcast %151 : vector<1x32xf32> to vector<16x32xf32>
    %171 = arith.mulf %169, %170 : vector<16x32xf32>
    %172 = vector.broadcast %153 : vector<1x32xf32> to vector<16x32xf32>
    %173 = arith.addf %171, %172 : vector<16x32xf32>
    %c1_86 = arith.constant 1 : index
    %c0_87 = arith.constant 0 : index
    %c0_88 = arith.constant 0 : index
    %174 = vector.load %arg8[%c1_86, %c0_87, %c0_88] : memref<2x32x96xf32, #tpu.memory_space<vmem>>, vector<1x32x96xf32>
    %175 = vector.shape_cast %174 : vector<1x32x96xf32> to vector<32x96xf32>
    %c1_89 = arith.constant 1 : index
    %c0_90 = arith.constant 0 : index
    %c0_91 = arith.constant 0 : index
    %176 = vector.load %arg9[%c1_89, %c0_90, %c0_91] : memref<2x1x96xf32, #tpu.memory_space<vmem>>, vector<1x1x96xf32>
    %177 = vector.shape_cast %176 : vector<1x1x96xf32> to vector<1x96xf32>
    %c1_92 = arith.constant 1 : index
    %c0_93 = arith.constant 0 : index
    %c0_94 = arith.constant 0 : index
    %178 = vector.load %arg10[%c1_92, %c0_93, %c0_94] : memref<2x32x32xf32, #tpu.memory_space<vmem>>, vector<1x32x32xf32>
    %179 = vector.shape_cast %178 : vector<1x32x32xf32> to vector<32x32xf32>
    %c1_95 = arith.constant 1 : index
    %c0_96 = arith.constant 0 : index
    %c0_97 = arith.constant 0 : index
    %180 = vector.load %arg11[%c1_95, %c0_96, %c0_97] : memref<2x1x32xf32, #tpu.memory_space<vmem>>, vector<1x1x32xf32>
    %181 = vector.shape_cast %180 : vector<1x1x32xf32> to vector<1x32xf32>
    %cst_98 = arith.constant dense<0.000000e+00> : vector<16x96xf32>
    %182 = tpu.matmul %173, %175, %cst_98 {dimension_numbers = #tpu.dot_dimension_numbers<[1], [0], [0], [1], [0, 0, 1, 1], [], []>} : vector<16x32xf32>, vector<32x96xf32>, vector<16x96xf32> -> vector<16x96xf32>
    %183 = vector.broadcast %177 : vector<1x96xf32> to vector<16x96xf32>
    %184 = arith.addf %182, %183 : vector<16x96xf32>
    %185 = vector.extract_strided_slice %184 {offsets = [0, 0], sizes = [16, 32], strides = [1, 1]} : vector<16x96xf32> to vector<16x32xf32>
    %186 = vector.extract_strided_slice %184 {offsets = [0, 32], sizes = [16, 32], strides = [1, 1]} : vector<16x96xf32> to vector<16x32xf32>
    %187 = vector.extract_strided_slice %184 {offsets = [0, 64], sizes = [16, 32], strides = [1, 1]} : vector<16x96xf32> to vector<16x32xf32>
    %188 = vector.extract_strided_slice %185 {offsets = [0, 0], sizes = [16, 8], strides = [1, 1]} : vector<16x32xf32> to vector<16x8xf32>
    %189 = vector.extract_strided_slice %186 {offsets = [0, 0], sizes = [16, 8], strides = [1, 1]} : vector<16x32xf32> to vector<16x8xf32>
    %cst_99 = arith.constant dense<0.000000e+00> : vector<16x16xf32>
    %190 = tpu.matmul %188, %189, %cst_99 {dimension_numbers = #tpu.dot_dimension_numbers<[1], [1], [0], [0], [0, 0, 1, 0], [], []>} : vector<16x8xf32>, vector<16x8xf32>, vector<16x16xf32> -> vector<16x16xf32>
    %cst_100 = arith.constant 0.000000e+00 : f32
    %191 = vector.broadcast %cst_100 : f32 to vector<16x16xf32>
    %192 = arith.cmpf ogt, %1, %191 : vector<16x16xf32>
    %193 = arith.select %192, %190, %3 : vector<16x16xi1>, vector<16x16xf32>
    %cst_101 = arith.constant dense<0xFF800000> : vector<16xf32>
    %194 = vector.multi_reduction <maximumf>, %193, %cst_101 [1] : vector<16x16xf32> to vector<16xf32>
    %195 = vector.shape_cast %194 : vector<16xf32> to vector<16x1xf32>
    %196 = vector.broadcast %195 : vector<16x1xf32> to vector<16x16xf32>
    %197 = arith.subf %193, %196 : vector<16x16xf32>
    %198 = math.exp %197 : vector<16x16xf32>
    %cst_102 = arith.constant dense<0.000000e+00> : vector<16xf32>
    %199 = vector.multi_reduction <add>, %198, %cst_102 [1] : vector<16x16xf32> to vector<16xf32>
    %200 = vector.shape_cast %199 : vector<16xf32> to vector<16x1xf32>
    %201 = vector.broadcast %200 : vector<16x1xf32> to vector<16x16xf32>
    %202 = arith.divf %198, %201 : vector<16x16xf32>
    %203 = vector.extract_strided_slice %187 {offsets = [0, 0], sizes = [16, 8], strides = [1, 1]} : vector<16x32xf32> to vector<16x8xf32>
    %cst_103 = arith.constant dense<0.000000e+00> : vector<16x8xf32>
    %204 = tpu.matmul %202, %203, %cst_103 {dimension_numbers = #tpu.dot_dimension_numbers<[1], [0], [0], [1], [0, 0, 1, 1], [], []>} : vector<16x16xf32>, vector<16x8xf32>, vector<16x8xf32> -> vector<16x8xf32>
    %205 = vector.extract_strided_slice %185 {offsets = [0, 8], sizes = [16, 8], strides = [1, 1]} : vector<16x32xf32> to vector<16x8xf32>
    %206 = vector.extract_strided_slice %186 {offsets = [0, 8], sizes = [16, 8], strides = [1, 1]} : vector<16x32xf32> to vector<16x8xf32>
    %cst_104 = arith.constant dense<0.000000e+00> : vector<16x16xf32>
    %207 = tpu.matmul %205, %206, %cst_104 {dimension_numbers = #tpu.dot_dimension_numbers<[1], [1], [0], [0], [0, 0, 1, 0], [], []>} : vector<16x8xf32>, vector<16x8xf32>, vector<16x16xf32> -> vector<16x16xf32>
    %cst_105 = arith.constant 0.000000e+00 : f32
    %208 = vector.broadcast %cst_105 : f32 to vector<16x16xf32>
    %209 = arith.cmpf ogt, %1, %208 : vector<16x16xf32>
    %210 = arith.select %209, %207, %3 : vector<16x16xi1>, vector<16x16xf32>
    %cst_106 = arith.constant dense<0xFF800000> : vector<16xf32>
    %211 = vector.multi_reduction <maximumf>, %210, %cst_106 [1] : vector<16x16xf32> to vector<16xf32>
    %212 = vector.shape_cast %211 : vector<16xf32> to vector<16x1xf32>
    %213 = vector.broadcast %212 : vector<16x1xf32> to vector<16x16xf32>
    %214 = arith.subf %210, %213 : vector<16x16xf32>
    %215 = math.exp %214 : vector<16x16xf32>
    %cst_107 = arith.constant dense<0.000000e+00> : vector<16xf32>
    %216 = vector.multi_reduction <add>, %215, %cst_107 [1] : vector<16x16xf32> to vector<16xf32>
    %217 = vector.shape_cast %216 : vector<16xf32> to vector<16x1xf32>
    %218 = vector.broadcast %217 : vector<16x1xf32> to vector<16x16xf32>
    %219 = arith.divf %215, %218 : vector<16x16xf32>
    %220 = vector.extract_strided_slice %187 {offsets = [0, 8], sizes = [16, 8], strides = [1, 1]} : vector<16x32xf32> to vector<16x8xf32>
    %cst_108 = arith.constant dense<0.000000e+00> : vector<16x8xf32>
    %221 = tpu.matmul %219, %220, %cst_108 {dimension_numbers = #tpu.dot_dimension_numbers<[1], [0], [0], [1], [0, 0, 1, 1], [], []>} : vector<16x16xf32>, vector<16x8xf32>, vector<16x8xf32> -> vector<16x8xf32>
    %222 = vector.extract_strided_slice %185 {offsets = [0, 16], sizes = [16, 8], strides = [1, 1]} : vector<16x32xf32> to vector<16x8xf32>
    %223 = vector.extract_strided_slice %186 {offsets = [0, 16], sizes = [16, 8], strides = [1, 1]} : vector<16x32xf32> to vector<16x8xf32>
    %cst_109 = arith.constant dense<0.000000e+00> : vector<16x16xf32>
    %224 = tpu.matmul %222, %223, %cst_109 {dimension_numbers = #tpu.dot_dimension_numbers<[1], [1], [0], [0], [0, 0, 1, 0], [], []>} : vector<16x8xf32>, vector<16x8xf32>, vector<16x16xf32> -> vector<16x16xf32>
    %cst_110 = arith.constant 0.000000e+00 : f32
    %225 = vector.broadcast %cst_110 : f32 to vector<16x16xf32>
    %226 = arith.cmpf ogt, %1, %225 : vector<16x16xf32>
    %227 = arith.select %226, %224, %3 : vector<16x16xi1>, vector<16x16xf32>
    %cst_111 = arith.constant dense<0xFF800000> : vector<16xf32>
    %228 = vector.multi_reduction <maximumf>, %227, %cst_111 [1] : vector<16x16xf32> to vector<16xf32>
    %229 = vector.shape_cast %228 : vector<16xf32> to vector<16x1xf32>
    %230 = vector.broadcast %229 : vector<16x1xf32> to vector<16x16xf32>
    %231 = arith.subf %227, %230 : vector<16x16xf32>
    %232 = math.exp %231 : vector<16x16xf32>
    %cst_112 = arith.constant dense<0.000000e+00> : vector<16xf32>
    %233 = vector.multi_reduction <add>, %232, %cst_112 [1] : vector<16x16xf32> to vector<16xf32>
    %234 = vector.shape_cast %233 : vector<16xf32> to vector<16x1xf32>
    %235 = vector.broadcast %234 : vector<16x1xf32> to vector<16x16xf32>
    %236 = arith.divf %232, %235 : vector<16x16xf32>
    %237 = vector.extract_strided_slice %187 {offsets = [0, 16], sizes = [16, 8], strides = [1, 1]} : vector<16x32xf32> to vector<16x8xf32>
    %cst_113 = arith.constant dense<0.000000e+00> : vector<16x8xf32>
    %238 = tpu.matmul %236, %237, %cst_113 {dimension_numbers = #tpu.dot_dimension_numbers<[1], [0], [0], [1], [0, 0, 1, 1], [], []>} : vector<16x16xf32>, vector<16x8xf32>, vector<16x8xf32> -> vector<16x8xf32>
    %239 = vector.extract_strided_slice %185 {offsets = [0, 24], sizes = [16, 8], strides = [1, 1]} : vector<16x32xf32> to vector<16x8xf32>
    %240 = vector.extract_strided_slice %186 {offsets = [0, 24], sizes = [16, 8], strides = [1, 1]} : vector<16x32xf32> to vector<16x8xf32>
    %cst_114 = arith.constant dense<0.000000e+00> : vector<16x16xf32>
    %241 = tpu.matmul %239, %240, %cst_114 {dimension_numbers = #tpu.dot_dimension_numbers<[1], [1], [0], [0], [0, 0, 1, 0], [], []>} : vector<16x8xf32>, vector<16x8xf32>, vector<16x16xf32> -> vector<16x16xf32>
    %cst_115 = arith.constant 0.000000e+00 : f32
    %242 = vector.broadcast %cst_115 : f32 to vector<16x16xf32>
    %243 = arith.cmpf ogt, %1, %242 : vector<16x16xf32>
    %244 = arith.select %243, %241, %3 : vector<16x16xi1>, vector<16x16xf32>
    %cst_116 = arith.constant dense<0xFF800000> : vector<16xf32>
    %245 = vector.multi_reduction <maximumf>, %244, %cst_116 [1] : vector<16x16xf32> to vector<16xf32>
    %246 = vector.shape_cast %245 : vector<16xf32> to vector<16x1xf32>
    %247 = vector.broadcast %246 : vector<16x1xf32> to vector<16x16xf32>
    %248 = arith.subf %244, %247 : vector<16x16xf32>
    %249 = math.exp %248 : vector<16x16xf32>
    %cst_117 = arith.constant dense<0.000000e+00> : vector<16xf32>
    %250 = vector.multi_reduction <add>, %249, %cst_117 [1] : vector<16x16xf32> to vector<16xf32>
    %251 = vector.shape_cast %250 : vector<16xf32> to vector<16x1xf32>
    %252 = vector.broadcast %251 : vector<16x1xf32> to vector<16x16xf32>
    %253 = arith.divf %249, %252 : vector<16x16xf32>
    %254 = vector.extract_strided_slice %187 {offsets = [0, 24], sizes = [16, 8], strides = [1, 1]} : vector<16x32xf32> to vector<16x8xf32>
    %cst_118 = arith.constant dense<0.000000e+00> : vector<16x8xf32>
    %255 = tpu.matmul %253, %254, %cst_118 {dimension_numbers = #tpu.dot_dimension_numbers<[1], [0], [0], [1], [0, 0, 1, 1], [], []>} : vector<16x16xf32>, vector<16x8xf32>, vector<16x8xf32> -> vector<16x8xf32>
    %256 = tpu.concatenate %204, %221, %238, %255 in 1 : vector<16x8xf32>, vector<16x8xf32>, vector<16x8xf32>, vector<16x8xf32> -> vector<16x32xf32>
    %cst_119 = arith.constant dense<0.000000e+00> : vector<16x32xf32>
    %257 = tpu.matmul %256, %179, %cst_119 {dimension_numbers = #tpu.dot_dimension_numbers<[1], [0], [0], [1], [0, 0, 1, 1], [], []>} : vector<16x32xf32>, vector<32x32xf32>, vector<16x32xf32> -> vector<16x32xf32>
    %258 = vector.broadcast %181 : vector<1x32xf32> to vector<16x32xf32>
    %259 = arith.addf %257, %258 : vector<16x32xf32>
    %260 = arith.addf %173, %259 : vector<16x32xf32>
    %c2 = arith.constant 2 : index
    %c0_120 = arith.constant 0 : index
    %c0_121 = arith.constant 0 : index
    %261 = vector.load %arg12[%c2, %c0_120, %c0_121] : memref<4x1x32xf32, #tpu.memory_space<vmem>>, vector<1x1x32xf32>
    %262 = vector.shape_cast %261 : vector<1x1x32xf32> to vector<1x32xf32>
    %c2_122 = arith.constant 2 : index
    %c0_123 = arith.constant 0 : index
    %c0_124 = arith.constant 0 : index
    %263 = vector.load %arg13[%c2_122, %c0_123, %c0_124] : memref<4x1x32xf32, #tpu.memory_space<vmem>>, vector<1x1x32xf32>
    %264 = vector.shape_cast %263 : vector<1x1x32xf32> to vector<1x32xf32>
    %cst_125 = arith.constant dense<0.000000e+00> : vector<16xf32>
    %265 = vector.multi_reduction <add>, %260, %cst_125 [1] : vector<16x32xf32> to vector<16xf32>
    %266 = vector.shape_cast %265 : vector<16xf32> to vector<16x1xf32>
    %cst_126 = arith.constant 3.200000e+01 : f32
    %267 = vector.broadcast %cst_126 : f32 to vector<16x1xf32>
    %268 = arith.divf %266, %267 : vector<16x1xf32>
    %269 = vector.broadcast %268 : vector<16x1xf32> to vector<16x32xf32>
    %270 = arith.subf %260, %269 : vector<16x32xf32>
    %271 = arith.mulf %270, %270 : vector<16x32xf32>
    %cst_127 = arith.constant dense<0.000000e+00> : vector<16xf32>
    %272 = vector.multi_reduction <add>, %271, %cst_127 [1] : vector<16x32xf32> to vector<16xf32>
    %273 = vector.shape_cast %272 : vector<16xf32> to vector<16x1xf32>
    %cst_128 = arith.constant 3.200000e+01 : f32
    %274 = vector.broadcast %cst_128 : f32 to vector<16x1xf32>
    %275 = arith.divf %273, %274 : vector<16x1xf32>
    %cst_129 = arith.constant 9.99999974E-6 : f32
    %276 = vector.broadcast %cst_129 : f32 to vector<16x1xf32>
    %277 = arith.addf %275, %276 : vector<16x1xf32>
    %278 = math.rsqrt %277 : vector<16x1xf32>
    %279 = vector.broadcast %278 : vector<16x1xf32> to vector<16x32xf32>
    %280 = arith.mulf %270, %279 : vector<16x32xf32>
    %281 = vector.broadcast %262 : vector<1x32xf32> to vector<16x32xf32>
    %282 = arith.mulf %280, %281 : vector<16x32xf32>
    %283 = vector.broadcast %264 : vector<1x32xf32> to vector<16x32xf32>
    %284 = arith.addf %282, %283 : vector<16x32xf32>
    %c1_130 = arith.constant 1 : index
    %c0_131 = arith.constant 0 : index
    %c0_132 = arith.constant 0 : index
    %285 = vector.load %arg14[%c1_130, %c0_131, %c0_132] : memref<2x32x64xf32, #tpu.memory_space<vmem>>, vector<1x32x64xf32>
    %286 = vector.shape_cast %285 : vector<1x32x64xf32> to vector<32x64xf32>
    %c1_133 = arith.constant 1 : index
    %c0_134 = arith.constant 0 : index
    %c0_135 = arith.constant 0 : index
    %287 = vector.load %arg15[%c1_133, %c0_134, %c0_135] : memref<2x1x64xf32, #tpu.memory_space<vmem>>, vector<1x1x64xf32>
    %288 = vector.shape_cast %287 : vector<1x1x64xf32> to vector<1x64xf32>
    %c1_136 = arith.constant 1 : index
    %c0_137 = arith.constant 0 : index
    %c0_138 = arith.constant 0 : index
    %289 = vector.load %arg16[%c1_136, %c0_137, %c0_138] : memref<2x64x32xf32, #tpu.memory_space<vmem>>, vector<1x64x32xf32>
    %290 = vector.shape_cast %289 : vector<1x64x32xf32> to vector<64x32xf32>
    %c1_139 = arith.constant 1 : index
    %c0_140 = arith.constant 0 : index
    %c0_141 = arith.constant 0 : index
    %291 = vector.load %arg17[%c1_139, %c0_140, %c0_141] : memref<2x1x32xf32, #tpu.memory_space<vmem>>, vector<1x1x32xf32>
    %292 = vector.shape_cast %291 : vector<1x1x32xf32> to vector<1x32xf32>
    %cst_142 = arith.constant dense<0.000000e+00> : vector<16x64xf32>
    %293 = tpu.matmul %284, %286, %cst_142 {dimension_numbers = #tpu.dot_dimension_numbers<[1], [0], [0], [1], [0, 0, 1, 1], [], []>} : vector<16x32xf32>, vector<32x64xf32>, vector<16x64xf32> -> vector<16x64xf32>
    %294 = vector.broadcast %288 : vector<1x64xf32> to vector<16x64xf32>
    %295 = arith.addf %293, %294 : vector<16x64xf32>
    %cst_143 = arith.constant 0.000000e+00 : f32
    %296 = vector.broadcast %cst_143 : f32 to vector<16x64xf32>
    %297 = arith.maximumf %295, %296 : vector<16x64xf32>
    %cst_144 = arith.constant dense<0.000000e+00> : vector<16x32xf32>
    %298 = tpu.matmul %297, %290, %cst_144 {dimension_numbers = #tpu.dot_dimension_numbers<[1], [0], [0], [1], [0, 0, 1, 1], [], []>} : vector<16x64xf32>, vector<64x32xf32>, vector<16x32xf32> -> vector<16x32xf32>
    %299 = vector.broadcast %292 : vector<1x32xf32> to vector<16x32xf32>
    %300 = arith.addf %298, %299 : vector<16x32xf32>
    %301 = arith.addf %284, %300 : vector<16x32xf32>
    %c3 = arith.constant 3 : index
    %c0_145 = arith.constant 0 : index
    %c0_146 = arith.constant 0 : index
    %302 = vector.load %arg12[%c3, %c0_145, %c0_146] : memref<4x1x32xf32, #tpu.memory_space<vmem>>, vector<1x1x32xf32>
    %303 = vector.shape_cast %302 : vector<1x1x32xf32> to vector<1x32xf32>
    %c3_147 = arith.constant 3 : index
    %c0_148 = arith.constant 0 : index
    %c0_149 = arith.constant 0 : index
    %304 = vector.load %arg13[%c3_147, %c0_148, %c0_149] : memref<4x1x32xf32, #tpu.memory_space<vmem>>, vector<1x1x32xf32>
    %305 = vector.shape_cast %304 : vector<1x1x32xf32> to vector<1x32xf32>
    %cst_150 = arith.constant dense<0.000000e+00> : vector<16xf32>
    %306 = vector.multi_reduction <add>, %301, %cst_150 [1] : vector<16x32xf32> to vector<16xf32>
    %307 = vector.shape_cast %306 : vector<16xf32> to vector<16x1xf32>
    %cst_151 = arith.constant 3.200000e+01 : f32
    %308 = vector.broadcast %cst_151 : f32 to vector<16x1xf32>
    %309 = arith.divf %307, %308 : vector<16x1xf32>
    %310 = vector.broadcast %309 : vector<16x1xf32> to vector<16x32xf32>
    %311 = arith.subf %301, %310 : vector<16x32xf32>
    %312 = arith.mulf %311, %311 : vector<16x32xf32>
    %cst_152 = arith.constant dense<0.000000e+00> : vector<16xf32>
    %313 = vector.multi_reduction <add>, %312, %cst_152 [1] : vector<16x32xf32> to vector<16xf32>
    %314 = vector.shape_cast %313 : vector<16xf32> to vector<16x1xf32>
    %cst_153 = arith.constant 3.200000e+01 : f32
    %315 = vector.broadcast %cst_153 : f32 to vector<16x1xf32>
    %316 = arith.divf %314, %315 : vector<16x1xf32>
    %cst_154 = arith.constant 9.99999974E-6 : f32
    %317 = vector.broadcast %cst_154 : f32 to vector<16x1xf32>
    %318 = arith.addf %316, %317 : vector<16x1xf32>
    %319 = math.rsqrt %318 : vector<16x1xf32>
    %320 = vector.broadcast %319 : vector<16x1xf32> to vector<16x32xf32>
    %321 = arith.mulf %311, %320 : vector<16x32xf32>
    %322 = vector.broadcast %303 : vector<1x32xf32> to vector<16x32xf32>
    %323 = arith.mulf %321, %322 : vector<16x32xf32>
    %324 = vector.broadcast %305 : vector<1x32xf32> to vector<16x32xf32>
    %325 = arith.addf %323, %324 : vector<16x32xf32>
    %c0_155 = arith.constant 0 : index
    %c0_156 = arith.constant 0 : index
    %c0_157 = arith.constant 0 : index
    %326 = vector.load %arg18[%c0_155, %c0_156, %c0_157] : memref<2x32x96xf32, #tpu.memory_space<vmem>>, vector<1x32x96xf32>
    %327 = vector.shape_cast %326 : vector<1x32x96xf32> to vector<32x96xf32>
    %c0_158 = arith.constant 0 : index
    %c0_159 = arith.constant 0 : index
    %c0_160 = arith.constant 0 : index
    %328 = vector.load %arg19[%c0_158, %c0_159, %c0_160] : memref<2x1x96xf32, #tpu.memory_space<vmem>>, vector<1x1x96xf32>
    %329 = vector.shape_cast %328 : vector<1x1x96xf32> to vector<1x96xf32>
    %c0_161 = arith.constant 0 : index
    %c0_162 = arith.constant 0 : index
    %c0_163 = arith.constant 0 : index
    %330 = vector.load %arg20[%c0_161, %c0_162, %c0_163] : memref<2x32x32xf32, #tpu.memory_space<vmem>>, vector<1x32x32xf32>
    %331 = vector.shape_cast %330 : vector<1x32x32xf32> to vector<32x32xf32>
    %c0_164 = arith.constant 0 : index
    %c0_165 = arith.constant 0 : index
    %c0_166 = arith.constant 0 : index
    %332 = vector.load %arg21[%c0_164, %c0_165, %c0_166] : memref<2x1x32xf32, #tpu.memory_space<vmem>>, vector<1x1x32xf32>
    %333 = vector.shape_cast %332 : vector<1x1x32xf32> to vector<1x32xf32>
    %cst_167 = arith.constant dense<0.000000e+00> : vector<16x96xf32>
    %334 = tpu.matmul %21, %327, %cst_167 {dimension_numbers = #tpu.dot_dimension_numbers<[1], [0], [0], [1], [0, 0, 1, 1], [], []>} : vector<16x32xf32>, vector<32x96xf32>, vector<16x96xf32> -> vector<16x96xf32>
    %335 = vector.broadcast %329 : vector<1x96xf32> to vector<16x96xf32>
    %336 = arith.addf %334, %335 : vector<16x96xf32>
    %337 = vector.extract_strided_slice %336 {offsets = [0, 0], sizes = [16, 32], strides = [1, 1]} : vector<16x96xf32> to vector<16x32xf32>
    %338 = vector.extract_strided_slice %336 {offsets = [0, 32], sizes = [16, 32], strides = [1, 1]} : vector<16x96xf32> to vector<16x32xf32>
    %339 = vector.extract_strided_slice %336 {offsets = [0, 64], sizes = [16, 32], strides = [1, 1]} : vector<16x96xf32> to vector<16x32xf32>
    %340 = vector.extract_strided_slice %337 {offsets = [0, 0], sizes = [16, 8], strides = [1, 1]} : vector<16x32xf32> to vector<16x8xf32>
    %341 = vector.extract_strided_slice %338 {offsets = [0, 0], sizes = [16, 8], strides = [1, 1]} : vector<16x32xf32> to vector<16x8xf32>
    %cst_168 = arith.constant dense<0.000000e+00> : vector<16x16xf32>
    %342 = tpu.matmul %340, %341, %cst_168 {dimension_numbers = #tpu.dot_dimension_numbers<[1], [1], [0], [0], [0, 0, 1, 0], [], []>} : vector<16x8xf32>, vector<16x8xf32>, vector<16x16xf32> -> vector<16x16xf32>
    %cst_169 = arith.constant 0.000000e+00 : f32
    %343 = vector.broadcast %cst_169 : f32 to vector<16x16xf32>
    %344 = arith.cmpf ogt, %2, %343 : vector<16x16xf32>
    %345 = arith.select %344, %342, %3 : vector<16x16xi1>, vector<16x16xf32>
    %cst_170 = arith.constant dense<0xFF800000> : vector<16xf32>
    %346 = vector.multi_reduction <maximumf>, %345, %cst_170 [1] : vector<16x16xf32> to vector<16xf32>
    %347 = vector.shape_cast %346 : vector<16xf32> to vector<16x1xf32>
    %348 = vector.broadcast %347 : vector<16x1xf32> to vector<16x16xf32>
    %349 = arith.subf %345, %348 : vector<16x16xf32>
    %350 = math.exp %349 : vector<16x16xf32>
    %cst_171 = arith.constant dense<0.000000e+00> : vector<16xf32>
    %351 = vector.multi_reduction <add>, %350, %cst_171 [1] : vector<16x16xf32> to vector<16xf32>
    %352 = vector.shape_cast %351 : vector<16xf32> to vector<16x1xf32>
    %353 = vector.broadcast %352 : vector<16x1xf32> to vector<16x16xf32>
    %354 = arith.divf %350, %353 : vector<16x16xf32>
    %355 = vector.extract_strided_slice %339 {offsets = [0, 0], sizes = [16, 8], strides = [1, 1]} : vector<16x32xf32> to vector<16x8xf32>
    %cst_172 = arith.constant dense<0.000000e+00> : vector<16x8xf32>
    %356 = tpu.matmul %354, %355, %cst_172 {dimension_numbers = #tpu.dot_dimension_numbers<[1], [0], [0], [1], [0, 0, 1, 1], [], []>} : vector<16x16xf32>, vector<16x8xf32>, vector<16x8xf32> -> vector<16x8xf32>
    %357 = vector.extract_strided_slice %337 {offsets = [0, 8], sizes = [16, 8], strides = [1, 1]} : vector<16x32xf32> to vector<16x8xf32>
    %358 = vector.extract_strided_slice %338 {offsets = [0, 8], sizes = [16, 8], strides = [1, 1]} : vector<16x32xf32> to vector<16x8xf32>
    %cst_173 = arith.constant dense<0.000000e+00> : vector<16x16xf32>
    %359 = tpu.matmul %357, %358, %cst_173 {dimension_numbers = #tpu.dot_dimension_numbers<[1], [1], [0], [0], [0, 0, 1, 0], [], []>} : vector<16x8xf32>, vector<16x8xf32>, vector<16x16xf32> -> vector<16x16xf32>
    %cst_174 = arith.constant 0.000000e+00 : f32
    %360 = vector.broadcast %cst_174 : f32 to vector<16x16xf32>
    %361 = arith.cmpf ogt, %2, %360 : vector<16x16xf32>
    %362 = arith.select %361, %359, %3 : vector<16x16xi1>, vector<16x16xf32>
    %cst_175 = arith.constant dense<0xFF800000> : vector<16xf32>
    %363 = vector.multi_reduction <maximumf>, %362, %cst_175 [1] : vector<16x16xf32> to vector<16xf32>
    %364 = vector.shape_cast %363 : vector<16xf32> to vector<16x1xf32>
    %365 = vector.broadcast %364 : vector<16x1xf32> to vector<16x16xf32>
    %366 = arith.subf %362, %365 : vector<16x16xf32>
    %367 = math.exp %366 : vector<16x16xf32>
    %cst_176 = arith.constant dense<0.000000e+00> : vector<16xf32>
    %368 = vector.multi_reduction <add>, %367, %cst_176 [1] : vector<16x16xf32> to vector<16xf32>
    %369 = vector.shape_cast %368 : vector<16xf32> to vector<16x1xf32>
    %370 = vector.broadcast %369 : vector<16x1xf32> to vector<16x16xf32>
    %371 = arith.divf %367, %370 : vector<16x16xf32>
    %372 = vector.extract_strided_slice %339 {offsets = [0, 8], sizes = [16, 8], strides = [1, 1]} : vector<16x32xf32> to vector<16x8xf32>
    %cst_177 = arith.constant dense<0.000000e+00> : vector<16x8xf32>
    %373 = tpu.matmul %371, %372, %cst_177 {dimension_numbers = #tpu.dot_dimension_numbers<[1], [0], [0], [1], [0, 0, 1, 1], [], []>} : vector<16x16xf32>, vector<16x8xf32>, vector<16x8xf32> -> vector<16x8xf32>
    %374 = vector.extract_strided_slice %337 {offsets = [0, 16], sizes = [16, 8], strides = [1, 1]} : vector<16x32xf32> to vector<16x8xf32>
    %375 = vector.extract_strided_slice %338 {offsets = [0, 16], sizes = [16, 8], strides = [1, 1]} : vector<16x32xf32> to vector<16x8xf32>
    %cst_178 = arith.constant dense<0.000000e+00> : vector<16x16xf32>
    %376 = tpu.matmul %374, %375, %cst_178 {dimension_numbers = #tpu.dot_dimension_numbers<[1], [1], [0], [0], [0, 0, 1, 0], [], []>} : vector<16x8xf32>, vector<16x8xf32>, vector<16x16xf32> -> vector<16x16xf32>
    %cst_179 = arith.constant 0.000000e+00 : f32
    %377 = vector.broadcast %cst_179 : f32 to vector<16x16xf32>
    %378 = arith.cmpf ogt, %2, %377 : vector<16x16xf32>
    %379 = arith.select %378, %376, %3 : vector<16x16xi1>, vector<16x16xf32>
    %cst_180 = arith.constant dense<0xFF800000> : vector<16xf32>
    %380 = vector.multi_reduction <maximumf>, %379, %cst_180 [1] : vector<16x16xf32> to vector<16xf32>
    %381 = vector.shape_cast %380 : vector<16xf32> to vector<16x1xf32>
    %382 = vector.broadcast %381 : vector<16x1xf32> to vector<16x16xf32>
    %383 = arith.subf %379, %382 : vector<16x16xf32>
    %384 = math.exp %383 : vector<16x16xf32>
    %cst_181 = arith.constant dense<0.000000e+00> : vector<16xf32>
    %385 = vector.multi_reduction <add>, %384, %cst_181 [1] : vector<16x16xf32> to vector<16xf32>
    %386 = vector.shape_cast %385 : vector<16xf32> to vector<16x1xf32>
    %387 = vector.broadcast %386 : vector<16x1xf32> to vector<16x16xf32>
    %388 = arith.divf %384, %387 : vector<16x16xf32>
    %389 = vector.extract_strided_slice %339 {offsets = [0, 16], sizes = [16, 8], strides = [1, 1]} : vector<16x32xf32> to vector<16x8xf32>
    %cst_182 = arith.constant dense<0.000000e+00> : vector<16x8xf32>
    %390 = tpu.matmul %388, %389, %cst_182 {dimension_numbers = #tpu.dot_dimension_numbers<[1], [0], [0], [1], [0, 0, 1, 1], [], []>} : vector<16x16xf32>, vector<16x8xf32>, vector<16x8xf32> -> vector<16x8xf32>
    %391 = vector.extract_strided_slice %337 {offsets = [0, 24], sizes = [16, 8], strides = [1, 1]} : vector<16x32xf32> to vector<16x8xf32>
    %392 = vector.extract_strided_slice %338 {offsets = [0, 24], sizes = [16, 8], strides = [1, 1]} : vector<16x32xf32> to vector<16x8xf32>
    %cst_183 = arith.constant dense<0.000000e+00> : vector<16x16xf32>
    %393 = tpu.matmul %391, %392, %cst_183 {dimension_numbers = #tpu.dot_dimension_numbers<[1], [1], [0], [0], [0, 0, 1, 0], [], []>} : vector<16x8xf32>, vector<16x8xf32>, vector<16x16xf32> -> vector<16x16xf32>
    %cst_184 = arith.constant 0.000000e+00 : f32
    %394 = vector.broadcast %cst_184 : f32 to vector<16x16xf32>
    %395 = arith.cmpf ogt, %2, %394 : vector<16x16xf32>
    %396 = arith.select %395, %393, %3 : vector<16x16xi1>, vector<16x16xf32>
    %cst_185 = arith.constant dense<0xFF800000> : vector<16xf32>
    %397 = vector.multi_reduction <maximumf>, %396, %cst_185 [1] : vector<16x16xf32> to vector<16xf32>
    %398 = vector.shape_cast %397 : vector<16xf32> to vector<16x1xf32>
    %399 = vector.broadcast %398 : vector<16x1xf32> to vector<16x16xf32>
    %400 = arith.subf %396, %399 : vector<16x16xf32>
    %401 = math.exp %400 : vector<16x16xf32>
    %cst_186 = arith.constant dense<0.000000e+00> : vector<16xf32>
    %402 = vector.multi_reduction <add>, %401, %cst_186 [1] : vector<16x16xf32> to vector<16xf32>
    %403 = vector.shape_cast %402 : vector<16xf32> to vector<16x1xf32>
    %404 = vector.broadcast %403 : vector<16x1xf32> to vector<16x16xf32>
    %405 = arith.divf %401, %404 : vector<16x16xf32>
    %406 = vector.extract_strided_slice %339 {offsets = [0, 24], sizes = [16, 8], strides = [1, 1]} : vector<16x32xf32> to vector<16x8xf32>
    %cst_187 = arith.constant dense<0.000000e+00> : vector<16x8xf32>
    %407 = tpu.matmul %405, %406, %cst_187 {dimension_numbers = #tpu.dot_dimension_numbers<[1], [0], [0], [1], [0, 0, 1, 1], [], []>} : vector<16x16xf32>, vector<16x8xf32>, vector<16x8xf32> -> vector<16x8xf32>
    %408 = tpu.concatenate %356, %373, %390, %407 in 1 : vector<16x8xf32>, vector<16x8xf32>, vector<16x8xf32>, vector<16x8xf32> -> vector<16x32xf32>
    %cst_188 = arith.constant dense<0.000000e+00> : vector<16x32xf32>
    %409 = tpu.matmul %408, %331, %cst_188 {dimension_numbers = #tpu.dot_dimension_numbers<[1], [0], [0], [1], [0, 0, 1, 1], [], []>} : vector<16x32xf32>, vector<32x32xf32>, vector<16x32xf32> -> vector<16x32xf32>
    %410 = vector.broadcast %333 : vector<1x32xf32> to vector<16x32xf32>
    %411 = arith.addf %409, %410 : vector<16x32xf32>
    %412 = arith.addf %21, %411 : vector<16x32xf32>
    %c0_189 = arith.constant 0 : index
    %c0_190 = arith.constant 0 : index
    %c0_191 = arith.constant 0 : index
    %413 = vector.load %arg26[%c0_189, %c0_190, %c0_191] : memref<6x1x32xf32, #tpu.memory_space<vmem>>, vector<1x1x32xf32>
    %414 = vector.shape_cast %413 : vector<1x1x32xf32> to vector<1x32xf32>
    %c0_192 = arith.constant 0 : index
    %c0_193 = arith.constant 0 : index
    %c0_194 = arith.constant 0 : index
    %415 = vector.load %arg27[%c0_192, %c0_193, %c0_194] : memref<6x1x32xf32, #tpu.memory_space<vmem>>, vector<1x1x32xf32>
    %416 = vector.shape_cast %415 : vector<1x1x32xf32> to vector<1x32xf32>
    %cst_195 = arith.constant dense<0.000000e+00> : vector<16xf32>
    %417 = vector.multi_reduction <add>, %412, %cst_195 [1] : vector<16x32xf32> to vector<16xf32>
    %418 = vector.shape_cast %417 : vector<16xf32> to vector<16x1xf32>
    %cst_196 = arith.constant 3.200000e+01 : f32
    %419 = vector.broadcast %cst_196 : f32 to vector<16x1xf32>
    %420 = arith.divf %418, %419 : vector<16x1xf32>
    %421 = vector.broadcast %420 : vector<16x1xf32> to vector<16x32xf32>
    %422 = arith.subf %412, %421 : vector<16x32xf32>
    %423 = arith.mulf %422, %422 : vector<16x32xf32>
    %cst_197 = arith.constant dense<0.000000e+00> : vector<16xf32>
    %424 = vector.multi_reduction <add>, %423, %cst_197 [1] : vector<16x32xf32> to vector<16xf32>
    %425 = vector.shape_cast %424 : vector<16xf32> to vector<16x1xf32>
    %cst_198 = arith.constant 3.200000e+01 : f32
    %426 = vector.broadcast %cst_198 : f32 to vector<16x1xf32>
    %427 = arith.divf %425, %426 : vector<16x1xf32>
    %cst_199 = arith.constant 9.99999974E-6 : f32
    %428 = vector.broadcast %cst_199 : f32 to vector<16x1xf32>
    %429 = arith.addf %427, %428 : vector<16x1xf32>
    %430 = math.rsqrt %429 : vector<16x1xf32>
    %431 = vector.broadcast %430 : vector<16x1xf32> to vector<16x32xf32>
    %432 = arith.mulf %422, %431 : vector<16x32xf32>
    %433 = vector.broadcast %414 : vector<1x32xf32> to vector<16x32xf32>
    %434 = arith.mulf %432, %433 : vector<16x32xf32>
    %435 = vector.broadcast %416 : vector<1x32xf32> to vector<16x32xf32>
    %436 = arith.addf %434, %435 : vector<16x32xf32>
    %c0_200 = arith.constant 0 : index
    %c0_201 = arith.constant 0 : index
    %c0_202 = arith.constant 0 : index
    %437 = vector.load %arg22[%c0_200, %c0_201, %c0_202] : memref<2x32x96xf32, #tpu.memory_space<vmem>>, vector<1x32x96xf32>
    %438 = vector.shape_cast %437 : vector<1x32x96xf32> to vector<32x96xf32>
    %c0_203 = arith.constant 0 : index
    %c0_204 = arith.constant 0 : index
    %c0_205 = arith.constant 0 : index
    %439 = vector.load %arg23[%c0_203, %c0_204, %c0_205] : memref<2x1x96xf32, #tpu.memory_space<vmem>>, vector<1x1x96xf32>
    %440 = vector.shape_cast %439 : vector<1x1x96xf32> to vector<1x96xf32>
    %c0_206 = arith.constant 0 : index
    %c0_207 = arith.constant 0 : index
    %c0_208 = arith.constant 0 : index
    %441 = vector.load %arg24[%c0_206, %c0_207, %c0_208] : memref<2x32x32xf32, #tpu.memory_space<vmem>>, vector<1x32x32xf32>
    %442 = vector.shape_cast %441 : vector<1x32x32xf32> to vector<32x32xf32>
    %c0_209 = arith.constant 0 : index
    %c0_210 = arith.constant 0 : index
    %c0_211 = arith.constant 0 : index
    %443 = vector.load %arg25[%c0_209, %c0_210, %c0_211] : memref<2x1x32xf32, #tpu.memory_space<vmem>>, vector<1x1x32xf32>
    %444 = vector.shape_cast %443 : vector<1x1x32xf32> to vector<1x32xf32>
    %445 = vector.extract_strided_slice %438 {offsets = [0, 0], sizes = [32, 32], strides = [1, 1]} : vector<32x96xf32> to vector<32x32xf32>
    %cst_212 = arith.constant dense<0.000000e+00> : vector<16x32xf32>
    %446 = tpu.matmul %436, %445, %cst_212 {dimension_numbers = #tpu.dot_dimension_numbers<[1], [0], [0], [1], [0, 0, 1, 1], [], []>} : vector<16x32xf32>, vector<32x32xf32>, vector<16x32xf32> -> vector<16x32xf32>
    %447 = vector.extract_strided_slice %440 {offsets = [0, 0], sizes = [1, 32], strides = [1, 1]} : vector<1x96xf32> to vector<1x32xf32>
    %448 = vector.broadcast %447 : vector<1x32xf32> to vector<16x32xf32>
    %449 = arith.addf %446, %448 : vector<16x32xf32>
    %450 = vector.extract_strided_slice %438 {offsets = [0, 32], sizes = [32, 64], strides = [1, 1]} : vector<32x96xf32> to vector<32x64xf32>
    %cst_213 = arith.constant dense<0.000000e+00> : vector<16x64xf32>
    %451 = tpu.matmul %325, %450, %cst_213 {dimension_numbers = #tpu.dot_dimension_numbers<[1], [0], [0], [1], [0, 0, 1, 1], [], []>} : vector<16x32xf32>, vector<32x64xf32>, vector<16x64xf32> -> vector<16x64xf32>
    %452 = vector.extract_strided_slice %440 {offsets = [0, 32], sizes = [1, 64], strides = [1, 1]} : vector<1x96xf32> to vector<1x64xf32>
    %453 = vector.broadcast %452 : vector<1x64xf32> to vector<16x64xf32>
    %454 = arith.addf %451, %453 : vector<16x64xf32>
    %455 = vector.extract_strided_slice %454 {offsets = [0, 0], sizes = [16, 32], strides = [1, 1]} : vector<16x64xf32> to vector<16x32xf32>
    %456 = vector.extract_strided_slice %454 {offsets = [0, 32], sizes = [16, 32], strides = [1, 1]} : vector<16x64xf32> to vector<16x32xf32>
    %457 = vector.extract_strided_slice %449 {offsets = [0, 0], sizes = [16, 8], strides = [1, 1]} : vector<16x32xf32> to vector<16x8xf32>
    %458 = vector.extract_strided_slice %455 {offsets = [0, 0], sizes = [16, 8], strides = [1, 1]} : vector<16x32xf32> to vector<16x8xf32>
    %cst_214 = arith.constant dense<0.000000e+00> : vector<16x16xf32>
    %459 = tpu.matmul %457, %458, %cst_214 {dimension_numbers = #tpu.dot_dimension_numbers<[1], [1], [0], [0], [0, 0, 1, 0], [], []>} : vector<16x8xf32>, vector<16x8xf32>, vector<16x16xf32> -> vector<16x16xf32>
    %cst_215 = arith.constant 0.000000e+00 : f32
    %460 = vector.broadcast %cst_215 : f32 to vector<16x16xf32>
    %461 = arith.cmpf ogt, %1, %460 : vector<16x16xf32>
    %462 = arith.select %461, %459, %3 : vector<16x16xi1>, vector<16x16xf32>
    %cst_216 = arith.constant dense<0xFF800000> : vector<16xf32>
    %463 = vector.multi_reduction <maximumf>, %462, %cst_216 [1] : vector<16x16xf32> to vector<16xf32>
    %464 = vector.shape_cast %463 : vector<16xf32> to vector<16x1xf32>
    %465 = vector.broadcast %464 : vector<16x1xf32> to vector<16x16xf32>
    %466 = arith.subf %462, %465 : vector<16x16xf32>
    %467 = math.exp %466 : vector<16x16xf32>
    %cst_217 = arith.constant dense<0.000000e+00> : vector<16xf32>
    %468 = vector.multi_reduction <add>, %467, %cst_217 [1] : vector<16x16xf32> to vector<16xf32>
    %469 = vector.shape_cast %468 : vector<16xf32> to vector<16x1xf32>
    %470 = vector.broadcast %469 : vector<16x1xf32> to vector<16x16xf32>
    %471 = arith.divf %467, %470 : vector<16x16xf32>
    %472 = vector.extract_strided_slice %456 {offsets = [0, 0], sizes = [16, 8], strides = [1, 1]} : vector<16x32xf32> to vector<16x8xf32>
    %cst_218 = arith.constant dense<0.000000e+00> : vector<16x8xf32>
    %473 = tpu.matmul %471, %472, %cst_218 {dimension_numbers = #tpu.dot_dimension_numbers<[1], [0], [0], [1], [0, 0, 1, 1], [], []>} : vector<16x16xf32>, vector<16x8xf32>, vector<16x8xf32> -> vector<16x8xf32>
    %474 = vector.extract_strided_slice %449 {offsets = [0, 8], sizes = [16, 8], strides = [1, 1]} : vector<16x32xf32> to vector<16x8xf32>
    %475 = vector.extract_strided_slice %455 {offsets = [0, 8], sizes = [16, 8], strides = [1, 1]} : vector<16x32xf32> to vector<16x8xf32>
    %cst_219 = arith.constant dense<0.000000e+00> : vector<16x16xf32>
    %476 = tpu.matmul %474, %475, %cst_219 {dimension_numbers = #tpu.dot_dimension_numbers<[1], [1], [0], [0], [0, 0, 1, 0], [], []>} : vector<16x8xf32>, vector<16x8xf32>, vector<16x16xf32> -> vector<16x16xf32>
    %cst_220 = arith.constant 0.000000e+00 : f32
    %477 = vector.broadcast %cst_220 : f32 to vector<16x16xf32>
    %478 = arith.cmpf ogt, %1, %477 : vector<16x16xf32>
    %479 = arith.select %478, %476, %3 : vector<16x16xi1>, vector<16x16xf32>
    %cst_221 = arith.constant dense<0xFF800000> : vector<16xf32>
    %480 = vector.multi_reduction <maximumf>, %479, %cst_221 [1] : vector<16x16xf32> to vector<16xf32>
    %481 = vector.shape_cast %480 : vector<16xf32> to vector<16x1xf32>
    %482 = vector.broadcast %481 : vector<16x1xf32> to vector<16x16xf32>
    %483 = arith.subf %479, %482 : vector<16x16xf32>
    %484 = math.exp %483 : vector<16x16xf32>
    %cst_222 = arith.constant dense<0.000000e+00> : vector<16xf32>
    %485 = vector.multi_reduction <add>, %484, %cst_222 [1] : vector<16x16xf32> to vector<16xf32>
    %486 = vector.shape_cast %485 : vector<16xf32> to vector<16x1xf32>
    %487 = vector.broadcast %486 : vector<16x1xf32> to vector<16x16xf32>
    %488 = arith.divf %484, %487 : vector<16x16xf32>
    %489 = vector.extract_strided_slice %456 {offsets = [0, 8], sizes = [16, 8], strides = [1, 1]} : vector<16x32xf32> to vector<16x8xf32>
    %cst_223 = arith.constant dense<0.000000e+00> : vector<16x8xf32>
    %490 = tpu.matmul %488, %489, %cst_223 {dimension_numbers = #tpu.dot_dimension_numbers<[1], [0], [0], [1], [0, 0, 1, 1], [], []>} : vector<16x16xf32>, vector<16x8xf32>, vector<16x8xf32> -> vector<16x8xf32>
    %491 = vector.extract_strided_slice %449 {offsets = [0, 16], sizes = [16, 8], strides = [1, 1]} : vector<16x32xf32> to vector<16x8xf32>
    %492 = vector.extract_strided_slice %455 {offsets = [0, 16], sizes = [16, 8], strides = [1, 1]} : vector<16x32xf32> to vector<16x8xf32>
    %cst_224 = arith.constant dense<0.000000e+00> : vector<16x16xf32>
    %493 = tpu.matmul %491, %492, %cst_224 {dimension_numbers = #tpu.dot_dimension_numbers<[1], [1], [0], [0], [0, 0, 1, 0], [], []>} : vector<16x8xf32>, vector<16x8xf32>, vector<16x16xf32> -> vector<16x16xf32>
    %cst_225 = arith.constant 0.000000e+00 : f32
    %494 = vector.broadcast %cst_225 : f32 to vector<16x16xf32>
    %495 = arith.cmpf ogt, %1, %494 : vector<16x16xf32>
    %496 = arith.select %495, %493, %3 : vector<16x16xi1>, vector<16x16xf32>
    %cst_226 = arith.constant dense<0xFF800000> : vector<16xf32>
    %497 = vector.multi_reduction <maximumf>, %496, %cst_226 [1] : vector<16x16xf32> to vector<16xf32>
    %498 = vector.shape_cast %497 : vector<16xf32> to vector<16x1xf32>
    %499 = vector.broadcast %498 : vector<16x1xf32> to vector<16x16xf32>
    %500 = arith.subf %496, %499 : vector<16x16xf32>
    %501 = math.exp %500 : vector<16x16xf32>
    %cst_227 = arith.constant dense<0.000000e+00> : vector<16xf32>
    %502 = vector.multi_reduction <add>, %501, %cst_227 [1] : vector<16x16xf32> to vector<16xf32>
    %503 = vector.shape_cast %502 : vector<16xf32> to vector<16x1xf32>
    %504 = vector.broadcast %503 : vector<16x1xf32> to vector<16x16xf32>
    %505 = arith.divf %501, %504 : vector<16x16xf32>
    %506 = vector.extract_strided_slice %456 {offsets = [0, 16], sizes = [16, 8], strides = [1, 1]} : vector<16x32xf32> to vector<16x8xf32>
    %cst_228 = arith.constant dense<0.000000e+00> : vector<16x8xf32>
    %507 = tpu.matmul %505, %506, %cst_228 {dimension_numbers = #tpu.dot_dimension_numbers<[1], [0], [0], [1], [0, 0, 1, 1], [], []>} : vector<16x16xf32>, vector<16x8xf32>, vector<16x8xf32> -> vector<16x8xf32>
    %508 = vector.extract_strided_slice %449 {offsets = [0, 24], sizes = [16, 8], strides = [1, 1]} : vector<16x32xf32> to vector<16x8xf32>
    %509 = vector.extract_strided_slice %455 {offsets = [0, 24], sizes = [16, 8], strides = [1, 1]} : vector<16x32xf32> to vector<16x8xf32>
    %cst_229 = arith.constant dense<0.000000e+00> : vector<16x16xf32>
    %510 = tpu.matmul %508, %509, %cst_229 {dimension_numbers = #tpu.dot_dimension_numbers<[1], [1], [0], [0], [0, 0, 1, 0], [], []>} : vector<16x8xf32>, vector<16x8xf32>, vector<16x16xf32> -> vector<16x16xf32>
    %cst_230 = arith.constant 0.000000e+00 : f32
    %511 = vector.broadcast %cst_230 : f32 to vector<16x16xf32>
    %512 = arith.cmpf ogt, %1, %511 : vector<16x16xf32>
    %513 = arith.select %512, %510, %3 : vector<16x16xi1>, vector<16x16xf32>
    %cst_231 = arith.constant dense<0xFF800000> : vector<16xf32>
    %514 = vector.multi_reduction <maximumf>, %513, %cst_231 [1] : vector<16x16xf32> to vector<16xf32>
    %515 = vector.shape_cast %514 : vector<16xf32> to vector<16x1xf32>
    %516 = vector.broadcast %515 : vector<16x1xf32> to vector<16x16xf32>
    %517 = arith.subf %513, %516 : vector<16x16xf32>
    %518 = math.exp %517 : vector<16x16xf32>
    %cst_232 = arith.constant dense<0.000000e+00> : vector<16xf32>
    %519 = vector.multi_reduction <add>, %518, %cst_232 [1] : vector<16x16xf32> to vector<16xf32>
    %520 = vector.shape_cast %519 : vector<16xf32> to vector<16x1xf32>
    %521 = vector.broadcast %520 : vector<16x1xf32> to vector<16x16xf32>
    %522 = arith.divf %518, %521 : vector<16x16xf32>
    %523 = vector.extract_strided_slice %456 {offsets = [0, 24], sizes = [16, 8], strides = [1, 1]} : vector<16x32xf32> to vector<16x8xf32>
    %cst_233 = arith.constant dense<0.000000e+00> : vector<16x8xf32>
    %524 = tpu.matmul %522, %523, %cst_233 {dimension_numbers = #tpu.dot_dimension_numbers<[1], [0], [0], [1], [0, 0, 1, 1], [], []>} : vector<16x16xf32>, vector<16x8xf32>, vector<16x8xf32> -> vector<16x8xf32>
    %525 = tpu.concatenate %473, %490, %507, %524 in 1 : vector<16x8xf32>, vector<16x8xf32>, vector<16x8xf32>, vector<16x8xf32> -> vector<16x32xf32>
    %cst_234 = arith.constant dense<0.000000e+00> : vector<16x32xf32>
    %526 = tpu.matmul %525, %442, %cst_234 {dimension_numbers = #tpu.dot_dimension_numbers<[1], [0], [0], [1], [0, 0, 1, 1], [], []>} : vector<16x32xf32>, vector<32x32xf32>, vector<16x32xf32> -> vector<16x32xf32>
    %527 = vector.broadcast %444 : vector<1x32xf32> to vector<16x32xf32>
    %528 = arith.addf %526, %527 : vector<16x32xf32>
    %529 = arith.addf %436, %528 : vector<16x32xf32>
    %c1_235 = arith.constant 1 : index
    %c0_236 = arith.constant 0 : index
    %c0_237 = arith.constant 0 : index
    %530 = vector.load %arg26[%c1_235, %c0_236, %c0_237] : memref<6x1x32xf32, #tpu.memory_space<vmem>>, vector<1x1x32xf32>
    %531 = vector.shape_cast %530 : vector<1x1x32xf32> to vector<1x32xf32>
    %c1_238 = arith.constant 1 : index
    %c0_239 = arith.constant 0 : index
    %c0_240 = arith.constant 0 : index
    %532 = vector.load %arg27[%c1_238, %c0_239, %c0_240] : memref<6x1x32xf32, #tpu.memory_space<vmem>>, vector<1x1x32xf32>
    %533 = vector.shape_cast %532 : vector<1x1x32xf32> to vector<1x32xf32>
    %cst_241 = arith.constant dense<0.000000e+00> : vector<16xf32>
    %534 = vector.multi_reduction <add>, %529, %cst_241 [1] : vector<16x32xf32> to vector<16xf32>
    %535 = vector.shape_cast %534 : vector<16xf32> to vector<16x1xf32>
    %cst_242 = arith.constant 3.200000e+01 : f32
    %536 = vector.broadcast %cst_242 : f32 to vector<16x1xf32>
    %537 = arith.divf %535, %536 : vector<16x1xf32>
    %538 = vector.broadcast %537 : vector<16x1xf32> to vector<16x32xf32>
    %539 = arith.subf %529, %538 : vector<16x32xf32>
    %540 = arith.mulf %539, %539 : vector<16x32xf32>
    %cst_243 = arith.constant dense<0.000000e+00> : vector<16xf32>
    %541 = vector.multi_reduction <add>, %540, %cst_243 [1] : vector<16x32xf32> to vector<16xf32>
    %542 = vector.shape_cast %541 : vector<16xf32> to vector<16x1xf32>
    %cst_244 = arith.constant 3.200000e+01 : f32
    %543 = vector.broadcast %cst_244 : f32 to vector<16x1xf32>
    %544 = arith.divf %542, %543 : vector<16x1xf32>
    %cst_245 = arith.constant 9.99999974E-6 : f32
    %545 = vector.broadcast %cst_245 : f32 to vector<16x1xf32>
    %546 = arith.addf %544, %545 : vector<16x1xf32>
    %547 = math.rsqrt %546 : vector<16x1xf32>
    %548 = vector.broadcast %547 : vector<16x1xf32> to vector<16x32xf32>
    %549 = arith.mulf %539, %548 : vector<16x32xf32>
    %550 = vector.broadcast %531 : vector<1x32xf32> to vector<16x32xf32>
    %551 = arith.mulf %549, %550 : vector<16x32xf32>
    %552 = vector.broadcast %533 : vector<1x32xf32> to vector<16x32xf32>
    %553 = arith.addf %551, %552 : vector<16x32xf32>
    %c0_246 = arith.constant 0 : index
    %c0_247 = arith.constant 0 : index
    %c0_248 = arith.constant 0 : index
    %554 = vector.load %arg28[%c0_246, %c0_247, %c0_248] : memref<2x32x64xf32, #tpu.memory_space<vmem>>, vector<1x32x64xf32>
    %555 = vector.shape_cast %554 : vector<1x32x64xf32> to vector<32x64xf32>
    %c0_249 = arith.constant 0 : index
    %c0_250 = arith.constant 0 : index
    %c0_251 = arith.constant 0 : index
    %556 = vector.load %arg29[%c0_249, %c0_250, %c0_251] : memref<2x1x64xf32, #tpu.memory_space<vmem>>, vector<1x1x64xf32>
    %557 = vector.shape_cast %556 : vector<1x1x64xf32> to vector<1x64xf32>
    %c0_252 = arith.constant 0 : index
    %c0_253 = arith.constant 0 : index
    %c0_254 = arith.constant 0 : index
    %558 = vector.load %arg30[%c0_252, %c0_253, %c0_254] : memref<2x64x32xf32, #tpu.memory_space<vmem>>, vector<1x64x32xf32>
    %559 = vector.shape_cast %558 : vector<1x64x32xf32> to vector<64x32xf32>
    %c0_255 = arith.constant 0 : index
    %c0_256 = arith.constant 0 : index
    %c0_257 = arith.constant 0 : index
    %560 = vector.load %arg31[%c0_255, %c0_256, %c0_257] : memref<2x1x32xf32, #tpu.memory_space<vmem>>, vector<1x1x32xf32>
    %561 = vector.shape_cast %560 : vector<1x1x32xf32> to vector<1x32xf32>
    %cst_258 = arith.constant dense<0.000000e+00> : vector<16x64xf32>
    %562 = tpu.matmul %553, %555, %cst_258 {dimension_numbers = #tpu.dot_dimension_numbers<[1], [0], [0], [1], [0, 0, 1, 1], [], []>} : vector<16x32xf32>, vector<32x64xf32>, vector<16x64xf32> -> vector<16x64xf32>
    %563 = vector.broadcast %557 : vector<1x64xf32> to vector<16x64xf32>
    %564 = arith.addf %562, %563 : vector<16x64xf32>
    %cst_259 = arith.constant 0.000000e+00 : f32
    %565 = vector.broadcast %cst_259 : f32 to vector<16x64xf32>
    %566 = arith.maximumf %564, %565 : vector<16x64xf32>
    %cst_260 = arith.constant dense<0.000000e+00> : vector<16x32xf32>
    %567 = tpu.matmul %566, %559, %cst_260 {dimension_numbers = #tpu.dot_dimension_numbers<[1], [0], [0], [1], [0, 0, 1, 1], [], []>} : vector<16x64xf32>, vector<64x32xf32>, vector<16x32xf32> -> vector<16x32xf32>
    %568 = vector.broadcast %561 : vector<1x32xf32> to vector<16x32xf32>
    %569 = arith.addf %567, %568 : vector<16x32xf32>
    %570 = arith.addf %553, %569 : vector<16x32xf32>
    %c2_261 = arith.constant 2 : index
    %c0_262 = arith.constant 0 : index
    %c0_263 = arith.constant 0 : index
    %571 = vector.load %arg26[%c2_261, %c0_262, %c0_263] : memref<6x1x32xf32, #tpu.memory_space<vmem>>, vector<1x1x32xf32>
    %572 = vector.shape_cast %571 : vector<1x1x32xf32> to vector<1x32xf32>
    %c2_264 = arith.constant 2 : index
    %c0_265 = arith.constant 0 : index
    %c0_266 = arith.constant 0 : index
    %573 = vector.load %arg27[%c2_264, %c0_265, %c0_266] : memref<6x1x32xf32, #tpu.memory_space<vmem>>, vector<1x1x32xf32>
    %574 = vector.shape_cast %573 : vector<1x1x32xf32> to vector<1x32xf32>
    %cst_267 = arith.constant dense<0.000000e+00> : vector<16xf32>
    %575 = vector.multi_reduction <add>, %570, %cst_267 [1] : vector<16x32xf32> to vector<16xf32>
    %576 = vector.shape_cast %575 : vector<16xf32> to vector<16x1xf32>
    %cst_268 = arith.constant 3.200000e+01 : f32
    %577 = vector.broadcast %cst_268 : f32 to vector<16x1xf32>
    %578 = arith.divf %576, %577 : vector<16x1xf32>
    %579 = vector.broadcast %578 : vector<16x1xf32> to vector<16x32xf32>
    %580 = arith.subf %570, %579 : vector<16x32xf32>
    %581 = arith.mulf %580, %580 : vector<16x32xf32>
    %cst_269 = arith.constant dense<0.000000e+00> : vector<16xf32>
    %582 = vector.multi_reduction <add>, %581, %cst_269 [1] : vector<16x32xf32> to vector<16xf32>
    %583 = vector.shape_cast %582 : vector<16xf32> to vector<16x1xf32>
    %cst_270 = arith.constant 3.200000e+01 : f32
    %584 = vector.broadcast %cst_270 : f32 to vector<16x1xf32>
    %585 = arith.divf %583, %584 : vector<16x1xf32>
    %cst_271 = arith.constant 9.99999974E-6 : f32
    %586 = vector.broadcast %cst_271 : f32 to vector<16x1xf32>
    %587 = arith.addf %585, %586 : vector<16x1xf32>
    %588 = math.rsqrt %587 : vector<16x1xf32>
    %589 = vector.broadcast %588 : vector<16x1xf32> to vector<16x32xf32>
    %590 = arith.mulf %580, %589 : vector<16x32xf32>
    %591 = vector.broadcast %572 : vector<1x32xf32> to vector<16x32xf32>
    %592 = arith.mulf %590, %591 : vector<16x32xf32>
    %593 = vector.broadcast %574 : vector<1x32xf32> to vector<16x32xf32>
    %594 = arith.addf %592, %593 : vector<16x32xf32>
    %c1_272 = arith.constant 1 : index
    %c0_273 = arith.constant 0 : index
    %c0_274 = arith.constant 0 : index
    %595 = vector.load %arg18[%c1_272, %c0_273, %c0_274] : memref<2x32x96xf32, #tpu.memory_space<vmem>>, vector<1x32x96xf32>
    %596 = vector.shape_cast %595 : vector<1x32x96xf32> to vector<32x96xf32>
    %c1_275 = arith.constant 1 : index
    %c0_276 = arith.constant 0 : index
    %c0_277 = arith.constant 0 : index
    %597 = vector.load %arg19[%c1_275, %c0_276, %c0_277] : memref<2x1x96xf32, #tpu.memory_space<vmem>>, vector<1x1x96xf32>
    %598 = vector.shape_cast %597 : vector<1x1x96xf32> to vector<1x96xf32>
    %c1_278 = arith.constant 1 : index
    %c0_279 = arith.constant 0 : index
    %c0_280 = arith.constant 0 : index
    %599 = vector.load %arg20[%c1_278, %c0_279, %c0_280] : memref<2x32x32xf32, #tpu.memory_space<vmem>>, vector<1x32x32xf32>
    %600 = vector.shape_cast %599 : vector<1x32x32xf32> to vector<32x32xf32>
    %c1_281 = arith.constant 1 : index
    %c0_282 = arith.constant 0 : index
    %c0_283 = arith.constant 0 : index
    %601 = vector.load %arg21[%c1_281, %c0_282, %c0_283] : memref<2x1x32xf32, #tpu.memory_space<vmem>>, vector<1x1x32xf32>
    %602 = vector.shape_cast %601 : vector<1x1x32xf32> to vector<1x32xf32>
    %cst_284 = arith.constant dense<0.000000e+00> : vector<16x96xf32>
    %603 = tpu.matmul %594, %596, %cst_284 {dimension_numbers = #tpu.dot_dimension_numbers<[1], [0], [0], [1], [0, 0, 1, 1], [], []>} : vector<16x32xf32>, vector<32x96xf32>, vector<16x96xf32> -> vector<16x96xf32>
    %604 = vector.broadcast %598 : vector<1x96xf32> to vector<16x96xf32>
    %605 = arith.addf %603, %604 : vector<16x96xf32>
    %606 = vector.extract_strided_slice %605 {offsets = [0, 0], sizes = [16, 32], strides = [1, 1]} : vector<16x96xf32> to vector<16x32xf32>
    %607 = vector.extract_strided_slice %605 {offsets = [0, 32], sizes = [16, 32], strides = [1, 1]} : vector<16x96xf32> to vector<16x32xf32>
    %608 = vector.extract_strided_slice %605 {offsets = [0, 64], sizes = [16, 32], strides = [1, 1]} : vector<16x96xf32> to vector<16x32xf32>
    %609 = vector.extract_strided_slice %606 {offsets = [0, 0], sizes = [16, 8], strides = [1, 1]} : vector<16x32xf32> to vector<16x8xf32>
    %610 = vector.extract_strided_slice %607 {offsets = [0, 0], sizes = [16, 8], strides = [1, 1]} : vector<16x32xf32> to vector<16x8xf32>
    %cst_285 = arith.constant dense<0.000000e+00> : vector<16x16xf32>
    %611 = tpu.matmul %609, %610, %cst_285 {dimension_numbers = #tpu.dot_dimension_numbers<[1], [1], [0], [0], [0, 0, 1, 0], [], []>} : vector<16x8xf32>, vector<16x8xf32>, vector<16x16xf32> -> vector<16x16xf32>
    %cst_286 = arith.constant 0.000000e+00 : f32
    %612 = vector.broadcast %cst_286 : f32 to vector<16x16xf32>
    %613 = arith.cmpf ogt, %2, %612 : vector<16x16xf32>
    %614 = arith.select %613, %611, %3 : vector<16x16xi1>, vector<16x16xf32>
    %cst_287 = arith.constant dense<0xFF800000> : vector<16xf32>
    %615 = vector.multi_reduction <maximumf>, %614, %cst_287 [1] : vector<16x16xf32> to vector<16xf32>
    %616 = vector.shape_cast %615 : vector<16xf32> to vector<16x1xf32>
    %617 = vector.broadcast %616 : vector<16x1xf32> to vector<16x16xf32>
    %618 = arith.subf %614, %617 : vector<16x16xf32>
    %619 = math.exp %618 : vector<16x16xf32>
    %cst_288 = arith.constant dense<0.000000e+00> : vector<16xf32>
    %620 = vector.multi_reduction <add>, %619, %cst_288 [1] : vector<16x16xf32> to vector<16xf32>
    %621 = vector.shape_cast %620 : vector<16xf32> to vector<16x1xf32>
    %622 = vector.broadcast %621 : vector<16x1xf32> to vector<16x16xf32>
    %623 = arith.divf %619, %622 : vector<16x16xf32>
    %624 = vector.extract_strided_slice %608 {offsets = [0, 0], sizes = [16, 8], strides = [1, 1]} : vector<16x32xf32> to vector<16x8xf32>
    %cst_289 = arith.constant dense<0.000000e+00> : vector<16x8xf32>
    %625 = tpu.matmul %623, %624, %cst_289 {dimension_numbers = #tpu.dot_dimension_numbers<[1], [0], [0], [1], [0, 0, 1, 1], [], []>} : vector<16x16xf32>, vector<16x8xf32>, vector<16x8xf32> -> vector<16x8xf32>
    %626 = vector.extract_strided_slice %606 {offsets = [0, 8], sizes = [16, 8], strides = [1, 1]} : vector<16x32xf32> to vector<16x8xf32>
    %627 = vector.extract_strided_slice %607 {offsets = [0, 8], sizes = [16, 8], strides = [1, 1]} : vector<16x32xf32> to vector<16x8xf32>
    %cst_290 = arith.constant dense<0.000000e+00> : vector<16x16xf32>
    %628 = tpu.matmul %626, %627, %cst_290 {dimension_numbers = #tpu.dot_dimension_numbers<[1], [1], [0], [0], [0, 0, 1, 0], [], []>} : vector<16x8xf32>, vector<16x8xf32>, vector<16x16xf32> -> vector<16x16xf32>
    %cst_291 = arith.constant 0.000000e+00 : f32
    %629 = vector.broadcast %cst_291 : f32 to vector<16x16xf32>
    %630 = arith.cmpf ogt, %2, %629 : vector<16x16xf32>
    %631 = arith.select %630, %628, %3 : vector<16x16xi1>, vector<16x16xf32>
    %cst_292 = arith.constant dense<0xFF800000> : vector<16xf32>
    %632 = vector.multi_reduction <maximumf>, %631, %cst_292 [1] : vector<16x16xf32> to vector<16xf32>
    %633 = vector.shape_cast %632 : vector<16xf32> to vector<16x1xf32>
    %634 = vector.broadcast %633 : vector<16x1xf32> to vector<16x16xf32>
    %635 = arith.subf %631, %634 : vector<16x16xf32>
    %636 = math.exp %635 : vector<16x16xf32>
    %cst_293 = arith.constant dense<0.000000e+00> : vector<16xf32>
    %637 = vector.multi_reduction <add>, %636, %cst_293 [1] : vector<16x16xf32> to vector<16xf32>
    %638 = vector.shape_cast %637 : vector<16xf32> to vector<16x1xf32>
    %639 = vector.broadcast %638 : vector<16x1xf32> to vector<16x16xf32>
    %640 = arith.divf %636, %639 : vector<16x16xf32>
    %641 = vector.extract_strided_slice %608 {offsets = [0, 8], sizes = [16, 8], strides = [1, 1]} : vector<16x32xf32> to vector<16x8xf32>
    %cst_294 = arith.constant dense<0.000000e+00> : vector<16x8xf32>
    %642 = tpu.matmul %640, %641, %cst_294 {dimension_numbers = #tpu.dot_dimension_numbers<[1], [0], [0], [1], [0, 0, 1, 1], [], []>} : vector<16x16xf32>, vector<16x8xf32>, vector<16x8xf32> -> vector<16x8xf32>
    %643 = vector.extract_strided_slice %606 {offsets = [0, 16], sizes = [16, 8], strides = [1, 1]} : vector<16x32xf32> to vector<16x8xf32>
    %644 = vector.extract_strided_slice %607 {offsets = [0, 16], sizes = [16, 8], strides = [1, 1]} : vector<16x32xf32> to vector<16x8xf32>
    %cst_295 = arith.constant dense<0.000000e+00> : vector<16x16xf32>
    %645 = tpu.matmul %643, %644, %cst_295 {dimension_numbers = #tpu.dot_dimension_numbers<[1], [1], [0], [0], [0, 0, 1, 0], [], []>} : vector<16x8xf32>, vector<16x8xf32>, vector<16x16xf32> -> vector<16x16xf32>
    %cst_296 = arith.constant 0.000000e+00 : f32
    %646 = vector.broadcast %cst_296 : f32 to vector<16x16xf32>
    %647 = arith.cmpf ogt, %2, %646 : vector<16x16xf32>
    %648 = arith.select %647, %645, %3 : vector<16x16xi1>, vector<16x16xf32>
    %cst_297 = arith.constant dense<0xFF800000> : vector<16xf32>
    %649 = vector.multi_reduction <maximumf>, %648, %cst_297 [1] : vector<16x16xf32> to vector<16xf32>
    %650 = vector.shape_cast %649 : vector<16xf32> to vector<16x1xf32>
    %651 = vector.broadcast %650 : vector<16x1xf32> to vector<16x16xf32>
    %652 = arith.subf %648, %651 : vector<16x16xf32>
    %653 = math.exp %652 : vector<16x16xf32>
    %cst_298 = arith.constant dense<0.000000e+00> : vector<16xf32>
    %654 = vector.multi_reduction <add>, %653, %cst_298 [1] : vector<16x16xf32> to vector<16xf32>
    %655 = vector.shape_cast %654 : vector<16xf32> to vector<16x1xf32>
    %656 = vector.broadcast %655 : vector<16x1xf32> to vector<16x16xf32>
    %657 = arith.divf %653, %656 : vector<16x16xf32>
    %658 = vector.extract_strided_slice %608 {offsets = [0, 16], sizes = [16, 8], strides = [1, 1]} : vector<16x32xf32> to vector<16x8xf32>
    %cst_299 = arith.constant dense<0.000000e+00> : vector<16x8xf32>
    %659 = tpu.matmul %657, %658, %cst_299 {dimension_numbers = #tpu.dot_dimension_numbers<[1], [0], [0], [1], [0, 0, 1, 1], [], []>} : vector<16x16xf32>, vector<16x8xf32>, vector<16x8xf32> -> vector<16x8xf32>
    %660 = vector.extract_strided_slice %606 {offsets = [0, 24], sizes = [16, 8], strides = [1, 1]} : vector<16x32xf32> to vector<16x8xf32>
    %661 = vector.extract_strided_slice %607 {offsets = [0, 24], sizes = [16, 8], strides = [1, 1]} : vector<16x32xf32> to vector<16x8xf32>
    %cst_300 = arith.constant dense<0.000000e+00> : vector<16x16xf32>
    %662 = tpu.matmul %660, %661, %cst_300 {dimension_numbers = #tpu.dot_dimension_numbers<[1], [1], [0], [0], [0, 0, 1, 0], [], []>} : vector<16x8xf32>, vector<16x8xf32>, vector<16x16xf32> -> vector<16x16xf32>
    %cst_301 = arith.constant 0.000000e+00 : f32
    %663 = vector.broadcast %cst_301 : f32 to vector<16x16xf32>
    %664 = arith.cmpf ogt, %2, %663 : vector<16x16xf32>
    %665 = arith.select %664, %662, %3 : vector<16x16xi1>, vector<16x16xf32>
    %cst_302 = arith.constant dense<0xFF800000> : vector<16xf32>
    %666 = vector.multi_reduction <maximumf>, %665, %cst_302 [1] : vector<16x16xf32> to vector<16xf32>
    %667 = vector.shape_cast %666 : vector<16xf32> to vector<16x1xf32>
    %668 = vector.broadcast %667 : vector<16x1xf32> to vector<16x16xf32>
    %669 = arith.subf %665, %668 : vector<16x16xf32>
    %670 = math.exp %669 : vector<16x16xf32>
    %cst_303 = arith.constant dense<0.000000e+00> : vector<16xf32>
    %671 = vector.multi_reduction <add>, %670, %cst_303 [1] : vector<16x16xf32> to vector<16xf32>
    %672 = vector.shape_cast %671 : vector<16xf32> to vector<16x1xf32>
    %673 = vector.broadcast %672 : vector<16x1xf32> to vector<16x16xf32>
    %674 = arith.divf %670, %673 : vector<16x16xf32>
    %675 = vector.extract_strided_slice %608 {offsets = [0, 24], sizes = [16, 8], strides = [1, 1]} : vector<16x32xf32> to vector<16x8xf32>
    %cst_304 = arith.constant dense<0.000000e+00> : vector<16x8xf32>
    %676 = tpu.matmul %674, %675, %cst_304 {dimension_numbers = #tpu.dot_dimension_numbers<[1], [0], [0], [1], [0, 0, 1, 1], [], []>} : vector<16x16xf32>, vector<16x8xf32>, vector<16x8xf32> -> vector<16x8xf32>
    %677 = tpu.concatenate %625, %642, %659, %676 in 1 : vector<16x8xf32>, vector<16x8xf32>, vector<16x8xf32>, vector<16x8xf32> -> vector<16x32xf32>
    %cst_305 = arith.constant dense<0.000000e+00> : vector<16x32xf32>
    %678 = tpu.matmul %677, %600, %cst_305 {dimension_numbers = #tpu.dot_dimension_numbers<[1], [0], [0], [1], [0, 0, 1, 1], [], []>} : vector<16x32xf32>, vector<32x32xf32>, vector<16x32xf32> -> vector<16x32xf32>
    %679 = vector.broadcast %602 : vector<1x32xf32> to vector<16x32xf32>
    %680 = arith.addf %678, %679 : vector<16x32xf32>
    %681 = arith.addf %594, %680 : vector<16x32xf32>
    %c3_306 = arith.constant 3 : index
    %c0_307 = arith.constant 0 : index
    %c0_308 = arith.constant 0 : index
    %682 = vector.load %arg26[%c3_306, %c0_307, %c0_308] : memref<6x1x32xf32, #tpu.memory_space<vmem>>, vector<1x1x32xf32>
    %683 = vector.shape_cast %682 : vector<1x1x32xf32> to vector<1x32xf32>
    %c3_309 = arith.constant 3 : index
    %c0_310 = arith.constant 0 : index
    %c0_311 = arith.constant 0 : index
    %684 = vector.load %arg27[%c3_309, %c0_310, %c0_311] : memref<6x1x32xf32, #tpu.memory_space<vmem>>, vector<1x1x32xf32>
    %685 = vector.shape_cast %684 : vector<1x1x32xf32> to vector<1x32xf32>
    %cst_312 = arith.constant dense<0.000000e+00> : vector<16xf32>
    %686 = vector.multi_reduction <add>, %681, %cst_312 [1] : vector<16x32xf32> to vector<16xf32>
    %687 = vector.shape_cast %686 : vector<16xf32> to vector<16x1xf32>
    %cst_313 = arith.constant 3.200000e+01 : f32
    %688 = vector.broadcast %cst_313 : f32 to vector<16x1xf32>
    %689 = arith.divf %687, %688 : vector<16x1xf32>
    %690 = vector.broadcast %689 : vector<16x1xf32> to vector<16x32xf32>
    %691 = arith.subf %681, %690 : vector<16x32xf32>
    %692 = arith.mulf %691, %691 : vector<16x32xf32>
    %cst_314 = arith.constant dense<0.000000e+00> : vector<16xf32>
    %693 = vector.multi_reduction <add>, %692, %cst_314 [1] : vector<16x32xf32> to vector<16xf32>
    %694 = vector.shape_cast %693 : vector<16xf32> to vector<16x1xf32>
    %cst_315 = arith.constant 3.200000e+01 : f32
    %695 = vector.broadcast %cst_315 : f32 to vector<16x1xf32>
    %696 = arith.divf %694, %695 : vector<16x1xf32>
    %cst_316 = arith.constant 9.99999974E-6 : f32
    %697 = vector.broadcast %cst_316 : f32 to vector<16x1xf32>
    %698 = arith.addf %696, %697 : vector<16x1xf32>
    %699 = math.rsqrt %698 : vector<16x1xf32>
    %700 = vector.broadcast %699 : vector<16x1xf32> to vector<16x32xf32>
    %701 = arith.mulf %691, %700 : vector<16x32xf32>
    %702 = vector.broadcast %683 : vector<1x32xf32> to vector<16x32xf32>
    %703 = arith.mulf %701, %702 : vector<16x32xf32>
    %704 = vector.broadcast %685 : vector<1x32xf32> to vector<16x32xf32>
    %705 = arith.addf %703, %704 : vector<16x32xf32>
    %c1_317 = arith.constant 1 : index
    %c0_318 = arith.constant 0 : index
    %c0_319 = arith.constant 0 : index
    %706 = vector.load %arg22[%c1_317, %c0_318, %c0_319] : memref<2x32x96xf32, #tpu.memory_space<vmem>>, vector<1x32x96xf32>
    %707 = vector.shape_cast %706 : vector<1x32x96xf32> to vector<32x96xf32>
    %c1_320 = arith.constant 1 : index
    %c0_321 = arith.constant 0 : index
    %c0_322 = arith.constant 0 : index
    %708 = vector.load %arg23[%c1_320, %c0_321, %c0_322] : memref<2x1x96xf32, #tpu.memory_space<vmem>>, vector<1x1x96xf32>
    %709 = vector.shape_cast %708 : vector<1x1x96xf32> to vector<1x96xf32>
    %c1_323 = arith.constant 1 : index
    %c0_324 = arith.constant 0 : index
    %c0_325 = arith.constant 0 : index
    %710 = vector.load %arg24[%c1_323, %c0_324, %c0_325] : memref<2x32x32xf32, #tpu.memory_space<vmem>>, vector<1x32x32xf32>
    %711 = vector.shape_cast %710 : vector<1x32x32xf32> to vector<32x32xf32>
    %c1_326 = arith.constant 1 : index
    %c0_327 = arith.constant 0 : index
    %c0_328 = arith.constant 0 : index
    %712 = vector.load %arg25[%c1_326, %c0_327, %c0_328] : memref<2x1x32xf32, #tpu.memory_space<vmem>>, vector<1x1x32xf32>
    %713 = vector.shape_cast %712 : vector<1x1x32xf32> to vector<1x32xf32>
    %714 = vector.extract_strided_slice %707 {offsets = [0, 0], sizes = [32, 32], strides = [1, 1]} : vector<32x96xf32> to vector<32x32xf32>
    %cst_329 = arith.constant dense<0.000000e+00> : vector<16x32xf32>
    %715 = tpu.matmul %705, %714, %cst_329 {dimension_numbers = #tpu.dot_dimension_numbers<[1], [0], [0], [1], [0, 0, 1, 1], [], []>} : vector<16x32xf32>, vector<32x32xf32>, vector<16x32xf32> -> vector<16x32xf32>
    %716 = vector.extract_strided_slice %709 {offsets = [0, 0], sizes = [1, 32], strides = [1, 1]} : vector<1x96xf32> to vector<1x32xf32>
    %717 = vector.broadcast %716 : vector<1x32xf32> to vector<16x32xf32>
    %718 = arith.addf %715, %717 : vector<16x32xf32>
    %719 = vector.extract_strided_slice %707 {offsets = [0, 32], sizes = [32, 64], strides = [1, 1]} : vector<32x96xf32> to vector<32x64xf32>
    %cst_330 = arith.constant dense<0.000000e+00> : vector<16x64xf32>
    %720 = tpu.matmul %325, %719, %cst_330 {dimension_numbers = #tpu.dot_dimension_numbers<[1], [0], [0], [1], [0, 0, 1, 1], [], []>} : vector<16x32xf32>, vector<32x64xf32>, vector<16x64xf32> -> vector<16x64xf32>
    %721 = vector.extract_strided_slice %709 {offsets = [0, 32], sizes = [1, 64], strides = [1, 1]} : vector<1x96xf32> to vector<1x64xf32>
    %722 = vector.broadcast %721 : vector<1x64xf32> to vector<16x64xf32>
    %723 = arith.addf %720, %722 : vector<16x64xf32>
    %724 = vector.extract_strided_slice %723 {offsets = [0, 0], sizes = [16, 32], strides = [1, 1]} : vector<16x64xf32> to vector<16x32xf32>
    %725 = vector.extract_strided_slice %723 {offsets = [0, 32], sizes = [16, 32], strides = [1, 1]} : vector<16x64xf32> to vector<16x32xf32>
    %726 = vector.extract_strided_slice %718 {offsets = [0, 0], sizes = [16, 8], strides = [1, 1]} : vector<16x32xf32> to vector<16x8xf32>
    %727 = vector.extract_strided_slice %724 {offsets = [0, 0], sizes = [16, 8], strides = [1, 1]} : vector<16x32xf32> to vector<16x8xf32>
    %cst_331 = arith.constant dense<0.000000e+00> : vector<16x16xf32>
    %728 = tpu.matmul %726, %727, %cst_331 {dimension_numbers = #tpu.dot_dimension_numbers<[1], [1], [0], [0], [0, 0, 1, 0], [], []>} : vector<16x8xf32>, vector<16x8xf32>, vector<16x16xf32> -> vector<16x16xf32>
    %cst_332 = arith.constant 0.000000e+00 : f32
    %729 = vector.broadcast %cst_332 : f32 to vector<16x16xf32>
    %730 = arith.cmpf ogt, %1, %729 : vector<16x16xf32>
    %731 = arith.select %730, %728, %3 : vector<16x16xi1>, vector<16x16xf32>
    %cst_333 = arith.constant dense<0xFF800000> : vector<16xf32>
    %732 = vector.multi_reduction <maximumf>, %731, %cst_333 [1] : vector<16x16xf32> to vector<16xf32>
    %733 = vector.shape_cast %732 : vector<16xf32> to vector<16x1xf32>
    %734 = vector.broadcast %733 : vector<16x1xf32> to vector<16x16xf32>
    %735 = arith.subf %731, %734 : vector<16x16xf32>
    %736 = math.exp %735 : vector<16x16xf32>
    %cst_334 = arith.constant dense<0.000000e+00> : vector<16xf32>
    %737 = vector.multi_reduction <add>, %736, %cst_334 [1] : vector<16x16xf32> to vector<16xf32>
    %738 = vector.shape_cast %737 : vector<16xf32> to vector<16x1xf32>
    %739 = vector.broadcast %738 : vector<16x1xf32> to vector<16x16xf32>
    %740 = arith.divf %736, %739 : vector<16x16xf32>
    %741 = vector.extract_strided_slice %725 {offsets = [0, 0], sizes = [16, 8], strides = [1, 1]} : vector<16x32xf32> to vector<16x8xf32>
    %cst_335 = arith.constant dense<0.000000e+00> : vector<16x8xf32>
    %742 = tpu.matmul %740, %741, %cst_335 {dimension_numbers = #tpu.dot_dimension_numbers<[1], [0], [0], [1], [0, 0, 1, 1], [], []>} : vector<16x16xf32>, vector<16x8xf32>, vector<16x8xf32> -> vector<16x8xf32>
    %743 = vector.extract_strided_slice %718 {offsets = [0, 8], sizes = [16, 8], strides = [1, 1]} : vector<16x32xf32> to vector<16x8xf32>
    %744 = vector.extract_strided_slice %724 {offsets = [0, 8], sizes = [16, 8], strides = [1, 1]} : vector<16x32xf32> to vector<16x8xf32>
    %cst_336 = arith.constant dense<0.000000e+00> : vector<16x16xf32>
    %745 = tpu.matmul %743, %744, %cst_336 {dimension_numbers = #tpu.dot_dimension_numbers<[1], [1], [0], [0], [0, 0, 1, 0], [], []>} : vector<16x8xf32>, vector<16x8xf32>, vector<16x16xf32> -> vector<16x16xf32>
    %cst_337 = arith.constant 0.000000e+00 : f32
    %746 = vector.broadcast %cst_337 : f32 to vector<16x16xf32>
    %747 = arith.cmpf ogt, %1, %746 : vector<16x16xf32>
    %748 = arith.select %747, %745, %3 : vector<16x16xi1>, vector<16x16xf32>
    %cst_338 = arith.constant dense<0xFF800000> : vector<16xf32>
    %749 = vector.multi_reduction <maximumf>, %748, %cst_338 [1] : vector<16x16xf32> to vector<16xf32>
    %750 = vector.shape_cast %749 : vector<16xf32> to vector<16x1xf32>
    %751 = vector.broadcast %750 : vector<16x1xf32> to vector<16x16xf32>
    %752 = arith.subf %748, %751 : vector<16x16xf32>
    %753 = math.exp %752 : vector<16x16xf32>
    %cst_339 = arith.constant dense<0.000000e+00> : vector<16xf32>
    %754 = vector.multi_reduction <add>, %753, %cst_339 [1] : vector<16x16xf32> to vector<16xf32>
    %755 = vector.shape_cast %754 : vector<16xf32> to vector<16x1xf32>
    %756 = vector.broadcast %755 : vector<16x1xf32> to vector<16x16xf32>
    %757 = arith.divf %753, %756 : vector<16x16xf32>
    %758 = vector.extract_strided_slice %725 {offsets = [0, 8], sizes = [16, 8], strides = [1, 1]} : vector<16x32xf32> to vector<16x8xf32>
    %cst_340 = arith.constant dense<0.000000e+00> : vector<16x8xf32>
    %759 = tpu.matmul %757, %758, %cst_340 {dimension_numbers = #tpu.dot_dimension_numbers<[1], [0], [0], [1], [0, 0, 1, 1], [], []>} : vector<16x16xf32>, vector<16x8xf32>, vector<16x8xf32> -> vector<16x8xf32>
    %760 = vector.extract_strided_slice %718 {offsets = [0, 16], sizes = [16, 8], strides = [1, 1]} : vector<16x32xf32> to vector<16x8xf32>
    %761 = vector.extract_strided_slice %724 {offsets = [0, 16], sizes = [16, 8], strides = [1, 1]} : vector<16x32xf32> to vector<16x8xf32>
    %cst_341 = arith.constant dense<0.000000e+00> : vector<16x16xf32>
    %762 = tpu.matmul %760, %761, %cst_341 {dimension_numbers = #tpu.dot_dimension_numbers<[1], [1], [0], [0], [0, 0, 1, 0], [], []>} : vector<16x8xf32>, vector<16x8xf32>, vector<16x16xf32> -> vector<16x16xf32>
    %cst_342 = arith.constant 0.000000e+00 : f32
    %763 = vector.broadcast %cst_342 : f32 to vector<16x16xf32>
    %764 = arith.cmpf ogt, %1, %763 : vector<16x16xf32>
    %765 = arith.select %764, %762, %3 : vector<16x16xi1>, vector<16x16xf32>
    %cst_343 = arith.constant dense<0xFF800000> : vector<16xf32>
    %766 = vector.multi_reduction <maximumf>, %765, %cst_343 [1] : vector<16x16xf32> to vector<16xf32>
    %767 = vector.shape_cast %766 : vector<16xf32> to vector<16x1xf32>
    %768 = vector.broadcast %767 : vector<16x1xf32> to vector<16x16xf32>
    %769 = arith.subf %765, %768 : vector<16x16xf32>
    %770 = math.exp %769 : vector<16x16xf32>
    %cst_344 = arith.constant dense<0.000000e+00> : vector<16xf32>
    %771 = vector.multi_reduction <add>, %770, %cst_344 [1] : vector<16x16xf32> to vector<16xf32>
    %772 = vector.shape_cast %771 : vector<16xf32> to vector<16x1xf32>
    %773 = vector.broadcast %772 : vector<16x1xf32> to vector<16x16xf32>
    %774 = arith.divf %770, %773 : vector<16x16xf32>
    %775 = vector.extract_strided_slice %725 {offsets = [0, 16], sizes = [16, 8], strides = [1, 1]} : vector<16x32xf32> to vector<16x8xf32>
    %cst_345 = arith.constant dense<0.000000e+00> : vector<16x8xf32>
    %776 = tpu.matmul %774, %775, %cst_345 {dimension_numbers = #tpu.dot_dimension_numbers<[1], [0], [0], [1], [0, 0, 1, 1], [], []>} : vector<16x16xf32>, vector<16x8xf32>, vector<16x8xf32> -> vector<16x8xf32>
    %777 = vector.extract_strided_slice %718 {offsets = [0, 24], sizes = [16, 8], strides = [1, 1]} : vector<16x32xf32> to vector<16x8xf32>
    %778 = vector.extract_strided_slice %724 {offsets = [0, 24], sizes = [16, 8], strides = [1, 1]} : vector<16x32xf32> to vector<16x8xf32>
    %cst_346 = arith.constant dense<0.000000e+00> : vector<16x16xf32>
    %779 = tpu.matmul %777, %778, %cst_346 {dimension_numbers = #tpu.dot_dimension_numbers<[1], [1], [0], [0], [0, 0, 1, 0], [], []>} : vector<16x8xf32>, vector<16x8xf32>, vector<16x16xf32> -> vector<16x16xf32>
    %cst_347 = arith.constant 0.000000e+00 : f32
    %780 = vector.broadcast %cst_347 : f32 to vector<16x16xf32>
    %781 = arith.cmpf ogt, %1, %780 : vector<16x16xf32>
    %782 = arith.select %781, %779, %3 : vector<16x16xi1>, vector<16x16xf32>
    %cst_348 = arith.constant dense<0xFF800000> : vector<16xf32>
    %783 = vector.multi_reduction <maximumf>, %782, %cst_348 [1] : vector<16x16xf32> to vector<16xf32>
    %784 = vector.shape_cast %783 : vector<16xf32> to vector<16x1xf32>
    %785 = vector.broadcast %784 : vector<16x1xf32> to vector<16x16xf32>
    %786 = arith.subf %782, %785 : vector<16x16xf32>
    %787 = math.exp %786 : vector<16x16xf32>
    %cst_349 = arith.constant dense<0.000000e+00> : vector<16xf32>
    %788 = vector.multi_reduction <add>, %787, %cst_349 [1] : vector<16x16xf32> to vector<16xf32>
    %789 = vector.shape_cast %788 : vector<16xf32> to vector<16x1xf32>
    %790 = vector.broadcast %789 : vector<16x1xf32> to vector<16x16xf32>
    %791 = arith.divf %787, %790 : vector<16x16xf32>
    %792 = vector.extract_strided_slice %725 {offsets = [0, 24], sizes = [16, 8], strides = [1, 1]} : vector<16x32xf32> to vector<16x8xf32>
    %cst_350 = arith.constant dense<0.000000e+00> : vector<16x8xf32>
    %793 = tpu.matmul %791, %792, %cst_350 {dimension_numbers = #tpu.dot_dimension_numbers<[1], [0], [0], [1], [0, 0, 1, 1], [], []>} : vector<16x16xf32>, vector<16x8xf32>, vector<16x8xf32> -> vector<16x8xf32>
    %794 = tpu.concatenate %742, %759, %776, %793 in 1 : vector<16x8xf32>, vector<16x8xf32>, vector<16x8xf32>, vector<16x8xf32> -> vector<16x32xf32>
    %cst_351 = arith.constant dense<0.000000e+00> : vector<16x32xf32>
    %795 = tpu.matmul %794, %711, %cst_351 {dimension_numbers = #tpu.dot_dimension_numbers<[1], [0], [0], [1], [0, 0, 1, 1], [], []>} : vector<16x32xf32>, vector<32x32xf32>, vector<16x32xf32> -> vector<16x32xf32>
    %796 = vector.broadcast %713 : vector<1x32xf32> to vector<16x32xf32>
    %797 = arith.addf %795, %796 : vector<16x32xf32>
    %798 = arith.addf %705, %797 : vector<16x32xf32>
    %c4 = arith.constant 4 : index
    %c0_352 = arith.constant 0 : index
    %c0_353 = arith.constant 0 : index
    %799 = vector.load %arg26[%c4, %c0_352, %c0_353] : memref<6x1x32xf32, #tpu.memory_space<vmem>>, vector<1x1x32xf32>
    %800 = vector.shape_cast %799 : vector<1x1x32xf32> to vector<1x32xf32>
    %c4_354 = arith.constant 4 : index
    %c0_355 = arith.constant 0 : index
    %c0_356 = arith.constant 0 : index
    %801 = vector.load %arg27[%c4_354, %c0_355, %c0_356] : memref<6x1x32xf32, #tpu.memory_space<vmem>>, vector<1x1x32xf32>
    %802 = vector.shape_cast %801 : vector<1x1x32xf32> to vector<1x32xf32>
    %cst_357 = arith.constant dense<0.000000e+00> : vector<16xf32>
    %803 = vector.multi_reduction <add>, %798, %cst_357 [1] : vector<16x32xf32> to vector<16xf32>
    %804 = vector.shape_cast %803 : vector<16xf32> to vector<16x1xf32>
    %cst_358 = arith.constant 3.200000e+01 : f32
    %805 = vector.broadcast %cst_358 : f32 to vector<16x1xf32>
    %806 = arith.divf %804, %805 : vector<16x1xf32>
    %807 = vector.broadcast %806 : vector<16x1xf32> to vector<16x32xf32>
    %808 = arith.subf %798, %807 : vector<16x32xf32>
    %809 = arith.mulf %808, %808 : vector<16x32xf32>
    %cst_359 = arith.constant dense<0.000000e+00> : vector<16xf32>
    %810 = vector.multi_reduction <add>, %809, %cst_359 [1] : vector<16x32xf32> to vector<16xf32>
    %811 = vector.shape_cast %810 : vector<16xf32> to vector<16x1xf32>
    %cst_360 = arith.constant 3.200000e+01 : f32
    %812 = vector.broadcast %cst_360 : f32 to vector<16x1xf32>
    %813 = arith.divf %811, %812 : vector<16x1xf32>
    %cst_361 = arith.constant 9.99999974E-6 : f32
    %814 = vector.broadcast %cst_361 : f32 to vector<16x1xf32>
    %815 = arith.addf %813, %814 : vector<16x1xf32>
    %816 = math.rsqrt %815 : vector<16x1xf32>
    %817 = vector.broadcast %816 : vector<16x1xf32> to vector<16x32xf32>
    %818 = arith.mulf %808, %817 : vector<16x32xf32>
    %819 = vector.broadcast %800 : vector<1x32xf32> to vector<16x32xf32>
    %820 = arith.mulf %818, %819 : vector<16x32xf32>
    %821 = vector.broadcast %802 : vector<1x32xf32> to vector<16x32xf32>
    %822 = arith.addf %820, %821 : vector<16x32xf32>
    %c1_362 = arith.constant 1 : index
    %c0_363 = arith.constant 0 : index
    %c0_364 = arith.constant 0 : index
    %823 = vector.load %arg28[%c1_362, %c0_363, %c0_364] : memref<2x32x64xf32, #tpu.memory_space<vmem>>, vector<1x32x64xf32>
    %824 = vector.shape_cast %823 : vector<1x32x64xf32> to vector<32x64xf32>
    %c1_365 = arith.constant 1 : index
    %c0_366 = arith.constant 0 : index
    %c0_367 = arith.constant 0 : index
    %825 = vector.load %arg29[%c1_365, %c0_366, %c0_367] : memref<2x1x64xf32, #tpu.memory_space<vmem>>, vector<1x1x64xf32>
    %826 = vector.shape_cast %825 : vector<1x1x64xf32> to vector<1x64xf32>
    %c1_368 = arith.constant 1 : index
    %c0_369 = arith.constant 0 : index
    %c0_370 = arith.constant 0 : index
    %827 = vector.load %arg30[%c1_368, %c0_369, %c0_370] : memref<2x64x32xf32, #tpu.memory_space<vmem>>, vector<1x64x32xf32>
    %828 = vector.shape_cast %827 : vector<1x64x32xf32> to vector<64x32xf32>
    %c1_371 = arith.constant 1 : index
    %c0_372 = arith.constant 0 : index
    %c0_373 = arith.constant 0 : index
    %829 = vector.load %arg31[%c1_371, %c0_372, %c0_373] : memref<2x1x32xf32, #tpu.memory_space<vmem>>, vector<1x1x32xf32>
    %830 = vector.shape_cast %829 : vector<1x1x32xf32> to vector<1x32xf32>
    %cst_374 = arith.constant dense<0.000000e+00> : vector<16x64xf32>
    %831 = tpu.matmul %822, %824, %cst_374 {dimension_numbers = #tpu.dot_dimension_numbers<[1], [0], [0], [1], [0, 0, 1, 1], [], []>} : vector<16x32xf32>, vector<32x64xf32>, vector<16x64xf32> -> vector<16x64xf32>
    %832 = vector.broadcast %826 : vector<1x64xf32> to vector<16x64xf32>
    %833 = arith.addf %831, %832 : vector<16x64xf32>
    %cst_375 = arith.constant 0.000000e+00 : f32
    %834 = vector.broadcast %cst_375 : f32 to vector<16x64xf32>
    %835 = arith.maximumf %833, %834 : vector<16x64xf32>
    %cst_376 = arith.constant dense<0.000000e+00> : vector<16x32xf32>
    %836 = tpu.matmul %835, %828, %cst_376 {dimension_numbers = #tpu.dot_dimension_numbers<[1], [0], [0], [1], [0, 0, 1, 1], [], []>} : vector<16x64xf32>, vector<64x32xf32>, vector<16x32xf32> -> vector<16x32xf32>
    %837 = vector.broadcast %830 : vector<1x32xf32> to vector<16x32xf32>
    %838 = arith.addf %836, %837 : vector<16x32xf32>
    %839 = arith.addf %822, %838 : vector<16x32xf32>
    %c5 = arith.constant 5 : index
    %c0_377 = arith.constant 0 : index
    %c0_378 = arith.constant 0 : index
    %840 = vector.load %arg26[%c5, %c0_377, %c0_378] : memref<6x1x32xf32, #tpu.memory_space<vmem>>, vector<1x1x32xf32>
    %841 = vector.shape_cast %840 : vector<1x1x32xf32> to vector<1x32xf32>
    %c5_379 = arith.constant 5 : index
    %c0_380 = arith.constant 0 : index
    %c0_381 = arith.constant 0 : index
    %842 = vector.load %arg27[%c5_379, %c0_380, %c0_381] : memref<6x1x32xf32, #tpu.memory_space<vmem>>, vector<1x1x32xf32>
    %843 = vector.shape_cast %842 : vector<1x1x32xf32> to vector<1x32xf32>
    %cst_382 = arith.constant dense<0.000000e+00> : vector<16xf32>
    %844 = vector.multi_reduction <add>, %839, %cst_382 [1] : vector<16x32xf32> to vector<16xf32>
    %845 = vector.shape_cast %844 : vector<16xf32> to vector<16x1xf32>
    %cst_383 = arith.constant 3.200000e+01 : f32
    %846 = vector.broadcast %cst_383 : f32 to vector<16x1xf32>
    %847 = arith.divf %845, %846 : vector<16x1xf32>
    %848 = vector.broadcast %847 : vector<16x1xf32> to vector<16x32xf32>
    %849 = arith.subf %839, %848 : vector<16x32xf32>
    %850 = arith.mulf %849, %849 : vector<16x32xf32>
    %cst_384 = arith.constant dense<0.000000e+00> : vector<16xf32>
    %851 = vector.multi_reduction <add>, %850, %cst_384 [1] : vector<16x32xf32> to vector<16xf32>
    %852 = vector.shape_cast %851 : vector<16xf32> to vector<16x1xf32>
    %cst_385 = arith.constant 3.200000e+01 : f32
    %853 = vector.broadcast %cst_385 : f32 to vector<16x1xf32>
    %854 = arith.divf %852, %853 : vector<16x1xf32>
    %cst_386 = arith.constant 9.99999974E-6 : f32
    %855 = vector.broadcast %cst_386 : f32 to vector<16x1xf32>
    %856 = arith.addf %854, %855 : vector<16x1xf32>
    %857 = math.rsqrt %856 : vector<16x1xf32>
    %858 = vector.broadcast %857 : vector<16x1xf32> to vector<16x32xf32>
    %859 = arith.mulf %849, %858 : vector<16x32xf32>
    %860 = vector.broadcast %841 : vector<1x32xf32> to vector<16x32xf32>
    %861 = arith.mulf %859, %860 : vector<16x32xf32>
    %862 = vector.broadcast %843 : vector<1x32xf32> to vector<16x32xf32>
    %863 = arith.addf %861, %862 : vector<16x32xf32>
    %c0_387 = arith.constant 0 : index
    %c0_388 = arith.constant 0 : index
    %864 = vector.load %arg32[%c0_387, %c0_388] : memref<32x128xf32, #tpu.memory_space<vmem>>, vector<32x128xf32>
    %cst_389 = arith.constant dense<0.000000e+00> : vector<16x128xf32>
    %865 = tpu.matmul %863, %864, %cst_389 {dimension_numbers = #tpu.dot_dimension_numbers<[1], [0], [0], [1], [0, 0, 1, 1], [], []>} : vector<16x32xf32>, vector<32x128xf32>, vector<16x128xf32> -> vector<16x128xf32>
    %c0_390 = arith.constant 0 : index
    %c0_391 = arith.constant 0 : index
    %866 = vector.load %arg33[%c0_390, %c0_391] : memref<1x128xf32, #tpu.memory_space<vmem>>, vector<1x128xf32>
    %867 = vector.broadcast %866 : vector<1x128xf32> to vector<16x128xf32>
    %868 = arith.addf %865, %867 : vector<16x128xf32>
    %c0_392 = arith.constant 0 : index
    %c0_393 = arith.constant 0 : index
    %869 = vector.load %arg34[%c0_392, %c0_393] : memref<16x128xf32, #tpu.memory_space<vmem>>, vector<16x128xf32>
    tpu.vector_store %arg34[%c0_392, %c0_393], %868 {strides = array<i32>} : memref<16x128xf32, #tpu.memory_space<vmem>>, vector<16x128xf32>,
    return
  }
}

</mosaic_0001>

<llo_original>
// kernel: le.8
$region0: #{le.8}
  %s0 = inlined_call_operand.vmem [shape: s32[2,8], index: 0, kind: input, shape index: {}]
  %s1 = inlined_call_operand.vmem [shape: s32[16], index: 1, kind: output, shape index: {}]
  $region1: #{le.8} parent=0
    #allocation0 [shape = 'u8[4096]{0}', space=vmem, size = 0x1000, scoped, tag = 'scoped mem for output reshape']
    #allocation1 [shape = 'u8[4096]{0}', space=vmem, size = 0x1000, scoped, tag = 'scoped mem for input reshape']
    %s3 = sshll.u32 1, 2
    %s4 = ssub.s32 %s3, 1
    %v5 = vld [vmem:[%s0] sm:%s4]
    %6 = vst [vmem:[#allocation1] sm:%s4] %v5
    %v7 = vld [vmem:[#allocation1] sm:$0x1]
    %vm8 = vcmask 64512
    %9 = vst.msk [vmem:[#allocation0] sm:$0x1] %vm8, %v7
    %s10 = scalar_lea.vmem [#allocation1], 1
    %v11 = vld [vmem:[%s10] sm:$0x1]
    %12 = vrot.lane.b32.xlu0 %v11, 8
    %v13 = vpop.permute.xlu0 %12
    %vm14 = vcmask 130112
    %15 = vst.msk [vmem:[#allocation0] sm:$0x1] %vm14, %v13
    %s17 = sshll.u32 1, 1
    %s18 = ssub.s32 %s17, 1
    %v20 = vld [vmem:[#allocation0] sm:%s18]
    %s21 = sshll.u32 1, 1
    %s22 = ssub.s32 %s21, 1
    %23 = vst [vmem:[%s1] sm:%s22] %v20

// kernel: transformer_forward.1
$region0: #{transformer_forward.1}
  #allocation0 [shape = 'u32[]', space=smem, size = 0x4, offset = 0x4, fixed_abs, tag = 'smem constant byte address 0x4 - core index']
  #allocation1 [shape = 'u32[144,128]{1,0:T(1,128)}', space=vmem, size = 0x12000, scoped, tag = 'internal scratch']
  %s0 = inlined_call_operand.smem [shape: u32[35], index: -1, kind: input, shape index: {}]
  %s1 = sld [smem:[%s0]]
  %s2 = scalar_lea.smem %s0, 1
  %s3 = sld [smem:[%s2]]
  %s4 = scalar_lea.smem %s0, 2
  %s5 = sld [smem:[%s4]]
  %s6 = scalar_lea.smem %s0, 3
  %s7 = sld [smem:[%s6]]
  %s8 = scalar_lea.smem %s0, 4
  %s9 = sld [smem:[%s8]]
  %s10 = scalar_lea.smem %s0, 5
  %s11 = sld [smem:[%s10]]
  %s12 = scalar_lea.smem %s0, 6
  %s13 = sld [smem:[%s12]]
  %s14 = scalar_lea.smem %s0, 7
  %s15 = sld [smem:[%s14]]
  %s16 = scalar_lea.smem %s0, 8
  %s17 = sld [smem:[%s16]]
  %s18 = scalar_lea.smem %s0, 9
  %s19 = sld [smem:[%s18]]
  %s20 = scalar_lea.smem %s0, 10
  %s21 = sld [smem:[%s20]]
  %s22 = scalar_lea.smem %s0, 11
  %s23 = sld [smem:[%s22]]
  %s24 = scalar_lea.smem %s0, 12
  %s25 = sld [smem:[%s24]]
  %s26 = scalar_lea.smem %s0, 13
  %s27 = sld [smem:[%s26]]
  %s28 = scalar_lea.smem %s0, 14
  %s29 = sld [smem:[%s28]]
  %s30 = scalar_lea.smem %s0, 15
  %s31 = sld [smem:[%s30]]
  %s32 = scalar_lea.smem %s0, 16
  %s33 = sld [smem:[%s32]]
  %s34 = scalar_lea.smem %s0, 17
  %s35 = sld [smem:[%s34]]
  %s36 = scalar_lea.smem %s0, 18
  %s37 = sld [smem:[%s36]]
  %s38 = scalar_lea.smem %s0, 19
  %s39 = sld [smem:[%s38]]
  %s40 = scalar_lea.smem %s0, 20
  %s41 = sld [smem:[%s40]]
  %s42 = scalar_lea.smem %s0, 21
  %s43 = sld [smem:[%s42]]
  %s44 = scalar_lea.smem %s0, 22
  %s45 = sld [smem:[%s44]]
  %s46 = scalar_lea.smem %s0, 23
  %s47 = sld [smem:[%s46]]
  %s48 = scalar_lea.smem %s0, 24
  %s49 = sld [smem:[%s48]]
  %s50 = scalar_lea.smem %s0, 25
  %s51 = sld [smem:[%s50]]
  %s52 = scalar_lea.smem %s0, 26
  %s53 = sld [smem:[%s52]]
  %s54 = scalar_lea.smem %s0, 27
  %s55 = sld [smem:[%s54]]
  %s56 = scalar_lea.smem %s0, 28
  %s57 = sld [smem:[%s56]]
  %s58 = scalar_lea.smem %s0, 29
  %s59 = sld [smem:[%s58]]
  %s60 = scalar_lea.smem %s0, 30
  %s61 = sld [smem:[%s60]]
  %s62 = scalar_lea.smem %s0, 31
  %s63 = sld [smem:[%s62]]
  %s64 = scalar_lea.smem %s0, 32
  %s65 = sld [smem:[%s64]]
  %s66 = scalar_lea.smem %s0, 33
  %s67 = sld [smem:[%s66]]
  %s68 = scalar_lea.smem %s0, 34
  %s69 = sld [smem:[%s68]]
  %s70 = sld [smem:[#allocation0]]
  $region146: #{transformer_forward.1} parent=0
    _
  %s72 = ssub.s32 1, %s70
  %s73 = scalar_select 0, %s72, %s70
  $region1: #{transformer_forward.1} parent=0
    #allocation2 [shape = 'u8[8192]{0}', space=vmem, size = 0x2000, scoped, tag = 'output window, operand 0, single buffered']
    #allocation3 [shape = 's32[1]{0}', space=sflag, size = 0x4, scoped, tag = 'scoped memory for transformer_forward.1']
    %74 = vsyncpa [#allocation3], 0
    // Predicated region
    $region2: #{transformer_forward.1} parent=1 // pred_check
      _
    $region3: #{transformer_forward.1} parent=1 // pred_check_branch
      %76 = sbr.rel (0) target = $region5
    $region4: #{transformer_forward.1} parent=1 // pred_region
      _
    $region5: #{transformer_forward.1} parent=1 // pred_fallthru
      _
    // Predicated region
    $region6: #{transformer_forward.1} parent=1 // pred_check
      _
    $region7: #{transformer_forward.1} parent=1 // pred_check_branch
      %78 = sbr.rel (0) target = $region9
    $region8: #{transformer_forward.1} parent=1 // pred_region
      _
    $region9: #{transformer_forward.1} parent=1 // pred_fallthru
      _
    // Predicated region
    $region10: #{transformer_forward.1} parent=1 // pred_check
      _
    $region11: #{transformer_forward.1} parent=1 // pred_check_branch
      %80 = sbr.rel (0) target = $region13
    $region12: #{transformer_forward.1} parent=1 // pred_region
      _
    $region13: #{transformer_forward.1} parent=1 // pred_fallthru
      _
    // Predicated region
    $region14: #{transformer_forward.1} parent=1 // pred_check
      _
    $region15: #{transformer_forward.1} parent=1 // pred_check_branch
      %82 = sbr.rel (0) target = $region17
    $region16: #{transformer_forward.1} parent=1 // pred_region
      _
    $region17: #{transformer_forward.1} parent=1 // pred_fallthru
      _
    // Predicated region
    $region18: #{transformer_forward.1} parent=1 // pred_check
      _
    $region19: #{transformer_forward.1} parent=1 // pred_check_branch
      %84 = sbr.rel (0) target = $region21
    $region20: #{transformer_forward.1} parent=1 // pred_region
      _
    $region21: #{transformer_forward.1} parent=1 // pred_fallthru
      _
    // Predicated region
    $region22: #{transformer_forward.1} parent=1 // pred_check
      _
    $region23: #{transformer_forward.1} parent=1 // pred_check_branch
      %86 = sbr.rel (0) target = $region25
    $region24: #{transformer_forward.1} parent=1 // pred_region
      _
    $region25: #{transformer_forward.1} parent=1 // pred_fallthru
      _
    // Predicated region
    $region26: #{transformer_forward.1} parent=1 // pred_check
      _
    $region27: #{transformer_forward.1} parent=1 // pred_check_branch
      %88 = sbr.rel (0) target = $region29
    $region28: #{transformer_forward.1} parent=1 // pred_region
      _
    $region29: #{transformer_forward.1} parent=1 // pred_fallthru
      _
    // Predicated region
    $region30: #{transformer_forward.1} parent=1 // pred_check
      _
    $region31: #{transformer_forward.1} parent=1 // pred_check_branch
      %90 = sbr.rel (0) target = $region33
    $region32: #{transformer_forward.1} parent=1 // pred_region
      _
    $region33: #{transformer_forward.1} parent=1 // pred_fallthru
      _
    // Predicated region
    $region34: #{transformer_forward.1} parent=1 // pred_check
      _
    $region35: #{transformer_forward.1} parent=1 // pred_check_branch
      %92 = sbr.rel (0) target = $region37
    $region36: #{transformer_forward.1} parent=1 // pred_region
      _
    $region37: #{transformer_forward.1} parent=1 // pred_fallthru
      _
    // Predicated region
    $region38: #{transformer_forward.1} parent=1 // pred_check
      _
    $region39: #{transformer_forward.1} parent=1 // pred_check_branch
      %94 = sbr.rel (0) target = $region41
    $region40: #{transformer_forward.1} parent=1 // pred_region
      _
    $region41: #{transformer_forward.1} parent=1 // pred_fallthru
      _
    // Predicated region
    $region42: #{transformer_forward.1} parent=1 // pred_check
      _
    $region43: #{transformer_forward.1} parent=1 // pred_check_branch
      %96 = sbr.rel (0) target = $region45
    $region44: #{transformer_forward.1} parent=1 // pred_region
      _
    $region45: #{transformer_forward.1} parent=1 // pred_fallthru
      _
    // Predicated region
    $region46: #{transformer_forward.1} parent=1 // pred_check
      _
    $region47: #{transformer_forward.1} parent=1 // pred_check_branch
      %98 = sbr.rel (0) target = $region49
    $region48: #{transformer_forward.1} parent=1 // pred_region
      _
    $region49: #{transformer_forward.1} parent=1 // pred_fallthru
      _
    // Predicated region
    $region50: #{transformer_forward.1} parent=1 // pred_check
      _
    $region51: #{transformer_forward.1} parent=1 // pred_check_branch
      %100 = sbr.rel (0) target = $region53
    $region52: #{transformer_forward.1} parent=1 // pred_region
      _
    $region53: #{transformer_forward.1} parent=1 // pred_fallthru
      _
    // Predicated region
    $region54: #{transformer_forward.1} parent=1 // pred_check
      _
    $region55: #{transformer_forward.1} parent=1 // pred_check_branch
      %102 = sbr.rel (0) target = $region57
    $region56: #{transformer_forward.1} parent=1 // pred_region
      _
    $region57: #{transformer_forward.1} parent=1 // pred_fallthru
      _
    // Predicated region
    $region58: #{transformer_forward.1} parent=1 // pred_check
      _
    $region59: #{transformer_forward.1} parent=1 // pred_check_branch
      %104 = sbr.rel (0) target = $region61
    $region60: #{transformer_forward.1} parent=1 // pred_region
      _
    $region61: #{transformer_forward.1} parent=1 // pred_fallthru
      _
    // Predicated region
    $region62: #{transformer_forward.1} parent=1 // pred_check
      _
    $region63: #{transformer_forward.1} parent=1 // pred_check_branch
      %106 = sbr.rel (0) target = $region65
    $region64: #{transformer_forward.1} parent=1 // pred_region
      _
    $region65: #{transformer_forward.1} parent=1 // pred_fallthru
      _
    // Predicated region
    $region66: #{transformer_forward.1} parent=1 // pred_check
      _
    $region67: #{transformer_forward.1} parent=1 // pred_check_branch
      %108 = sbr.rel (0) target = $region69
    $region68: #{transformer_forward.1} parent=1 // pred_region
      _
    $region69: #{transformer_forward.1} parent=1 // pred_fallthru
      _
    // Predicated region
    $region70: #{transformer_forward.1} parent=1 // pred_check
      _
    $region71: #{transformer_forward.1} parent=1 // pred_check_branch
      %110 = sbr.rel (0) target = $region73
    $region72: #{transformer_forward.1} parent=1 // pred_region
      _
    $region73: #{transformer_forward.1} parent=1 // pred_fallthru
      _
    // Predicated region
    $region74: #{transformer_forward.1} parent=1 // pred_check
      _
    $region75: #{transformer_forward.1} parent=1 // pred_check_branch
      %112 = sbr.rel (0) target = $region77
    $region76: #{transformer_forward.1} parent=1 // pred_region
      _
    $region77: #{transformer_forward.1} parent=1 // pred_fallthru
      _
    // Predicated region
    $region78: #{transformer_forward.1} parent=1 // pred_check
      _
    $region79: #{transformer_forward.1} parent=1 // pred_check_branch
      %114 = sbr.rel (0) target = $region81
    $region80: #{transformer_forward.1} parent=1 // pred_region
      _
    $region81: #{transformer_forward.1} parent=1 // pred_fallthru
      _
    // Predicated region
    $region82: #{transformer_forward.1} parent=1 // pred_check
      _
    $region83: #{transformer_forward.1} parent=1 // pred_check_branch
      %116 = sbr.rel (0) target = $region85
    $region84: #{transformer_forward.1} parent=1 // pred_region
      _
    $region85: #{transformer_forward.1} parent=1 // pred_fallthru
      _
    // Predicated region
    $region86: #{transformer_forward.1} parent=1 // pred_check
      _
    $region87: #{transformer_forward.1} parent=1 // pred_check_branch
      %118 = sbr.rel (0) target = $region89
    $region88: #{transformer_forward.1} parent=1 // pred_region
      _
    $region89: #{transformer_forward.1} parent=1 // pred_fallthru
      _
    // Predicated region
    $region90: #{transformer_forward.1} parent=1 // pred_check
      _
    $region91: #{transformer_forward.1} parent=1 // pred_check_branch
      %120 = sbr.rel (0) target = $region93
    $region92: #{transformer_forward.1} parent=1 // pred_region
      _
    $region93: #{transformer_forward.1} parent=1 // pred_fallthru
      _
    // Predicated region
    $region94: #{transformer_forward.1} parent=1 // pred_check
      _
    $region95: #{transformer_forward.1} parent=1 // pred_check_branch
      %122 = sbr.rel (0) target = $region97
    $region96: #{transformer_forward.1} parent=1 // pred_region
      _
    $region97: #{transformer_forward.1} parent=1 // pred_fallthru
      _
    // Predicated region
    $region98: #{transformer_forward.1} parent=1 // pred_check
      _
    $region99: #{transformer_forward.1} parent=1 // pred_check_branch
      %124 = sbr.rel (0) target = $region101
    $region100: #{transformer_forward.1} parent=1 // pred_region
      _
    $region101: #{transformer_forward.1} parent=1 // pred_fallthru
      _
    // Predicated region
    $region102: #{transformer_forward.1} parent=1 // pred_check
      _
    $region103: #{transformer_forward.1} parent=1 // pred_check_branch
      %126 = sbr.rel (0) target = $region105
    $region104: #{transformer_forward.1} parent=1 // pred_region
      _
    $region105: #{transformer_forward.1} parent=1 // pred_fallthru
      _
    // Predicated region
    $region106: #{transformer_forward.1} parent=1 // pred_check
      _
    $region107: #{transformer_forward.1} parent=1 // pred_check_branch
      %128 = sbr.rel (0) target = $region109
    $region108: #{transformer_forward.1} parent=1 // pred_region
      _
    $region109: #{transformer_forward.1} parent=1 // pred_fallthru
      _
    // Predicated region
    $region110: #{transformer_forward.1} parent=1 // pred_check
      _
    $region111: #{transformer_forward.1} parent=1 // pred_check_branch
      %130 = sbr.rel (0) target = $region113
    $region112: #{transformer_forward.1} parent=1 // pred_region
      _
    $region113: #{transformer_forward.1} parent=1 // pred_fallthru
      _
    // Predicated region
    $region114: #{transformer_forward.1} parent=1 // pred_check
      _
    $region115: #{transformer_forward.1} parent=1 // pred_check_branch
      %132 = sbr.rel (0) target = $region117
    $region116: #{transformer_forward.1} parent=1 // pred_region
      _
    $region117: #{transformer_forward.1} parent=1 // pred_fallthru
      _
    // Predicated region
    $region118: #{transformer_forward.1} parent=1 // pred_check
      _
    $region119: #{transformer_forward.1} parent=1 // pred_check_branch
      %134 = sbr.rel (0) target = $region121
    $region120: #{transformer_forward.1} parent=1 // pred_region
      _
    $region121: #{transformer_forward.1} parent=1 // pred_fallthru
      _
    // Predicated region
    $region122: #{transformer_forward.1} parent=1 // pred_check
      _
    $region123: #{transformer_forward.1} parent=1 // pred_check_branch
      %136 = sbr.rel (0) target = $region125
    $region124: #{transformer_forward.1} parent=1 // pred_region
      _
    $region125: #{transformer_forward.1} parent=1 // pred_fallthru
      _
    // Predicated region
    $region126: #{transformer_forward.1} parent=1 // pred_check
      _
    $region127: #{transformer_forward.1} parent=1 // pred_check_branch
      %138 = sbr.rel (0) target = $region129
    $region128: #{transformer_forward.1} parent=1 // pred_region
      _
    $region129: #{transformer_forward.1} parent=1 // pred_fallthru
      _
    // Predicated region
    $region130: #{transformer_forward.1} parent=1 // pred_check
      _
    $region131: #{transformer_forward.1} parent=1 // pred_check_branch
      %140 = sbr.rel (0) target = $region133
    $region132: #{transformer_forward.1} parent=1 // pred_region
      _
    $region133: #{transformer_forward.1} parent=1 // pred_fallthru
      _
    // Predicated region
    $region134: #{transformer_forward.1} parent=1 // pred_check
      _
    $region135: #{transformer_forward.1} parent=1 // pred_check_branch
      %142 = sbr.rel (0) target = $region137
    $region136: #{transformer_forward.1} parent=1 // pred_region
      _
    $region137: #{transformer_forward.1} parent=1 // pred_fallthru
      _
    %v143 = vld [vmem:[%s9] sm:$0xff]
    %v144 = vld [vmem:[%s9 + $0x8] sm:$0xff]
    %v145 = vld [vmem:[%s11] sm:$0xff]
    %v146 = vld [vmem:[%s11 + $0x8] sm:$0xff]
    %v147 = vld [vmem:[%s13] sm:$0xff]
    %v148 = vld [vmem:[%s13 + $0x8] sm:$0xff]
    %v149 = vld [vmem:[%s15] sm:$0xff]
    %v150 = vld [vmem:[%s15 + $0x8] sm:$0xff]
    %v151 = vld [vmem:[%s1] sm:$0xff]
    %v152 = vld [vmem:[%s1 + $0x8] sm:$0xff]
    %v153 = vlaneseq
    %v154 = vand.u32 %v153, 127
    %155 = vset.pattern.permute.xlu0 0
    %156 = vperm.xlu0 %155, %v151
    %v157 = vpop.permute.xlu0 %156
    %158 = vset.pattern.permute.xlu0 0
    %159 = vperm.xlu0 %158, %v152
    %v160 = vpop.permute.xlu0 %159
    %vm161 = vcmp.eq.s32.totalorder %v154, %v157
    %vm162 = vcmp.eq.s32.totalorder %v154, %v160
    %v163 = vsel %vm161, 1, 0
    %v164 = vsel %vm162, 1, 0
    %v165 = vcvt.s32.f32 %v163
    %v166 = vcvt.s32.f32 %v164
    %v167 = vld [vmem:[%s5] sm:$0xff]
    %v168 = vld [vmem:[%s5 + $0x8] sm:$0xff]
    %v169 = vld [vmem:[%s5 + $0x10] sm:$0xff]
    %v170 = vld [vmem:[%s5 + $0x18] sm:$0xff]
    %v171 = vld [vmem:[%s5 + $0x20] sm:$0xff]
    %v172 = vld [vmem:[%s5 + $0x28] sm:$0xff]
    %v173 = vld [vmem:[%s5 + $0x30] sm:$0xff]
    %v174 = vld [vmem:[%s5 + $0x38] sm:$0xff]
    %v175 = vld [vmem:[%s5 + $0x40] sm:$0xff]
    %v176 = vld [vmem:[%s5 + $0x48] sm:$0xff]
    %v177 = vld [vmem:[%s5 + $0x50] sm:$0xff]
    %v178 = vld [vmem:[%s5 + $0x58] sm:$0xff]
    %v179 = vld [vmem:[%s5 + $0x60] sm:$0xff]
    %v180 = vld [vmem:[%s5 + $0x68] sm:$0xff]
    %v181 = vld [vmem:[%s5 + $0x70] sm:$0xff]
    %v182 = vld [vmem:[%s5 + $0x78] sm:$0xff]
    %183 = vmatprep.subr.mxu0 0.0
    %184 = vmatpush1.msra.mxu0 %v182
    %185 = vmatprep.subr.mxu0 0.0
    %186 = vmatpush1.msra.mxu0 %v181
    %187 = vmatprep.subr.mxu0 0.0
    %188 = vmatpush1.msra.mxu0 %v180
    %189 = vmatprep.subr.mxu0 0.0
    %190 = vmatpush1.msra.mxu0 %v179
    %191 = vmatprep.subr.mxu0 0.0
    %192 = vmatpush1.msra.mxu0 %v178
    %193 = vmatprep.subr.mxu0 0.0
    %194 = vmatpush1.msra.mxu0 %v177
    %195 = vmatprep.subr.mxu0 0.0
    %196 = vmatpush1.msra.mxu0 %v176
    %197 = vmatprep.subr.mxu0 0.0
    %198 = vmatpush1.msra.mxu0 %v175
    %199 = vmatprep.subr.mxu0 0.0
    %200 = vmatpush1.msra.mxu0 %v174
    %201 = vmatprep.subr.mxu0 0.0
    %202 = vmatpush1.msra.mxu0 %v173
    %203 = vmatprep.subr.mxu0 0.0
    %204 = vmatpush1.msra.mxu0 %v172
    %205 = vmatprep.subr.mxu0 0.0
    %206 = vmatpush1.msra.mxu0 %v171
    %207 = vmatprep.subr.mxu0 0.0
    %208 = vmatpush1.msra.mxu0 %v170
    %209 = vmatprep.subr.mxu0 0.0
    %210 = vmatpush1.msra.mxu0 %v169
    %211 = vmatprep.subr.mxu0 0.0
    %212 = vmatpush1.msra.mxu0 %v168
    %213 = vmatprep.subr.mxu0 0.0
    %214 = vmatpush1.msra.mxu0 %v167
    %215 = vmatprep.subr.mxu0 0.0
    %216 = vmatpush2.msra.mxu0 0.0
    %217 = vmatprep.subr.mxu0 0.0
    %218 = vmatpush2.msra.mxu0 0.0
    %219 = vmatprep.subr.mxu0 0.0
    %220 = vmatpush2.msra.mxu0 0.0
    %221 = vmatprep.subr.mxu0 0.0
    %222 = vmatpush2.msra.mxu0 0.0
    %223 = vmatprep.subr.mxu0 0.0
    %224 = vmatpush2.msra.mxu0 0.0
    %225 = vmatprep.subr.mxu0 0.0
    %226 = vmatpush2.msra.mxu0 0.0
    %227 = vmatprep.subr.mxu0 0.0
    %228 = vmatpush2.msra.mxu0 0.0
    %229 = vmatprep.subr.mxu0 0.0
    %230 = vmatpush2.msra.mxu0 0.0
    %231 = vmatprep.subr.mxu0 0.0
    %232 = vmatpush2.msra.mxu0 0.0
    %233 = vmatprep.subr.mxu0 0.0
    %234 = vmatpush2.msra.mxu0 0.0
    %235 = vmatprep.subr.mxu0 0.0
    %236 = vmatpush2.msra.mxu0 0.0
    %237 = vmatprep.subr.mxu0 0.0
    %238 = vmatpush2.msra.mxu0 0.0
    %239 = vmatprep.subr.mxu0 0.0
    %240 = vmatpush2.msra.mxu0 0.0
    %241 = vmatprep.subr.mxu0 0.0
    %242 = vmatpush2.msra.mxu0 0.0
    %243 = vmatprep.subr.mxu0 0.0
    %244 = vmatpush2.msra.mxu0 0.0
    %245 = vmatprep.subr.mxu0 0.0
    %246 = vmatpush2.msra.mxu0 0.0
    %247 = vmatprep.mubr.f32.mxu0 0.0
    %248 = vmatmul.mubr.f32.gmra.mxu0 %v165
    %v249 = vpop.f32.mrf.mxu0
    %v250 = vadd.f32 %v143, %v249
    %v251 = vpop.f32.mrf.mxu0
    %252 = vmatprep.mubr.f32.mxu0 0.0
    %253 = vmatmul.mubr.f32.gmra.mxu0 %v166
    %v254 = vpop.f32.mrf.mxu0
    %v255 = vadd.f32 %v144, %v254
    %v256 = vpop.f32.mrf.mxu0
    %257 = vdwg.mxu0
    %v258 = vld [vmem:[%s3] sm:$0xff]
    %v259 = vld [vmem:[%s3 + $0x8] sm:$0xff]
    %260 = vset.pattern.permute.xlu0 0
    %261 = vperm.xlu0 %260, %v258
    %v262 = vpop.permute.xlu0 %261
    %263 = vset.pattern.permute.xlu0 0
    %264 = vperm.xlu0 %263, %v259
    %v265 = vpop.permute.xlu0 %264
    %vm266 = vcmp.eq.s32.totalorder %v154, %v262
    %vm267 = vcmp.eq.s32.totalorder %v154, %v265
    %v268 = vsel %vm266, 1, 0
    %v269 = vsel %vm267, 1, 0
    %v270 = vcvt.s32.f32 %v268
    %v271 = vcvt.s32.f32 %v269
    %v272 = vld [vmem:[%s7] sm:$0xff]
    %v273 = vld [vmem:[%s7 + $0x8] sm:$0xff]
    %v274 = vld [vmem:[%s7 + $0x10] sm:$0xff]
    %v275 = vld [vmem:[%s7 + $0x18] sm:$0xff]
    %v276 = vld [vmem:[%s7 + $0x20] sm:$0xff]
    %v277 = vld [vmem:[%s7 + $0x28] sm:$0xff]
    %v278 = vld [vmem:[%s7 + $0x30] sm:$0xff]
    %v279 = vld [vmem:[%s7 + $0x38] sm:$0xff]
    %v280 = vld [vmem:[%s7 + $0x40] sm:$0xff]
    %v281 = vld [vmem:[%s7 + $0x48] sm:$0xff]
    %v282 = vld [vmem:[%s7 + $0x50] sm:$0xff]
    %v283 = vld [vmem:[%s7 + $0x58] sm:$0xff]
    %v284 = vld [vmem:[%s7 + $0x60] sm:$0xff]
    %v285 = vld [vmem:[%s7 + $0x68] sm:$0xff]
    %v286 = vld [vmem:[%s7 + $0x70] sm:$0xff]
    %v287 = vld [vmem:[%s7 + $0x78] sm:$0xff]
    %288 = vmatprep.subr.mxu0 0.0
    %289 = vmatpush1.msra.mxu0 %v287
    %290 = vmatprep.subr.mxu0 0.0
    %291 = vmatpush1.msra.mxu0 %v286
    %292 = vmatprep.subr.mxu0 0.0
    %293 = vmatpush1.msra.mxu0 %v285
    %294 = vmatprep.subr.mxu0 0.0
    %295 = vmatpush1.msra.mxu0 %v284
    %296 = vmatprep.subr.mxu0 0.0
    %297 = vmatpush1.msra.mxu0 %v283
    %298 = vmatprep.subr.mxu0 0.0
    %299 = vmatpush1.msra.mxu0 %v282
    %300 = vmatprep.subr.mxu0 0.0
    %301 = vmatpush1.msra.mxu0 %v281
    %302 = vmatprep.subr.mxu0 0.0
    %303 = vmatpush1.msra.mxu0 %v280
    %304 = vmatprep.subr.mxu0 0.0
    %305 = vmatpush1.msra.mxu0 %v279
    %306 = vmatprep.subr.mxu0 0.0
    %307 = vmatpush1.msra.mxu0 %v278
    %308 = vmatprep.subr.mxu0 0.0
    %309 = vmatpush1.msra.mxu0 %v277
    %310 = vmatprep.subr.mxu0 0.0
    %311 = vmatpush1.msra.mxu0 %v276
    %312 = vmatprep.subr.mxu0 0.0
    %313 = vmatpush1.msra.mxu0 %v275
    %314 = vmatprep.subr.mxu0 0.0
    %315 = vmatpush1.msra.mxu0 %v274
    %316 = vmatprep.subr.mxu0 0.0
    %317 = vmatpush1.msra.mxu0 %v273
    %318 = vmatprep.subr.mxu0 0.0
    %319 = vmatpush1.msra.mxu0 %v272
    %320 = vmatprep.subr.mxu0 0.0
    %321 = vmatpush2.msra.mxu0 0.0
    %322 = vmatprep.subr.mxu0 0.0
    %323 = vmatpush2.msra.mxu0 0.0
    %324 = vmatprep.subr.mxu0 0.0
    %325 = vmatpush2.msra.mxu0 0.0
    %326 = vmatprep.subr.mxu0 0.0
    %327 = vmatpush2.msra.mxu0 0.0
    %328 = vmatprep.subr.mxu0 0.0
    %329 = vmatpush2.msra.mxu0 0.0
    %330 = vmatprep.subr.mxu0 0.0
    %331 = vmatpush2.msra.mxu0 0.0
    %332 = vmatprep.subr.mxu0 0.0
    %333 = vmatpush2.msra.mxu0 0.0
    %334 = vmatprep.subr.mxu0 0.0
    %335 = vmatpush2.msra.mxu0 0.0
    %336 = vmatprep.subr.mxu0 0.0
    %337 = vmatpush2.msra.mxu0 0.0
    %338 = vmatprep.subr.mxu0 0.0
    %339 = vmatpush2.msra.mxu0 0.0
    %340 = vmatprep.subr.mxu0 0.0
    %341 = vmatpush2.msra.mxu0 0.0
    %342 = vmatprep.subr.mxu0 0.0
    %343 = vmatpush2.msra.mxu0 0.0
    %344 = vmatprep.subr.mxu0 0.0
    %345 = vmatpush2.msra.mxu0 0.0
    %346 = vmatprep.subr.mxu0 0.0
    %347 = vmatpush2.msra.mxu0 0.0
    %348 = vmatprep.subr.mxu0 0.0
    %349 = vmatpush2.msra.mxu0 0.0
    %350 = vmatprep.subr.mxu0 0.0
    %351 = vmatpush2.msra.mxu0 0.0
    %352 = vmatprep.mubr.f32.mxu0 0.0
    %353 = vmatmul.mubr.f32.gmra.mxu0 %v270
    %v354 = vpop.f32.mrf.mxu0
    %v355 = vadd.f32 %v143, %v354
    %v356 = vpop.f32.mrf.mxu0
    %357 = vmatprep.mubr.f32.mxu0 0.0
    %358 = vmatmul.mubr.f32.gmra.mxu0 %v271
    %v359 = vpop.f32.mrf.mxu0
    %v360 = vadd.f32 %v144, %v359
    %v361 = vpop.f32.mrf.mxu0
    %362 = vdwg.mxu0
    %v363 = vld [vmem:[%s17] sm:$0xff]
    %v364 = vld [vmem:[%s17 + $0x8] sm:$0xff]
    %v365 = vld [vmem:[%s17 + $0x10] sm:$0xff]
    %v366 = vld [vmem:[%s17 + $0x18] sm:$0xff]
    %v367 = vld [vmem:[%s19] sm:$0x1]
    %v368 = vld [vmem:[%s21] sm:$0xff]
    %v369 = vld [vmem:[%s21 + $0x8] sm:$0xff]
    %v370 = vld [vmem:[%s21 + $0x10] sm:$0xff]
    %v371 = vld [vmem:[%s21 + $0x18] sm:$0xff]
    %v372 = vld [vmem:[%s23] sm:$0x1]
    %v374 = vlaneseq
    %v375 = vshrl.u32 %v374, 7
    %v376 = vsub.s32 0, %v375
    %v377 = vrot.slane %v367, %v376
    %vm379 = vcmask 261120
    %v381 = vsel %vm379, %v250, 0
    %v384 = vsel %vm379, %v255, 0
    %386 = vmatprep.subr.mxu0 0.0
    %387 = vmatpush1.msra.mxu0 0.0
    %388 = vmatprep.subr.mxu0 0.0
    %389 = vmatpush1.msra.mxu0 0.0
    %390 = vmatprep.subr.mxu0 0.0
    %391 = vmatpush1.msra.mxu0 0.0
    %392 = vmatprep.subr.mxu0 0.0
    %393 = vmatpush1.msra.mxu0 0.0
    %394 = vmatprep.subr.mxu0 0.0
    %395 = vmatpush1.msra.mxu0 0.0
    %396 = vmatprep.subr.mxu0 0.0
    %397 = vmatpush1.msra.mxu0 0.0
    %398 = vmatprep.subr.mxu0 0.0
    %399 = vmatpush1.msra.mxu0 0.0
    %400 = vmatprep.subr.mxu0 0.0
    %401 = vmatpush1.msra.mxu0 0.0
    %402 = vmatprep.subr.mxu0 0.0
    %403 = vmatpush1.msra.mxu0 0.0
    %404 = vmatprep.subr.mxu0 0.0
    %405 = vmatpush1.msra.mxu0 0.0
    %406 = vmatprep.subr.mxu0 0.0
    %407 = vmatpush1.msra.mxu0 0.0
    %408 = vmatprep.subr.mxu0 0.0
    %409 = vmatpush1.msra.mxu0 0.0
    %410 = vmatprep.subr.mxu0 0.0
    %411 = vmatpush1.msra.mxu0 %v366
    %412 = vmatprep.subr.mxu0 0.0
    %413 = vmatpush1.msra.mxu0 %v365
    %414 = vmatprep.subr.mxu0 0.0
    %415 = vmatpush1.msra.mxu0 %v364
    %416 = vmatprep.subr.mxu0 0.0
    %417 = vmatpush1.msra.mxu0 %v363
    %418 = vmatprep.subr.mxu0 0.0
    %419 = vmatpush2.msra.mxu0 0.0
    %420 = vmatprep.subr.mxu0 0.0
    %421 = vmatpush2.msra.mxu0 0.0
    %422 = vmatprep.subr.mxu0 0.0
    %423 = vmatpush2.msra.mxu0 0.0
    %424 = vmatprep.subr.mxu0 0.0
    %425 = vmatpush2.msra.mxu0 0.0
    %426 = vmatprep.subr.mxu0 0.0
    %427 = vmatpush2.msra.mxu0 0.0
    %428 = vmatprep.subr.mxu0 0.0
    %429 = vmatpush2.msra.mxu0 0.0
    %430 = vmatprep.subr.mxu0 0.0
    %431 = vmatpush2.msra.mxu0 0.0
    %432 = vmatprep.subr.mxu0 0.0
    %433 = vmatpush2.msra.mxu0 0.0
    %434 = vmatprep.subr.mxu0 0.0
    %435 = vmatpush2.msra.mxu0 0.0
    %436 = vmatprep.subr.mxu0 0.0
    %437 = vmatpush2.msra.mxu0 0.0
    %438 = vmatprep.subr.mxu0 0.0
    %439 = vmatpush2.msra.mxu0 0.0
    %440 = vmatprep.subr.mxu0 0.0
    %441 = vmatpush2.msra.mxu0 0.0
    %442 = vmatprep.subr.mxu0 0.0
    %443 = vmatpush2.msra.mxu0 0.0
    %444 = vmatprep.subr.mxu0 0.0
    %445 = vmatpush2.msra.mxu0 0.0
    %446 = vmatprep.subr.mxu0 0.0
    %447 = vmatpush2.msra.mxu0 0.0
    %448 = vmatprep.subr.mxu0 0.0
    %449 = vmatpush2.msra.mxu0 0.0
    %450 = vmatprep.mubr.f32.mxu0 0.0
    %451 = vmatmul.mubr.f32.gmra.mxu0 %v381
    %v452 = vpop.f32.mrf.mxu0
    %v453 = vadd.f32 %v377, %v452
    %v454 = vpop.f32.mrf.mxu0
    %455 = vmatprep.mubr.f32.mxu0 0.0
    %456 = vmatmul.mubr.f32.gmra.mxu0 %v384
    %v457 = vpop.f32.mrf.mxu0
    %v458 = vadd.f32 %v377, %v457
    %v459 = vpop.f32.mrf.mxu0
    %460 = vdwg.mxu0
    %463 = vrot.lane.b32.xlu0 %v453, 96
    %v464 = vpop.permute.xlu0 %463
    %465 = vrot.lane.b32.xlu0 %v458, 96
    %v466 = vpop.permute.xlu0 %465
    %vm467 = vcmask 64512
    %v468 = vsel %vm467, %v453, 0
    %v470 = vsel %vm467, %v458, 0
    %v472 = vsel %vm467, %v464, 0
    %v474 = vsel %vm467, %v466, 0
    %476 = vmatprep.subr.mxu0 0.0
    %477 = vmatpush1.xpose.msra.mxu0 0.0
    %478 = vmatprep.subr.mxu0 0.0
    %479 = vmatpush1.xpose.msra.mxu0 0.0
    %480 = vmatprep.subr.mxu0 0.0
    %481 = vmatpush1.xpose.msra.mxu0 0.0
    %482 = vmatprep.subr.mxu0 0.0
    %483 = vmatpush1.xpose.msra.mxu0 0.0
    %484 = vmatprep.subr.mxu0 0.0
    %485 = vmatpush1.xpose.msra.mxu0 0.0
    %486 = vmatprep.subr.mxu0 0.0
    %487 = vmatpush1.xpose.msra.mxu0 0.0
    %488 = vmatprep.subr.mxu0 0.0
    %489 = vmatpush1.xpose.msra.mxu0 0.0
    %490 = vmatprep.subr.mxu0 0.0
    %491 = vmatpush1.xpose.msra.mxu0 0.0
    %492 = vmatprep.subr.mxu0 0.0
    %493 = vmatpush1.xpose.msra.mxu0 0.0
    %494 = vmatprep.subr.mxu0 0.0
    %495 = vmatpush1.xpose.msra.mxu0 0.0
    %496 = vmatprep.subr.mxu0 0.0
    %497 = vmatpush1.xpose.msra.mxu0 0.0
    %498 = vmatprep.subr.mxu0 0.0
    %499 = vmatpush1.xpose.msra.mxu0 0.0
    %500 = vmatprep.subr.mxu0 0.0
    %501 = vmatpush1.xpose.msra.mxu0 0.0
    %502 = vmatprep.subr.mxu0 0.0
    %503 = vmatpush1.xpose.msra.mxu0 0.0
    %504 = vmatprep.subr.mxu0 0.0
    %505 = vmatpush1.xpose.msra.mxu0 %v474
    %506 = vmatprep.subr.mxu0 0.0
    %507 = vmatpush1.xpose.msra.mxu0 %v472
    %508 = vmatprep.subr.mxu0 0.0
    %509 = vmatpush2.xpose.msra.mxu0 0.0
    %510 = vmatprep.subr.mxu0 0.0
    %511 = vmatpush2.xpose.msra.mxu0 0.0
    %512 = vmatprep.subr.mxu0 0.0
    %513 = vmatpush2.xpose.msra.mxu0 0.0
    %514 = vmatprep.subr.mxu0 0.0
    %515 = vmatpush2.xpose.msra.mxu0 0.0
    %516 = vmatprep.subr.mxu0 0.0
    %517 = vmatpush2.xpose.msra.mxu0 0.0
    %518 = vmatprep.subr.mxu0 0.0
    %519 = vmatpush2.xpose.msra.mxu0 0.0
    %520 = vmatprep.subr.mxu0 0.0
    %521 = vmatpush2.xpose.msra.mxu0 0.0
    %522 = vmatprep.subr.mxu0 0.0
    %523 = vmatpush2.xpose.msra.mxu0 0.0
    %524 = vmatprep.subr.mxu0 0.0
    %525 = vmatpush2.xpose.msra.mxu0 0.0
    %526 = vmatprep.subr.mxu0 0.0
    %527 = vmatpush2.xpose.msra.mxu0 0.0
    %528 = vmatprep.subr.mxu0 0.0
    %529 = vmatpush2.xpose.msra.mxu0 0.0
    %530 = vmatprep.subr.mxu0 0.0
    %531 = vmatpush2.xpose.msra.mxu0 0.0
    %532 = vmatprep.subr.mxu0 0.0
    %533 = vmatpush2.xpose.msra.mxu0 0.0
    %534 = vmatprep.subr.mxu0 0.0
    %535 = vmatpush2.xpose.msra.mxu0 0.0
    %536 = vmatprep.subr.mxu0 0.0
    %537 = vmatpush2.xpose.msra.mxu0 0.0
    %538 = vmatprep.subr.mxu0 0.0
    %539 = vmatpush2.xpose.msra.mxu0 0.0
    %540 = vmatprep.mubr.f32.mxu0 0.0
    %541 = vmatmul.mubr.f32.gmra.mxu0 %v468
    %v542 = vpop.f32.mrf.mxu0
    %v543 = vadd.f32 0.0, %v542
    %v544 = vpop.f32.mrf.mxu0
    %545 = vmatprep.mubr.f32.mxu0 0.0
    %546 = vmatmul.mubr.f32.gmra.mxu0 %v470
    %v547 = vpop.f32.mrf.mxu0
    %v548 = vadd.f32 0.0, %v547
    %v549 = vpop.f32.mrf.mxu0
    %550 = vdwg.mxu0
    %vm551 = vcmp.gt.f32.partialorder %v145, 0.0
    %vm552 = vcmp.gt.f32.partialorder %v146, 0.0
    %v553 = vsel %vm551, %v543, %v149
    %v554 = vsel %vm552, %v548, %v150
    %vm555 = vcmask 130048
    %v556 = vsel %vm555, %v553, -inf
    %557 = vmax.xlane.f32.xlu0 %v556
    %v558 = vpop.xlane.xlu0 %557
    %v559 = vsel %vm555, %v554, -inf
    %560 = vmax.xlane.f32.xlu0 %v559
    %v561 = vpop.xlane.xlu0 %560
    %v562 = vsub.f32 %v553, %v558
    %v563 = vsub.f32 %v554, %v561
    %v564 = vmul.f32 %v562, 1.442695
    %v565 = vpow.pop %v564
    %v566 = vmul.f32 %v563, 1.442695
    %v567 = vpow.pop %v566
    %v568 = vsel %vm555, %v565, 0.0
    %569 = vadd.xlane.f32.xlu0 %v568
    %v570 = vpop.xlane.xlu0 %569
    %v571 = vsel %vm555, %v567, 0.0
    %572 = vadd.xlane.f32.xlu0 %v571
    %v573 = vpop.xlane.xlu0 %572
    %v574 = vrcp.pop %v570
    %v575 = vmul.f32 %v565, %v574
    %v576 = vrcp.pop %v573
    %v577 = vmul.f32 %v567, %v576
    %578 = vrot.lane.b32.xlu0 %v453, 64
    %v579 = vpop.permute.xlu0 %578
    %580 = vrot.lane.b32.xlu0 %v458, 64
    %v581 = vpop.permute.xlu0 %580
    %v585 = vsel %vm555, %v575, 0
    %v588 = vsel %vm555, %v577, 0
    %590 = vmatprep.subr.mxu0 0.0
    %591 = vmatpush1.msra.mxu0 0.0
    %592 = vmatprep.subr.mxu0 0.0
    %593 = vmatpush1.msra.mxu0 0.0
    %594 = vmatprep.subr.mxu0 0.0
    %595 = vmatpush1.msra.mxu0 0.0
    %596 = vmatprep.subr.mxu0 0.0
    %597 = vmatpush1.msra.mxu0 0.0
    %598 = vmatprep.subr.mxu0 0.0
    %599 = vmatpush1.msra.mxu0 0.0
    %600 = vmatprep.subr.mxu0 0.0
    %601 = vmatpush1.msra.mxu0 0.0
    %602 = vmatprep.subr.mxu0 0.0
    %603 = vmatpush1.msra.mxu0 0.0
    %604 = vmatprep.subr.mxu0 0.0
    %605 = vmatpush1.msra.mxu0 0.0
    %606 = vmatprep.subr.mxu0 0.0
    %607 = vmatpush1.msra.mxu0 0.0
    %608 = vmatprep.subr.mxu0 0.0
    %609 = vmatpush1.msra.mxu0 0.0
    %610 = vmatprep.subr.mxu0 0.0
    %611 = vmatpush1.msra.mxu0 0.0
    %612 = vmatprep.subr.mxu0 0.0
    %613 = vmatpush1.msra.mxu0 0.0
    %614 = vmatprep.subr.mxu0 0.0
    %615 = vmatpush1.msra.mxu0 0.0
    %616 = vmatprep.subr.mxu0 0.0
    %617 = vmatpush1.msra.mxu0 0.0
    %618 = vmatprep.subr.mxu0 0.0
    %619 = vmatpush1.msra.mxu0 %v581
    %620 = vmatprep.subr.mxu0 0.0
    %621 = vmatpush1.msra.mxu0 %v579
    %622 = vmatprep.subr.mxu0 0.0
    %623 = vmatpush2.msra.mxu0 0.0
    %624 = vmatprep.subr.mxu0 0.0
    %625 = vmatpush2.msra.mxu0 0.0
    %626 = vmatprep.subr.mxu0 0.0
    %627 = vmatpush2.msra.mxu0 0.0
    %628 = vmatprep.subr.mxu0 0.0
    %629 = vmatpush2.msra.mxu0 0.0
    %630 = vmatprep.subr.mxu0 0.0
    %631 = vmatpush2.msra.mxu0 0.0
    %632 = vmatprep.subr.mxu0 0.0
    %633 = vmatpush2.msra.mxu0 0.0
    %634 = vmatprep.subr.mxu0 0.0
    %635 = vmatpush2.msra.mxu0 0.0
    %636 = vmatprep.subr.mxu0 0.0
    %637 = vmatpush2.msra.mxu0 0.0
    %638 = vmatprep.subr.mxu0 0.0
    %639 = vmatpush2.msra.mxu0 0.0
    %640 = vmatprep.subr.mxu0 0.0
    %641 = vmatpush2.msra.mxu0 0.0
    %642 = vmatprep.subr.mxu0 0.0
    %643 = vmatpush2.msra.mxu0 0.0
    %644 = vmatprep.subr.mxu0 0.0
    %645 = vmatpush2.msra.mxu0 0.0
    %646 = vmatprep.subr.mxu0 0.0
    %647 = vmatpush2.msra.mxu0 0.0
    %648 = vmatprep.subr.mxu0 0.0
    %649 = vmatpush2.msra.mxu0 0.0
    %650 = vmatprep.subr.mxu0 0.0
    %651 = vmatpush2.msra.mxu0 0.0
    %652 = vmatprep.subr.mxu0 0.0
    %653 = vmatpush2.msra.mxu0 0.0
    %654 = vmatprep.mubr.f32.mxu0 0.0
    %655 = vmatmul.mubr.f32.gmra.mxu0 %v585
    %v656 = vpop.f32.mrf.mxu0
    %v657 = vadd.f32 0.0, %v656
    %v658 = vpop.f32.mrf.mxu0
    %659 = vmatprep.mubr.f32.mxu0 0.0
    %660 = vmatmul.mubr.f32.gmra.mxu0 %v588
    %v661 = vpop.f32.mrf.mxu0
    %v662 = vadd.f32 0.0, %v661
    %v663 = vpop.f32.mrf.mxu0
    %664 = vdwg.mxu0
    %665 = vrot.lane.b32.xlu0 %v453, 120
    %v666 = vpop.permute.xlu0 %665
    %667 = vrot.lane.b32.xlu0 %v458, 120
    %v668 = vpop.permute.xlu0 %667
    %669 = vrot.lane.b32.xlu0 %v453, 88
    %v670 = vpop.permute.xlu0 %669
    %671 = vrot.lane.b32.xlu0 %v458, 88
    %v672 = vpop.permute.xlu0 %671
    %v673 = vsel %vm467, %v666, 0
    %v675 = vsel %vm467, %v668, 0
    %v677 = vsel %vm467, %v670, 0
    %v679 = vsel %vm467, %v672, 0
    %681 = vmatprep.subr.mxu0 0.0
    %682 = vmatpush1.xpose.msra.mxu0 0.0
    %683 = vmatprep.subr.mxu0 0.0
    %684 = vmatpush1.xpose.msra.mxu0 0.0
    %685 = vmatprep.subr.mxu0 0.0
    %686 = vmatpush1.xpose.msra.mxu0 0.0
    %687 = vmatprep.subr.mxu0 0.0
    %688 = vmatpush1.xpose.msra.mxu0 0.0
    %689 = vmatprep.subr.mxu0 0.0
    %690 = vmatpush1.xpose.msra.mxu0 0.0
    %691 = vmatprep.subr.mxu0 0.0
    %692 = vmatpush1.xpose.msra.mxu0 0.0
    %693 = vmatprep.subr.mxu0 0.0
    %694 = vmatpush1.xpose.msra.mxu0 0.0
    %695 = vmatprep.subr.mxu0 0.0
    %696 = vmatpush1.xpose.msra.mxu0 0.0
    %697 = vmatprep.subr.mxu0 0.0
    %698 = vmatpush1.xpose.msra.mxu0 0.0
    %699 = vmatprep.subr.mxu0 0.0
    %700 = vmatpush1.xpose.msra.mxu0 0.0
    %701 = vmatprep.subr.mxu0 0.0
    %702 = vmatpush1.xpose.msra.mxu0 0.0
    %703 = vmatprep.subr.mxu0 0.0
    %704 = vmatpush1.xpose.msra.mxu0 0.0
    %705 = vmatprep.subr.mxu0 0.0
    %706 = vmatpush1.xpose.msra.mxu0 0.0
    %707 = vmatprep.subr.mxu0 0.0
    %708 = vmatpush1.xpose.msra.mxu0 0.0
    %709 = vmatprep.subr.mxu0 0.0
    %710 = vmatpush1.xpose.msra.mxu0 %v679
    %711 = vmatprep.subr.mxu0 0.0
    %712 = vmatpush1.xpose.msra.mxu0 %v677
    %713 = vmatprep.subr.mxu0 0.0
    %714 = vmatpush2.xpose.msra.mxu0 0.0
    %715 = vmatprep.subr.mxu0 0.0
    %716 = vmatpush2.xpose.msra.mxu0 0.0
    %717 = vmatprep.subr.mxu0 0.0
    %718 = vmatpush2.xpose.msra.mxu0 0.0
    %719 = vmatprep.subr.mxu0 0.0
    %720 = vmatpush2.xpose.msra.mxu0 0.0
    %721 = vmatprep.subr.mxu0 0.0
    %722 = vmatpush2.xpose.msra.mxu0 0.0
    %723 = vmatprep.subr.mxu0 0.0
    %724 = vmatpush2.xpose.msra.mxu0 0.0
    %725 = vmatprep.subr.mxu0 0.0
    %726 = vmatpush2.xpose.msra.mxu0 0.0
    %727 = vmatprep.subr.mxu0 0.0
    %728 = vmatpush2.xpose.msra.mxu0 0.0
    %729 = vmatprep.subr.mxu0 0.0
    %730 = vmatpush2.xpose.msra.mxu0 0.0
    %731 = vmatprep.subr.mxu0 0.0
    %732 = vmatpush2.xpose.msra.mxu0 0.0
    %733 = vmatprep.subr.mxu0 0.0
    %734 = vmatpush2.xpose.msra.mxu0 0.0
    %735 = vmatprep.subr.mxu0 0.0
    %736 = vmatpush2.xpose.msra.mxu0 0.0
    %737 = vmatprep.subr.mxu0 0.0
    %738 = vmatpush2.xpose.msra.mxu0 0.0
    %739 = vmatprep.subr.mxu0 0.0
    %740 = vmatpush2.xpose.msra.mxu0 0.0
    %741 = vmatprep.subr.mxu0 0.0
    %742 = vmatpush2.xpose.msra.mxu0 0.0
    %743 = vmatprep.subr.mxu0 0.0
    %744 = vmatpush2.xpose.msra.mxu0 0.0
    %745 = vmatprep.mubr.f32.mxu0 0.0
    %746 = vmatmul.mubr.f32.gmra.mxu0 %v673
    %v747 = vpop.f32.mrf.mxu0
    %v748 = vadd.f32 0.0, %v747
    %v749 = vpop.f32.mrf.mxu0
    %750 = vmatprep.mubr.f32.mxu0 0.0
    %751 = vmatmul.mubr.f32.gmra.mxu0 %v675
    %v752 = vpop.f32.mrf.mxu0
    %v753 = vadd.f32 0.0, %v752
    %v754 = vpop.f32.mrf.mxu0
    %755 = vdwg.mxu0
    %v756 = vsel %vm551, %v748, %v149
    %v757 = vsel %vm552, %v753, %v150
    %v758 = vsel %vm555, %v756, -inf
    %759 = vmax.xlane.f32.xlu0 %v758
    %v760 = vpop.xlane.xlu0 %759
    %v761 = vsel %vm555, %v757, -inf
    %762 = vmax.xlane.f32.xlu0 %v761
    %v763 = vpop.xlane.xlu0 %762
    %v764 = vsub.f32 %v756, %v760
    %v765 = vsub.f32 %v757, %v763
    %v766 = vmul.f32 %v764, 1.442695
    %v767 = vpow.pop %v766
    %v768 = vmul.f32 %v765, 1.442695
    %v769 = vpow.pop %v768
    %v770 = vsel %vm555, %v767, 0.0
    %771 = vadd.xlane.f32.xlu0 %v770
    %v772 = vpop.xlane.xlu0 %771
    %v773 = vsel %vm555, %v769, 0.0
    %774 = vadd.xlane.f32.xlu0 %v773
    %v775 = vpop.xlane.xlu0 %774
    %v776 = vrcp.pop %v772
    %v777 = vmul.f32 %v767, %v776
    %v778 = vrcp.pop %v775
    %v779 = vmul.f32 %v769, %v778
    %780 = vrot.lane.b32.xlu0 %v453, 56
    %v781 = vpop.permute.xlu0 %780
    %782 = vrot.lane.b32.xlu0 %v458, 56
    %v783 = vpop.permute.xlu0 %782
    %v787 = vsel %vm555, %v777, 0
    %v790 = vsel %vm555, %v779, 0
    %792 = vmatprep.subr.mxu0 0.0
    %793 = vmatpush1.msra.mxu0 0.0
    %794 = vmatprep.subr.mxu0 0.0
    %795 = vmatpush1.msra.mxu0 0.0
    %796 = vmatprep.subr.mxu0 0.0
    %797 = vmatpush1.msra.mxu0 0.0
    %798 = vmatprep.subr.mxu0 0.0
    %799 = vmatpush1.msra.mxu0 0.0
    %800 = vmatprep.subr.mxu0 0.0
    %801 = vmatpush1.msra.mxu0 0.0
    %802 = vmatprep.subr.mxu0 0.0
    %803 = vmatpush1.msra.mxu0 0.0
    %804 = vmatprep.subr.mxu0 0.0
    %805 = vmatpush1.msra.mxu0 0.0
    %806 = vmatprep.subr.mxu0 0.0
    %807 = vmatpush1.msra.mxu0 0.0
    %808 = vmatprep.subr.mxu0 0.0
    %809 = vmatpush1.msra.mxu0 0.0
    %810 = vmatprep.subr.mxu0 0.0
    %811 = vmatpush1.msra.mxu0 0.0
    %812 = vmatprep.subr.mxu0 0.0
    %813 = vmatpush1.msra.mxu0 0.0
    %814 = vmatprep.subr.mxu0 0.0
    %815 = vmatpush1.msra.mxu0 0.0
    %816 = vmatprep.subr.mxu0 0.0
    %817 = vmatpush1.msra.mxu0 0.0
    %818 = vmatprep.subr.mxu0 0.0
    %819 = vmatpush1.msra.mxu0 0.0
    %820 = vmatprep.subr.mxu0 0.0
    %821 = vmatpush1.msra.mxu0 %v783
    %822 = vmatprep.subr.mxu0 0.0
    %823 = vmatpush1.msra.mxu0 %v781
    %824 = vmatprep.subr.mxu0 0.0
    %825 = vmatpush2.msra.mxu0 0.0
    %826 = vmatprep.subr.mxu0 0.0
    %827 = vmatpush2.msra.mxu0 0.0
    %828 = vmatprep.subr.mxu0 0.0
    %829 = vmatpush2.msra.mxu0 0.0
    %830 = vmatprep.subr.mxu0 0.0
    %831 = vmatpush2.msra.mxu0 0.0
    %832 = vmatprep.subr.mxu0 0.0
    %833 = vmatpush2.msra.mxu0 0.0
    %834 = vmatprep.subr.mxu0 0.0
    %835 = vmatpush2.msra.mxu0 0.0
    %836 = vmatprep.subr.mxu0 0.0
    %837 = vmatpush2.msra.mxu0 0.0
    %838 = vmatprep.subr.mxu0 0.0
    %839 = vmatpush2.msra.mxu0 0.0
    %840 = vmatprep.subr.mxu0 0.0
    %841 = vmatpush2.msra.mxu0 0.0
    %842 = vmatprep.subr.mxu0 0.0
    %843 = vmatpush2.msra.mxu0 0.0
    %844 = vmatprep.subr.mxu0 0.0
    %845 = vmatpush2.msra.mxu0 0.0
    %846 = vmatprep.subr.mxu0 0.0
    %847 = vmatpush2.msra.mxu0 0.0
    %848 = vmatprep.subr.mxu0 0.0
    %849 = vmatpush2.msra.mxu0 0.0
    %850 = vmatprep.subr.mxu0 0.0
    %851 = vmatpush2.msra.mxu0 0.0
    %852 = vmatprep.subr.mxu0 0.0
    %853 = vmatpush2.msra.mxu0 0.0
    %854 = vmatprep.subr.mxu0 0.0
    %855 = vmatpush2.msra.mxu0 0.0
    %856 = vmatprep.mubr.f32.mxu0 0.0
    %857 = vmatmul.mubr.f32.gmra.mxu0 %v787
    %v858 = vpop.f32.mrf.mxu0
    %v859 = vadd.f32 0.0, %v858
    %v860 = vpop.f32.mrf.mxu0
    %861 = vmatprep.mubr.f32.mxu0 0.0
    %862 = vmatmul.mubr.f32.gmra.mxu0 %v790
    %v863 = vpop.f32.mrf.mxu0
    %v864 = vadd.f32 0.0, %v863
    %v865 = vpop.f32.mrf.mxu0
    %866 = vdwg.mxu0
    %867 = vrot.lane.b32.xlu0 %v453, 112
    %v868 = vpop.permute.xlu0 %867
    %869 = vrot.lane.b32.xlu0 %v458, 112
    %v870 = vpop.permute.xlu0 %869
    %871 = vrot.lane.b32.xlu0 %v453, 80
    %v872 = vpop.permute.xlu0 %871
    %873 = vrot.lane.b32.xlu0 %v458, 80
    %v874 = vpop.permute.xlu0 %873
    %v875 = vsel %vm467, %v868, 0
    %v877 = vsel %vm467, %v870, 0
    %v879 = vsel %vm467, %v872, 0
    %v881 = vsel %vm467, %v874, 0
    %883 = vmatprep.subr.mxu0 0.0
    %884 = vmatpush1.xpose.msra.mxu0 0.0
    %885 = vmatprep.subr.mxu0 0.0
    %886 = vmatpush1.xpose.msra.mxu0 0.0
    %887 = vmatprep.subr.mxu0 0.0
    %888 = vmatpush1.xpose.msra.mxu0 0.0
    %889 = vmatprep.subr.mxu0 0.0
    %890 = vmatpush1.xpose.msra.mxu0 0.0
    %891 = vmatprep.subr.mxu0 0.0
    %892 = vmatpush1.xpose.msra.mxu0 0.0
    %893 = vmatprep.subr.mxu0 0.0
    %894 = vmatpush1.xpose.msra.mxu0 0.0
    %895 = vmatprep.subr.mxu0 0.0
    %896 = vmatpush1.xpose.msra.mxu0 0.0
    %897 = vmatprep.subr.mxu0 0.0
    %898 = vmatpush1.xpose.msra.mxu0 0.0
    %899 = vmatprep.subr.mxu0 0.0
    %900 = vmatpush1.xpose.msra.mxu0 0.0
    %901 = vmatprep.subr.mxu0 0.0
    %902 = vmatpush1.xpose.msra.mxu0 0.0
    %903 = vmatprep.subr.mxu0 0.0
    %904 = vmatpush1.xpose.msra.mxu0 0.0
    %905 = vmatprep.subr.mxu0 0.0
    %906 = vmatpush1.xpose.msra.mxu0 0.0
    %907 = vmatprep.subr.mxu0 0.0
    %908 = vmatpush1.xpose.msra.mxu0 0.0
    %909 = vmatprep.subr.mxu0 0.0
    %910 = vmatpush1.xpose.msra.mxu0 0.0
    %911 = vmatprep.subr.mxu0 0.0
    %912 = vmatpush1.xpose.msra.mxu0 %v881
    %913 = vmatprep.subr.mxu0 0.0
    %914 = vmatpush1.xpose.msra.mxu0 %v879
    %915 = vmatprep.subr.mxu0 0.0
    %916 = vmatpush2.xpose.msra.mxu0 0.0
    %917 = vmatprep.subr.mxu0 0.0
    %918 = vmatpush2.xpose.msra.mxu0 0.0
    %919 = vmatprep.subr.mxu0 0.0
    %920 = vmatpush2.xpose.msra.mxu0 0.0
    %921 = vmatprep.subr.mxu0 0.0
    %922 = vmatpush2.xpose.msra.mxu0 0.0
    %923 = vmatprep.subr.mxu0 0.0
    %924 = vmatpush2.xpose.msra.mxu0 0.0
    %925 = vmatprep.subr.mxu0 0.0
    %926 = vmatpush2.xpose.msra.mxu0 0.0
    %927 = vmatprep.subr.mxu0 0.0
    %928 = vmatpush2.xpose.msra.mxu0 0.0
    %929 = vmatprep.subr.mxu0 0.0
    %930 = vmatpush2.xpose.msra.mxu0 0.0
    %931 = vmatprep.subr.mxu0 0.0
    %932 = vmatpush2.xpose.msra.mxu0 0.0
    %933 = vmatprep.subr.mxu0 0.0
    %934 = vmatpush2.xpose.msra.mxu0 0.0
    %935 = vmatprep.subr.mxu0 0.0
    %936 = vmatpush2.xpose.msra.mxu0 0.0
    %937 = vmatprep.subr.mxu0 0.0
    %938 = vmatpush2.xpose.msra.mxu0 0.0
    %939 = vmatprep.subr.mxu0 0.0
    %940 = vmatpush2.xpose.msra.mxu0 0.0
    %941 = vmatprep.subr.mxu0 0.0
    %942 = vmatpush2.xpose.msra.mxu0 0.0
    %943 = vmatprep.subr.mxu0 0.0
    %944 = vmatpush2.xpose.msra.mxu0 0.0
    %945 = vmatprep.subr.mxu0 0.0
    %946 = vmatpush2.xpose.msra.mxu0 0.0
    %947 = vmatprep.mubr.f32.mxu0 0.0
    %948 = vmatmul.mubr.f32.gmra.mxu0 %v875
    %v949 = vpop.f32.mrf.mxu0
    %v950 = vadd.f32 0.0, %v949
    %v951 = vpop.f32.mrf.mxu0
    %952 = vmatprep.mubr.f32.mxu0 0.0
    %953 = vmatmul.mubr.f32.gmra.mxu0 %v877
    %v954 = vpop.f32.mrf.mxu0
    %v955 = vadd.f32 0.0, %v954
    %v956 = vpop.f32.mrf.mxu0
    %957 = vdwg.mxu0
    %v958 = vsel %vm551, %v950, %v149
    %v959 = vsel %vm552, %v955, %v150
    %v960 = vsel %vm555, %v958, -inf
    %961 = vmax.xlane.f32.xlu0 %v960
    %v962 = vpop.xlane.xlu0 %961
    %v963 = vsel %vm555, %v959, -inf
    %964 = vmax.xlane.f32.xlu0 %v963
    %v965 = vpop.xlane.xlu0 %964
    %v966 = vsub.f32 %v958, %v962
    %v967 = vsub.f32 %v959, %v965
    %v968 = vmul.f32 %v966, 1.442695
    %v969 = vpow.pop %v968
    %v970 = vmul.f32 %v967, 1.442695
    %v971 = vpow.pop %v970
    %v972 = vsel %vm555, %v969, 0.0
    %973 = vadd.xlane.f32.xlu0 %v972
    %v974 = vpop.xlane.xlu0 %973
    %v975 = vsel %vm555, %v971, 0.0
    %976 = vadd.xlane.f32.xlu0 %v975
    %v977 = vpop.xlane.xlu0 %976
    %v978 = vrcp.pop %v974
    %v979 = vmul.f32 %v969, %v978
    %v980 = vrcp.pop %v977
    %v981 = vmul.f32 %v971, %v980
    %982 = vrot.lane.b32.xlu0 %v453, 48
    %v983 = vpop.permute.xlu0 %982
    %984 = vrot.lane.b32.xlu0 %v458, 48
    %v985 = vpop.permute.xlu0 %984
    %v989 = vsel %vm555, %v979, 0
    %v992 = vsel %vm555, %v981, 0
    %994 = vmatprep.subr.mxu0 0.0
    %995 = vmatpush1.msra.mxu0 0.0
    %996 = vmatprep.subr.mxu0 0.0
    %997 = vmatpush1.msra.mxu0 0.0
    %998 = vmatprep.subr.mxu0 0.0
    %999 = vmatpush1.msra.mxu0 0.0
    %1000 = vmatprep.subr.mxu0 0.0
    %1001 = vmatpush1.msra.mxu0 0.0
    %1002 = vmatprep.subr.mxu0 0.0
    %1003 = vmatpush1.msra.mxu0 0.0
    %1004 = vmatprep.subr.mxu0 0.0
    %1005 = vmatpush1.msra.mxu0 0.0
    %1006 = vmatprep.subr.mxu0 0.0
    %1007 = vmatpush1.msra.mxu0 0.0
    %1008 = vmatprep.subr.mxu0 0.0
    %1009 = vmatpush1.msra.mxu0 0.0
    %1010 = vmatprep.subr.mxu0 0.0
    %1011 = vmatpush1.msra.mxu0 0.0
    %1012 = vmatprep.subr.mxu0 0.0
    %1013 = vmatpush1.msra.mxu0 0.0
    %1014 = vmatprep.subr.mxu0 0.0
    %1015 = vmatpush1.msra.mxu0 0.0
    %1016 = vmatprep.subr.mxu0 0.0
    %1017 = vmatpush1.msra.mxu0 0.0
    %1018 = vmatprep.subr.mxu0 0.0
    %1019 = vmatpush1.msra.mxu0 0.0
    %1020 = vmatprep.subr.mxu0 0.0
    %1021 = vmatpush1.msra.mxu0 0.0
    %1022 = vmatprep.subr.mxu0 0.0
    %1023 = vmatpush1.msra.mxu0 %v985
    %1024 = vmatprep.subr.mxu0 0.0
    %1025 = vmatpush1.msra.mxu0 %v983
    %1026 = vmatprep.subr.mxu0 0.0
    %1027 = vmatpush2.msra.mxu0 0.0
    %1028 = vmatprep.subr.mxu0 0.0
    %1029 = vmatpush2.msra.mxu0 0.0
    %1030 = vmatprep.subr.mxu0 0.0
    %1031 = vmatpush2.msra.mxu0 0.0
    %1032 = vmatprep.subr.mxu0 0.0
    %1033 = vmatpush2.msra.mxu0 0.0
    %1034 = vmatprep.subr.mxu0 0.0
    %1035 = vmatpush2.msra.mxu0 0.0
    %1036 = vmatprep.subr.mxu0 0.0
    %1037 = vmatpush2.msra.mxu0 0.0
    %1038 = vmatprep.subr.mxu0 0.0
    %1039 = vmatpush2.msra.mxu0 0.0
    %1040 = vmatprep.subr.mxu0 0.0
    %1041 = vmatpush2.msra.mxu0 0.0
    %1042 = vmatprep.subr.mxu0 0.0
    %1043 = vmatpush2.msra.mxu0 0.0
    %1044 = vmatprep.subr.mxu0 0.0
    %1045 = vmatpush2.msra.mxu0 0.0
    %1046 = vmatprep.subr.mxu0 0.0
    %1047 = vmatpush2.msra.mxu0 0.0
    %1048 = vmatprep.subr.mxu0 0.0
    %1049 = vmatpush2.msra.mxu0 0.0
    %1050 = vmatprep.subr.mxu0 0.0
    %1051 = vmatpush2.msra.mxu0 0.0
    %1052 = vmatprep.subr.mxu0 0.0
    %1053 = vmatpush2.msra.mxu0 0.0
    %1054 = vmatprep.subr.mxu0 0.0
    %1055 = vmatpush2.msra.mxu0 0.0
    %1056 = vmatprep.subr.mxu0 0.0
    %1057 = vmatpush2.msra.mxu0 0.0
    %1058 = vmatprep.mubr.f32.mxu0 0.0
    %1059 = vmatmul.mubr.f32.gmra.mxu0 %v989
    %v1060 = vpop.f32.mrf.mxu0
    %v1061 = vadd.f32 0.0, %v1060
    %v1062 = vpop.f32.mrf.mxu0
    %1063 = vmatprep.mubr.f32.mxu0 0.0
    %1064 = vmatmul.mubr.f32.gmra.mxu0 %v992
    %v1065 = vpop.f32.mrf.mxu0
    %v1066 = vadd.f32 0.0, %v1065
    %v1067 = vpop.f32.mrf.mxu0
    %1068 = vdwg.mxu0
    %1069 = vrot.lane.b32.xlu0 %v453, 104
    %v1070 = vpop.permute.xlu0 %1069
    %1071 = vrot.lane.b32.xlu0 %v458, 104
    %v1072 = vpop.permute.xlu0 %1071
    %1073 = vrot.lane.b32.xlu0 %v453, 72
    %v1074 = vpop.permute.xlu0 %1073
    %1075 = vrot.lane.b32.xlu0 %v458, 72
    %v1076 = vpop.permute.xlu0 %1075
    %v1077 = vsel %vm467, %v1070, 0
    %v1079 = vsel %vm467, %v1072, 0
    %v1081 = vsel %vm467, %v1074, 0
    %v1083 = vsel %vm467, %v1076, 0
    %1085 = vmatprep.subr.mxu0 0.0
    %1086 = vmatpush1.xpose.msra.mxu0 0.0
    %1087 = vmatprep.subr.mxu0 0.0
    %1088 = vmatpush1.xpose.msra.mxu0 0.0
    %1089 = vmatprep.subr.mxu0 0.0
    %1090 = vmatpush1.xpose.msra.mxu0 0.0
    %1091 = vmatprep.subr.mxu0 0.0
    %1092 = vmatpush1.xpose.msra.mxu0 0.0
    %1093 = vmatprep.subr.mxu0 0.0
    %1094 = vmatpush1.xpose.msra.mxu0 0.0
    %1095 = vmatprep.subr.mxu0 0.0
    %1096 = vmatpush1.xpose.msra.mxu0 0.0
    %1097 = vmatprep.subr.mxu0 0.0
    %1098 = vmatpush1.xpose.msra.mxu0 0.0
    %1099 = vmatprep.subr.mxu0 0.0
    %1100 = vmatpush1.xpose.msra.mxu0 0.0
    %1101 = vmatprep.subr.mxu0 0.0
    %1102 = vmatpush1.xpose.msra.mxu0 0.0
    %1103 = vmatprep.subr.mxu0 0.0
    %1104 = vmatpush1.xpose.msra.mxu0 0.0
    %1105 = vmatprep.subr.mxu0 0.0
    %1106 = vmatpush1.xpose.msra.mxu0 0.0
    %1107 = vmatprep.subr.mxu0 0.0
    %1108 = vmatpush1.xpose.msra.mxu0 0.0
    %1109 = vmatprep.subr.mxu0 0.0
    %1110 = vmatpush1.xpose.msra.mxu0 0.0
    %1111 = vmatprep.subr.mxu0 0.0
    %1112 = vmatpush1.xpose.msra.mxu0 0.0
    %1113 = vmatprep.subr.mxu0 0.0
    %1114 = vmatpush1.xpose.msra.mxu0 %v1083
    %1115 = vmatprep.subr.mxu0 0.0
    %1116 = vmatpush1.xpose.msra.mxu0 %v1081
    %1117 = vmatprep.subr.mxu0 0.0
    %1118 = vmatpush2.xpose.msra.mxu0 0.0
    %1119 = vmatprep.subr.mxu0 0.0
    %1120 = vmatpush2.xpose.msra.mxu0 0.0
    %1121 = vmatprep.subr.mxu0 0.0
    %1122 = vmatpush2.xpose.msra.mxu0 0.0
    %1123 = vmatprep.subr.mxu0 0.0
    %1124 = vmatpush2.xpose.msra.mxu0 0.0
    %1125 = vmatprep.subr.mxu0 0.0
    %1126 = vmatpush2.xpose.msra.mxu0 0.0
    %1127 = vmatprep.subr.mxu0 0.0
    %1128 = vmatpush2.xpose.msra.mxu0 0.0
    %1129 = vmatprep.subr.mxu0 0.0
    %1130 = vmatpush2.xpose.msra.mxu0 0.0
    %1131 = vmatprep.subr.mxu0 0.0
    %1132 = vmatpush2.xpose.msra.mxu0 0.0
    %1133 = vmatprep.subr.mxu0 0.0
    %1134 = vmatpush2.xpose.msra.mxu0 0.0
    %1135 = vmatprep.subr.mxu0 0.0
    %1136 = vmatpush2.xpose.msra.mxu0 0.0
    %1137 = vmatprep.subr.mxu0 0.0
    %1138 = vmatpush2.xpose.msra.mxu0 0.0
    %1139 = vmatprep.subr.mxu0 0.0
    %1140 = vmatpush2.xpose.msra.mxu0 0.0
    %1141 = vmatprep.subr.mxu0 0.0
    %1142 = vmatpush2.xpose.msra.mxu0 0.0
    %1143 = vmatprep.subr.mxu0 0.0
    %1144 = vmatpush2.xpose.msra.mxu0 0.0
    %1145 = vmatprep.subr.mxu0 0.0
    %1146 = vmatpush2.xpose.msra.mxu0 0.0
    %1147 = vmatprep.subr.mxu0 0.0
    %1148 = vmatpush2.xpose.msra.mxu0 0.0
    %1149 = vmatprep.mubr.f32.mxu0 0.0
    %1150 = vmatmul.mubr.f32.gmra.mxu0 %v1077
    %v1151 = vpop.f32.mrf.mxu0
    %v1152 = vadd.f32 0.0, %v1151
    %v1153 = vpop.f32.mrf.mxu0
    %1154 = vmatprep.mubr.f32.mxu0 0.0
    %1155 = vmatmul.mubr.f32.gmra.mxu0 %v1079
    %v1156 = vpop.f32.mrf.mxu0
    %v1157 = vadd.f32 0.0, %v1156
    %v1158 = vpop.f32.mrf.mxu0
    %1159 = vdwg.mxu0
    %v1160 = vsel %vm551, %v1152, %v149
    %v1161 = vsel %vm552, %v1157, %v150
    %v1162 = vsel %vm555, %v1160, -inf
    %1163 = vmax.xlane.f32.xlu0 %v1162
    %v1164 = vpop.xlane.xlu0 %1163
    %v1165 = vsel %vm555, %v1161, -inf
    %1166 = vmax.xlane.f32.xlu0 %v1165
    %v1167 = vpop.xlane.xlu0 %1166
    %v1168 = vsub.f32 %v1160, %v1164
    %v1169 = vsub.f32 %v1161, %v1167
    %v1170 = vmul.f32 %v1168, 1.442695
    %v1171 = vpow.pop %v1170
    %v1172 = vmul.f32 %v1169, 1.442695
    %v1173 = vpow.pop %v1172
    %v1174 = vsel %vm555, %v1171, 0.0
    %1175 = vadd.xlane.f32.xlu0 %v1174
    %v1176 = vpop.xlane.xlu0 %1175
    %v1177 = vsel %vm555, %v1173, 0.0
    %1178 = vadd.xlane.f32.xlu0 %v1177
    %v1179 = vpop.xlane.xlu0 %1178
    %v1180 = vrcp.pop %v1176
    %v1181 = vmul.f32 %v1171, %v1180
    %v1182 = vrcp.pop %v1179
    %v1183 = vmul.f32 %v1173, %v1182
    %1184 = vrot.lane.b32.xlu0 %v453, 40
    %v1185 = vpop.permute.xlu0 %1184
    %1186 = vrot.lane.b32.xlu0 %v458, 40
    %v1187 = vpop.permute.xlu0 %1186
    %v1191 = vsel %vm555, %v1181, 0
    %v1194 = vsel %vm555, %v1183, 0
    %1196 = vmatprep.subr.mxu0 0.0
    %1197 = vmatpush1.msra.mxu0 0.0
    %1198 = vmatprep.subr.mxu0 0.0
    %1199 = vmatpush1.msra.mxu0 0.0
    %1200 = vmatprep.subr.mxu0 0.0
    %1201 = vmatpush1.msra.mxu0 0.0
    %1202 = vmatprep.subr.mxu0 0.0
    %1203 = vmatpush1.msra.mxu0 0.0
    %1204 = vmatprep.subr.mxu0 0.0
    %1205 = vmatpush1.msra.mxu0 0.0
    %1206 = vmatprep.subr.mxu0 0.0
    %1207 = vmatpush1.msra.mxu0 0.0
    %1208 = vmatprep.subr.mxu0 0.0
    %1209 = vmatpush1.msra.mxu0 0.0
    %1210 = vmatprep.subr.mxu0 0.0
    %1211 = vmatpush1.msra.mxu0 0.0
    %1212 = vmatprep.subr.mxu0 0.0
    %1213 = vmatpush1.msra.mxu0 0.0
    %1214 = vmatprep.subr.mxu0 0.0
    %1215 = vmatpush1.msra.mxu0 0.0
    %1216 = vmatprep.subr.mxu0 0.0
    %1217 = vmatpush1.msra.mxu0 0.0
    %1218 = vmatprep.subr.mxu0 0.0
    %1219 = vmatpush1.msra.mxu0 0.0
    %1220 = vmatprep.subr.mxu0 0.0
    %1221 = vmatpush1.msra.mxu0 0.0
    %1222 = vmatprep.subr.mxu0 0.0
    %1223 = vmatpush1.msra.mxu0 0.0
    %1224 = vmatprep.subr.mxu0 0.0
    %1225 = vmatpush1.msra.mxu0 %v1187
    %1226 = vmatprep.subr.mxu0 0.0
    %1227 = vmatpush1.msra.mxu0 %v1185
    %1228 = vmatprep.subr.mxu0 0.0
    %1229 = vmatpush2.msra.mxu0 0.0
    %1230 = vmatprep.subr.mxu0 0.0
    %1231 = vmatpush2.msra.mxu0 0.0
    %1232 = vmatprep.subr.mxu0 0.0
    %1233 = vmatpush2.msra.mxu0 0.0
    %1234 = vmatprep.subr.mxu0 0.0
    %1235 = vmatpush2.msra.mxu0 0.0
    %1236 = vmatprep.subr.mxu0 0.0
    %1237 = vmatpush2.msra.mxu0 0.0
    %1238 = vmatprep.subr.mxu0 0.0
    %1239 = vmatpush2.msra.mxu0 0.0
    %1240 = vmatprep.subr.mxu0 0.0
    %1241 = vmatpush2.msra.mxu0 0.0
    %1242 = vmatprep.subr.mxu0 0.0
    %1243 = vmatpush2.msra.mxu0 0.0
    %1244 = vmatprep.subr.mxu0 0.0
    %1245 = vmatpush2.msra.mxu0 0.0
    %1246 = vmatprep.subr.mxu0 0.0
    %1247 = vmatpush2.msra.mxu0 0.0
    %1248 = vmatprep.subr.mxu0 0.0
    %1249 = vmatpush2.msra.mxu0 0.0
    %1250 = vmatprep.subr.mxu0 0.0
    %1251 = vmatpush2.msra.mxu0 0.0
    %1252 = vmatprep.subr.mxu0 0.0
    %1253 = vmatpush2.msra.mxu0 0.0
    %1254 = vmatprep.subr.mxu0 0.0
    %1255 = vmatpush2.msra.mxu0 0.0
    %1256 = vmatprep.subr.mxu0 0.0
    %1257 = vmatpush2.msra.mxu0 0.0
    %1258 = vmatprep.subr.mxu0 0.0
    %1259 = vmatpush2.msra.mxu0 0.0
    %1260 = vmatprep.mubr.f32.mxu0 0.0
    %1261 = vmatmul.mubr.f32.gmra.mxu0 %v1191
    %v1262 = vpop.f32.mrf.mxu0
    %v1263 = vadd.f32 0.0, %v1262
    %v1264 = vpop.f32.mrf.mxu0
    %1265 = vmatprep.mubr.f32.mxu0 0.0
    %1266 = vmatmul.mubr.f32.gmra.mxu0 %v1194
    %v1267 = vpop.f32.mrf.mxu0
    %v1268 = vadd.f32 0.0, %v1267
    %v1269 = vpop.f32.mrf.mxu0
    %1270 = vdwg.mxu0
    %1273 = vrot.lane.b32.xlu0 %v859, 8
    %v1274 = vpop.permute.xlu0 %1273
    %1275 = vrot.lane.b32.xlu0 %v864, 8
    %v1276 = vpop.permute.xlu0 %1275
    %1281 = vrot.lane.b32.xlu0 %v1061, 16
    %v1282 = vpop.permute.xlu0 %1281
    %1283 = vrot.lane.b32.xlu0 %v1066, 16
    %v1284 = vpop.permute.xlu0 %1283
    %1289 = vrot.lane.b32.xlu0 %v1263, 24
    %v1290 = vpop.permute.xlu0 %1289
    %1291 = vrot.lane.b32.xlu0 %v1268, 24
    %v1292 = vpop.permute.xlu0 %1291
    %v1295 = vsel %vm467, %v657, %v1274
    %v1296 = vsel %vm467, %v662, %v1276
    %v1297 = vsel %vm555, %v1295, %v1282
    %v1298 = vsel %vm555, %v1296, %v1284
    %vm1299 = vcmask 195584
    %v1300 = vsel %vm1299, %v1297, %v1290
    %v1301 = vsel %vm1299, %v1298, %v1292
    %v1303 = vlaneseq
    %v1304 = vshrl.u32 %v1303, 7
    %v1305 = vsub.s32 0, %v1304
    %v1306 = vrot.slane %v372, %v1305
    %v1309 = vsel %vm379, %v1300, 0
    %v1312 = vsel %vm379, %v1301, 0
    %1314 = vmatprep.subr.mxu0 0.0
    %1315 = vmatpush1.msra.mxu0 0.0
    %1316 = vmatprep.subr.mxu0 0.0
    %1317 = vmatpush1.msra.mxu0 0.0
    %1318 = vmatprep.subr.mxu0 0.0
    %1319 = vmatpush1.msra.mxu0 0.0
    %1320 = vmatprep.subr.mxu0 0.0
    %1321 = vmatpush1.msra.mxu0 0.0
    %1322 = vmatprep.subr.mxu0 0.0
    %1323 = vmatpush1.msra.mxu0 0.0
    %1324 = vmatprep.subr.mxu0 0.0
    %1325 = vmatpush1.msra.mxu0 0.0
    %1326 = vmatprep.subr.mxu0 0.0
    %1327 = vmatpush1.msra.mxu0 0.0
    %1328 = vmatprep.subr.mxu0 0.0
    %1329 = vmatpush1.msra.mxu0 0.0
    %1330 = vmatprep.subr.mxu0 0.0
    %1331 = vmatpush1.msra.mxu0 0.0
    %1332 = vmatprep.subr.mxu0 0.0
    %1333 = vmatpush1.msra.mxu0 0.0
    %1334 = vmatprep.subr.mxu0 0.0
    %1335 = vmatpush1.msra.mxu0 0.0
    %1336 = vmatprep.subr.mxu0 0.0
    %1337 = vmatpush1.msra.mxu0 0.0
    %1338 = vmatprep.subr.mxu0 0.0
    %1339 = vmatpush1.msra.mxu0 %v371
    %1340 = vmatprep.subr.mxu0 0.0
    %1341 = vmatpush1.msra.mxu0 %v370
    %1342 = vmatprep.subr.mxu0 0.0
    %1343 = vmatpush1.msra.mxu0 %v369
    %1344 = vmatprep.subr.mxu0 0.0
    %1345 = vmatpush1.msra.mxu0 %v368
    %1346 = vmatprep.subr.mxu0 0.0
    %1347 = vmatpush2.msra.mxu0 0.0
    %1348 = vmatprep.subr.mxu0 0.0
    %1349 = vmatpush2.msra.mxu0 0.0
    %1350 = vmatprep.subr.mxu0 0.0
    %1351 = vmatpush2.msra.mxu0 0.0
    %1352 = vmatprep.subr.mxu0 0.0
    %1353 = vmatpush2.msra.mxu0 0.0
    %1354 = vmatprep.subr.mxu0 0.0
    %1355 = vmatpush2.msra.mxu0 0.0
    %1356 = vmatprep.subr.mxu0 0.0
    %1357 = vmatpush2.msra.mxu0 0.0
    %1358 = vmatprep.subr.mxu0 0.0
    %1359 = vmatpush2.msra.mxu0 0.0
    %1360 = vmatprep.subr.mxu0 0.0
    %1361 = vmatpush2.msra.mxu0 0.0
    %1362 = vmatprep.subr.mxu0 0.0
    %1363 = vmatpush2.msra.mxu0 0.0
    %1364 = vmatprep.subr.mxu0 0.0
    %1365 = vmatpush2.msra.mxu0 0.0
    %1366 = vmatprep.subr.mxu0 0.0
    %1367 = vmatpush2.msra.mxu0 0.0
    %1368 = vmatprep.subr.mxu0 0.0
    %1369 = vmatpush2.msra.mxu0 0.0
    %1370 = vmatprep.subr.mxu0 0.0
    %1371 = vmatpush2.msra.mxu0 0.0
    %1372 = vmatprep.subr.mxu0 0.0
    %1373 = vmatpush2.msra.mxu0 0.0
    %1374 = vmatprep.subr.mxu0 0.0
    %1375 = vmatpush2.msra.mxu0 0.0
    %1376 = vmatprep.subr.mxu0 0.0
    %1377 = vmatpush2.msra.mxu0 0.0
    %1378 = vmatprep.mubr.f32.mxu0 0.0
    %1379 = vmatmul.mubr.f32.gmra.mxu0 %v1309
    %v1380 = vpop.f32.mrf.mxu0
    %v1381 = vadd.f32 %v1306, %v1380
    %v1382 = vpop.f32.mrf.mxu0
    %1383 = vmatprep.mubr.f32.mxu0 0.0
    %1384 = vmatmul.mubr.f32.gmra.mxu0 %v1312
    %v1385 = vpop.f32.mrf.mxu0
    %v1386 = vadd.f32 %v1306, %v1385
    %v1387 = vpop.f32.mrf.mxu0
    %1388 = vdwg.mxu0
    %v1389 = vadd.f32 %v250, %v1381
    %v1390 = vadd.f32 %v255, %v1386
    %v1391 = vld [vmem:[%s25] sm:$0x1]
    %v1392 = vld [vmem:[%s27] sm:$0x1]
    %v1393 = vsel %vm379, %v1389, 0.0
    %1394 = vadd.xlane.f32.xlu0 %v1393
    %v1395 = vpop.xlane.xlu0 %1394
    %v1396 = vsel %vm379, %v1390, 0.0
    %1397 = vadd.xlane.f32.xlu0 %v1396
    %v1398 = vpop.xlane.xlu0 %1397
    %v1399 = vrcp.pop 32.0
    %v1400 = vmul.f32 %v1395, %v1399
    %v1401 = vmul.f32 %v1398, %v1399
    %v1402 = vsub.f32 %v1389, %v1400
    %v1403 = vsub.f32 %v1390, %v1401
    %v1404 = vmul.f32 %v1402, %v1402
    %v1405 = vmul.f32 %v1403, %v1403
    %v1406 = vsel %vm379, %v1404, 0.0
    %1407 = vadd.xlane.f32.xlu0 %v1406
    %v1408 = vpop.xlane.xlu0 %1407
    %v1409 = vsel %vm379, %v1405, 0.0
    %1410 = vadd.xlane.f32.xlu0 %v1409
    %v1411 = vpop.xlane.xlu0 %1410
    %v1412 = vmul.f32 %v1408, %v1399
    %v1413 = vmul.f32 %v1411, %v1399
    %v1414 = vadd.f32 %v1412, 1e-05
    %v1415 = vadd.f32 %v1413, 1e-05
    %v1416 = vrsqrt.pop %v1414
    %v1417 = vrsqrt.pop %v1415
    %v1418 = vmul.f32 %v1402, %v1416
    %v1419 = vmul.f32 %v1403, %v1417
    %v1421 = vlaneseq
    %v1422 = vshrl.u32 %v1421, 7
    %v1423 = vsub.s32 0, %v1422
    %v1424 = vrot.slane %v1391, %v1423
    %v1426 = vmul.f32 %v1418, %v1424
    %v1427 = vmul.f32 %v1419, %v1424
    %v1429 = vlaneseq
    %v1430 = vshrl.u32 %v1429, 7
    %v1431 = vsub.s32 0, %v1430
    %v1432 = vrot.slane %v1392, %v1431
    %v1434 = vadd.f32 %v1426, %v1432
    %v1435 = vadd.f32 %v1427, %v1432
    %v1436 = vld [vmem:[%s29] sm:$0xff]
    %v1437 = vld [vmem:[%s29 + $0x8] sm:$0xff]
    %v1438 = vld [vmem:[%s29 + $0x10] sm:$0xff]
    %v1439 = vld [vmem:[%s29 + $0x18] sm:$0xff]
    %v1440 = vld [vmem:[%s31] sm:$0x1]
    %v1441 = vld [vmem:[%s33] sm:$0xff]
    %v1442 = vld [vmem:[%s33 + $0x8] sm:$0xff]
    %v1443 = vld [vmem:[%s33 + $0x10] sm:$0xff]
    %v1444 = vld [vmem:[%s33 + $0x18] sm:$0xff]
    %v1445 = vld [vmem:[%s33 + $0x20] sm:$0xff]
    %v1446 = vld [vmem:[%s33 + $0x28] sm:$0xff]
    %v1447 = vld [vmem:[%s33 + $0x30] sm:$0xff]
    %v1448 = vld [vmem:[%s33 + $0x38] sm:$0xff]
    %v1449 = vld [vmem:[%s35] sm:$0x1]
    %v1451 = vlaneseq
    %v1452 = vshrl.u32 %v1451, 7
    %v1453 = vsub.s32 0, %v1452
    %v1454 = vrot.slane %v1440, %v1453
    %v1457 = vsel %vm379, %v1434, 0
    %v1460 = vsel %vm379, %v1435, 0
    %1462 = vmatprep.subr.mxu0 0.0
    %1463 = vmatpush1.msra.mxu0 0.0
    %1464 = vmatprep.subr.mxu0 0.0
    %1465 = vmatpush1.msra.mxu0 0.0
    %1466 = vmatprep.subr.mxu0 0.0
    %1467 = vmatpush1.msra.mxu0 0.0
    %1468 = vmatprep.subr.mxu0 0.0
    %1469 = vmatpush1.msra.mxu0 0.0
    %1470 = vmatprep.subr.mxu0 0.0
    %1471 = vmatpush1.msra.mxu0 0.0
    %1472 = vmatprep.subr.mxu0 0.0
    %1473 = vmatpush1.msra.mxu0 0.0
    %1474 = vmatprep.subr.mxu0 0.0
    %1475 = vmatpush1.msra.mxu0 0.0
    %1476 = vmatprep.subr.mxu0 0.0
    %1477 = vmatpush1.msra.mxu0 0.0
    %1478 = vmatprep.subr.mxu0 0.0
    %1479 = vmatpush1.msra.mxu0 0.0
    %1480 = vmatprep.subr.mxu0 0.0
    %1481 = vmatpush1.msra.mxu0 0.0
    %1482 = vmatprep.subr.mxu0 0.0
    %1483 = vmatpush1.msra.mxu0 0.0
    %1484 = vmatprep.subr.mxu0 0.0
    %1485 = vmatpush1.msra.mxu0 0.0
    %1486 = vmatprep.subr.mxu0 0.0
    %1487 = vmatpush1.msra.mxu0 %v1439
    %1488 = vmatprep.subr.mxu0 0.0
    %1489 = vmatpush1.msra.mxu0 %v1438
    %1490 = vmatprep.subr.mxu0 0.0
    %1491 = vmatpush1.msra.mxu0 %v1437
    %1492 = vmatprep.subr.mxu0 0.0
    %1493 = vmatpush1.msra.mxu0 %v1436
    %1494 = vmatprep.subr.mxu0 0.0
    %1495 = vmatpush2.msra.mxu0 0.0
    %1496 = vmatprep.subr.mxu0 0.0
    %1497 = vmatpush2.msra.mxu0 0.0
    %1498 = vmatprep.subr.mxu0 0.0
    %1499 = vmatpush2.msra.mxu0 0.0
    %1500 = vmatprep.subr.mxu0 0.0
    %1501 = vmatpush2.msra.mxu0 0.0
    %1502 = vmatprep.subr.mxu0 0.0
    %1503 = vmatpush2.msra.mxu0 0.0
    %1504 = vmatprep.subr.mxu0 0.0
    %1505 = vmatpush2.msra.mxu0 0.0
    %1506 = vmatprep.subr.mxu0 0.0
    %1507 = vmatpush2.msra.mxu0 0.0
    %1508 = vmatprep.subr.mxu0 0.0
    %1509 = vmatpush2.msra.mxu0 0.0
    %1510 = vmatprep.subr.mxu0 0.0
    %1511 = vmatpush2.msra.mxu0 0.0
    %1512 = vmatprep.subr.mxu0 0.0
    %1513 = vmatpush2.msra.mxu0 0.0
    %1514 = vmatprep.subr.mxu0 0.0
    %1515 = vmatpush2.msra.mxu0 0.0
    %1516 = vmatprep.subr.mxu0 0.0
    %1517 = vmatpush2.msra.mxu0 0.0
    %1518 = vmatprep.subr.mxu0 0.0
    %1519 = vmatpush2.msra.mxu0 0.0
    %1520 = vmatprep.subr.mxu0 0.0
    %1521 = vmatpush2.msra.mxu0 0.0
    %1522 = vmatprep.subr.mxu0 0.0
    %1523 = vmatpush2.msra.mxu0 0.0
    %1524 = vmatprep.subr.mxu0 0.0
    %1525 = vmatpush2.msra.mxu0 0.0
    %1526 = vmatprep.mubr.f32.mxu0 0.0
    %1527 = vmatmul.mubr.f32.gmra.mxu0 %v1457
    %v1528 = vpop.f32.mrf.mxu0
    %v1529 = vadd.f32 %v1454, %v1528
    %v1530 = vpop.f32.mrf.mxu0
    %1531 = vmatprep.mubr.f32.mxu0 0.0
    %1532 = vmatmul.mubr.f32.gmra.mxu0 %v1460
    %v1533 = vpop.f32.mrf.mxu0
    %v1534 = vadd.f32 %v1454, %v1533
    %v1535 = vpop.f32.mrf.mxu0
    %1536 = vdwg.mxu0
    %v1537 = vmax.f32 %v1529, 0.0
    %v1538 = vmax.f32 %v1534, 0.0
    %v1540 = vlaneseq
    %v1541 = vshrl.u32 %v1540, 7
    %v1542 = vsub.s32 0, %v1541
    %v1543 = vrot.slane %v1449, %v1542
    %vm1545 = vcmask 523264
    %v1547 = vsel %vm1545, %v1537, 0
    %v1550 = vsel %vm1545, %v1538, 0
    %1552 = vmatprep.subr.mxu0 0.0
    %1553 = vmatpush1.msra.mxu0 0.0
    %1554 = vmatprep.subr.mxu0 0.0
    %1555 = vmatpush1.msra.mxu0 0.0
    %1556 = vmatprep.subr.mxu0 0.0
    %1557 = vmatpush1.msra.mxu0 0.0
    %1558 = vmatprep.subr.mxu0 0.0
    %1559 = vmatpush1.msra.mxu0 0.0
    %1560 = vmatprep.subr.mxu0 0.0
    %1561 = vmatpush1.msra.mxu0 0.0
    %1562 = vmatprep.subr.mxu0 0.0
    %1563 = vmatpush1.msra.mxu0 0.0
    %1564 = vmatprep.subr.mxu0 0.0
    %1565 = vmatpush1.msra.mxu0 0.0
    %1566 = vmatprep.subr.mxu0 0.0
    %1567 = vmatpush1.msra.mxu0 0.0
    %1568 = vmatprep.subr.mxu0 0.0
    %1569 = vmatpush1.msra.mxu0 %v1448
    %1570 = vmatprep.subr.mxu0 0.0
    %1571 = vmatpush1.msra.mxu0 %v1447
    %1572 = vmatprep.subr.mxu0 0.0
    %1573 = vmatpush1.msra.mxu0 %v1446
    %1574 = vmatprep.subr.mxu0 0.0
    %1575 = vmatpush1.msra.mxu0 %v1445
    %1576 = vmatprep.subr.mxu0 0.0
    %1577 = vmatpush1.msra.mxu0 %v1444
    %1578 = vmatprep.subr.mxu0 0.0
    %1579 = vmatpush1.msra.mxu0 %v1443
    %1580 = vmatprep.subr.mxu0 0.0
    %1581 = vmatpush1.msra.mxu0 %v1442
    %1582 = vmatprep.subr.mxu0 0.0
    %1583 = vmatpush1.msra.mxu0 %v1441
    %1584 = vmatprep.subr.mxu0 0.0
    %1585 = vmatpush2.msra.mxu0 0.0
    %1586 = vmatprep.subr.mxu0 0.0
    %1587 = vmatpush2.msra.mxu0 0.0
    %1588 = vmatprep.subr.mxu0 0.0
    %1589 = vmatpush2.msra.mxu0 0.0
    %1590 = vmatprep.subr.mxu0 0.0
    %1591 = vmatpush2.msra.mxu0 0.0
    %1592 = vmatprep.subr.mxu0 0.0
    %1593 = vmatpush2.msra.mxu0 0.0
    %1594 = vmatprep.subr.mxu0 0.0
    %1595 = vmatpush2.msra.mxu0 0.0
    %1596 = vmatprep.subr.mxu0 0.0
    %1597 = vmatpush2.msra.mxu0 0.0
    %1598 = vmatprep.subr.mxu0 0.0
    %1599 = vmatpush2.msra.mxu0 0.0
    %1600 = vmatprep.subr.mxu0 0.0
    %1601 = vmatpush2.msra.mxu0 0.0
    %1602 = vmatprep.subr.mxu0 0.0
    %1603 = vmatpush2.msra.mxu0 0.0
    %1604 = vmatprep.subr.mxu0 0.0
    %1605 = vmatpush2.msra.mxu0 0.0
    %1606 = vmatprep.subr.mxu0 0.0
    %1607 = vmatpush2.msra.mxu0 0.0
    %1608 = vmatprep.subr.mxu0 0.0
    %1609 = vmatpush2.msra.mxu0 0.0
    %1610 = vmatprep.subr.mxu0 0.0
    %1611 = vmatpush2.msra.mxu0 0.0
    %1612 = vmatprep.subr.mxu0 0.0
    %1613 = vmatpush2.msra.mxu0 0.0
    %1614 = vmatprep.subr.mxu0 0.0
    %1615 = vmatpush2.msra.mxu0 0.0
    %1616 = vmatprep.mubr.f32.mxu0 0.0
    %1617 = vmatmul.mubr.f32.gmra.mxu0 %v1547
    %v1618 = vpop.f32.mrf.mxu0
    %v1619 = vadd.f32 %v1543, %v1618
    %v1620 = vpop.f32.mrf.mxu0
    %1621 = vmatprep.mubr.f32.mxu0 0.0
    %1622 = vmatmul.mubr.f32.gmra.mxu0 %v1550
    %v1623 = vpop.f32.mrf.mxu0
    %v1624 = vadd.f32 %v1543, %v1623
    %v1625 = vpop.f32.mrf.mxu0
    %1626 = vdwg.mxu0
    %v1627 = vadd.f32 %v1434, %v1619
    %v1628 = vadd.f32 %v1435, %v1624
    %s1629 = scalar_lea.vmem %s25, 1
    %v1630 = vld [vmem:[%s1629] sm:$0x1]
    %s1631 = scalar_lea.vmem %s27, 1
    %v1632 = vld [vmem:[%s1631] sm:$0x1]
    %v1633 = vsel %vm379, %v1627, 0.0
    %1634 = vadd.xlane.f32.xlu0 %v1633
    %v1635 = vpop.xlane.xlu0 %1634
    %v1636 = vsel %vm379, %v1628, 0.0
    %1637 = vadd.xlane.f32.xlu0 %v1636
    %v1638 = vpop.xlane.xlu0 %1637
    %v1639 = vmul.f32 %v1635, %v1399
    %v1640 = vmul.f32 %v1638, %v1399
    %v1641 = vsub.f32 %v1627, %v1639
    %v1642 = vsub.f32 %v1628, %v1640
    %v1643 = vmul.f32 %v1641, %v1641
    %v1644 = vmul.f32 %v1642, %v1642
    %v1645 = vsel %vm379, %v1643, 0.0
    %1646 = vadd.xlane.f32.xlu0 %v1645
    %v1647 = vpop.xlane.xlu0 %1646
    %v1648 = vsel %vm379, %v1644, 0.0
    %1649 = vadd.xlane.f32.xlu0 %v1648
    %v1650 = vpop.xlane.xlu0 %1649
    %v1651 = vmul.f32 %v1647, %v1399
    %v1652 = vmul.f32 %v1650, %v1399
    %v1653 = vadd.f32 %v1651, 1e-05
    %v1654 = vadd.f32 %v1652, 1e-05
    %v1655 = vrsqrt.pop %v1653
    %v1656 = vrsqrt.pop %v1654
    %v1657 = vmul.f32 %v1641, %v1655
    %v1658 = vmul.f32 %v1642, %v1656
    %v1660 = vlaneseq
    %v1661 = vshrl.u32 %v1660, 7
    %v1662 = vsub.s32 0, %v1661
    %v1663 = vrot.slane %v1630, %v1662
    %v1665 = vmul.f32 %v1657, %v1663
    %v1666 = vmul.f32 %v1658, %v1663
    %v1668 = vlaneseq
    %v1669 = vshrl.u32 %v1668, 7
    %v1670 = vsub.s32 0, %v1669
    %v1671 = vrot.slane %v1632, %v1670
    %v1673 = vadd.f32 %v1665, %v1671
    %v1674 = vadd.f32 %v1666, %v1671
    %s1675 = scalar_lea.vmem %s17, 32
    %v1676 = vld [vmem:[%s1675] sm:$0xff]
    %v1677 = vld [vmem:[%s1675 + $0x8] sm:$0xff]
    %v1678 = vld [vmem:[%s1675 + $0x10] sm:$0xff]
    %v1679 = vld [vmem:[%s1675 + $0x18] sm:$0xff]
    %s1680 = scalar_lea.vmem %s19, 1
    %v1681 = vld [vmem:[%s1680] sm:$0x1]
    %s1682 = scalar_lea.vmem %s21, 32
    %v1683 = vld [vmem:[%s1682] sm:$0xff]
    %v1684 = vld [vmem:[%s1682 + $0x8] sm:$0xff]
    %v1685 = vld [vmem:[%s1682 + $0x10] sm:$0xff]
    %v1686 = vld [vmem:[%s1682 + $0x18] sm:$0xff]
    %s1687 = scalar_lea.vmem %s23, 1
    %v1688 = vld [vmem:[%s1687] sm:$0x1]
    %v1690 = vlaneseq
    %v1691 = vshrl.u32 %v1690, 7
    %v1692 = vsub.s32 0, %v1691
    %v1693 = vrot.slane %v1681, %v1692
    %v1696 = vsel %vm379, %v1673, 0
    %v1699 = vsel %vm379, %v1674, 0
    %1701 = vmatprep.subr.mxu0 0.0
    %1702 = vmatpush1.msra.mxu0 0.0
    %1703 = vmatprep.subr.mxu0 0.0
    %1704 = vmatpush1.msra.mxu0 0.0
    %1705 = vmatprep.subr.mxu0 0.0
    %1706 = vmatpush1.msra.mxu0 0.0
    %1707 = vmatprep.subr.mxu0 0.0
    %1708 = vmatpush1.msra.mxu0 0.0
    %1709 = vmatprep.subr.mxu0 0.0
    %1710 = vmatpush1.msra.mxu0 0.0
    %1711 = vmatprep.subr.mxu0 0.0
    %1712 = vmatpush1.msra.mxu0 0.0
    %1713 = vmatprep.subr.mxu0 0.0
    %1714 = vmatpush1.msra.mxu0 0.0
    %1715 = vmatprep.subr.mxu0 0.0
    %1716 = vmatpush1.msra.mxu0 0.0
    %1717 = vmatprep.subr.mxu0 0.0
    %1718 = vmatpush1.msra.mxu0 0.0
    %1719 = vmatprep.subr.mxu0 0.0
    %1720 = vmatpush1.msra.mxu0 0.0
    %1721 = vmatprep.subr.mxu0 0.0
    %1722 = vmatpush1.msra.mxu0 0.0
    %1723 = vmatprep.subr.mxu0 0.0
    %1724 = vmatpush1.msra.mxu0 0.0
    %1725 = vmatprep.subr.mxu0 0.0
    %1726 = vmatpush1.msra.mxu0 %v1679
    %1727 = vmatprep.subr.mxu0 0.0
    %1728 = vmatpush1.msra.mxu0 %v1678
    %1729 = vmatprep.subr.mxu0 0.0
    %1730 = vmatpush1.msra.mxu0 %v1677
    %1731 = vmatprep.subr.mxu0 0.0
    %1732 = vmatpush1.msra.mxu0 %v1676
    %1733 = vmatprep.subr.mxu0 0.0
    %1734 = vmatpush2.msra.mxu0 0.0
    %1735 = vmatprep.subr.mxu0 0.0
    %1736 = vmatpush2.msra.mxu0 0.0
    %1737 = vmatprep.subr.mxu0 0.0
    %1738 = vmatpush2.msra.mxu0 0.0
    %1739 = vmatprep.subr.mxu0 0.0
    %1740 = vmatpush2.msra.mxu0 0.0
    %1741 = vmatprep.subr.mxu0 0.0
    %1742 = vmatpush2.msra.mxu0 0.0
    %1743 = vmatprep.subr.mxu0 0.0
    %1744 = vmatpush2.msra.mxu0 0.0
    %1745 = vmatprep.subr.mxu0 0.0
    %1746 = vmatpush2.msra.mxu0 0.0
    %1747 = vmatprep.subr.mxu0 0.0
    %1748 = vmatpush2.msra.mxu0 0.0
    %1749 = vmatprep.subr.mxu0 0.0
    %1750 = vmatpush2.msra.mxu0 0.0
    %1751 = vmatprep.subr.mxu0 0.0
    %1752 = vmatpush2.msra.mxu0 0.0
    %1753 = vmatprep.subr.mxu0 0.0
    %1754 = vmatpush2.msra.mxu0 0.0
    %1755 = vmatprep.subr.mxu0 0.0
    %1756 = vmatpush2.msra.mxu0 0.0
    %1757 = vmatprep.subr.mxu0 0.0
    %1758 = vmatpush2.msra.mxu0 0.0
    %1759 = vmatprep.subr.mxu0 0.0
    %1760 = vmatpush2.msra.mxu0 0.0
    %1761 = vmatprep.subr.mxu0 0.0
    %1762 = vmatpush2.msra.mxu0 0.0
    %1763 = vmatprep.subr.mxu0 0.0
    %1764 = vmatpush2.msra.mxu0 0.0
    %1765 = vmatprep.mubr.f32.mxu0 0.0
    %1766 = vmatmul.mubr.f32.gmra.mxu0 %v1696
    %v1767 = vpop.f32.mrf.mxu0
    %v1768 = vadd.f32 %v1693, %v1767
    %v1769 = vpop.f32.mrf.mxu0
    %1770 = vmatprep.mubr.f32.mxu0 0.0
    %1771 = vmatmul.mubr.f32.gmra.mxu0 %v1699
    %v1772 = vpop.f32.mrf.mxu0
    %v1773 = vadd.f32 %v1693, %v1772
    %v1774 = vpop.f32.mrf.mxu0
    %1775 = vdwg.mxu0
    %1778 = vrot.lane.b32.xlu0 %v1768, 96
    %v1779 = vpop.permute.xlu0 %1778
    %1780 = vrot.lane.b32.xlu0 %v1773, 96
    %v1781 = vpop.permute.xlu0 %1780
    %v1782 = vsel %vm467, %v1768, 0
    %v1784 = vsel %vm467, %v1773, 0
    %v1786 = vsel %vm467, %v1779, 0
    %v1788 = vsel %vm467, %v1781, 0
    %1790 = vmatprep.subr.mxu0 0.0
    %1791 = vmatpush1.xpose.msra.mxu0 0.0
    %1792 = vmatprep.subr.mxu0 0.0
    %1793 = vmatpush1.xpose.msra.mxu0 0.0
    %1794 = vmatprep.subr.mxu0 0.0
    %1795 = vmatpush1.xpose.msra.mxu0 0.0
    %1796 = vmatprep.subr.mxu0 0.0
    %1797 = vmatpush1.xpose.msra.mxu0 0.0
    %1798 = vmatprep.subr.mxu0 0.0
    %1799 = vmatpush1.xpose.msra.mxu0 0.0
    %1800 = vmatprep.subr.mxu0 0.0
    %1801 = vmatpush1.xpose.msra.mxu0 0.0
    %1802 = vmatprep.subr.mxu0 0.0
    %1803 = vmatpush1.xpose.msra.mxu0 0.0
    %1804 = vmatprep.subr.mxu0 0.0
    %1805 = vmatpush1.xpose.msra.mxu0 0.0
    %1806 = vmatprep.subr.mxu0 0.0
    %1807 = vmatpush1.xpose.msra.mxu0 0.0
    %1808 = vmatprep.subr.mxu0 0.0
    %1809 = vmatpush1.xpose.msra.mxu0 0.0
    %1810 = vmatprep.subr.mxu0 0.0
    %1811 = vmatpush1.xpose.msra.mxu0 0.0
    %1812 = vmatprep.subr.mxu0 0.0
    %1813 = vmatpush1.xpose.msra.mxu0 0.0
    %1814 = vmatprep.subr.mxu0 0.0
    %1815 = vmatpush1.xpose.msra.mxu0 0.0
    %1816 = vmatprep.subr.mxu0 0.0
    %1817 = vmatpush1.xpose.msra.mxu0 0.0
    %1818 = vmatprep.subr.mxu0 0.0
    %1819 = vmatpush1.xpose.msra.mxu0 %v1788
    %1820 = vmatprep.subr.mxu0 0.0
    %1821 = vmatpush1.xpose.msra.mxu0 %v1786
    %1822 = vmatprep.subr.mxu0 0.0
    %1823 = vmatpush2.xpose.msra.mxu0 0.0
    %1824 = vmatprep.subr.mxu0 0.0
    %1825 = vmatpush2.xpose.msra.mxu0 0.0
    %1826 = vmatprep.subr.mxu0 0.0
    %1827 = vmatpush2.xpose.msra.mxu0 0.0
    %1828 = vmatprep.subr.mxu0 0.0
    %1829 = vmatpush2.xpose.msra.mxu0 0.0
    %1830 = vmatprep.subr.mxu0 0.0
    %1831 = vmatpush2.xpose.msra.mxu0 0.0
    %1832 = vmatprep.subr.mxu0 0.0
    %1833 = vmatpush2.xpose.msra.mxu0 0.0
    %1834 = vmatprep.subr.mxu0 0.0
    %1835 = vmatpush2.xpose.msra.mxu0 0.0
    %1836 = vmatprep.subr.mxu0 0.0
    %1837 = vmatpush2.xpose.msra.mxu0 0.0
    %1838 = vmatprep.subr.mxu0 0.0
    %1839 = vmatpush2.xpose.msra.mxu0 0.0
    %1840 = vmatprep.subr.mxu0 0.0
    %1841 = vmatpush2.xpose.msra.mxu0 0.0
    %1842 = vmatprep.subr.mxu0 0.0
    %1843 = vmatpush2.xpose.msra.mxu0 0.0
    %1844 = vmatprep.subr.mxu0 0.0
    %1845 = vmatpush2.xpose.msra.mxu0 0.0
    %1846 = vmatprep.subr.mxu0 0.0
    %1847 = vmatpush2.xpose.msra.mxu0 0.0
    %1848 = vmatprep.subr.mxu0 0.0
    %1849 = vmatpush2.xpose.msra.mxu0 0.0
    %1850 = vmatprep.subr.mxu0 0.0
    %1851 = vmatpush2.xpose.msra.mxu0 0.0
    %1852 = vmatprep.subr.mxu0 0.0
    %1853 = vmatpush2.xpose.msra.mxu0 0.0
    %1854 = vmatprep.mubr.f32.mxu0 0.0
    %1855 = vmatmul.mubr.f32.gmra.mxu0 %v1782
    %v1856 = vpop.f32.mrf.mxu0
    %v1857 = vadd.f32 0.0, %v1856
    %v1858 = vpop.f32.mrf.mxu0
    %1859 = vmatprep.mubr.f32.mxu0 0.0
    %1860 = vmatmul.mubr.f32.gmra.mxu0 %v1784
    %v1861 = vpop.f32.mrf.mxu0
    %v1862 = vadd.f32 0.0, %v1861
    %v1863 = vpop.f32.mrf.mxu0
    %1864 = vdwg.mxu0
    %v1865 = vsel %vm551, %v1857, %v149
    %v1866 = vsel %vm552, %v1862, %v150
    %v1867 = vsel %vm555, %v1865, -inf
    %1868 = vmax.xlane.f32.xlu0 %v1867
    %v1869 = vpop.xlane.xlu0 %1868
    %v1870 = vsel %vm555, %v1866, -inf
    %1871 = vmax.xlane.f32.xlu0 %v1870
    %v1872 = vpop.xlane.xlu0 %1871
    %v1873 = vsub.f32 %v1865, %v1869
    %v1874 = vsub.f32 %v1866, %v1872
    %v1875 = vmul.f32 %v1873, 1.442695
    %v1876 = vpow.pop %v1875
    %v1877 = vmul.f32 %v1874, 1.442695
    %v1878 = vpow.pop %v1877
    %v1879 = vsel %vm555, %v1876, 0.0
    %1880 = vadd.xlane.f32.xlu0 %v1879
    %v1881 = vpop.xlane.xlu0 %1880
    %v1882 = vsel %vm555, %v1878, 0.0
    %1883 = vadd.xlane.f32.xlu0 %v1882
    %v1884 = vpop.xlane.xlu0 %1883
    %v1885 = vrcp.pop %v1881
    %v1886 = vmul.f32 %v1876, %v1885
    %v1887 = vrcp.pop %v1884
    %v1888 = vmul.f32 %v1878, %v1887
    %1889 = vrot.lane.b32.xlu0 %v1768, 64
    %v1890 = vpop.permute.xlu0 %1889
    %1891 = vrot.lane.b32.xlu0 %v1773, 64
    %v1892 = vpop.permute.xlu0 %1891
    %v1896 = vsel %vm555, %v1886, 0
    %v1899 = vsel %vm555, %v1888, 0
    %1901 = vmatprep.subr.mxu0 0.0
    %1902 = vmatpush1.msra.mxu0 0.0
    %1903 = vmatprep.subr.mxu0 0.0
    %1904 = vmatpush1.msra.mxu0 0.0
    %1905 = vmatprep.subr.mxu0 0.0
    %1906 = vmatpush1.msra.mxu0 0.0
    %1907 = vmatprep.subr.mxu0 0.0
    %1908 = vmatpush1.msra.mxu0 0.0
    %1909 = vmatprep.subr.mxu0 0.0
    %1910 = vmatpush1.msra.mxu0 0.0
    %1911 = vmatprep.subr.mxu0 0.0
    %1912 = vmatpush1.msra.mxu0 0.0
    %1913 = vmatprep.subr.mxu0 0.0
    %1914 = vmatpush1.msra.mxu0 0.0
    %1915 = vmatprep.subr.mxu0 0.0
    %1916 = vmatpush1.msra.mxu0 0.0
    %1917 = vmatprep.subr.mxu0 0.0
    %1918 = vmatpush1.msra.mxu0 0.0
    %1919 = vmatprep.subr.mxu0 0.0
    %1920 = vmatpush1.msra.mxu0 0.0
    %1921 = vmatprep.subr.mxu0 0.0
    %1922 = vmatpush1.msra.mxu0 0.0
    %1923 = vmatprep.subr.mxu0 0.0
    %1924 = vmatpush1.msra.mxu0 0.0
    %1925 = vmatprep.subr.mxu0 0.0
    %1926 = vmatpush1.msra.mxu0 0.0
    %1927 = vmatprep.subr.mxu0 0.0
    %1928 = vmatpush1.msra.mxu0 0.0
    %1929 = vmatprep.subr.mxu0 0.0
    %1930 = vmatpush1.msra.mxu0 %v1892
    %1931 = vmatprep.subr.mxu0 0.0
    %1932 = vmatpush1.msra.mxu0 %v1890
    %1933 = vmatprep.subr.mxu0 0.0
    %1934 = vmatpush2.msra.mxu0 0.0
    %1935 = vmatprep.subr.mxu0 0.0
    %1936 = vmatpush2.msra.mxu0 0.0
    %1937 = vmatprep.subr.mxu0 0.0
    %1938 = vmatpush2.msra.mxu0 0.0
    %1939 = vmatprep.subr.mxu0 0.0
    %1940 = vmatpush2.msra.mxu0 0.0
    %1941 = vmatprep.subr.mxu0 0.0
    %1942 = vmatpush2.msra.mxu0 0.0
    %1943 = vmatprep.subr.mxu0 0.0
    %1944 = vmatpush2.msra.mxu0 0.0
    %1945 = vmatprep.subr.mxu0 0.0
    %1946 = vmatpush2.msra.mxu0 0.0
    %1947 = vmatprep.subr.mxu0 0.0
    %1948 = vmatpush2.msra.mxu0 0.0
    %1949 = vmatprep.subr.mxu0 0.0
    %1950 = vmatpush2.msra.mxu0 0.0
    %1951 = vmatprep.subr.mxu0 0.0
    %1952 = vmatpush2.msra.mxu0 0.0
    %1953 = vmatprep.subr.mxu0 0.0
    %1954 = vmatpush2.msra.mxu0 0.0
    %1955 = vmatprep.subr.mxu0 0.0
    %1956 = vmatpush2.msra.mxu0 0.0
    %1957 = vmatprep.subr.mxu0 0.0
    %1958 = vmatpush2.msra.mxu0 0.0
    %1959 = vmatprep.subr.mxu0 0.0
    %1960 = vmatpush2.msra.mxu0 0.0
    %1961 = vmatprep.subr.mxu0 0.0
    %1962 = vmatpush2.msra.mxu0 0.0
    %1963 = vmatprep.subr.mxu0 0.0
    %1964 = vmatpush2.msra.mxu0 0.0
    %1965 = vmatprep.mubr.f32.mxu0 0.0
    %1966 = vmatmul.mubr.f32.gmra.mxu0 %v1896
    %v1967 = vpop.f32.mrf.mxu0
    %v1968 = vadd.f32 0.0, %v1967
    %v1969 = vpop.f32.mrf.mxu0
    %1970 = vmatprep.mubr.f32.mxu0 0.0
    %1971 = vmatmul.mubr.f32.gmra.mxu0 %v1899
    %v1972 = vpop.f32.mrf.mxu0
    %v1973 = vadd.f32 0.0, %v1972
    %v1974 = vpop.f32.mrf.mxu0
    %1975 = vdwg.mxu0
    %1976 = vrot.lane.b32.xlu0 %v1768, 120
    %v1977 = vpop.permute.xlu0 %1976
    %1978 = vrot.lane.b32.xlu0 %v1773, 120
    %v1979 = vpop.permute.xlu0 %1978
    %1980 = vrot.lane.b32.xlu0 %v1768, 88
    %v1981 = vpop.permute.xlu0 %1980
    %1982 = vrot.lane.b32.xlu0 %v1773, 88
    %v1983 = vpop.permute.xlu0 %1982
    %v1984 = vsel %vm467, %v1977, 0
    %v1986 = vsel %vm467, %v1979, 0
    %v1988 = vsel %vm467, %v1981, 0
    %v1990 = vsel %vm467, %v1983, 0
    %1992 = vmatprep.subr.mxu0 0.0
    %1993 = vmatpush1.xpose.msra.mxu0 0.0
    %1994 = vmatprep.subr.mxu0 0.0
    %1995 = vmatpush1.xpose.msra.mxu0 0.0
    %1996 = vmatprep.subr.mxu0 0.0
    %1997 = vmatpush1.xpose.msra.mxu0 0.0
    %1998 = vmatprep.subr.mxu0 0.0
    %1999 = vmatpush1.xpose.msra.mxu0 0.0
    %2000 = vmatprep.subr.mxu0 0.0
    %2001 = vmatpush1.xpose.msra.mxu0 0.0
    %2002 = vmatprep.subr.mxu0 0.0
    %2003 = vmatpush1.xpose.msra.mxu0 0.0
    %2004 = vmatprep.subr.mxu0 0.0
    %2005 = vmatpush1.xpose.msra.mxu0 0.0
    %2006 = vmatprep.subr.mxu0 0.0
    %2007 = vmatpush1.xpose.msra.mxu0 0.0
    %2008 = vmatprep.subr.mxu0 0.0
    %2009 = vmatpush1.xpose.msra.mxu0 0.0
    %2010 = vmatprep.subr.mxu0 0.0
    %2011 = vmatpush1.xpose.msra.mxu0 0.0
    %2012 = vmatprep.subr.mxu0 0.0
    %2013 = vmatpush1.xpose.msra.mxu0 0.0
    %2014 = vmatprep.subr.mxu0 0.0
    %2015 = vmatpush1.xpose.msra.mxu0 0.0
    %2016 = vmatprep.subr.mxu0 0.0
    %2017 = vmatpush1.xpose.msra.mxu0 0.0
    %2018 = vmatprep.subr.mxu0 0.0
    %2019 = vmatpush1.xpose.msra.mxu0 0.0
    %2020 = vmatprep.subr.mxu0 0.0
    %2021 = vmatpush1.xpose.msra.mxu0 %v1990
    %2022 = vmatprep.subr.mxu0 0.0
    %2023 = vmatpush1.xpose.msra.mxu0 %v1988
    %2024 = vmatprep.subr.mxu0 0.0
    %2025 = vmatpush2.xpose.msra.mxu0 0.0
    %2026 = vmatprep.subr.mxu0 0.0
    %2027 = vmatpush2.xpose.msra.mxu0 0.0
    %2028 = vmatprep.subr.mxu0 0.0
    %2029 = vmatpush2.xpose.msra.mxu0 0.0
    %2030 = vmatprep.subr.mxu0 0.0
    %2031 = vmatpush2.xpose.msra.mxu0 0.0
    %2032 = vmatprep.subr.mxu0 0.0
    %2033 = vmatpush2.xpose.msra.mxu0 0.0
    %2034 = vmatprep.subr.mxu0 0.0
    %2035 = vmatpush2.xpose.msra.mxu0 0.0
    %2036 = vmatprep.subr.mxu0 0.0
    %2037 = vmatpush2.xpose.msra.mxu0 0.0
    %2038 = vmatprep.subr.mxu0 0.0
    %2039 = vmatpush2.xpose.msra.mxu0 0.0
    %2040 = vmatprep.subr.mxu0 0.0
    %2041 = vmatpush2.xpose.msra.mxu0 0.0
    %2042 = vmatprep.subr.mxu0 0.0
    %2043 = vmatpush2.xpose.msra.mxu0 0.0
    %2044 = vmatprep.subr.mxu0 0.0
    %2045 = vmatpush2.xpose.msra.mxu0 0.0
    %2046 = vmatprep.subr.mxu0 0.0
    %2047 = vmatpush2.xpose.msra.mxu0 0.0
    %2048 = vmatprep.subr.mxu0 0.0
    %2049 = vmatpush2.xpose.msra.mxu0 0.0
    %2050 = vmatprep.subr.mxu0 0.0
    %2051 = vmatpush2.xpose.msra.mxu0 0.0
    %2052 = vmatprep.subr.mxu0 0.0
    %2053 = vmatpush2.xpose.msra.mxu0 0.0
    %2054 = vmatprep.subr.mxu0 0.0
    %2055 = vmatpush2.xpose.msra.mxu0 0.0
    %2056 = vmatprep.mubr.f32.mxu0 0.0
    %2057 = vmatmul.mubr.f32.gmra.mxu0 %v1984
    %v2058 = vpop.f32.mrf.mxu0
    %v2059 = vadd.f32 0.0, %v2058
    %v2060 = vpop.f32.mrf.mxu0
    %2061 = vmatprep.mubr.f32.mxu0 0.0
    %2062 = vmatmul.mubr.f32.gmra.mxu0 %v1986
    %v2063 = vpop.f32.mrf.mxu0
    %v2064 = vadd.f32 0.0, %v2063
    %v2065 = vpop.f32.mrf.mxu0
    %2066 = vdwg.mxu0
    %v2067 = vsel %vm551, %v2059, %v149
    %v2068 = vsel %vm552, %v2064, %v150
    %v2069 = vsel %vm555, %v2067, -inf
    %2070 = vmax.xlane.f32.xlu0 %v2069
    %v2071 = vpop.xlane.xlu0 %2070
    %v2072 = vsel %vm555, %v2068, -inf
    %2073 = vmax.xlane.f32.xlu0 %v2072
    %v2074 = vpop.xlane.xlu0 %2073
    %v2075 = vsub.f32 %v2067, %v2071
    %v2076 = vsub.f32 %v2068, %v2074
    %v2077 = vmul.f32 %v2075, 1.442695
    %v2078 = vpow.pop %v2077
    %v2079 = vmul.f32 %v2076, 1.442695
    %v2080 = vpow.pop %v2079
    %v2081 = vsel %vm555, %v2078, 0.0
    %2082 = vadd.xlane.f32.xlu0 %v2081
    %v2083 = vpop.xlane.xlu0 %2082
    %v2084 = vsel %vm555, %v2080, 0.0
    %2085 = vadd.xlane.f32.xlu0 %v2084
    %v2086 = vpop.xlane.xlu0 %2085
    %v2087 = vrcp.pop %v2083
    %v2088 = vmul.f32 %v2078, %v2087
    %v2089 = vrcp.pop %v2086
    %v2090 = vmul.f32 %v2080, %v2089
    %2091 = vrot.lane.b32.xlu0 %v1768, 56
    %v2092 = vpop.permute.xlu0 %2091
    %2093 = vrot.lane.b32.xlu0 %v1773, 56
    %v2094 = vpop.permute.xlu0 %2093
    %v2098 = vsel %vm555, %v2088, 0
    %v2101 = vsel %vm555, %v2090, 0
    %2103 = vmatprep.subr.mxu0 0.0
    %2104 = vmatpush1.msra.mxu0 0.0
    %2105 = vmatprep.subr.mxu0 0.0
    %2106 = vmatpush1.msra.mxu0 0.0
    %2107 = vmatprep.subr.mxu0 0.0
    %2108 = vmatpush1.msra.mxu0 0.0
    %2109 = vmatprep.subr.mxu0 0.0
    %2110 = vmatpush1.msra.mxu0 0.0
    %2111 = vmatprep.subr.mxu0 0.0
    %2112 = vmatpush1.msra.mxu0 0.0
    %2113 = vmatprep.subr.mxu0 0.0
    %2114 = vmatpush1.msra.mxu0 0.0
    %2115 = vmatprep.subr.mxu0 0.0
    %2116 = vmatpush1.msra.mxu0 0.0
    %2117 = vmatprep.subr.mxu0 0.0
    %2118 = vmatpush1.msra.mxu0 0.0
    %2119 = vmatprep.subr.mxu0 0.0
    %2120 = vmatpush1.msra.mxu0 0.0
    %2121 = vmatprep.subr.mxu0 0.0
    %2122 = vmatpush1.msra.mxu0 0.0
    %2123 = vmatprep.subr.mxu0 0.0
    %2124 = vmatpush1.msra.mxu0 0.0
    %2125 = vmatprep.subr.mxu0 0.0
    %2126 = vmatpush1.msra.mxu0 0.0
    %2127 = vmatprep.subr.mxu0 0.0
    %2128 = vmatpush1.msra.mxu0 0.0
    %2129 = vmatprep.subr.mxu0 0.0
    %2130 = vmatpush1.msra.mxu0 0.0
    %2131 = vmatprep.subr.mxu0 0.0
    %2132 = vmatpush1.msra.mxu0 %v2094
    %2133 = vmatprep.subr.mxu0 0.0
    %2134 = vmatpush1.msra.mxu0 %v2092
    %2135 = vmatprep.subr.mxu0 0.0
    %2136 = vmatpush2.msra.mxu0 0.0
    %2137 = vmatprep.subr.mxu0 0.0
    %2138 = vmatpush2.msra.mxu0 0.0
    %2139 = vmatprep.subr.mxu0 0.0
    %2140 = vmatpush2.msra.mxu0 0.0
    %2141 = vmatprep.subr.mxu0 0.0
    %2142 = vmatpush2.msra.mxu0 0.0
    %2143 = vmatprep.subr.mxu0 0.0
    %2144 = vmatpush2.msra.mxu0 0.0
    %2145 = vmatprep.subr.mxu0 0.0
    %2146 = vmatpush2.msra.mxu0 0.0
    %2147 = vmatprep.subr.mxu0 0.0
    %2148 = vmatpush2.msra.mxu0 0.0
    %2149 = vmatprep.subr.mxu0 0.0
    %2150 = vmatpush2.msra.mxu0 0.0
    %2151 = vmatprep.subr.mxu0 0.0
    %2152 = vmatpush2.msra.mxu0 0.0
    %2153 = vmatprep.subr.mxu0 0.0
    %2154 = vmatpush2.msra.mxu0 0.0
    %2155 = vmatprep.subr.mxu0 0.0
    %2156 = vmatpush2.msra.mxu0 0.0
    %2157 = vmatprep.subr.mxu0 0.0
    %2158 = vmatpush2.msra.mxu0 0.0
    %2159 = vmatprep.subr.mxu0 0.0
    %2160 = vmatpush2.msra.mxu0 0.0
    %2161 = vmatprep.subr.mxu0 0.0
    %2162 = vmatpush2.msra.mxu0 0.0
    %2163 = vmatprep.subr.mxu0 0.0
    %2164 = vmatpush2.msra.mxu0 0.0
    %2165 = vmatprep.subr.mxu0 0.0
    %2166 = vmatpush2.msra.mxu0 0.0
    %2167 = vmatprep.mubr.f32.mxu0 0.0
    %2168 = vmatmul.mubr.f32.gmra.mxu0 %v2098
    %v2169 = vpop.f32.mrf.mxu0
    %v2170 = vadd.f32 0.0, %v2169
    %v2171 = vpop.f32.mrf.mxu0
    %2172 = vmatprep.mubr.f32.mxu0 0.0
    %2173 = vmatmul.mubr.f32.gmra.mxu0 %v2101
    %v2174 = vpop.f32.mrf.mxu0
    %v2175 = vadd.f32 0.0, %v2174
    %v2176 = vpop.f32.mrf.mxu0
    %2177 = vdwg.mxu0
    %2178 = vrot.lane.b32.xlu0 %v1768, 112
    %v2179 = vpop.permute.xlu0 %2178
    %2180 = vrot.lane.b32.xlu0 %v1773, 112
    %v2181 = vpop.permute.xlu0 %2180
    %2182 = vrot.lane.b32.xlu0 %v1768, 80
    %v2183 = vpop.permute.xlu0 %2182
    %2184 = vrot.lane.b32.xlu0 %v1773, 80
    %v2185 = vpop.permute.xlu0 %2184
    %v2186 = vsel %vm467, %v2179, 0
    %v2188 = vsel %vm467, %v2181, 0
    %v2190 = vsel %vm467, %v2183, 0
    %v2192 = vsel %vm467, %v2185, 0
    %2194 = vmatprep.subr.mxu0 0.0
    %2195 = vmatpush1.xpose.msra.mxu0 0.0
    %2196 = vmatprep.subr.mxu0 0.0
    %2197 = vmatpush1.xpose.msra.mxu0 0.0
    %2198 = vmatprep.subr.mxu0 0.0
    %2199 = vmatpush1.xpose.msra.mxu0 0.0
    %2200 = vmatprep.subr.mxu0 0.0
    %2201 = vmatpush1.xpose.msra.mxu0 0.0
    %2202 = vmatprep.subr.mxu0 0.0
    %2203 = vmatpush1.xpose.msra.mxu0 0.0
    %2204 = vmatprep.subr.mxu0 0.0
    %2205 = vmatpush1.xpose.msra.mxu0 0.0
    %2206 = vmatprep.subr.mxu0 0.0
    %2207 = vmatpush1.xpose.msra.mxu0 0.0
    %2208 = vmatprep.subr.mxu0 0.0
    %2209 = vmatpush1.xpose.msra.mxu0 0.0
    %2210 = vmatprep.subr.mxu0 0.0
    %2211 = vmatpush1.xpose.msra.mxu0 0.0
    %2212 = vmatprep.subr.mxu0 0.0
    %2213 = vmatpush1.xpose.msra.mxu0 0.0
    %2214 = vmatprep.subr.mxu0 0.0
    %2215 = vmatpush1.xpose.msra.mxu0 0.0
    %2216 = vmatprep.subr.mxu0 0.0
    %2217 = vmatpush1.xpose.msra.mxu0 0.0
    %2218 = vmatprep.subr.mxu0 0.0
    %2219 = vmatpush1.xpose.msra.mxu0 0.0
    %2220 = vmatprep.subr.mxu0 0.0
    %2221 = vmatpush1.xpose.msra.mxu0 0.0
    %2222 = vmatprep.subr.mxu0 0.0
    %2223 = vmatpush1.xpose.msra.mxu0 %v2192
    %2224 = vmatprep.subr.mxu0 0.0
    %2225 = vmatpush1.xpose.msra.mxu0 %v2190
    %2226 = vmatprep.subr.mxu0 0.0
    %2227 = vmatpush2.xpose.msra.mxu0 0.0
    %2228 = vmatprep.subr.mxu0 0.0
    %2229 = vmatpush2.xpose.msra.mxu0 0.0
    %2230 = vmatprep.subr.mxu0 0.0
    %2231 = vmatpush2.xpose.msra.mxu0 0.0
    %2232 = vmatprep.subr.mxu0 0.0
    %2233 = vmatpush2.xpose.msra.mxu0 0.0
    %2234 = vmatprep.subr.mxu0 0.0
    %2235 = vmatpush2.xpose.msra.mxu0 0.0
    %2236 = vmatprep.subr.mxu0 0.0
    %2237 = vmatpush2.xpose.msra.mxu0 0.0
    %2238 = vmatprep.subr.mxu0 0.0
    %2239 = vmatpush2.xpose.msra.mxu0 0.0
    %2240 = vmatprep.subr.mxu0 0.0
    %2241 = vmatpush2.xpose.msra.mxu0 0.0
    %2242 = vmatprep.subr.mxu0 0.0
    %2243 = vmatpush2.xpose.msra.mxu0 0.0
    %2244 = vmatprep.subr.mxu0 0.0
    %2245 = vmatpush2.xpose.msra.mxu0 0.0
    %2246 = vmatprep.subr.mxu0 0.0
    %2247 = vmatpush2.xpose.msra.mxu0 0.0
    %2248 = vmatprep.subr.mxu0 0.0
    %2249 = vmatpush2.xpose.msra.mxu0 0.0
    %2250 = vmatprep.subr.mxu0 0.0
    %2251 = vmatpush2.xpose.msra.mxu0 0.0
    %2252 = vmatprep.subr.mxu0 0.0
    %2253 = vmatpush2.xpose.msra.mxu0 0.0
    %2254 = vmatprep.subr.mxu0 0.0
    %2255 = vmatpush2.xpose.msra.mxu0 0.0
    %2256 = vmatprep.subr.mxu0 0.0
    %2257 = vmatpush2.xpose.msra.mxu0 0.0
    %2258 = vmatprep.mubr.f32.mxu0 0.0
    %2259 = vmatmul.mubr.f32.gmra.mxu0 %v2186
    %v2260 = vpop.f32.mrf.mxu0
    %v2261 = vadd.f32 0.0, %v2260
    %v2262 = vpop.f32.mrf.mxu0
    %2263 = vmatprep.mubr.f32.mxu0 0.0
    %2264 = vmatmul.mubr.f32.gmra.mxu0 %v2188
    %v2265 = vpop.f32.mrf.mxu0
    %v2266 = vadd.f32 0.0, %v2265
    %v2267 = vpop.f32.mrf.mxu0
    %2268 = vdwg.mxu0
    %v2269 = vsel %vm551, %v2261, %v149
    %v2270 = vsel %vm552, %v2266, %v150
    %v2271 = vsel %vm555, %v2269, -inf
    %2272 = vmax.xlane.f32.xlu0 %v2271
    %v2273 = vpop.xlane.xlu0 %2272
    %v2274 = vsel %vm555, %v2270, -inf
    %2275 = vmax.xlane.f32.xlu0 %v2274
    %v2276 = vpop.xlane.xlu0 %2275
    %v2277 = vsub.f32 %v2269, %v2273
    %v2278 = vsub.f32 %v2270, %v2276
    %v2279 = vmul.f32 %v2277, 1.442695
    %v2280 = vpow.pop %v2279
    %v2281 = vmul.f32 %v2278, 1.442695
    %v2282 = vpow.pop %v2281
    %v2283 = vsel %vm555, %v2280, 0.0
    %2284 = vadd.xlane.f32.xlu0 %v2283
    %v2285 = vpop.xlane.xlu0 %2284
    %v2286 = vsel %vm555, %v2282, 0.0
    %2287 = vadd.xlane.f32.xlu0 %v2286
    %v2288 = vpop.xlane.xlu0 %2287
    %v2289 = vrcp.pop %v2285
    %v2290 = vmul.f32 %v2280, %v2289
    %v2291 = vrcp.pop %v2288
    %v2292 = vmul.f32 %v2282, %v2291
    %2293 = vrot.lane.b32.xlu0 %v1768, 48
    %v2294 = vpop.permute.xlu0 %2293
    %2295 = vrot.lane.b32.xlu0 %v1773, 48
    %v2296 = vpop.permute.xlu0 %2295
    %v2300 = vsel %vm555, %v2290, 0
    %v2303 = vsel %vm555, %v2292, 0
    %2305 = vmatprep.subr.mxu0 0.0
    %2306 = vmatpush1.msra.mxu0 0.0
    %2307 = vmatprep.subr.mxu0 0.0
    %2308 = vmatpush1.msra.mxu0 0.0
    %2309 = vmatprep.subr.mxu0 0.0
    %2310 = vmatpush1.msra.mxu0 0.0
    %2311 = vmatprep.subr.mxu0 0.0
    %2312 = vmatpush1.msra.mxu0 0.0
    %2313 = vmatprep.subr.mxu0 0.0
    %2314 = vmatpush1.msra.mxu0 0.0
    %2315 = vmatprep.subr.mxu0 0.0
    %2316 = vmatpush1.msra.mxu0 0.0
    %2317 = vmatprep.subr.mxu0 0.0
    %2318 = vmatpush1.msra.mxu0 0.0
    %2319 = vmatprep.subr.mxu0 0.0
    %2320 = vmatpush1.msra.mxu0 0.0
    %2321 = vmatprep.subr.mxu0 0.0
    %2322 = vmatpush1.msra.mxu0 0.0
    %2323 = vmatprep.subr.mxu0 0.0
    %2324 = vmatpush1.msra.mxu0 0.0
    %2325 = vmatprep.subr.mxu0 0.0
    %2326 = vmatpush1.msra.mxu0 0.0
    %2327 = vmatprep.subr.mxu0 0.0
    %2328 = vmatpush1.msra.mxu0 0.0
    %2329 = vmatprep.subr.mxu0 0.0
    %2330 = vmatpush1.msra.mxu0 0.0
    %2331 = vmatprep.subr.mxu0 0.0
    %2332 = vmatpush1.msra.mxu0 0.0
    %2333 = vmatprep.subr.mxu0 0.0
    %2334 = vmatpush1.msra.mxu0 %v2296
    %2335 = vmatprep.subr.mxu0 0.0
    %2336 = vmatpush1.msra.mxu0 %v2294
    %2337 = vmatprep.subr.mxu0 0.0
    %2338 = vmatpush2.msra.mxu0 0.0
    %2339 = vmatprep.subr.mxu0 0.0
    %2340 = vmatpush2.msra.mxu0 0.0
    %2341 = vmatprep.subr.mxu0 0.0
    %2342 = vmatpush2.msra.mxu0 0.0
    %2343 = vmatprep.subr.mxu0 0.0
    %2344 = vmatpush2.msra.mxu0 0.0
    %2345 = vmatprep.subr.mxu0 0.0
    %2346 = vmatpush2.msra.mxu0 0.0
    %2347 = vmatprep.subr.mxu0 0.0
    %2348 = vmatpush2.msra.mxu0 0.0
    %2349 = vmatprep.subr.mxu0 0.0
    %2350 = vmatpush2.msra.mxu0 0.0
    %2351 = vmatprep.subr.mxu0 0.0
    %2352 = vmatpush2.msra.mxu0 0.0
    %2353 = vmatprep.subr.mxu0 0.0
    %2354 = vmatpush2.msra.mxu0 0.0
    %2355 = vmatprep.subr.mxu0 0.0
    %2356 = vmatpush2.msra.mxu0 0.0
    %2357 = vmatprep.subr.mxu0 0.0
    %2358 = vmatpush2.msra.mxu0 0.0
    %2359 = vmatprep.subr.mxu0 0.0
    %2360 = vmatpush2.msra.mxu0 0.0
    %2361 = vmatprep.subr.mxu0 0.0
    %2362 = vmatpush2.msra.mxu0 0.0
    %2363 = vmatprep.subr.mxu0 0.0
    %2364 = vmatpush2.msra.mxu0 0.0
    %2365 = vmatprep.subr.mxu0 0.0
    %2366 = vmatpush2.msra.mxu0 0.0
    %2367 = vmatprep.subr.mxu0 0.0
    %2368 = vmatpush2.msra.mxu0 0.0
    %2369 = vmatprep.mubr.f32.mxu0 0.0
    %2370 = vmatmul.mubr.f32.gmra.mxu0 %v2300
    %v2371 = vpop.f32.mrf.mxu0
    %v2372 = vadd.f32 0.0, %v2371
    %v2373 = vpop.f32.mrf.mxu0
    %2374 = vmatprep.mubr.f32.mxu0 0.0
    %2375 = vmatmul.mubr.f32.gmra.mxu0 %v2303
    %v2376 = vpop.f32.mrf.mxu0
    %v2377 = vadd.f32 0.0, %v2376
    %v2378 = vpop.f32.mrf.mxu0
    %2379 = vdwg.mxu0
    %2380 = vrot.lane.b32.xlu0 %v1768, 104
    %v2381 = vpop.permute.xlu0 %2380
    %2382 = vrot.lane.b32.xlu0 %v1773, 104
    %v2383 = vpop.permute.xlu0 %2382
    %2384 = vrot.lane.b32.xlu0 %v1768, 72
    %v2385 = vpop.permute.xlu0 %2384
    %2386 = vrot.lane.b32.xlu0 %v1773, 72
    %v2387 = vpop.permute.xlu0 %2386
    %v2388 = vsel %vm467, %v2381, 0
    %v2390 = vsel %vm467, %v2383, 0
    %v2392 = vsel %vm467, %v2385, 0
    %v2394 = vsel %vm467, %v2387, 0
    %2396 = vmatprep.subr.mxu0 0.0
    %2397 = vmatpush1.xpose.msra.mxu0 0.0
    %2398 = vmatprep.subr.mxu0 0.0
    %2399 = vmatpush1.xpose.msra.mxu0 0.0
    %2400 = vmatprep.subr.mxu0 0.0
    %2401 = vmatpush1.xpose.msra.mxu0 0.0
    %2402 = vmatprep.subr.mxu0 0.0
    %2403 = vmatpush1.xpose.msra.mxu0 0.0
    %2404 = vmatprep.subr.mxu0 0.0
    %2405 = vmatpush1.xpose.msra.mxu0 0.0
    %2406 = vmatprep.subr.mxu0 0.0
    %2407 = vmatpush1.xpose.msra.mxu0 0.0
    %2408 = vmatprep.subr.mxu0 0.0
    %2409 = vmatpush1.xpose.msra.mxu0 0.0
    %2410 = vmatprep.subr.mxu0 0.0
    %2411 = vmatpush1.xpose.msra.mxu0 0.0
    %2412 = vmatprep.subr.mxu0 0.0
    %2413 = vmatpush1.xpose.msra.mxu0 0.0
    %2414 = vmatprep.subr.mxu0 0.0
    %2415 = vmatpush1.xpose.msra.mxu0 0.0
    %2416 = vmatprep.subr.mxu0 0.0
    %2417 = vmatpush1.xpose.msra.mxu0 0.0
    %2418 = vmatprep.subr.mxu0 0.0
    %2419 = vmatpush1.xpose.msra.mxu0 0.0
    %2420 = vmatprep.subr.mxu0 0.0
    %2421 = vmatpush1.xpose.msra.mxu0 0.0
    %2422 = vmatprep.subr.mxu0 0.0
    %2423 = vmatpush1.xpose.msra.mxu0 0.0
    %2424 = vmatprep.subr.mxu0 0.0
    %2425 = vmatpush1.xpose.msra.mxu0 %v2394
    %2426 = vmatprep.subr.mxu0 0.0
    %2427 = vmatpush1.xpose.msra.mxu0 %v2392
    %2428 = vmatprep.subr.mxu0 0.0
    %2429 = vmatpush2.xpose.msra.mxu0 0.0
    %2430 = vmatprep.subr.mxu0 0.0
    %2431 = vmatpush2.xpose.msra.mxu0 0.0
    %2432 = vmatprep.subr.mxu0 0.0
    %2433 = vmatpush2.xpose.msra.mxu0 0.0
    %2434 = vmatprep.subr.mxu0 0.0
    %2435 = vmatpush2.xpose.msra.mxu0 0.0
    %2436 = vmatprep.subr.mxu0 0.0
    %2437 = vmatpush2.xpose.msra.mxu0 0.0
    %2438 = vmatprep.subr.mxu0 0.0
    %2439 = vmatpush2.xpose.msra.mxu0 0.0
    %2440 = vmatprep.subr.mxu0 0.0
    %2441 = vmatpush2.xpose.msra.mxu0 0.0
    %2442 = vmatprep.subr.mxu0 0.0
    %2443 = vmatpush2.xpose.msra.mxu0 0.0
    %2444 = vmatprep.subr.mxu0 0.0
    %2445 = vmatpush2.xpose.msra.mxu0 0.0
    %2446 = vmatprep.subr.mxu0 0.0
    %2447 = vmatpush2.xpose.msra.mxu0 0.0
    %2448 = vmatprep.subr.mxu0 0.0
    %2449 = vmatpush2.xpose.msra.mxu0 0.0
    %2450 = vmatprep.subr.mxu0 0.0
    %2451 = vmatpush2.xpose.msra.mxu0 0.0
    %2452 = vmatprep.subr.mxu0 0.0
    %2453 = vmatpush2.xpose.msra.mxu0 0.0
    %2454 = vmatprep.subr.mxu0 0.0
    %2455 = vmatpush2.xpose.msra.mxu0 0.0
    %2456 = vmatprep.subr.mxu0 0.0
    %2457 = vmatpush2.xpose.msra.mxu0 0.0
    %2458 = vmatprep.subr.mxu0 0.0
    %2459 = vmatpush2.xpose.msra.mxu0 0.0
    %2460 = vmatprep.mubr.f32.mxu0 0.0
    %2461 = vmatmul.mubr.f32.gmra.mxu0 %v2388
    %v2462 = vpop.f32.mrf.mxu0
    %v2463 = vadd.f32 0.0, %v2462
    %v2464 = vpop.f32.mrf.mxu0
    %2465 = vmatprep.mubr.f32.mxu0 0.0
    %2466 = vmatmul.mubr.f32.gmra.mxu0 %v2390
    %v2467 = vpop.f32.mrf.mxu0
    %v2468 = vadd.f32 0.0, %v2467
    %v2469 = vpop.f32.mrf.mxu0
    %2470 = vdwg.mxu0
    %v2471 = vsel %vm551, %v2463, %v149
    %v2472 = vsel %vm552, %v2468, %v150
    %v2473 = vsel %vm555, %v2471, -inf
    %2474 = vmax.xlane.f32.xlu0 %v2473
    %v2475 = vpop.xlane.xlu0 %2474
    %v2476 = vsel %vm555, %v2472, -inf
    %2477 = vmax.xlane.f32.xlu0 %v2476
    %v2478 = vpop.xlane.xlu0 %2477
    %v2479 = vsub.f32 %v2471, %v2475
    %v2480 = vsub.f32 %v2472, %v2478
    %v2481 = vmul.f32 %v2479, 1.442695
    %v2482 = vpow.pop %v2481
    %v2483 = vmul.f32 %v2480, 1.442695
    %v2484 = vpow.pop %v2483
    %v2485 = vsel %vm555, %v2482, 0.0
    %2486 = vadd.xlane.f32.xlu0 %v2485
    %v2487 = vpop.xlane.xlu0 %2486
    %v2488 = vsel %vm555, %v2484, 0.0
    %2489 = vadd.xlane.f32.xlu0 %v2488
    %v2490 = vpop.xlane.xlu0 %2489
    %v2491 = vrcp.pop %v2487
    %v2492 = vmul.f32 %v2482, %v2491
    %v2493 = vrcp.pop %v2490
    %v2494 = vmul.f32 %v2484, %v2493
    %2495 = vrot.lane.b32.xlu0 %v1768, 40
    %v2496 = vpop.permute.xlu0 %2495
    %2497 = vrot.lane.b32.xlu0 %v1773, 40
    %v2498 = vpop.permute.xlu0 %2497
    %v2502 = vsel %vm555, %v2492, 0
    %v2505 = vsel %vm555, %v2494, 0
    %2507 = vmatprep.subr.mxu0 0.0
    %2508 = vmatpush1.msra.mxu0 0.0
    %2509 = vmatprep.subr.mxu0 0.0
    %2510 = vmatpush1.msra.mxu0 0.0
    %2511 = vmatprep.subr.mxu0 0.0
    %2512 = vmatpush1.msra.mxu0 0.0
    %2513 = vmatprep.subr.mxu0 0.0
    %2514 = vmatpush1.msra.mxu0 0.0
    %2515 = vmatprep.subr.mxu0 0.0
    %2516 = vmatpush1.msra.mxu0 0.0
    %2517 = vmatprep.subr.mxu0 0.0
    %2518 = vmatpush1.msra.mxu0 0.0
    %2519 = vmatprep.subr.mxu0 0.0
    %2520 = vmatpush1.msra.mxu0 0.0
    %2521 = vmatprep.subr.mxu0 0.0
    %2522 = vmatpush1.msra.mxu0 0.0
    %2523 = vmatprep.subr.mxu0 0.0
    %2524 = vmatpush1.msra.mxu0 0.0
    %2525 = vmatprep.subr.mxu0 0.0
    %2526 = vmatpush1.msra.mxu0 0.0
    %2527 = vmatprep.subr.mxu0 0.0
    %2528 = vmatpush1.msra.mxu0 0.0
    %2529 = vmatprep.subr.mxu0 0.0
    %2530 = vmatpush1.msra.mxu0 0.0
    %2531 = vmatprep.subr.mxu0 0.0
    %2532 = vmatpush1.msra.mxu0 0.0
    %2533 = vmatprep.subr.mxu0 0.0
    %2534 = vmatpush1.msra.mxu0 0.0
    %2535 = vmatprep.subr.mxu0 0.0
    %2536 = vmatpush1.msra.mxu0 %v2498
    %2537 = vmatprep.subr.mxu0 0.0
    %2538 = vmatpush1.msra.mxu0 %v2496
    %2539 = vmatprep.subr.mxu0 0.0
    %2540 = vmatpush2.msra.mxu0 0.0
    %2541 = vmatprep.subr.mxu0 0.0
    %2542 = vmatpush2.msra.mxu0 0.0
    %2543 = vmatprep.subr.mxu0 0.0
    %2544 = vmatpush2.msra.mxu0 0.0
    %2545 = vmatprep.subr.mxu0 0.0
    %2546 = vmatpush2.msra.mxu0 0.0
    %2547 = vmatprep.subr.mxu0 0.0
    %2548 = vmatpush2.msra.mxu0 0.0
    %2549 = vmatprep.subr.mxu0 0.0
    %2550 = vmatpush2.msra.mxu0 0.0
    %2551 = vmatprep.subr.mxu0 0.0
    %2552 = vmatpush2.msra.mxu0 0.0
    %2553 = vmatprep.subr.mxu0 0.0
    %2554 = vmatpush2.msra.mxu0 0.0
    %2555 = vmatprep.subr.mxu0 0.0
    %2556 = vmatpush2.msra.mxu0 0.0
    %2557 = vmatprep.subr.mxu0 0.0
    %2558 = vmatpush2.msra.mxu0 0.0
    %2559 = vmatprep.subr.mxu0 0.0
    %2560 = vmatpush2.msra.mxu0 0.0
    %2561 = vmatprep.subr.mxu0 0.0
    %2562 = vmatpush2.msra.mxu0 0.0
    %2563 = vmatprep.subr.mxu0 0.0
    %2564 = vmatpush2.msra.mxu0 0.0
    %2565 = vmatprep.subr.mxu0 0.0
    %2566 = vmatpush2.msra.mxu0 0.0
    %2567 = vmatprep.subr.mxu0 0.0
    %2568 = vmatpush2.msra.mxu0 0.0
    %2569 = vmatprep.subr.mxu0 0.0
    %2570 = vmatpush2.msra.mxu0 0.0
    %2571 = vmatprep.mubr.f32.mxu0 0.0
    %2572 = vmatmul.mubr.f32.gmra.mxu0 %v2502
    %v2573 = vpop.f32.mrf.mxu0
    %v2574 = vadd.f32 0.0, %v2573
    %v2575 = vpop.f32.mrf.mxu0
    %2576 = vmatprep.mubr.f32.mxu0 0.0
    %2577 = vmatmul.mubr.f32.gmra.mxu0 %v2505
    %v2578 = vpop.f32.mrf.mxu0
    %v2579 = vadd.f32 0.0, %v2578
    %v2580 = vpop.f32.mrf.mxu0
    %2581 = vdwg.mxu0
    %2584 = vrot.lane.b32.xlu0 %v2170, 8
    %v2585 = vpop.permute.xlu0 %2584
    %2586 = vrot.lane.b32.xlu0 %v2175, 8
    %v2587 = vpop.permute.xlu0 %2586
    %2592 = vrot.lane.b32.xlu0 %v2372, 16
    %v2593 = vpop.permute.xlu0 %2592
    %2594 = vrot.lane.b32.xlu0 %v2377, 16
    %v2595 = vpop.permute.xlu0 %2594
    %2600 = vrot.lane.b32.xlu0 %v2574, 24
    %v2601 = vpop.permute.xlu0 %2600
    %2602 = vrot.lane.b32.xlu0 %v2579, 24
    %v2603 = vpop.permute.xlu0 %2602
    %v2606 = vsel %vm467, %v1968, %v2585
    %v2607 = vsel %vm467, %v1973, %v2587
    %v2608 = vsel %vm555, %v2606, %v2593
    %v2609 = vsel %vm555, %v2607, %v2595
    %v2610 = vsel %vm1299, %v2608, %v2601
    %v2611 = vsel %vm1299, %v2609, %v2603
    %v2613 = vlaneseq
    %v2614 = vshrl.u32 %v2613, 7
    %v2615 = vsub.s32 0, %v2614
    %v2616 = vrot.slane %v1688, %v2615
    %v2619 = vsel %vm379, %v2610, 0
    %v2622 = vsel %vm379, %v2611, 0
    %2624 = vmatprep.subr.mxu0 0.0
    %2625 = vmatpush1.msra.mxu0 0.0
    %2626 = vmatprep.subr.mxu0 0.0
    %2627 = vmatpush1.msra.mxu0 0.0
    %2628 = vmatprep.subr.mxu0 0.0
    %2629 = vmatpush1.msra.mxu0 0.0
    %2630 = vmatprep.subr.mxu0 0.0
    %2631 = vmatpush1.msra.mxu0 0.0
    %2632 = vmatprep.subr.mxu0 0.0
    %2633 = vmatpush1.msra.mxu0 0.0
    %2634 = vmatprep.subr.mxu0 0.0
    %2635 = vmatpush1.msra.mxu0 0.0
    %2636 = vmatprep.subr.mxu0 0.0
    %2637 = vmatpush1.msra.mxu0 0.0
    %2638 = vmatprep.subr.mxu0 0.0
    %2639 = vmatpush1.msra.mxu0 0.0
    %2640 = vmatprep.subr.mxu0 0.0
    %2641 = vmatpush1.msra.mxu0 0.0
    %2642 = vmatprep.subr.mxu0 0.0
    %2643 = vmatpush1.msra.mxu0 0.0
    %2644 = vmatprep.subr.mxu0 0.0
    %2645 = vmatpush1.msra.mxu0 0.0
    %2646 = vmatprep.subr.mxu0 0.0
    %2647 = vmatpush1.msra.mxu0 0.0
    %2648 = vmatprep.subr.mxu0 0.0
    %2649 = vmatpush1.msra.mxu0 %v1686
    %2650 = vmatprep.subr.mxu0 0.0
    %2651 = vmatpush1.msra.mxu0 %v1685
    %2652 = vmatprep.subr.mxu0 0.0
    %2653 = vmatpush1.msra.mxu0 %v1684
    %2654 = vmatprep.subr.mxu0 0.0
    %2655 = vmatpush1.msra.mxu0 %v1683
    %2656 = vmatprep.subr.mxu0 0.0
    %2657 = vmatpush2.msra.mxu0 0.0
    %2658 = vmatprep.subr.mxu0 0.0
    %2659 = vmatpush2.msra.mxu0 0.0
    %2660 = vmatprep.subr.mxu0 0.0
    %2661 = vmatpush2.msra.mxu0 0.0
    %2662 = vmatprep.subr.mxu0 0.0
    %2663 = vmatpush2.msra.mxu0 0.0
    %2664 = vmatprep.subr.mxu0 0.0
    %2665 = vmatpush2.msra.mxu0 0.0
    %2666 = vmatprep.subr.mxu0 0.0
    %2667 = vmatpush2.msra.mxu0 0.0
    %2668 = vmatprep.subr.mxu0 0.0
    %2669 = vmatpush2.msra.mxu0 0.0
    %2670 = vmatprep.subr.mxu0 0.0
    %2671 = vmatpush2.msra.mxu0 0.0
    %2672 = vmatprep.subr.mxu0 0.0
    %2673 = vmatpush2.msra.mxu0 0.0
    %2674 = vmatprep.subr.mxu0 0.0
    %2675 = vmatpush2.msra.mxu0 0.0
    %2676 = vmatprep.subr.mxu0 0.0
    %2677 = vmatpush2.msra.mxu0 0.0
    %2678 = vmatprep.subr.mxu0 0.0
    %2679 = vmatpush2.msra.mxu0 0.0
    %2680 = vmatprep.subr.mxu0 0.0
    %2681 = vmatpush2.msra.mxu0 0.0
    %2682 = vmatprep.subr.mxu0 0.0
    %2683 = vmatpush2.msra.mxu0 0.0
    %2684 = vmatprep.subr.mxu0 0.0
    %2685 = vmatpush2.msra.mxu0 0.0
    %2686 = vmatprep.subr.mxu0 0.0
    %2687 = vmatpush2.msra.mxu0 0.0
    %2688 = vmatprep.mubr.f32.mxu0 0.0
    %2689 = vmatmul.mubr.f32.gmra.mxu0 %v2619
    %v2690 = vpop.f32.mrf.mxu0
    %v2691 = vadd.f32 %v2616, %v2690
    %v2692 = vpop.f32.mrf.mxu0
    %2693 = vmatprep.mubr.f32.mxu0 0.0
    %2694 = vmatmul.mubr.f32.gmra.mxu0 %v2622
    %v2695 = vpop.f32.mrf.mxu0
    %v2696 = vadd.f32 %v2616, %v2695
    %v2697 = vpop.f32.mrf.mxu0
    %2698 = vdwg.mxu0
    %v2699 = vadd.f32 %v1673, %v2691
    %v2700 = vadd.f32 %v1674, %v2696
    %s2701 = scalar_lea.vmem %s25, 2
    %v2702 = vld [vmem:[%s2701] sm:$0x1]
    %s2703 = scalar_lea.vmem %s27, 2
    %v2704 = vld [vmem:[%s2703] sm:$0x1]
    %v2705 = vsel %vm379, %v2699, 0.0
    %2706 = vadd.xlane.f32.xlu0 %v2705
    %v2707 = vpop.xlane.xlu0 %2706
    %v2708 = vsel %vm379, %v2700, 0.0
    %2709 = vadd.xlane.f32.xlu0 %v2708
    %v2710 = vpop.xlane.xlu0 %2709
    %v2711 = vmul.f32 %v2707, %v1399
    %v2712 = vmul.f32 %v2710, %v1399
    %v2713 = vsub.f32 %v2699, %v2711
    %v2714 = vsub.f32 %v2700, %v2712
    %v2715 = vmul.f32 %v2713, %v2713
    %v2716 = vmul.f32 %v2714, %v2714
    %v2717 = vsel %vm379, %v2715, 0.0
    %2718 = vadd.xlane.f32.xlu0 %v2717
    %v2719 = vpop.xlane.xlu0 %2718
    %v2720 = vsel %vm379, %v2716, 0.0
    %2721 = vadd.xlane.f32.xlu0 %v2720
    %v2722 = vpop.xlane.xlu0 %2721
    %v2723 = vmul.f32 %v2719, %v1399
    %v2724 = vmul.f32 %v2722, %v1399
    %v2725 = vadd.f32 %v2723, 1e-05
    %v2726 = vadd.f32 %v2724, 1e-05
    %v2727 = vrsqrt.pop %v2725
    %v2728 = vrsqrt.pop %v2726
    %v2729 = vmul.f32 %v2713, %v2727
    %v2730 = vmul.f32 %v2714, %v2728
    %v2732 = vlaneseq
    %v2733 = vshrl.u32 %v2732, 7
    %v2734 = vsub.s32 0, %v2733
    %v2735 = vrot.slane %v2702, %v2734
    %v2737 = vmul.f32 %v2729, %v2735
    %v2738 = vmul.f32 %v2730, %v2735
    %v2740 = vlaneseq
    %v2741 = vshrl.u32 %v2740, 7
    %v2742 = vsub.s32 0, %v2741
    %v2743 = vrot.slane %v2704, %v2742
    %v2745 = vadd.f32 %v2737, %v2743
    %v2746 = vadd.f32 %v2738, %v2743
    %s2747 = scalar_lea.vmem %s29, 32
    %v2748 = vld [vmem:[%s2747] sm:$0xff]
    %v2749 = vld [vmem:[%s2747 + $0x8] sm:$0xff]
    %v2750 = vld [vmem:[%s2747 + $0x10] sm:$0xff]
    %v2751 = vld [vmem:[%s2747 + $0x18] sm:$0xff]
    %s2752 = scalar_lea.vmem %s31, 1
    %v2753 = vld [vmem:[%s2752] sm:$0x1]
    %s2754 = scalar_lea.vmem %s33, 64
    %v2755 = vld [vmem:[%s2754] sm:$0xff]
    %v2756 = vld [vmem:[%s2754 + $0x8] sm:$0xff]
    %v2757 = vld [vmem:[%s2754 + $0x10] sm:$0xff]
    %v2758 = vld [vmem:[%s2754 + $0x18] sm:$0xff]
    %v2759 = vld [vmem:[%s2754 + $0x20] sm:$0xff]
    %v2760 = vld [vmem:[%s2754 + $0x28] sm:$0xff]
    %v2761 = vld [vmem:[%s2754 + $0x30] sm:$0xff]
    %v2762 = vld [vmem:[%s2754 + $0x38] sm:$0xff]
    %s2763 = scalar_lea.vmem %s35, 1
    %v2764 = vld [vmem:[%s2763] sm:$0x1]
    %v2766 = vlaneseq
    %v2767 = vshrl.u32 %v2766, 7
    %v2768 = vsub.s32 0, %v2767
    %v2769 = vrot.slane %v2753, %v2768
    %v2772 = vsel %vm379, %v2745, 0
    %v2775 = vsel %vm379, %v2746, 0
    %2777 = vmatprep.subr.mxu0 0.0
    %2778 = vmatpush1.msra.mxu0 0.0
    %2779 = vmatprep.subr.mxu0 0.0
    %2780 = vmatpush1.msra.mxu0 0.0
    %2781 = vmatprep.subr.mxu0 0.0
    %2782 = vmatpush1.msra.mxu0 0.0
    %2783 = vmatprep.subr.mxu0 0.0
    %2784 = vmatpush1.msra.mxu0 0.0
    %2785 = vmatprep.subr.mxu0 0.0
    %2786 = vmatpush1.msra.mxu0 0.0
    %2787 = vmatprep.subr.mxu0 0.0
    %2788 = vmatpush1.msra.mxu0 0.0
    %2789 = vmatprep.subr.mxu0 0.0
    %2790 = vmatpush1.msra.mxu0 0.0
    %2791 = vmatprep.subr.mxu0 0.0
    %2792 = vmatpush1.msra.mxu0 0.0
    %2793 = vmatprep.subr.mxu0 0.0
    %2794 = vmatpush1.msra.mxu0 0.0
    %2795 = vmatprep.subr.mxu0 0.0
    %2796 = vmatpush1.msra.mxu0 0.0
    %2797 = vmatprep.subr.mxu0 0.0
    %2798 = vmatpush1.msra.mxu0 0.0
    %2799 = vmatprep.subr.mxu0 0.0
    %2800 = vmatpush1.msra.mxu0 0.0
    %2801 = vmatprep.subr.mxu0 0.0
    %2802 = vmatpush1.msra.mxu0 %v2751
    %2803 = vmatprep.subr.mxu0 0.0
    %2804 = vmatpush1.msra.mxu0 %v2750
    %2805 = vmatprep.subr.mxu0 0.0
    %2806 = vmatpush1.msra.mxu0 %v2749
    %2807 = vmatprep.subr.mxu0 0.0
    %2808 = vmatpush1.msra.mxu0 %v2748
    %2809 = vmatprep.subr.mxu0 0.0
    %2810 = vmatpush2.msra.mxu0 0.0
    %2811 = vmatprep.subr.mxu0 0.0
    %2812 = vmatpush2.msra.mxu0 0.0
    %2813 = vmatprep.subr.mxu0 0.0
    %2814 = vmatpush2.msra.mxu0 0.0
    %2815 = vmatprep.subr.mxu0 0.0
    %2816 = vmatpush2.msra.mxu0 0.0
    %2817 = vmatprep.subr.mxu0 0.0
    %2818 = vmatpush2.msra.mxu0 0.0
    %2819 = vmatprep.subr.mxu0 0.0
    %2820 = vmatpush2.msra.mxu0 0.0
    %2821 = vmatprep.subr.mxu0 0.0
    %2822 = vmatpush2.msra.mxu0 0.0
    %2823 = vmatprep.subr.mxu0 0.0
    %2824 = vmatpush2.msra.mxu0 0.0
    %2825 = vmatprep.subr.mxu0 0.0
    %2826 = vmatpush2.msra.mxu0 0.0
    %2827 = vmatprep.subr.mxu0 0.0
    %2828 = vmatpush2.msra.mxu0 0.0
    %2829 = vmatprep.subr.mxu0 0.0
    %2830 = vmatpush2.msra.mxu0 0.0
    %2831 = vmatprep.subr.mxu0 0.0
    %2832 = vmatpush2.msra.mxu0 0.0
    %2833 = vmatprep.subr.mxu0 0.0
    %2834 = vmatpush2.msra.mxu0 0.0
    %2835 = vmatprep.subr.mxu0 0.0
    %2836 = vmatpush2.msra.mxu0 0.0
    %2837 = vmatprep.subr.mxu0 0.0
    %2838 = vmatpush2.msra.mxu0 0.0
    %2839 = vmatprep.subr.mxu0 0.0
    %2840 = vmatpush2.msra.mxu0 0.0
    %2841 = vmatprep.mubr.f32.mxu0 0.0
    %2842 = vmatmul.mubr.f32.gmra.mxu0 %v2772
    %v2843 = vpop.f32.mrf.mxu0
    %v2844 = vadd.f32 %v2769, %v2843
    %v2845 = vpop.f32.mrf.mxu0
    %2846 = vmatprep.mubr.f32.mxu0 0.0
    %2847 = vmatmul.mubr.f32.gmra.mxu0 %v2775
    %v2848 = vpop.f32.mrf.mxu0
    %v2849 = vadd.f32 %v2769, %v2848
    %v2850 = vpop.f32.mrf.mxu0
    %2851 = vdwg.mxu0
    %v2852 = vmax.f32 %v2844, 0.0
    %v2853 = vmax.f32 %v2849, 0.0
    %v2855 = vlaneseq
    %v2856 = vshrl.u32 %v2855, 7
    %v2857 = vsub.s32 0, %v2856
    %v2858 = vrot.slane %v2764, %v2857
    %v2861 = vsel %vm1545, %v2852, 0
    %v2864 = vsel %vm1545, %v2853, 0
    %2866 = vmatprep.subr.mxu0 0.0
    %2867 = vmatpush1.msra.mxu0 0.0
    %2868 = vmatprep.subr.mxu0 0.0
    %2869 = vmatpush1.msra.mxu0 0.0
    %2870 = vmatprep.subr.mxu0 0.0
    %2871 = vmatpush1.msra.mxu0 0.0
    %2872 = vmatprep.subr.mxu0 0.0
    %2873 = vmatpush1.msra.mxu0 0.0
    %2874 = vmatprep.subr.mxu0 0.0
    %2875 = vmatpush1.msra.mxu0 0.0
    %2876 = vmatprep.subr.mxu0 0.0
    %2877 = vmatpush1.msra.mxu0 0.0
    %2878 = vmatprep.subr.mxu0 0.0
    %2879 = vmatpush1.msra.mxu0 0.0
    %2880 = vmatprep.subr.mxu0 0.0
    %2881 = vmatpush1.msra.mxu0 0.0
    %2882 = vmatprep.subr.mxu0 0.0
    %2883 = vmatpush1.msra.mxu0 %v2762
    %2884 = vmatprep.subr.mxu0 0.0
    %2885 = vmatpush1.msra.mxu0 %v2761
    %2886 = vmatprep.subr.mxu0 0.0
    %2887 = vmatpush1.msra.mxu0 %v2760
    %2888 = vmatprep.subr.mxu0 0.0
    %2889 = vmatpush1.msra.mxu0 %v2759
    %2890 = vmatprep.subr.mxu0 0.0
    %2891 = vmatpush1.msra.mxu0 %v2758
    %2892 = vmatprep.subr.mxu0 0.0
    %2893 = vmatpush1.msra.mxu0 %v2757
    %2894 = vmatprep.subr.mxu0 0.0
    %2895 = vmatpush1.msra.mxu0 %v2756
    %2896 = vmatprep.subr.mxu0 0.0
    %2897 = vmatpush1.msra.mxu0 %v2755
    %2898 = vmatprep.subr.mxu0 0.0
    %2899 = vmatpush2.msra.mxu0 0.0
    %2900 = vmatprep.subr.mxu0 0.0
    %2901 = vmatpush2.msra.mxu0 0.0
    %2902 = vmatprep.subr.mxu0 0.0
    %2903 = vmatpush2.msra.mxu0 0.0
    %2904 = vmatprep.subr.mxu0 0.0
    %2905 = vmatpush2.msra.mxu0 0.0
    %2906 = vmatprep.subr.mxu0 0.0
    %2907 = vmatpush2.msra.mxu0 0.0
    %2908 = vmatprep.subr.mxu0 0.0
    %2909 = vmatpush2.msra.mxu0 0.0
    %2910 = vmatprep.subr.mxu0 0.0
    %2911 = vmatpush2.msra.mxu0 0.0
    %2912 = vmatprep.subr.mxu0 0.0
    %2913 = vmatpush2.msra.mxu0 0.0
    %2914 = vmatprep.subr.mxu0 0.0
    %2915 = vmatpush2.msra.mxu0 0.0
    %2916 = vmatprep.subr.mxu0 0.0
    %2917 = vmatpush2.msra.mxu0 0.0
    %2918 = vmatprep.subr.mxu0 0.0
    %2919 = vmatpush2.msra.mxu0 0.0
    %2920 = vmatprep.subr.mxu0 0.0
    %2921 = vmatpush2.msra.mxu0 0.0
    %2922 = vmatprep.subr.mxu0 0.0
    %2923 = vmatpush2.msra.mxu0 0.0
    %2924 = vmatprep.subr.mxu0 0.0
    %2925 = vmatpush2.msra.mxu0 0.0
    %2926 = vmatprep.subr.mxu0 0.0
    %2927 = vmatpush2.msra.mxu0 0.0
    %2928 = vmatprep.subr.mxu0 0.0
    %2929 = vmatpush2.msra.mxu0 0.0
    %2930 = vmatprep.mubr.f32.mxu0 0.0
    %2931 = vmatmul.mubr.f32.gmra.mxu0 %v2861
    %v2932 = vpop.f32.mrf.mxu0
    %v2933 = vadd.f32 %v2858, %v2932
    %v2934 = vpop.f32.mrf.mxu0
    %2935 = vmatprep.mubr.f32.mxu0 0.0
    %2936 = vmatmul.mubr.f32.gmra.mxu0 %v2864
    %v2937 = vpop.f32.mrf.mxu0
    %v2938 = vadd.f32 %v2858, %v2937
    %v2939 = vpop.f32.mrf.mxu0
    %2940 = vdwg.mxu0
    %v2941 = vadd.f32 %v2745, %v2933
    %v2942 = vadd.f32 %v2746, %v2938
    %s2943 = scalar_lea.vmem %s25, 3
    %v2944 = vld [vmem:[%s2943] sm:$0x1]
    %s2945 = scalar_lea.vmem %s27, 3
    %v2946 = vld [vmem:[%s2945] sm:$0x1]
    %v2947 = vsel %vm379, %v2941, 0.0
    %2948 = vadd.xlane.f32.xlu0 %v2947
    %v2949 = vpop.xlane.xlu0 %2948
    %v2950 = vsel %vm379, %v2942, 0.0
    %2951 = vadd.xlane.f32.xlu0 %v2950
    %v2952 = vpop.xlane.xlu0 %2951
    %v2953 = vmul.f32 %v2949, %v1399
    %v2954 = vmul.f32 %v2952, %v1399
    %v2955 = vsub.f32 %v2941, %v2953
    %v2956 = vsub.f32 %v2942, %v2954
    %v2957 = vmul.f32 %v2955, %v2955
    %v2958 = vmul.f32 %v2956, %v2956
    %v2959 = vsel %vm379, %v2957, 0.0
    %2960 = vadd.xlane.f32.xlu0 %v2959
    %v2961 = vpop.xlane.xlu0 %2960
    %v2962 = vsel %vm379, %v2958, 0.0
    %2963 = vadd.xlane.f32.xlu0 %v2962
    %v2964 = vpop.xlane.xlu0 %2963
    %v2965 = vmul.f32 %v2961, %v1399
    %v2966 = vmul.f32 %v2964, %v1399
    %v2967 = vadd.f32 %v2965, 1e-05
    %v2968 = vadd.f32 %v2966, 1e-05
    %v2969 = vrsqrt.pop %v2967
    %v2970 = vrsqrt.pop %v2968
    %v2971 = vmul.f32 %v2955, %v2969
    %v2972 = vmul.f32 %v2956, %v2970
    %v2974 = vlaneseq
    %v2975 = vshrl.u32 %v2974, 7
    %v2976 = vsub.s32 0, %v2975
    %v2977 = vrot.slane %v2944, %v2976
    %v2979 = vmul.f32 %v2971, %v2977
    %v2980 = vmul.f32 %v2972, %v2977
    %v2982 = vlaneseq
    %v2983 = vshrl.u32 %v2982, 7
    %v2984 = vsub.s32 0, %v2983
    %v2985 = vrot.slane %v2946, %v2984
    %v2987 = vadd.f32 %v2979, %v2985
    %v2988 = vadd.f32 %v2980, %v2985
    %v2989 = vld [vmem:[%s37] sm:$0xff]
    %v2990 = vld [vmem:[%s37 + $0x8] sm:$0xff]
    %v2991 = vld [vmem:[%s37 + $0x10] sm:$0xff]
    %v2992 = vld [vmem:[%s37 + $0x18] sm:$0xff]
    %v2993 = vld [vmem:[%s39] sm:$0x1]
    %v2994 = vld [vmem:[%s41] sm:$0xff]
    %v2995 = vld [vmem:[%s41 + $0x8] sm:$0xff]
    %v2996 = vld [vmem:[%s41 + $0x10] sm:$0xff]
    %v2997 = vld [vmem:[%s41 + $0x18] sm:$0xff]
    %v2998 = vld [vmem:[%s43] sm:$0x1]
    %v3000 = vlaneseq
    %v3001 = vshrl.u32 %v3000, 7
    %v3002 = vsub.s32 0, %v3001
    %v3003 = vrot.slane %v2993, %v3002
    %v3006 = vsel %vm379, %v355, 0
    %v3009 = vsel %vm379, %v360, 0
    %3011 = vmatprep.subr.mxu0 0.0
    %3012 = vmatpush1.msra.mxu0 0.0
    %3013 = vmatprep.subr.mxu0 0.0
    %3014 = vmatpush1.msra.mxu0 0.0
    %3015 = vmatprep.subr.mxu0 0.0
    %3016 = vmatpush1.msra.mxu0 0.0
    %3017 = vmatprep.subr.mxu0 0.0
    %3018 = vmatpush1.msra.mxu0 0.0
    %3019 = vmatprep.subr.mxu0 0.0
    %3020 = vmatpush1.msra.mxu0 0.0
    %3021 = vmatprep.subr.mxu0 0.0
    %3022 = vmatpush1.msra.mxu0 0.0
    %3023 = vmatprep.subr.mxu0 0.0
    %3024 = vmatpush1.msra.mxu0 0.0
    %3025 = vmatprep.subr.mxu0 0.0
    %3026 = vmatpush1.msra.mxu0 0.0
    %3027 = vmatprep.subr.mxu0 0.0
    %3028 = vmatpush1.msra.mxu0 0.0
    %3029 = vmatprep.subr.mxu0 0.0
    %3030 = vmatpush1.msra.mxu0 0.0
    %3031 = vmatprep.subr.mxu0 0.0
    %3032 = vmatpush1.msra.mxu0 0.0
    %3033 = vmatprep.subr.mxu0 0.0
    %3034 = vmatpush1.msra.mxu0 0.0
    %3035 = vmatprep.subr.mxu0 0.0
    %3036 = vmatpush1.msra.mxu0 %v2992
    %3037 = vmatprep.subr.mxu0 0.0
    %3038 = vmatpush1.msra.mxu0 %v2991
    %3039 = vmatprep.subr.mxu0 0.0
    %3040 = vmatpush1.msra.mxu0 %v2990
    %3041 = vmatprep.subr.mxu0 0.0
    %3042 = vmatpush1.msra.mxu0 %v2989
    %3043 = vmatprep.subr.mxu0 0.0
    %3044 = vmatpush2.msra.mxu0 0.0
    %3045 = vmatprep.subr.mxu0 0.0
    %3046 = vmatpush2.msra.mxu0 0.0
    %3047 = vmatprep.subr.mxu0 0.0
    %3048 = vmatpush2.msra.mxu0 0.0
    %3049 = vmatprep.subr.mxu0 0.0
    %3050 = vmatpush2.msra.mxu0 0.0
    %3051 = vmatprep.subr.mxu0 0.0
    %3052 = vmatpush2.msra.mxu0 0.0
    %3053 = vmatprep.subr.mxu0 0.0
    %3054 = vmatpush2.msra.mxu0 0.0
    %3055 = vmatprep.subr.mxu0 0.0
    %3056 = vmatpush2.msra.mxu0 0.0
    %3057 = vmatprep.subr.mxu0 0.0
    %3058 = vmatpush2.msra.mxu0 0.0
    %3059 = vmatprep.subr.mxu0 0.0
    %3060 = vmatpush2.msra.mxu0 0.0
    %3061 = vmatprep.subr.mxu0 0.0
    %3062 = vmatpush2.msra.mxu0 0.0
    %3063 = vmatprep.subr.mxu0 0.0
    %3064 = vmatpush2.msra.mxu0 0.0
    %3065 = vmatprep.subr.mxu0 0.0
    %3066 = vmatpush2.msra.mxu0 0.0
    %3067 = vmatprep.subr.mxu0 0.0
    %3068 = vmatpush2.msra.mxu0 0.0
    %3069 = vmatprep.subr.mxu0 0.0
    %3070 = vmatpush2.msra.mxu0 0.0
    %3071 = vmatprep.subr.mxu0 0.0
    %3072 = vmatpush2.msra.mxu0 0.0
    %3073 = vmatprep.subr.mxu0 0.0
    %3074 = vmatpush2.msra.mxu0 0.0
    %3075 = vmatprep.mubr.f32.mxu0 0.0
    %3076 = vmatmul.mubr.f32.gmra.mxu0 %v3006
    %v3077 = vpop.f32.mrf.mxu0
    %v3078 = vadd.f32 %v3003, %v3077
    %v3079 = vpop.f32.mrf.mxu0
    %3080 = vmatprep.mubr.f32.mxu0 0.0
    %3081 = vmatmul.mubr.f32.gmra.mxu0 %v3009
    %v3082 = vpop.f32.mrf.mxu0
    %v3083 = vadd.f32 %v3003, %v3082
    %v3084 = vpop.f32.mrf.mxu0
    %3085 = vdwg.mxu0
    %3088 = vrot.lane.b32.xlu0 %v3078, 96
    %v3089 = vpop.permute.xlu0 %3088
    %3090 = vrot.lane.b32.xlu0 %v3083, 96
    %v3091 = vpop.permute.xlu0 %3090
    %v3092 = vsel %vm467, %v3078, 0
    %v3094 = vsel %vm467, %v3083, 0
    %v3096 = vsel %vm467, %v3089, 0
    %v3098 = vsel %vm467, %v3091, 0
    %3100 = vmatprep.subr.mxu0 0.0
    %3101 = vmatpush1.xpose.msra.mxu0 0.0
    %3102 = vmatprep.subr.mxu0 0.0
    %3103 = vmatpush1.xpose.msra.mxu0 0.0
    %3104 = vmatprep.subr.mxu0 0.0
    %3105 = vmatpush1.xpose.msra.mxu0 0.0
    %3106 = vmatprep.subr.mxu0 0.0
    %3107 = vmatpush1.xpose.msra.mxu0 0.0
    %3108 = vmatprep.subr.mxu0 0.0
    %3109 = vmatpush1.xpose.msra.mxu0 0.0
    %3110 = vmatprep.subr.mxu0 0.0
    %3111 = vmatpush1.xpose.msra.mxu0 0.0
    %3112 = vmatprep.subr.mxu0 0.0
    %3113 = vmatpush1.xpose.msra.mxu0 0.0
    %3114 = vmatprep.subr.mxu0 0.0
    %3115 = vmatpush1.xpose.msra.mxu0 0.0
    %3116 = vmatprep.subr.mxu0 0.0
    %3117 = vmatpush1.xpose.msra.mxu0 0.0
    %3118 = vmatprep.subr.mxu0 0.0
    %3119 = vmatpush1.xpose.msra.mxu0 0.0
    %3120 = vmatprep.subr.mxu0 0.0
    %3121 = vmatpush1.xpose.msra.mxu0 0.0
    %3122 = vmatprep.subr.mxu0 0.0
    %3123 = vmatpush1.xpose.msra.mxu0 0.0
    %3124 = vmatprep.subr.mxu0 0.0
    %3125 = vmatpush1.xpose.msra.mxu0 0.0
    %3126 = vmatprep.subr.mxu0 0.0
    %3127 = vmatpush1.xpose.msra.mxu0 0.0
    %3128 = vmatprep.subr.mxu0 0.0
    %3129 = vmatpush1.xpose.msra.mxu0 %v3098
    %3130 = vmatprep.subr.mxu0 0.0
    %3131 = vmatpush1.xpose.msra.mxu0 %v3096
    %3132 = vmatprep.subr.mxu0 0.0
    %3133 = vmatpush2.xpose.msra.mxu0 0.0
    %3134 = vmatprep.subr.mxu0 0.0
    %3135 = vmatpush2.xpose.msra.mxu0 0.0
    %3136 = vmatprep.subr.mxu0 0.0
    %3137 = vmatpush2.xpose.msra.mxu0 0.0
    %3138 = vmatprep.subr.mxu0 0.0
    %3139 = vmatpush2.xpose.msra.mxu0 0.0
    %3140 = vmatprep.subr.mxu0 0.0
    %3141 = vmatpush2.xpose.msra.mxu0 0.0
    %3142 = vmatprep.subr.mxu0 0.0
    %3143 = vmatpush2.xpose.msra.mxu0 0.0
    %3144 = vmatprep.subr.mxu0 0.0
    %3145 = vmatpush2.xpose.msra.mxu0 0.0
    %3146 = vmatprep.subr.mxu0 0.0
    %3147 = vmatpush2.xpose.msra.mxu0 0.0
    %3148 = vmatprep.subr.mxu0 0.0
    %3149 = vmatpush2.xpose.msra.mxu0 0.0
    %3150 = vmatprep.subr.mxu0 0.0
    %3151 = vmatpush2.xpose.msra.mxu0 0.0
    %3152 = vmatprep.subr.mxu0 0.0
    %3153 = vmatpush2.xpose.msra.mxu0 0.0
    %3154 = vmatprep.subr.mxu0 0.0
    %3155 = vmatpush2.xpose.msra.mxu0 0.0
    %3156 = vmatprep.subr.mxu0 0.0
    %3157 = vmatpush2.xpose.msra.mxu0 0.0
    %3158 = vmatprep.subr.mxu0 0.0
    %3159 = vmatpush2.xpose.msra.mxu0 0.0
    %3160 = vmatprep.subr.mxu0 0.0
    %3161 = vmatpush2.xpose.msra.mxu0 0.0
    %3162 = vmatprep.subr.mxu0 0.0
    %3163 = vmatpush2.xpose.msra.mxu0 0.0
    %3164 = vmatprep.mubr.f32.mxu0 0.0
    %3165 = vmatmul.mubr.f32.gmra.mxu0 %v3092
    %v3166 = vpop.f32.mrf.mxu0
    %v3167 = vadd.f32 0.0, %v3166
    %v3168 = vpop.f32.mrf.mxu0
    %3169 = vmatprep.mubr.f32.mxu0 0.0
    %3170 = vmatmul.mubr.f32.gmra.mxu0 %v3094
    %v3171 = vpop.f32.mrf.mxu0
    %v3172 = vadd.f32 0.0, %v3171
    %v3173 = vpop.f32.mrf.mxu0
    %3174 = vdwg.mxu0
    %vm3175 = vcmp.gt.f32.partialorder %v147, 0.0
    %vm3176 = vcmp.gt.f32.partialorder %v148, 0.0
    %v3177 = vsel %vm3175, %v3167, %v149
    %v3178 = vsel %vm3176, %v3172, %v150
    %v3179 = vsel %vm555, %v3177, -inf
    %3180 = vmax.xlane.f32.xlu0 %v3179
    %v3181 = vpop.xlane.xlu0 %3180
    %v3182 = vsel %vm555, %v3178, -inf
    %3183 = vmax.xlane.f32.xlu0 %v3182
    %v3184 = vpop.xlane.xlu0 %3183
    %v3185 = vsub.f32 %v3177, %v3181
    %v3186 = vsub.f32 %v3178, %v3184
    %v3187 = vmul.f32 %v3185, 1.442695
    %v3188 = vpow.pop %v3187
    %v3189 = vmul.f32 %v3186, 1.442695
    %v3190 = vpow.pop %v3189
    %v3191 = vsel %vm555, %v3188, 0.0
    %3192 = vadd.xlane.f32.xlu0 %v3191
    %v3193 = vpop.xlane.xlu0 %3192
    %v3194 = vsel %vm555, %v3190, 0.0
    %3195 = vadd.xlane.f32.xlu0 %v3194
    %v3196 = vpop.xlane.xlu0 %3195
    %v3197 = vrcp.pop %v3193
    %v3198 = vmul.f32 %v3188, %v3197
    %v3199 = vrcp.pop %v3196
    %v3200 = vmul.f32 %v3190, %v3199
    %3201 = vrot.lane.b32.xlu0 %v3078, 64
    %v3202 = vpop.permute.xlu0 %3201
    %3203 = vrot.lane.b32.xlu0 %v3083, 64
    %v3204 = vpop.permute.xlu0 %3203
    %v3208 = vsel %vm555, %v3198, 0
    %v3211 = vsel %vm555, %v3200, 0
    %3213 = vmatprep.subr.mxu0 0.0
    %3214 = vmatpush1.msra.mxu0 0.0
    %3215 = vmatprep.subr.mxu0 0.0
    %3216 = vmatpush1.msra.mxu0 0.0
    %3217 = vmatprep.subr.mxu0 0.0
    %3218 = vmatpush1.msra.mxu0 0.0
    %3219 = vmatprep.subr.mxu0 0.0
    %3220 = vmatpush1.msra.mxu0 0.0
    %3221 = vmatprep.subr.mxu0 0.0
    %3222 = vmatpush1.msra.mxu0 0.0
    %3223 = vmatprep.subr.mxu0 0.0
    %3224 = vmatpush1.msra.mxu0 0.0
    %3225 = vmatprep.subr.mxu0 0.0
    %3226 = vmatpush1.msra.mxu0 0.0
    %3227 = vmatprep.subr.mxu0 0.0
    %3228 = vmatpush1.msra.mxu0 0.0
    %3229 = vmatprep.subr.mxu0 0.0
    %3230 = vmatpush1.msra.mxu0 0.0
    %3231 = vmatprep.subr.mxu0 0.0
    %3232 = vmatpush1.msra.mxu0 0.0
    %3233 = vmatprep.subr.mxu0 0.0
    %3234 = vmatpush1.msra.mxu0 0.0
    %3235 = vmatprep.subr.mxu0 0.0
    %3236 = vmatpush1.msra.mxu0 0.0
    %3237 = vmatprep.subr.mxu0 0.0
    %3238 = vmatpush1.msra.mxu0 0.0
    %3239 = vmatprep.subr.mxu0 0.0
    %3240 = vmatpush1.msra.mxu0 0.0
    %3241 = vmatprep.subr.mxu0 0.0
    %3242 = vmatpush1.msra.mxu0 %v3204
    %3243 = vmatprep.subr.mxu0 0.0
    %3244 = vmatpush1.msra.mxu0 %v3202
    %3245 = vmatprep.subr.mxu0 0.0
    %3246 = vmatpush2.msra.mxu0 0.0
    %3247 = vmatprep.subr.mxu0 0.0
    %3248 = vmatpush2.msra.mxu0 0.0
    %3249 = vmatprep.subr.mxu0 0.0
    %3250 = vmatpush2.msra.mxu0 0.0
    %3251 = vmatprep.subr.mxu0 0.0
    %3252 = vmatpush2.msra.mxu0 0.0
    %3253 = vmatprep.subr.mxu0 0.0
    %3254 = vmatpush2.msra.mxu0 0.0
    %3255 = vmatprep.subr.mxu0 0.0
    %3256 = vmatpush2.msra.mxu0 0.0
    %3257 = vmatprep.subr.mxu0 0.0
    %3258 = vmatpush2.msra.mxu0 0.0
    %3259 = vmatprep.subr.mxu0 0.0
    %3260 = vmatpush2.msra.mxu0 0.0
    %3261 = vmatprep.subr.mxu0 0.0
    %3262 = vmatpush2.msra.mxu0 0.0
    %3263 = vmatprep.subr.mxu0 0.0
    %3264 = vmatpush2.msra.mxu0 0.0
    %3265 = vmatprep.subr.mxu0 0.0
    %3266 = vmatpush2.msra.mxu0 0.0
    %3267 = vmatprep.subr.mxu0 0.0
    %3268 = vmatpush2.msra.mxu0 0.0
    %3269 = vmatprep.subr.mxu0 0.0
    %3270 = vmatpush2.msra.mxu0 0.0
    %3271 = vmatprep.subr.mxu0 0.0
    %3272 = vmatpush2.msra.mxu0 0.0
    %3273 = vmatprep.subr.mxu0 0.0
    %3274 = vmatpush2.msra.mxu0 0.0
    %3275 = vmatprep.subr.mxu0 0.0
    %3276 = vmatpush2.msra.mxu0 0.0
    %3277 = vmatprep.mubr.f32.mxu0 0.0
    %3278 = vmatmul.mubr.f32.gmra.mxu0 %v3208
    %v3279 = vpop.f32.mrf.mxu0
    %v3280 = vadd.f32 0.0, %v3279
    %v3281 = vpop.f32.mrf.mxu0
    %3282 = vmatprep.mubr.f32.mxu0 0.0
    %3283 = vmatmul.mubr.f32.gmra.mxu0 %v3211
    %v3284 = vpop.f32.mrf.mxu0
    %v3285 = vadd.f32 0.0, %v3284
    %v3286 = vpop.f32.mrf.mxu0
    %3287 = vdwg.mxu0
    %3288 = vrot.lane.b32.xlu0 %v3078, 120
    %v3289 = vpop.permute.xlu0 %3288
    %3290 = vrot.lane.b32.xlu0 %v3083, 120
    %v3291 = vpop.permute.xlu0 %3290
    %3292 = vrot.lane.b32.xlu0 %v3078, 88
    %v3293 = vpop.permute.xlu0 %3292
    %3294 = vrot.lane.b32.xlu0 %v3083, 88
    %v3295 = vpop.permute.xlu0 %3294
    %v3296 = vsel %vm467, %v3289, 0
    %v3298 = vsel %vm467, %v3291, 0
    %v3300 = vsel %vm467, %v3293, 0
    %v3302 = vsel %vm467, %v3295, 0
    %3304 = vmatprep.subr.mxu0 0.0
    %3305 = vmatpush1.xpose.msra.mxu0 0.0
    %3306 = vmatprep.subr.mxu0 0.0
    %3307 = vmatpush1.xpose.msra.mxu0 0.0
    %3308 = vmatprep.subr.mxu0 0.0
    %3309 = vmatpush1.xpose.msra.mxu0 0.0
    %3310 = vmatprep.subr.mxu0 0.0
    %3311 = vmatpush1.xpose.msra.mxu0 0.0
    %3312 = vmatprep.subr.mxu0 0.0
    %3313 = vmatpush1.xpose.msra.mxu0 0.0
    %3314 = vmatprep.subr.mxu0 0.0
    %3315 = vmatpush1.xpose.msra.mxu0 0.0
    %3316 = vmatprep.subr.mxu0 0.0
    %3317 = vmatpush1.xpose.msra.mxu0 0.0
    %3318 = vmatprep.subr.mxu0 0.0
    %3319 = vmatpush1.xpose.msra.mxu0 0.0
    %3320 = vmatprep.subr.mxu0 0.0
    %3321 = vmatpush1.xpose.msra.mxu0 0.0
    %3322 = vmatprep.subr.mxu0 0.0
    %3323 = vmatpush1.xpose.msra.mxu0 0.0
    %3324 = vmatprep.subr.mxu0 0.0
    %3325 = vmatpush1.xpose.msra.mxu0 0.0
    %3326 = vmatprep.subr.mxu0 0.0
    %3327 = vmatpush1.xpose.msra.mxu0 0.0
    %3328 = vmatprep.subr.mxu0 0.0
    %3329 = vmatpush1.xpose.msra.mxu0 0.0
    %3330 = vmatprep.subr.mxu0 0.0
    %3331 = vmatpush1.xpose.msra.mxu0 0.0
    %3332 = vmatprep.subr.mxu0 0.0
    %3333 = vmatpush1.xpose.msra.mxu0 %v3302
    %3334 = vmatprep.subr.mxu0 0.0
    %3335 = vmatpush1.xpose.msra.mxu0 %v3300
    %3336 = vmatprep.subr.mxu0 0.0
    %3337 = vmatpush2.xpose.msra.mxu0 0.0
    %3338 = vmatprep.subr.mxu0 0.0
    %3339 = vmatpush2.xpose.msra.mxu0 0.0
    %3340 = vmatprep.subr.mxu0 0.0
    %3341 = vmatpush2.xpose.msra.mxu0 0.0
    %3342 = vmatprep.subr.mxu0 0.0
    %3343 = vmatpush2.xpose.msra.mxu0 0.0
    %3344 = vmatprep.subr.mxu0 0.0
    %3345 = vmatpush2.xpose.msra.mxu0 0.0
    %3346 = vmatprep.subr.mxu0 0.0
    %3347 = vmatpush2.xpose.msra.mxu0 0.0
    %3348 = vmatprep.subr.mxu0 0.0
    %3349 = vmatpush2.xpose.msra.mxu0 0.0
    %3350 = vmatprep.subr.mxu0 0.0
    %3351 = vmatpush2.xpose.msra.mxu0 0.0
    %3352 = vmatprep.subr.mxu0 0.0
    %3353 = vmatpush2.xpose.msra.mxu0 0.0
    %3354 = vmatprep.subr.mxu0 0.0
    %3355 = vmatpush2.xpose.msra.mxu0 0.0
    %3356 = vmatprep.subr.mxu0 0.0
    %3357 = vmatpush2.xpose.msra.mxu0 0.0
    %3358 = vmatprep.subr.mxu0 0.0
    %3359 = vmatpush2.xpose.msra.mxu0 0.0
    %3360 = vmatprep.subr.mxu0 0.0
    %3361 = vmatpush2.xpose.msra.mxu0 0.0
    %3362 = vmatprep.subr.mxu0 0.0
    %3363 = vmatpush2.xpose.msra.mxu0 0.0
    %3364 = vmatprep.subr.mxu0 0.0
    %3365 = vmatpush2.xpose.msra.mxu0 0.0
    %3366 = vmatprep.subr.mxu0 0.0
    %3367 = vmatpush2.xpose.msra.mxu0 0.0
    %3368 = vmatprep.mubr.f32.mxu0 0.0
    %3369 = vmatmul.mubr.f32.gmra.mxu0 %v3296
    %v3370 = vpop.f32.mrf.mxu0
    %v3371 = vadd.f32 0.0, %v3370
    %v3372 = vpop.f32.mrf.mxu0
    %3373 = vmatprep.mubr.f32.mxu0 0.0
    %3374 = vmatmul.mubr.f32.gmra.mxu0 %v3298
    %v3375 = vpop.f32.mrf.mxu0
    %v3376 = vadd.f32 0.0, %v3375
    %v3377 = vpop.f32.mrf.mxu0
    %3378 = vdwg.mxu0
    %v3379 = vsel %vm3175, %v3371, %v149
    %v3380 = vsel %vm3176, %v3376, %v150
    %v3381 = vsel %vm555, %v3379, -inf
    %3382 = vmax.xlane.f32.xlu0 %v3381
    %v3383 = vpop.xlane.xlu0 %3382
    %v3384 = vsel %vm555, %v3380, -inf
    %3385 = vmax.xlane.f32.xlu0 %v3384
    %v3386 = vpop.xlane.xlu0 %3385
    %v3387 = vsub.f32 %v3379, %v3383
    %v3388 = vsub.f32 %v3380, %v3386
    %v3389 = vmul.f32 %v3387, 1.442695
    %v3390 = vpow.pop %v3389
    %v3391 = vmul.f32 %v3388, 1.442695
    %v3392 = vpow.pop %v3391
    %v3393 = vsel %vm555, %v3390, 0.0
    %3394 = vadd.xlane.f32.xlu0 %v3393
    %v3395 = vpop.xlane.xlu0 %3394
    %v3396 = vsel %vm555, %v3392, 0.0
    %3397 = vadd.xlane.f32.xlu0 %v3396
    %v3398 = vpop.xlane.xlu0 %3397
    %v3399 = vrcp.pop %v3395
    %v3400 = vmul.f32 %v3390, %v3399
    %v3401 = vrcp.pop %v3398
    %v3402 = vmul.f32 %v3392, %v3401
    %3403 = vrot.lane.b32.xlu0 %v3078, 56
    %v3404 = vpop.permute.xlu0 %3403
    %3405 = vrot.lane.b32.xlu0 %v3083, 56
    %v3406 = vpop.permute.xlu0 %3405
    %v3410 = vsel %vm555, %v3400, 0
    %v3413 = vsel %vm555, %v3402, 0
    %3415 = vmatprep.subr.mxu0 0.0
    %3416 = vmatpush1.msra.mxu0 0.0
    %3417 = vmatprep.subr.mxu0 0.0
    %3418 = vmatpush1.msra.mxu0 0.0
    %3419 = vmatprep.subr.mxu0 0.0
    %3420 = vmatpush1.msra.mxu0 0.0
    %3421 = vmatprep.subr.mxu0 0.0
    %3422 = vmatpush1.msra.mxu0 0.0
    %3423 = vmatprep.subr.mxu0 0.0
    %3424 = vmatpush1.msra.mxu0 0.0
    %3425 = vmatprep.subr.mxu0 0.0
    %3426 = vmatpush1.msra.mxu0 0.0
    %3427 = vmatprep.subr.mxu0 0.0
    %3428 = vmatpush1.msra.mxu0 0.0
    %3429 = vmatprep.subr.mxu0 0.0
    %3430 = vmatpush1.msra.mxu0 0.0
    %3431 = vmatprep.subr.mxu0 0.0
    %3432 = vmatpush1.msra.mxu0 0.0
    %3433 = vmatprep.subr.mxu0 0.0
    %3434 = vmatpush1.msra.mxu0 0.0
    %3435 = vmatprep.subr.mxu0 0.0
    %3436 = vmatpush1.msra.mxu0 0.0
    %3437 = vmatprep.subr.mxu0 0.0
    %3438 = vmatpush1.msra.mxu0 0.0
    %3439 = vmatprep.subr.mxu0 0.0
    %3440 = vmatpush1.msra.mxu0 0.0
    %3441 = vmatprep.subr.mxu0 0.0
    %3442 = vmatpush1.msra.mxu0 0.0
    %3443 = vmatprep.subr.mxu0 0.0
    %3444 = vmatpush1.msra.mxu0 %v3406
    %3445 = vmatprep.subr.mxu0 0.0
    %3446 = vmatpush1.msra.mxu0 %v3404
    %3447 = vmatprep.subr.mxu0 0.0
    %3448 = vmatpush2.msra.mxu0 0.0
    %3449 = vmatprep.subr.mxu0 0.0
    %3450 = vmatpush2.msra.mxu0 0.0
    %3451 = vmatprep.subr.mxu0 0.0
    %3452 = vmatpush2.msra.mxu0 0.0
    %3453 = vmatprep.subr.mxu0 0.0
    %3454 = vmatpush2.msra.mxu0 0.0
    %3455 = vmatprep.subr.mxu0 0.0
    %3456 = vmatpush2.msra.mxu0 0.0
    %3457 = vmatprep.subr.mxu0 0.0
    %3458 = vmatpush2.msra.mxu0 0.0
    %3459 = vmatprep.subr.mxu0 0.0
    %3460 = vmatpush2.msra.mxu0 0.0
    %3461 = vmatprep.subr.mxu0 0.0
    %3462 = vmatpush2.msra.mxu0 0.0
    %3463 = vmatprep.subr.mxu0 0.0
    %3464 = vmatpush2.msra.mxu0 0.0
    %3465 = vmatprep.subr.mxu0 0.0
    %3466 = vmatpush2.msra.mxu0 0.0
    %3467 = vmatprep.subr.mxu0 0.0
    %3468 = vmatpush2.msra.mxu0 0.0
    %3469 = vmatprep.subr.mxu0 0.0
    %3470 = vmatpush2.msra.mxu0 0.0
    %3471 = vmatprep.subr.mxu0 0.0
    %3472 = vmatpush2.msra.mxu0 0.0
    %3473 = vmatprep.subr.mxu0 0.0
    %3474 = vmatpush2.msra.mxu0 0.0
    %3475 = vmatprep.subr.mxu0 0.0
    %3476 = vmatpush2.msra.mxu0 0.0
    %3477 = vmatprep.subr.mxu0 0.0
    %3478 = vmatpush2.msra.mxu0 0.0
    %3479 = vmatprep.mubr.f32.mxu0 0.0
    %3480 = vmatmul.mubr.f32.gmra.mxu0 %v3410
    %v3481 = vpop.f32.mrf.mxu0
    %v3482 = vadd.f32 0.0, %v3481
    %v3483 = vpop.f32.mrf.mxu0
    %3484 = vmatprep.mubr.f32.mxu0 0.0
    %3485 = vmatmul.mubr.f32.gmra.mxu0 %v3413
    %v3486 = vpop.f32.mrf.mxu0
    %v3487 = vadd.f32 0.0, %v3486
    %v3488 = vpop.f32.mrf.mxu0
    %3489 = vdwg.mxu0
    %3490 = vrot.lane.b32.xlu0 %v3078, 112
    %v3491 = vpop.permute.xlu0 %3490
    %3492 = vrot.lane.b32.xlu0 %v3083, 112
    %v3493 = vpop.permute.xlu0 %3492
    %3494 = vrot.lane.b32.xlu0 %v3078, 80
    %v3495 = vpop.permute.xlu0 %3494
    %3496 = vrot.lane.b32.xlu0 %v3083, 80
    %v3497 = vpop.permute.xlu0 %3496
    %v3498 = vsel %vm467, %v3491, 0
    %v3500 = vsel %vm467, %v3493, 0
    %v3502 = vsel %vm467, %v3495, 0
    %v3504 = vsel %vm467, %v3497, 0
    %3506 = vmatprep.subr.mxu0 0.0
    %3507 = vmatpush1.xpose.msra.mxu0 0.0
    %3508 = vmatprep.subr.mxu0 0.0
    %3509 = vmatpush1.xpose.msra.mxu0 0.0
    %3510 = vmatprep.subr.mxu0 0.0
    %3511 = vmatpush1.xpose.msra.mxu0 0.0
    %3512 = vmatprep.subr.mxu0 0.0
    %3513 = vmatpush1.xpose.msra.mxu0 0.0
    %3514 = vmatprep.subr.mxu0 0.0
    %3515 = vmatpush1.xpose.msra.mxu0 0.0
    %3516 = vmatprep.subr.mxu0 0.0
    %3517 = vmatpush1.xpose.msra.mxu0 0.0
    %3518 = vmatprep.subr.mxu0 0.0
    %3519 = vmatpush1.xpose.msra.mxu0 0.0
    %3520 = vmatprep.subr.mxu0 0.0
    %3521 = vmatpush1.xpose.msra.mxu0 0.0
    %3522 = vmatprep.subr.mxu0 0.0
    %3523 = vmatpush1.xpose.msra.mxu0 0.0
    %3524 = vmatprep.subr.mxu0 0.0
    %3525 = vmatpush1.xpose.msra.mxu0 0.0
    %3526 = vmatprep.subr.mxu0 0.0
    %3527 = vmatpush1.xpose.msra.mxu0 0.0
    %3528 = vmatprep.subr.mxu0 0.0
    %3529 = vmatpush1.xpose.msra.mxu0 0.0
    %3530 = vmatprep.subr.mxu0 0.0
    %3531 = vmatpush1.xpose.msra.mxu0 0.0
    %3532 = vmatprep.subr.mxu0 0.0
    %3533 = vmatpush1.xpose.msra.mxu0 0.0
    %3534 = vmatprep.subr.mxu0 0.0
    %3535 = vmatpush1.xpose.msra.mxu0 %v3504
    %3536 = vmatprep.subr.mxu0 0.0
    %3537 = vmatpush1.xpose.msra.mxu0 %v3502
    %3538 = vmatprep.subr.mxu0 0.0
    %3539 = vmatpush2.xpose.msra.mxu0 0.0
    %3540 = vmatprep.subr.mxu0 0.0
    %3541 = vmatpush2.xpose.msra.mxu0 0.0
    %3542 = vmatprep.subr.mxu0 0.0
    %3543 = vmatpush2.xpose.msra.mxu0 0.0
    %3544 = vmatprep.subr.mxu0 0.0
    %3545 = vmatpush2.xpose.msra.mxu0 0.0
    %3546 = vmatprep.subr.mxu0 0.0
    %3547 = vmatpush2.xpose.msra.mxu0 0.0
    %3548 = vmatprep.subr.mxu0 0.0
    %3549 = vmatpush2.xpose.msra.mxu0 0.0
    %3550 = vmatprep.subr.mxu0 0.0
    %3551 = vmatpush2.xpose.msra.mxu0 0.0
    %3552 = vmatprep.subr.mxu0 0.0
    %3553 = vmatpush2.xpose.msra.mxu0 0.0
    %3554 = vmatprep.subr.mxu0 0.0
    %3555 = vmatpush2.xpose.msra.mxu0 0.0
    %3556 = vmatprep.subr.mxu0 0.0
    %3557 = vmatpush2.xpose.msra.mxu0 0.0
    %3558 = vmatprep.subr.mxu0 0.0
    %3559 = vmatpush2.xpose.msra.mxu0 0.0
    %3560 = vmatprep.subr.mxu0 0.0
    %3561 = vmatpush2.xpose.msra.mxu0 0.0
    %3562 = vmatprep.subr.mxu0 0.0
    %3563 = vmatpush2.xpose.msra.mxu0 0.0
    %3564 = vmatprep.subr.mxu0 0.0
    %3565 = vmatpush2.xpose.msra.mxu0 0.0
    %3566 = vmatprep.subr.mxu0 0.0
    %3567 = vmatpush2.xpose.msra.mxu0 0.0
    %3568 = vmatprep.subr.mxu0 0.0
    %3569 = vmatpush2.xpose.msra.mxu0 0.0
    %3570 = vmatprep.mubr.f32.mxu0 0.0
    %3571 = vmatmul.mubr.f32.gmra.mxu0 %v3498
    %v3572 = vpop.f32.mrf.mxu0
    %v3573 = vadd.f32 0.0, %v3572
    %v3574 = vpop.f32.mrf.mxu0
    %3575 = vmatprep.mubr.f32.mxu0 0.0
    %3576 = vmatmul.mubr.f32.gmra.mxu0 %v3500
    %v3577 = vpop.f32.mrf.mxu0
    %v3578 = vadd.f32 0.0, %v3577
    %v3579 = vpop.f32.mrf.mxu0
    %3580 = vdwg.mxu0
    %v3581 = vsel %vm3175, %v3573, %v149
    %v3582 = vsel %vm3176, %v3578, %v150
    %v3583 = vsel %vm555, %v3581, -inf
    %3584 = vmax.xlane.f32.xlu0 %v3583
    %v3585 = vpop.xlane.xlu0 %3584
    %v3586 = vsel %vm555, %v3582, -inf
    %3587 = vmax.xlane.f32.xlu0 %v3586
    %v3588 = vpop.xlane.xlu0 %3587
    %v3589 = vsub.f32 %v3581, %v3585
    %v3590 = vsub.f32 %v3582, %v3588
    %v3591 = vmul.f32 %v3589, 1.442695
    %v3592 = vpow.pop %v3591
    %v3593 = vmul.f32 %v3590, 1.442695
    %v3594 = vpow.pop %v3593
    %v3595 = vsel %vm555, %v3592, 0.0
    %3596 = vadd.xlane.f32.xlu0 %v3595
    %v3597 = vpop.xlane.xlu0 %3596
    %v3598 = vsel %vm555, %v3594, 0.0
    %3599 = vadd.xlane.f32.xlu0 %v3598
    %v3600 = vpop.xlane.xlu0 %3599
    %v3601 = vrcp.pop %v3597
    %v3602 = vmul.f32 %v3592, %v3601
    %v3603 = vrcp.pop %v3600
    %v3604 = vmul.f32 %v3594, %v3603
    %3605 = vrot.lane.b32.xlu0 %v3078, 48
    %v3606 = vpop.permute.xlu0 %3605
    %3607 = vrot.lane.b32.xlu0 %v3083, 48
    %v3608 = vpop.permute.xlu0 %3607
    %v3612 = vsel %vm555, %v3602, 0
    %v3615 = vsel %vm555, %v3604, 0
    %3617 = vmatprep.subr.mxu0 0.0
    %3618 = vmatpush1.msra.mxu0 0.0
    %3619 = vmatprep.subr.mxu0 0.0
    %3620 = vmatpush1.msra.mxu0 0.0
    %3621 = vmatprep.subr.mxu0 0.0
    %3622 = vmatpush1.msra.mxu0 0.0
    %3623 = vmatprep.subr.mxu0 0.0
    %3624 = vmatpush1.msra.mxu0 0.0
    %3625 = vmatprep.subr.mxu0 0.0
    %3626 = vmatpush1.msra.mxu0 0.0
    %3627 = vmatprep.subr.mxu0 0.0
    %3628 = vmatpush1.msra.mxu0 0.0
    %3629 = vmatprep.subr.mxu0 0.0
    %3630 = vmatpush1.msra.mxu0 0.0
    %3631 = vmatprep.subr.mxu0 0.0
    %3632 = vmatpush1.msra.mxu0 0.0
    %3633 = vmatprep.subr.mxu0 0.0
    %3634 = vmatpush1.msra.mxu0 0.0
    %3635 = vmatprep.subr.mxu0 0.0
    %3636 = vmatpush1.msra.mxu0 0.0
    %3637 = vmatprep.subr.mxu0 0.0
    %3638 = vmatpush1.msra.mxu0 0.0
    %3639 = vmatprep.subr.mxu0 0.0
    %3640 = vmatpush1.msra.mxu0 0.0
    %3641 = vmatprep.subr.mxu0 0.0
    %3642 = vmatpush1.msra.mxu0 0.0
    %3643 = vmatprep.subr.mxu0 0.0
    %3644 = vmatpush1.msra.mxu0 0.0
    %3645 = vmatprep.subr.mxu0 0.0
    %3646 = vmatpush1.msra.mxu0 %v3608
    %3647 = vmatprep.subr.mxu0 0.0
    %3648 = vmatpush1.msra.mxu0 %v3606
    %3649 = vmatprep.subr.mxu0 0.0
    %3650 = vmatpush2.msra.mxu0 0.0
    %3651 = vmatprep.subr.mxu0 0.0
    %3652 = vmatpush2.msra.mxu0 0.0
    %3653 = vmatprep.subr.mxu0 0.0
    %3654 = vmatpush2.msra.mxu0 0.0
    %3655 = vmatprep.subr.mxu0 0.0
    %3656 = vmatpush2.msra.mxu0 0.0
    %3657 = vmatprep.subr.mxu0 0.0
    %3658 = vmatpush2.msra.mxu0 0.0
    %3659 = vmatprep.subr.mxu0 0.0
    %3660 = vmatpush2.msra.mxu0 0.0
    %3661 = vmatprep.subr.mxu0 0.0
    %3662 = vmatpush2.msra.mxu0 0.0
    %3663 = vmatprep.subr.mxu0 0.0
    %3664 = vmatpush2.msra.mxu0 0.0
    %3665 = vmatprep.subr.mxu0 0.0
    %3666 = vmatpush2.msra.mxu0 0.0
    %3667 = vmatprep.subr.mxu0 0.0
    %3668 = vmatpush2.msra.mxu0 0.0
    %3669 = vmatprep.subr.mxu0 0.0
    %3670 = vmatpush2.msra.mxu0 0.0
    %3671 = vmatprep.subr.mxu0 0.0
    %3672 = vmatpush2.msra.mxu0 0.0
    %3673 = vmatprep.subr.mxu0 0.0
    %3674 = vmatpush2.msra.mxu0 0.0
    %3675 = vmatprep.subr.mxu0 0.0
    %3676 = vmatpush2.msra.mxu0 0.0
    %3677 = vmatprep.subr.mxu0 0.0
    %3678 = vmatpush2.msra.mxu0 0.0
    %3679 = vmatprep.subr.mxu0 0.0
    %3680 = vmatpush2.msra.mxu0 0.0
    %3681 = vmatprep.mubr.f32.mxu0 0.0
    %3682 = vmatmul.mubr.f32.gmra.mxu0 %v3612
    %v3683 = vpop.f32.mrf.mxu0
    %v3684 = vadd.f32 0.0, %v3683
    %v3685 = vpop.f32.mrf.mxu0
    %3686 = vmatprep.mubr.f32.mxu0 0.0
    %3687 = vmatmul.mubr.f32.gmra.mxu0 %v3615
    %v3688 = vpop.f32.mrf.mxu0
    %v3689 = vadd.f32 0.0, %v3688
    %v3690 = vpop.f32.mrf.mxu0
    %3691 = vdwg.mxu0
    %3692 = vrot.lane.b32.xlu0 %v3078, 104
    %v3693 = vpop.permute.xlu0 %3692
    %3694 = vrot.lane.b32.xlu0 %v3083, 104
    %v3695 = vpop.permute.xlu0 %3694
    %3696 = vrot.lane.b32.xlu0 %v3078, 72
    %v3697 = vpop.permute.xlu0 %3696
    %3698 = vrot.lane.b32.xlu0 %v3083, 72
    %v3699 = vpop.permute.xlu0 %3698
    %v3700 = vsel %vm467, %v3693, 0
    %v3702 = vsel %vm467, %v3695, 0
    %v3704 = vsel %vm467, %v3697, 0
    %v3706 = vsel %vm467, %v3699, 0
    %3708 = vmatprep.subr.mxu0 0.0
    %3709 = vmatpush1.xpose.msra.mxu0 0.0
    %3710 = vmatprep.subr.mxu0 0.0
    %3711 = vmatpush1.xpose.msra.mxu0 0.0
    %3712 = vmatprep.subr.mxu0 0.0
    %3713 = vmatpush1.xpose.msra.mxu0 0.0
    %3714 = vmatprep.subr.mxu0 0.0
    %3715 = vmatpush1.xpose.msra.mxu0 0.0
    %3716 = vmatprep.subr.mxu0 0.0
    %3717 = vmatpush1.xpose.msra.mxu0 0.0
    %3718 = vmatprep.subr.mxu0 0.0
    %3719 = vmatpush1.xpose.msra.mxu0 0.0
    %3720 = vmatprep.subr.mxu0 0.0
    %3721 = vmatpush1.xpose.msra.mxu0 0.0
    %3722 = vmatprep.subr.mxu0 0.0
    %3723 = vmatpush1.xpose.msra.mxu0 0.0
    %3724 = vmatprep.subr.mxu0 0.0
    %3725 = vmatpush1.xpose.msra.mxu0 0.0
    %3726 = vmatprep.subr.mxu0 0.0
    %3727 = vmatpush1.xpose.msra.mxu0 0.0
    %3728 = vmatprep.subr.mxu0 0.0
    %3729 = vmatpush1.xpose.msra.mxu0 0.0
    %3730 = vmatprep.subr.mxu0 0.0
    %3731 = vmatpush1.xpose.msra.mxu0 0.0
    %3732 = vmatprep.subr.mxu0 0.0
    %3733 = vmatpush1.xpose.msra.mxu0 0.0
    %3734 = vmatprep.subr.mxu0 0.0
    %3735 = vmatpush1.xpose.msra.mxu0 0.0
    %3736 = vmatprep.subr.mxu0 0.0
    %3737 = vmatpush1.xpose.msra.mxu0 %v3706
    %3738 = vmatprep.subr.mxu0 0.0
    %3739 = vmatpush1.xpose.msra.mxu0 %v3704
    %3740 = vmatprep.subr.mxu0 0.0
    %3741 = vmatpush2.xpose.msra.mxu0 0.0
    %3742 = vmatprep.subr.mxu0 0.0
    %3743 = vmatpush2.xpose.msra.mxu0 0.0
    %3744 = vmatprep.subr.mxu0 0.0
    %3745 = vmatpush2.xpose.msra.mxu0 0.0
    %3746 = vmatprep.subr.mxu0 0.0
    %3747 = vmatpush2.xpose.msra.mxu0 0.0
    %3748 = vmatprep.subr.mxu0 0.0
    %3749 = vmatpush2.xpose.msra.mxu0 0.0
    %3750 = vmatprep.subr.mxu0 0.0
    %3751 = vmatpush2.xpose.msra.mxu0 0.0
    %3752 = vmatprep.subr.mxu0 0.0
    %3753 = vmatpush2.xpose.msra.mxu0 0.0
    %3754 = vmatprep.subr.mxu0 0.0
    %3755 = vmatpush2.xpose.msra.mxu0 0.0
    %3756 = vmatprep.subr.mxu0 0.0
    %3757 = vmatpush2.xpose.msra.mxu0 0.0
    %3758 = vmatprep.subr.mxu0 0.0
    %3759 = vmatpush2.xpose.msra.mxu0 0.0
    %3760 = vmatprep.subr.mxu0 0.0
    %3761 = vmatpush2.xpose.msra.mxu0 0.0
    %3762 = vmatprep.subr.mxu0 0.0
    %3763 = vmatpush2.xpose.msra.mxu0 0.0
    %3764 = vmatprep.subr.mxu0 0.0
    %3765 = vmatpush2.xpose.msra.mxu0 0.0
    %3766 = vmatprep.subr.mxu0 0.0
    %3767 = vmatpush2.xpose.msra.mxu0 0.0
    %3768 = vmatprep.subr.mxu0 0.0
    %3769 = vmatpush2.xpose.msra.mxu0 0.0
    %3770 = vmatprep.subr.mxu0 0.0
    %3771 = vmatpush2.xpose.msra.mxu0 0.0
    %3772 = vmatprep.mubr.f32.mxu0 0.0
    %3773 = vmatmul.mubr.f32.gmra.mxu0 %v3700
    %v3774 = vpop.f32.mrf.mxu0
    %v3775 = vadd.f32 0.0, %v3774
    %v3776 = vpop.f32.mrf.mxu0
    %3777 = vmatprep.mubr.f32.mxu0 0.0
    %3778 = vmatmul.mubr.f32.gmra.mxu0 %v3702
    %v3779 = vpop.f32.mrf.mxu0
    %v3780 = vadd.f32 0.0, %v3779
    %v3781 = vpop.f32.mrf.mxu0
    %3782 = vdwg.mxu0
    %v3783 = vsel %vm3175, %v3775, %v149
    %v3784 = vsel %vm3176, %v3780, %v150
    %v3785 = vsel %vm555, %v3783, -inf
    %3786 = vmax.xlane.f32.xlu0 %v3785
    %v3787 = vpop.xlane.xlu0 %3786
    %v3788 = vsel %vm555, %v3784, -inf
    %3789 = vmax.xlane.f32.xlu0 %v3788
    %v3790 = vpop.xlane.xlu0 %3789
    %v3791 = vsub.f32 %v3783, %v3787
    %v3792 = vsub.f32 %v3784, %v3790
    %v3793 = vmul.f32 %v3791, 1.442695
    %v3794 = vpow.pop %v3793
    %v3795 = vmul.f32 %v3792, 1.442695
    %v3796 = vpow.pop %v3795
    %v3797 = vsel %vm555, %v3794, 0.0
    %3798 = vadd.xlane.f32.xlu0 %v3797
    %v3799 = vpop.xlane.xlu0 %3798
    %v3800 = vsel %vm555, %v3796, 0.0
    %3801 = vadd.xlane.f32.xlu0 %v3800
    %v3802 = vpop.xlane.xlu0 %3801
    %v3803 = vrcp.pop %v3799
    %v3804 = vmul.f32 %v3794, %v3803
    %v3805 = vrcp.pop %v3802
    %v3806 = vmul.f32 %v3796, %v3805
    %3807 = vrot.lane.b32.xlu0 %v3078, 40
    %v3808 = vpop.permute.xlu0 %3807
    %3809 = vrot.lane.b32.xlu0 %v3083, 40
    %v3810 = vpop.permute.xlu0 %3809
    %v3814 = vsel %vm555, %v3804, 0
    %v3817 = vsel %vm555, %v3806, 0
    %3819 = vmatprep.subr.mxu0 0.0
    %3820 = vmatpush1.msra.mxu0 0.0
    %3821 = vmatprep.subr.mxu0 0.0
    %3822 = vmatpush1.msra.mxu0 0.0
    %3823 = vmatprep.subr.mxu0 0.0
    %3824 = vmatpush1.msra.mxu0 0.0
    %3825 = vmatprep.subr.mxu0 0.0
    %3826 = vmatpush1.msra.mxu0 0.0
    %3827 = vmatprep.subr.mxu0 0.0
    %3828 = vmatpush1.msra.mxu0 0.0
    %3829 = vmatprep.subr.mxu0 0.0
    %3830 = vmatpush1.msra.mxu0 0.0
    %3831 = vmatprep.subr.mxu0 0.0
    %3832 = vmatpush1.msra.mxu0 0.0
    %3833 = vmatprep.subr.mxu0 0.0
    %3834 = vmatpush1.msra.mxu0 0.0
    %3835 = vmatprep.subr.mxu0 0.0
    %3836 = vmatpush1.msra.mxu0 0.0
    %3837 = vmatprep.subr.mxu0 0.0
    %3838 = vmatpush1.msra.mxu0 0.0
    %3839 = vmatprep.subr.mxu0 0.0
    %3840 = vmatpush1.msra.mxu0 0.0
    %3841 = vmatprep.subr.mxu0 0.0
    %3842 = vmatpush1.msra.mxu0 0.0
    %3843 = vmatprep.subr.mxu0 0.0
    %3844 = vmatpush1.msra.mxu0 0.0
    %3845 = vmatprep.subr.mxu0 0.0
    %3846 = vmatpush1.msra.mxu0 0.0
    %3847 = vmatprep.subr.mxu0 0.0
    %3848 = vmatpush1.msra.mxu0 %v3810
    %3849 = vmatprep.subr.mxu0 0.0
    %3850 = vmatpush1.msra.mxu0 %v3808
    %3851 = vmatprep.subr.mxu0 0.0
    %3852 = vmatpush2.msra.mxu0 0.0
    %3853 = vmatprep.subr.mxu0 0.0
    %3854 = vmatpush2.msra.mxu0 0.0
    %3855 = vmatprep.subr.mxu0 0.0
    %3856 = vmatpush2.msra.mxu0 0.0
    %3857 = vmatprep.subr.mxu0 0.0
    %3858 = vmatpush2.msra.mxu0 0.0
    %3859 = vmatprep.subr.mxu0 0.0
    %3860 = vmatpush2.msra.mxu0 0.0
    %3861 = vmatprep.subr.mxu0 0.0
    %3862 = vmatpush2.msra.mxu0 0.0
    %3863 = vmatprep.subr.mxu0 0.0
    %3864 = vmatpush2.msra.mxu0 0.0
    %3865 = vmatprep.subr.mxu0 0.0
    %3866 = vmatpush2.msra.mxu0 0.0
    %3867 = vmatprep.subr.mxu0 0.0
    %3868 = vmatpush2.msra.mxu0 0.0
    %3869 = vmatprep.subr.mxu0 0.0
    %3870 = vmatpush2.msra.mxu0 0.0
    %3871 = vmatprep.subr.mxu0 0.0
    %3872 = vmatpush2.msra.mxu0 0.0
    %3873 = vmatprep.subr.mxu0 0.0
    %3874 = vmatpush2.msra.mxu0 0.0
    %3875 = vmatprep.subr.mxu0 0.0
    %3876 = vmatpush2.msra.mxu0 0.0
    %3877 = vmatprep.subr.mxu0 0.0
    %3878 = vmatpush2.msra.mxu0 0.0
    %3879 = vmatprep.subr.mxu0 0.0
    %3880 = vmatpush2.msra.mxu0 0.0
    %3881 = vmatprep.subr.mxu0 0.0
    %3882 = vmatpush2.msra.mxu0 0.0
    %3883 = vmatprep.mubr.f32.mxu0 0.0
    %3884 = vmatmul.mubr.f32.gmra.mxu0 %v3814
    %v3885 = vpop.f32.mrf.mxu0
    %v3886 = vadd.f32 0.0, %v3885
    %v3887 = vpop.f32.mrf.mxu0
    %3888 = vmatprep.mubr.f32.mxu0 0.0
    %3889 = vmatmul.mubr.f32.gmra.mxu0 %v3817
    %v3890 = vpop.f32.mrf.mxu0
    %v3891 = vadd.f32 0.0, %v3890
    %v3892 = vpop.f32.mrf.mxu0
    %3893 = vdwg.mxu0
    %3896 = vrot.lane.b32.xlu0 %v3482, 8
    %v3897 = vpop.permute.xlu0 %3896
    %3898 = vrot.lane.b32.xlu0 %v3487, 8
    %v3899 = vpop.permute.xlu0 %3898
    %3904 = vrot.lane.b32.xlu0 %v3684, 16
    %v3905 = vpop.permute.xlu0 %3904
    %3906 = vrot.lane.b32.xlu0 %v3689, 16
    %v3907 = vpop.permute.xlu0 %3906
    %3912 = vrot.lane.b32.xlu0 %v3886, 24
    %v3913 = vpop.permute.xlu0 %3912
    %3914 = vrot.lane.b32.xlu0 %v3891, 24
    %v3915 = vpop.permute.xlu0 %3914
    %v3918 = vsel %vm467, %v3280, %v3897
    %v3919 = vsel %vm467, %v3285, %v3899
    %v3920 = vsel %vm555, %v3918, %v3905
    %v3921 = vsel %vm555, %v3919, %v3907
    %v3922 = vsel %vm1299, %v3920, %v3913
    %v3923 = vsel %vm1299, %v3921, %v3915
    %v3925 = vlaneseq
    %v3926 = vshrl.u32 %v3925, 7
    %v3927 = vsub.s32 0, %v3926
    %v3928 = vrot.slane %v2998, %v3927
    %v3931 = vsel %vm379, %v3922, 0
    %v3934 = vsel %vm379, %v3923, 0
    %3936 = vmatprep.subr.mxu0 0.0
    %3937 = vmatpush1.msra.mxu0 0.0
    %3938 = vmatprep.subr.mxu0 0.0
    %3939 = vmatpush1.msra.mxu0 0.0
    %3940 = vmatprep.subr.mxu0 0.0
    %3941 = vmatpush1.msra.mxu0 0.0
    %3942 = vmatprep.subr.mxu0 0.0
    %3943 = vmatpush1.msra.mxu0 0.0
    %3944 = vmatprep.subr.mxu0 0.0
    %3945 = vmatpush1.msra.mxu0 0.0
    %3946 = vmatprep.subr.mxu0 0.0
    %3947 = vmatpush1.msra.mxu0 0.0
    %3948 = vmatprep.subr.mxu0 0.0
    %3949 = vmatpush1.msra.mxu0 0.0
    %3950 = vmatprep.subr.mxu0 0.0
    %3951 = vmatpush1.msra.mxu0 0.0
    %3952 = vmatprep.subr.mxu0 0.0
    %3953 = vmatpush1.msra.mxu0 0.0
    %3954 = vmatprep.subr.mxu0 0.0
    %3955 = vmatpush1.msra.mxu0 0.0
    %3956 = vmatprep.subr.mxu0 0.0
    %3957 = vmatpush1.msra.mxu0 0.0
    %3958 = vmatprep.subr.mxu0 0.0
    %3959 = vmatpush1.msra.mxu0 0.0
    %3960 = vmatprep.subr.mxu0 0.0
    %3961 = vmatpush1.msra.mxu0 %v2997
    %3962 = vmatprep.subr.mxu0 0.0
    %3963 = vmatpush1.msra.mxu0 %v2996
    %3964 = vmatprep.subr.mxu0 0.0
    %3965 = vmatpush1.msra.mxu0 %v2995
    %3966 = vmatprep.subr.mxu0 0.0
    %3967 = vmatpush1.msra.mxu0 %v2994
    %3968 = vmatprep.subr.mxu0 0.0
    %3969 = vmatpush2.msra.mxu0 0.0
    %3970 = vmatprep.subr.mxu0 0.0
    %3971 = vmatpush2.msra.mxu0 0.0
    %3972 = vmatprep.subr.mxu0 0.0
    %3973 = vmatpush2.msra.mxu0 0.0
    %3974 = vmatprep.subr.mxu0 0.0
    %3975 = vmatpush2.msra.mxu0 0.0
    %3976 = vmatprep.subr.mxu0 0.0
    %3977 = vmatpush2.msra.mxu0 0.0
    %3978 = vmatprep.subr.mxu0 0.0
    %3979 = vmatpush2.msra.mxu0 0.0
    %3980 = vmatprep.subr.mxu0 0.0
    %3981 = vmatpush2.msra.mxu0 0.0
    %3982 = vmatprep.subr.mxu0 0.0
    %3983 = vmatpush2.msra.mxu0 0.0
    %3984 = vmatprep.subr.mxu0 0.0
    %3985 = vmatpush2.msra.mxu0 0.0
    %3986 = vmatprep.subr.mxu0 0.0
    %3987 = vmatpush2.msra.mxu0 0.0
    %3988 = vmatprep.subr.mxu0 0.0
    %3989 = vmatpush2.msra.mxu0 0.0
    %3990 = vmatprep.subr.mxu0 0.0
    %3991 = vmatpush2.msra.mxu0 0.0
    %3992 = vmatprep.subr.mxu0 0.0
    %3993 = vmatpush2.msra.mxu0 0.0
    %3994 = vmatprep.subr.mxu0 0.0
    %3995 = vmatpush2.msra.mxu0 0.0
    %3996 = vmatprep.subr.mxu0 0.0
    %3997 = vmatpush2.msra.mxu0 0.0
    %3998 = vmatprep.subr.mxu0 0.0
    %3999 = vmatpush2.msra.mxu0 0.0
    %4000 = vmatprep.mubr.f32.mxu0 0.0
    %4001 = vmatmul.mubr.f32.gmra.mxu0 %v3931
    %v4002 = vpop.f32.mrf.mxu0
    %v4003 = vadd.f32 %v3928, %v4002
    %v4004 = vpop.f32.mrf.mxu0
    %4005 = vmatprep.mubr.f32.mxu0 0.0
    %4006 = vmatmul.mubr.f32.gmra.mxu0 %v3934
    %v4007 = vpop.f32.mrf.mxu0
    %v4008 = vadd.f32 %v3928, %v4007
    %v4009 = vpop.f32.mrf.mxu0
    %4010 = vdwg.mxu0
    %v4011 = vadd.f32 %v355, %v4003
    %v4012 = vadd.f32 %v360, %v4008
    %v4013 = vld [vmem:[%s53] sm:$0x1]
    %v4014 = vld [vmem:[%s55] sm:$0x1]
    %v4015 = vsel %vm379, %v4011, 0.0
    %4016 = vadd.xlane.f32.xlu0 %v4015
    %v4017 = vpop.xlane.xlu0 %4016
    %v4018 = vsel %vm379, %v4012, 0.0
    %4019 = vadd.xlane.f32.xlu0 %v4018
    %v4020 = vpop.xlane.xlu0 %4019
    %v4021 = vmul.f32 %v4017, %v1399
    %v4022 = vmul.f32 %v4020, %v1399
    %v4023 = vsub.f32 %v4011, %v4021
    %v4024 = vsub.f32 %v4012, %v4022
    %v4025 = vmul.f32 %v4023, %v4023
    %v4026 = vmul.f32 %v4024, %v4024
    %v4027 = vsel %vm379, %v4025, 0.0
    %4028 = vadd.xlane.f32.xlu0 %v4027
    %v4029 = vpop.xlane.xlu0 %4028
    %v4030 = vsel %vm379, %v4026, 0.0
    %4031 = vadd.xlane.f32.xlu0 %v4030
    %v4032 = vpop.xlane.xlu0 %4031
    %v4033 = vmul.f32 %v4029, %v1399
    %v4034 = vmul.f32 %v4032, %v1399
    %v4035 = vadd.f32 %v4033, 1e-05
    %v4036 = vadd.f32 %v4034, 1e-05
    %v4037 = vrsqrt.pop %v4035
    %v4038 = vrsqrt.pop %v4036
    %v4039 = vmul.f32 %v4023, %v4037
    %v4040 = vmul.f32 %v4024, %v4038
    %v4042 = vlaneseq
    %v4043 = vshrl.u32 %v4042, 7
    %v4044 = vsub.s32 0, %v4043
    %v4045 = vrot.slane %v4013, %v4044
    %v4047 = vmul.f32 %v4039, %v4045
    %v4048 = vmul.f32 %v4040, %v4045
    %v4050 = vlaneseq
    %v4051 = vshrl.u32 %v4050, 7
    %v4052 = vsub.s32 0, %v4051
    %v4053 = vrot.slane %v4014, %v4052
    %v4055 = vadd.f32 %v4047, %v4053
    %v4056 = vadd.f32 %v4048, %v4053
    %v4057 = vld [vmem:[%s45] sm:$0xff]
    %v4058 = vld [vmem:[%s45 + $0x8] sm:$0xff]
    %v4059 = vld [vmem:[%s45 + $0x10] sm:$0xff]
    %v4060 = vld [vmem:[%s45 + $0x18] sm:$0xff]
    %v4061 = vld [vmem:[%s47] sm:$0x1]
    %v4062 = vld [vmem:[%s49] sm:$0xff]
    %v4063 = vld [vmem:[%s49 + $0x8] sm:$0xff]
    %v4064 = vld [vmem:[%s49 + $0x10] sm:$0xff]
    %v4065 = vld [vmem:[%s49 + $0x18] sm:$0xff]
    %v4066 = vld [vmem:[%s51] sm:$0x1]
    %v4068 = vlaneseq
    %v4069 = vshrl.u32 %v4068, 7
    %v4070 = vsub.s32 0, %v4069
    %v4071 = vrot.slane %v4061, %v4070
    %v4074 = vsel %vm379, %v4055, 0
    %v4077 = vsel %vm379, %v4056, 0
    %4079 = vmatprep.subr.mxu0 0.0
    %4080 = vmatpush1.msra.mxu0 0.0
    %4081 = vmatprep.subr.mxu0 0.0
    %4082 = vmatpush1.msra.mxu0 0.0
    %4083 = vmatprep.subr.mxu0 0.0
    %4084 = vmatpush1.msra.mxu0 0.0
    %4085 = vmatprep.subr.mxu0 0.0
    %4086 = vmatpush1.msra.mxu0 0.0
    %4087 = vmatprep.subr.mxu0 0.0
    %4088 = vmatpush1.msra.mxu0 0.0
    %4089 = vmatprep.subr.mxu0 0.0
    %4090 = vmatpush1.msra.mxu0 0.0
    %4091 = vmatprep.subr.mxu0 0.0
    %4092 = vmatpush1.msra.mxu0 0.0
    %4093 = vmatprep.subr.mxu0 0.0
    %4094 = vmatpush1.msra.mxu0 0.0
    %4095 = vmatprep.subr.mxu0 0.0
    %4096 = vmatpush1.msra.mxu0 0.0
    %4097 = vmatprep.subr.mxu0 0.0
    %4098 = vmatpush1.msra.mxu0 0.0
    %4099 = vmatprep.subr.mxu0 0.0
    %4100 = vmatpush1.msra.mxu0 0.0
    %4101 = vmatprep.subr.mxu0 0.0
    %4102 = vmatpush1.msra.mxu0 0.0
    %4103 = vmatprep.subr.mxu0 0.0
    %4104 = vmatpush1.msra.mxu0 %v4060
    %4105 = vmatprep.subr.mxu0 0.0
    %4106 = vmatpush1.msra.mxu0 %v4059
    %4107 = vmatprep.subr.mxu0 0.0
    %4108 = vmatpush1.msra.mxu0 %v4058
    %4109 = vmatprep.subr.mxu0 0.0
    %4110 = vmatpush1.msra.mxu0 %v4057
    %4111 = vmatprep.subr.mxu0 0.0
    %4112 = vmatpush2.msra.mxu0 0.0
    %4113 = vmatprep.subr.mxu0 0.0
    %4114 = vmatpush2.msra.mxu0 0.0
    %4115 = vmatprep.subr.mxu0 0.0
    %4116 = vmatpush2.msra.mxu0 0.0
    %4117 = vmatprep.subr.mxu0 0.0
    %4118 = vmatpush2.msra.mxu0 0.0
    %4119 = vmatprep.subr.mxu0 0.0
    %4120 = vmatpush2.msra.mxu0 0.0
    %4121 = vmatprep.subr.mxu0 0.0
    %4122 = vmatpush2.msra.mxu0 0.0
    %4123 = vmatprep.subr.mxu0 0.0
    %4124 = vmatpush2.msra.mxu0 0.0
    %4125 = vmatprep.subr.mxu0 0.0
    %4126 = vmatpush2.msra.mxu0 0.0
    %4127 = vmatprep.subr.mxu0 0.0
    %4128 = vmatpush2.msra.mxu0 0.0
    %4129 = vmatprep.subr.mxu0 0.0
    %4130 = vmatpush2.msra.mxu0 0.0
    %4131 = vmatprep.subr.mxu0 0.0
    %4132 = vmatpush2.msra.mxu0 0.0
    %4133 = vmatprep.subr.mxu0 0.0
    %4134 = vmatpush2.msra.mxu0 0.0
    %4135 = vmatprep.subr.mxu0 0.0
    %4136 = vmatpush2.msra.mxu0 0.0
    %4137 = vmatprep.subr.mxu0 0.0
    %4138 = vmatpush2.msra.mxu0 0.0
    %4139 = vmatprep.subr.mxu0 0.0
    %4140 = vmatpush2.msra.mxu0 0.0
    %4141 = vmatprep.subr.mxu0 0.0
    %4142 = vmatpush2.msra.mxu0 0.0
    %4143 = vmatprep.mubr.f32.mxu0 0.0
    %4144 = vmatmul.mubr.f32.gmra.mxu0 %v4074
    %v4145 = vpop.f32.mrf.mxu0
    %v4146 = vadd.f32 %v4071, %v4145
    %v4147 = vpop.f32.mrf.mxu0
    %4148 = vmatprep.mubr.f32.mxu0 0.0
    %4149 = vmatmul.mubr.f32.gmra.mxu0 %v4077
    %v4150 = vpop.f32.mrf.mxu0
    %v4151 = vadd.f32 %v4071, %v4150
    %v4152 = vpop.f32.mrf.mxu0
    %4153 = vdwg.mxu0
    %4158 = vrot.lane.b32.xlu0 %v4057, 96
    %v4159 = vpop.permute.xlu0 %4158
    %4160 = vrot.lane.b32.xlu0 %v4058, 96
    %v4161 = vpop.permute.xlu0 %4160
    %4162 = vrot.lane.b32.xlu0 %v4059, 96
    %v4163 = vpop.permute.xlu0 %4162
    %4164 = vrot.lane.b32.xlu0 %v4060, 96
    %v4165 = vpop.permute.xlu0 %4164
    %4170 = vrot.lane.b32.xlu0 %v4071, 96
    %v4171 = vpop.permute.xlu0 %4170
    %v4174 = vsel %vm379, %v2987, 0
    %v4177 = vsel %vm379, %v2988, 0
    %4179 = vmatprep.subr.mxu0 0.0
    %4180 = vmatpush1.msra.mxu0 0.0
    %4181 = vmatprep.subr.mxu0 0.0
    %4182 = vmatpush1.msra.mxu0 0.0
    %4183 = vmatprep.subr.mxu0 0.0
    %4184 = vmatpush1.msra.mxu0 0.0
    %4185 = vmatprep.subr.mxu0 0.0
    %4186 = vmatpush1.msra.mxu0 0.0
    %4187 = vmatprep.subr.mxu0 0.0
    %4188 = vmatpush1.msra.mxu0 0.0
    %4189 = vmatprep.subr.mxu0 0.0
    %4190 = vmatpush1.msra.mxu0 0.0
    %4191 = vmatprep.subr.mxu0 0.0
    %4192 = vmatpush1.msra.mxu0 0.0
    %4193 = vmatprep.subr.mxu0 0.0
    %4194 = vmatpush1.msra.mxu0 0.0
    %4195 = vmatprep.subr.mxu0 0.0
    %4196 = vmatpush1.msra.mxu0 0.0
    %4197 = vmatprep.subr.mxu0 0.0
    %4198 = vmatpush1.msra.mxu0 0.0
    %4199 = vmatprep.subr.mxu0 0.0
    %4200 = vmatpush1.msra.mxu0 0.0
    %4201 = vmatprep.subr.mxu0 0.0
    %4202 = vmatpush1.msra.mxu0 0.0
    %4203 = vmatprep.subr.mxu0 0.0
    %4204 = vmatpush1.msra.mxu0 %v4165
    %4205 = vmatprep.subr.mxu0 0.0
    %4206 = vmatpush1.msra.mxu0 %v4163
    %4207 = vmatprep.subr.mxu0 0.0
    %4208 = vmatpush1.msra.mxu0 %v4161
    %4209 = vmatprep.subr.mxu0 0.0
    %4210 = vmatpush1.msra.mxu0 %v4159
    %4211 = vmatprep.subr.mxu0 0.0
    %4212 = vmatpush2.msra.mxu0 0.0
    %4213 = vmatprep.subr.mxu0 0.0
    %4214 = vmatpush2.msra.mxu0 0.0
    %4215 = vmatprep.subr.mxu0 0.0
    %4216 = vmatpush2.msra.mxu0 0.0
    %4217 = vmatprep.subr.mxu0 0.0
    %4218 = vmatpush2.msra.mxu0 0.0
    %4219 = vmatprep.subr.mxu0 0.0
    %4220 = vmatpush2.msra.mxu0 0.0
    %4221 = vmatprep.subr.mxu0 0.0
    %4222 = vmatpush2.msra.mxu0 0.0
    %4223 = vmatprep.subr.mxu0 0.0
    %4224 = vmatpush2.msra.mxu0 0.0
    %4225 = vmatprep.subr.mxu0 0.0
    %4226 = vmatpush2.msra.mxu0 0.0
    %4227 = vmatprep.subr.mxu0 0.0
    %4228 = vmatpush2.msra.mxu0 0.0
    %4229 = vmatprep.subr.mxu0 0.0
    %4230 = vmatpush2.msra.mxu0 0.0
    %4231 = vmatprep.subr.mxu0 0.0
    %4232 = vmatpush2.msra.mxu0 0.0
    %4233 = vmatprep.subr.mxu0 0.0
    %4234 = vmatpush2.msra.mxu0 0.0
    %4235 = vmatprep.subr.mxu0 0.0
    %4236 = vmatpush2.msra.mxu0 0.0
    %4237 = vmatprep.subr.mxu0 0.0
    %4238 = vmatpush2.msra.mxu0 0.0
    %4239 = vmatprep.subr.mxu0 0.0
    %4240 = vmatpush2.msra.mxu0 0.0
    %4241 = vmatprep.subr.mxu0 0.0
    %4242 = vmatpush2.msra.mxu0 0.0
    %4243 = vmatprep.mubr.f32.mxu0 0.0
    %4244 = vmatmul.mubr.f32.gmra.mxu0 %v4174
    %v4245 = vpop.f32.mrf.mxu0
    %v4246 = vadd.f32 %v4171, %v4245
    %v4247 = vpop.f32.mrf.mxu0
    %4248 = vmatprep.mubr.f32.mxu0 0.0
    %4249 = vmatmul.mubr.f32.gmra.mxu0 %v4177
    %v4250 = vpop.f32.mrf.mxu0
    %v4251 = vadd.f32 %v4171, %v4250
    %v4252 = vpop.f32.mrf.mxu0
    %4253 = vdwg.mxu0
    %v4255 = vsel %vm467, %v4146, 0
    %v4258 = vsel %vm467, %v4151, 0
    %v4261 = vsel %vm467, %v4246, 0
    %v4264 = vsel %vm467, %v4251, 0
    %4266 = vmatprep.subr.mxu0 0.0
    %4267 = vmatpush1.xpose.msra.mxu0 0.0
    %4268 = vmatprep.subr.mxu0 0.0
    %4269 = vmatpush1.xpose.msra.mxu0 0.0
    %4270 = vmatprep.subr.mxu0 0.0
    %4271 = vmatpush1.xpose.msra.mxu0 0.0
    %4272 = vmatprep.subr.mxu0 0.0
    %4273 = vmatpush1.xpose.msra.mxu0 0.0
    %4274 = vmatprep.subr.mxu0 0.0
    %4275 = vmatpush1.xpose.msra.mxu0 0.0
    %4276 = vmatprep.subr.mxu0 0.0
    %4277 = vmatpush1.xpose.msra.mxu0 0.0
    %4278 = vmatprep.subr.mxu0 0.0
    %4279 = vmatpush1.xpose.msra.mxu0 0.0
    %4280 = vmatprep.subr.mxu0 0.0
    %4281 = vmatpush1.xpose.msra.mxu0 0.0
    %4282 = vmatprep.subr.mxu0 0.0
    %4283 = vmatpush1.xpose.msra.mxu0 0.0
    %4284 = vmatprep.subr.mxu0 0.0
    %4285 = vmatpush1.xpose.msra.mxu0 0.0
    %4286 = vmatprep.subr.mxu0 0.0
    %4287 = vmatpush1.xpose.msra.mxu0 0.0
    %4288 = vmatprep.subr.mxu0 0.0
    %4289 = vmatpush1.xpose.msra.mxu0 0.0
    %4290 = vmatprep.subr.mxu0 0.0
    %4291 = vmatpush1.xpose.msra.mxu0 0.0
    %4292 = vmatprep.subr.mxu0 0.0
    %4293 = vmatpush1.xpose.msra.mxu0 0.0
    %4294 = vmatprep.subr.mxu0 0.0
    %4295 = vmatpush1.xpose.msra.mxu0 %v4264
    %4296 = vmatprep.subr.mxu0 0.0
    %4297 = vmatpush1.xpose.msra.mxu0 %v4261
    %4298 = vmatprep.subr.mxu0 0.0
    %4299 = vmatpush2.xpose.msra.mxu0 0.0
    %4300 = vmatprep.subr.mxu0 0.0
    %4301 = vmatpush2.xpose.msra.mxu0 0.0
    %4302 = vmatprep.subr.mxu0 0.0
    %4303 = vmatpush2.xpose.msra.mxu0 0.0
    %4304 = vmatprep.subr.mxu0 0.0
    %4305 = vmatpush2.xpose.msra.mxu0 0.0
    %4306 = vmatprep.subr.mxu0 0.0
    %4307 = vmatpush2.xpose.msra.mxu0 0.0
    %4308 = vmatprep.subr.mxu0 0.0
    %4309 = vmatpush2.xpose.msra.mxu0 0.0
    %4310 = vmatprep.subr.mxu0 0.0
    %4311 = vmatpush2.xpose.msra.mxu0 0.0
    %4312 = vmatprep.subr.mxu0 0.0
    %4313 = vmatpush2.xpose.msra.mxu0 0.0
    %4314 = vmatprep.subr.mxu0 0.0
    %4315 = vmatpush2.xpose.msra.mxu0 0.0
    %4316 = vmatprep.subr.mxu0 0.0
    %4317 = vmatpush2.xpose.msra.mxu0 0.0
    %4318 = vmatprep.subr.mxu0 0.0
    %4319 = vmatpush2.xpose.msra.mxu0 0.0
    %4320 = vmatprep.subr.mxu0 0.0
    %4321 = vmatpush2.xpose.msra.mxu0 0.0
    %4322 = vmatprep.subr.mxu0 0.0
    %4323 = vmatpush2.xpose.msra.mxu0 0.0
    %4324 = vmatprep.subr.mxu0 0.0
    %4325 = vmatpush2.xpose.msra.mxu0 0.0
    %4326 = vmatprep.subr.mxu0 0.0
    %4327 = vmatpush2.xpose.msra.mxu0 0.0
    %4328 = vmatprep.subr.mxu0 0.0
    %4329 = vmatpush2.xpose.msra.mxu0 0.0
    %4330 = vmatprep.mubr.f32.mxu0 0.0
    %4331 = vmatmul.mubr.f32.gmra.mxu0 %v4255
    %v4332 = vpop.f32.mrf.mxu0
    %v4333 = vadd.f32 0.0, %v4332
    %v4334 = vpop.f32.mrf.mxu0
    %4335 = vmatprep.mubr.f32.mxu0 0.0
    %4336 = vmatmul.mubr.f32.gmra.mxu0 %v4258
    %v4337 = vpop.f32.mrf.mxu0
    %v4338 = vadd.f32 0.0, %v4337
    %v4339 = vpop.f32.mrf.mxu0
    %4340 = vdwg.mxu0
    %v4341 = vsel %vm551, %v4333, %v149
    %v4342 = vsel %vm552, %v4338, %v150
    %v4343 = vsel %vm555, %v4341, -inf
    %4344 = vmax.xlane.f32.xlu0 %v4343
    %v4345 = vpop.xlane.xlu0 %4344
    %v4346 = vsel %vm555, %v4342, -inf
    %4347 = vmax.xlane.f32.xlu0 %v4346
    %v4348 = vpop.xlane.xlu0 %4347
    %v4349 = vsub.f32 %v4341, %v4345
    %v4350 = vsub.f32 %v4342, %v4348
    %v4351 = vmul.f32 %v4349, 1.442695
    %v4352 = vpow.pop %v4351
    %v4353 = vmul.f32 %v4350, 1.442695
    %v4354 = vpow.pop %v4353
    %v4355 = vsel %vm555, %v4352, 0.0
    %4356 = vadd.xlane.f32.xlu0 %v4355
    %v4357 = vpop.xlane.xlu0 %4356
    %v4358 = vsel %vm555, %v4354, 0.0
    %4359 = vadd.xlane.f32.xlu0 %v4358
    %v4360 = vpop.xlane.xlu0 %4359
    %v4361 = vrcp.pop %v4357
    %v4362 = vmul.f32 %v4352, %v4361
    %v4363 = vrcp.pop %v4360
    %v4364 = vmul.f32 %v4354, %v4363
    %4365 = vrot.lane.b32.xlu0 %v4246, 96
    %v4366 = vpop.permute.xlu0 %4365
    %4367 = vrot.lane.b32.xlu0 %v4251, 96
    %v4368 = vpop.permute.xlu0 %4367
    %v4372 = vsel %vm555, %v4362, 0
    %v4375 = vsel %vm555, %v4364, 0
    %4377 = vmatprep.subr.mxu0 0.0
    %4378 = vmatpush1.msra.mxu0 0.0
    %4379 = vmatprep.subr.mxu0 0.0
    %4380 = vmatpush1.msra.mxu0 0.0
    %4381 = vmatprep.subr.mxu0 0.0
    %4382 = vmatpush1.msra.mxu0 0.0
    %4383 = vmatprep.subr.mxu0 0.0
    %4384 = vmatpush1.msra.mxu0 0.0
    %4385 = vmatprep.subr.mxu0 0.0
    %4386 = vmatpush1.msra.mxu0 0.0
    %4387 = vmatprep.subr.mxu0 0.0
    %4388 = vmatpush1.msra.mxu0 0.0
    %4389 = vmatprep.subr.mxu0 0.0
    %4390 = vmatpush1.msra.mxu0 0.0
    %4391 = vmatprep.subr.mxu0 0.0
    %4392 = vmatpush1.msra.mxu0 0.0
    %4393 = vmatprep.subr.mxu0 0.0
    %4394 = vmatpush1.msra.mxu0 0.0
    %4395 = vmatprep.subr.mxu0 0.0
    %4396 = vmatpush1.msra.mxu0 0.0
    %4397 = vmatprep.subr.mxu0 0.0
    %4398 = vmatpush1.msra.mxu0 0.0
    %4399 = vmatprep.subr.mxu0 0.0
    %4400 = vmatpush1.msra.mxu0 0.0
    %4401 = vmatprep.subr.mxu0 0.0
    %4402 = vmatpush1.msra.mxu0 0.0
    %4403 = vmatprep.subr.mxu0 0.0
    %4404 = vmatpush1.msra.mxu0 0.0
    %4405 = vmatprep.subr.mxu0 0.0
    %4406 = vmatpush1.msra.mxu0 %v4368
    %4407 = vmatprep.subr.mxu0 0.0
    %4408 = vmatpush1.msra.mxu0 %v4366
    %4409 = vmatprep.subr.mxu0 0.0
    %4410 = vmatpush2.msra.mxu0 0.0
    %4411 = vmatprep.subr.mxu0 0.0
    %4412 = vmatpush2.msra.mxu0 0.0
    %4413 = vmatprep.subr.mxu0 0.0
    %4414 = vmatpush2.msra.mxu0 0.0
    %4415 = vmatprep.subr.mxu0 0.0
    %4416 = vmatpush2.msra.mxu0 0.0
    %4417 = vmatprep.subr.mxu0 0.0
    %4418 = vmatpush2.msra.mxu0 0.0
    %4419 = vmatprep.subr.mxu0 0.0
    %4420 = vmatpush2.msra.mxu0 0.0
    %4421 = vmatprep.subr.mxu0 0.0
    %4422 = vmatpush2.msra.mxu0 0.0
    %4423 = vmatprep.subr.mxu0 0.0
    %4424 = vmatpush2.msra.mxu0 0.0
    %4425 = vmatprep.subr.mxu0 0.0
    %4426 = vmatpush2.msra.mxu0 0.0
    %4427 = vmatprep.subr.mxu0 0.0
    %4428 = vmatpush2.msra.mxu0 0.0
    %4429 = vmatprep.subr.mxu0 0.0
    %4430 = vmatpush2.msra.mxu0 0.0
    %4431 = vmatprep.subr.mxu0 0.0
    %4432 = vmatpush2.msra.mxu0 0.0
    %4433 = vmatprep.subr.mxu0 0.0
    %4434 = vmatpush2.msra.mxu0 0.0
    %4435 = vmatprep.subr.mxu0 0.0
    %4436 = vmatpush2.msra.mxu0 0.0
    %4437 = vmatprep.subr.mxu0 0.0
    %4438 = vmatpush2.msra.mxu0 0.0
    %4439 = vmatprep.subr.mxu0 0.0
    %4440 = vmatpush2.msra.mxu0 0.0
    %4441 = vmatprep.mubr.f32.mxu0 0.0
    %4442 = vmatmul.mubr.f32.gmra.mxu0 %v4372
    %v4443 = vpop.f32.mrf.mxu0
    %v4444 = vadd.f32 0.0, %v4443
    %v4445 = vpop.f32.mrf.mxu0
    %4446 = vmatprep.mubr.f32.mxu0 0.0
    %4447 = vmatmul.mubr.f32.gmra.mxu0 %v4375
    %v4448 = vpop.f32.mrf.mxu0
    %v4449 = vadd.f32 0.0, %v4448
    %v4450 = vpop.f32.mrf.mxu0
    %4451 = vdwg.mxu0
    %4452 = vrot.lane.b32.xlu0 %v4146, 120
    %v4453 = vpop.permute.xlu0 %4452
    %4454 = vrot.lane.b32.xlu0 %v4151, 120
    %v4455 = vpop.permute.xlu0 %4454
    %4456 = vrot.lane.b32.xlu0 %v4246, 120
    %v4457 = vpop.permute.xlu0 %4456
    %4458 = vrot.lane.b32.xlu0 %v4251, 120
    %v4459 = vpop.permute.xlu0 %4458
    %v4460 = vsel %vm467, %v4453, 0
    %v4462 = vsel %vm467, %v4455, 0
    %v4464 = vsel %vm467, %v4457, 0
    %v4466 = vsel %vm467, %v4459, 0
    %4468 = vmatprep.subr.mxu0 0.0
    %4469 = vmatpush1.xpose.msra.mxu0 0.0
    %4470 = vmatprep.subr.mxu0 0.0
    %4471 = vmatpush1.xpose.msra.mxu0 0.0
    %4472 = vmatprep.subr.mxu0 0.0
    %4473 = vmatpush1.xpose.msra.mxu0 0.0
    %4474 = vmatprep.subr.mxu0 0.0
    %4475 = vmatpush1.xpose.msra.mxu0 0.0
    %4476 = vmatprep.subr.mxu0 0.0
    %4477 = vmatpush1.xpose.msra.mxu0 0.0
    %4478 = vmatprep.subr.mxu0 0.0
    %4479 = vmatpush1.xpose.msra.mxu0 0.0
    %4480 = vmatprep.subr.mxu0 0.0
    %4481 = vmatpush1.xpose.msra.mxu0 0.0
    %4482 = vmatprep.subr.mxu0 0.0
    %4483 = vmatpush1.xpose.msra.mxu0 0.0
    %4484 = vmatprep.subr.mxu0 0.0
    %4485 = vmatpush1.xpose.msra.mxu0 0.0
    %4486 = vmatprep.subr.mxu0 0.0
    %4487 = vmatpush1.xpose.msra.mxu0 0.0
    %4488 = vmatprep.subr.mxu0 0.0
    %4489 = vmatpush1.xpose.msra.mxu0 0.0
    %4490 = vmatprep.subr.mxu0 0.0
    %4491 = vmatpush1.xpose.msra.mxu0 0.0
    %4492 = vmatprep.subr.mxu0 0.0
    %4493 = vmatpush1.xpose.msra.mxu0 0.0
    %4494 = vmatprep.subr.mxu0 0.0
    %4495 = vmatpush1.xpose.msra.mxu0 0.0
    %4496 = vmatprep.subr.mxu0 0.0
    %4497 = vmatpush1.xpose.msra.mxu0 %v4466
    %4498 = vmatprep.subr.mxu0 0.0
    %4499 = vmatpush1.xpose.msra.mxu0 %v4464
    %4500 = vmatprep.subr.mxu0 0.0
    %4501 = vmatpush2.xpose.msra.mxu0 0.0
    %4502 = vmatprep.subr.mxu0 0.0
    %4503 = vmatpush2.xpose.msra.mxu0 0.0
    %4504 = vmatprep.subr.mxu0 0.0
    %4505 = vmatpush2.xpose.msra.mxu0 0.0
    %4506 = vmatprep.subr.mxu0 0.0
    %4507 = vmatpush2.xpose.msra.mxu0 0.0
    %4508 = vmatprep.subr.mxu0 0.0
    %4509 = vmatpush2.xpose.msra.mxu0 0.0
    %4510 = vmatprep.subr.mxu0 0.0
    %4511 = vmatpush2.xpose.msra.mxu0 0.0
    %4512 = vmatprep.subr.mxu0 0.0
    %4513 = vmatpush2.xpose.msra.mxu0 0.0
    %4514 = vmatprep.subr.mxu0 0.0
    %4515 = vmatpush2.xpose.msra.mxu0 0.0
    %4516 = vmatprep.subr.mxu0 0.0
    %4517 = vmatpush2.xpose.msra.mxu0 0.0
    %4518 = vmatprep.subr.mxu0 0.0
    %4519 = vmatpush2.xpose.msra.mxu0 0.0
    %4520 = vmatprep.subr.mxu0 0.0
    %4521 = vmatpush2.xpose.msra.mxu0 0.0
    %4522 = vmatprep.subr.mxu0 0.0
    %4523 = vmatpush2.xpose.msra.mxu0 0.0
    %4524 = vmatprep.subr.mxu0 0.0
    %4525 = vmatpush2.xpose.msra.mxu0 0.0
    %4526 = vmatprep.subr.mxu0 0.0
    %4527 = vmatpush2.xpose.msra.mxu0 0.0
    %4528 = vmatprep.subr.mxu0 0.0
    %4529 = vmatpush2.xpose.msra.mxu0 0.0
    %4530 = vmatprep.subr.mxu0 0.0
    %4531 = vmatpush2.xpose.msra.mxu0 0.0
    %4532 = vmatprep.mubr.f32.mxu0 0.0
    %4533 = vmatmul.mubr.f32.gmra.mxu0 %v4460
    %v4534 = vpop.f32.mrf.mxu0
    %v4535 = vadd.f32 0.0, %v4534
    %v4536 = vpop.f32.mrf.mxu0
    %4537 = vmatprep.mubr.f32.mxu0 0.0
    %4538 = vmatmul.mubr.f32.gmra.mxu0 %v4462
    %v4539 = vpop.f32.mrf.mxu0
    %v4540 = vadd.f32 0.0, %v4539
    %v4541 = vpop.f32.mrf.mxu0
    %4542 = vdwg.mxu0
    %v4543 = vsel %vm551, %v4535, %v149
    %v4544 = vsel %vm552, %v4540, %v150
    %v4545 = vsel %vm555, %v4543, -inf
    %4546 = vmax.xlane.f32.xlu0 %v4545
    %v4547 = vpop.xlane.xlu0 %4546
    %v4548 = vsel %vm555, %v4544, -inf
    %4549 = vmax.xlane.f32.xlu0 %v4548
    %v4550 = vpop.xlane.xlu0 %4549
    %v4551 = vsub.f32 %v4543, %v4547
    %v4552 = vsub.f32 %v4544, %v4550
    %v4553 = vmul.f32 %v4551, 1.442695
    %v4554 = vpow.pop %v4553
    %v4555 = vmul.f32 %v4552, 1.442695
    %v4556 = vpow.pop %v4555
    %v4557 = vsel %vm555, %v4554, 0.0
    %4558 = vadd.xlane.f32.xlu0 %v4557
    %v4559 = vpop.xlane.xlu0 %4558
    %v4560 = vsel %vm555, %v4556, 0.0
    %4561 = vadd.xlane.f32.xlu0 %v4560
    %v4562 = vpop.xlane.xlu0 %4561
    %v4563 = vrcp.pop %v4559
    %v4564 = vmul.f32 %v4554, %v4563
    %v4565 = vrcp.pop %v4562
    %v4566 = vmul.f32 %v4556, %v4565
    %4567 = vrot.lane.b32.xlu0 %v4246, 88
    %v4568 = vpop.permute.xlu0 %4567
    %4569 = vrot.lane.b32.xlu0 %v4251, 88
    %v4570 = vpop.permute.xlu0 %4569
    %v4574 = vsel %vm555, %v4564, 0
    %v4577 = vsel %vm555, %v4566, 0
    %4579 = vmatprep.subr.mxu0 0.0
    %4580 = vmatpush1.msra.mxu0 0.0
    %4581 = vmatprep.subr.mxu0 0.0
    %4582 = vmatpush1.msra.mxu0 0.0
    %4583 = vmatprep.subr.mxu0 0.0
    %4584 = vmatpush1.msra.mxu0 0.0
    %4585 = vmatprep.subr.mxu0 0.0
    %4586 = vmatpush1.msra.mxu0 0.0
    %4587 = vmatprep.subr.mxu0 0.0
    %4588 = vmatpush1.msra.mxu0 0.0
    %4589 = vmatprep.subr.mxu0 0.0
    %4590 = vmatpush1.msra.mxu0 0.0
    %4591 = vmatprep.subr.mxu0 0.0
    %4592 = vmatpush1.msra.mxu0 0.0
    %4593 = vmatprep.subr.mxu0 0.0
    %4594 = vmatpush1.msra.mxu0 0.0
    %4595 = vmatprep.subr.mxu0 0.0
    %4596 = vmatpush1.msra.mxu0 0.0
    %4597 = vmatprep.subr.mxu0 0.0
    %4598 = vmatpush1.msra.mxu0 0.0
    %4599 = vmatprep.subr.mxu0 0.0
    %4600 = vmatpush1.msra.mxu0 0.0
    %4601 = vmatprep.subr.mxu0 0.0
    %4602 = vmatpush1.msra.mxu0 0.0
    %4603 = vmatprep.subr.mxu0 0.0
    %4604 = vmatpush1.msra.mxu0 0.0
    %4605 = vmatprep.subr.mxu0 0.0
    %4606 = vmatpush1.msra.mxu0 0.0
    %4607 = vmatprep.subr.mxu0 0.0
    %4608 = vmatpush1.msra.mxu0 %v4570
    %4609 = vmatprep.subr.mxu0 0.0
    %4610 = vmatpush1.msra.mxu0 %v4568
    %4611 = vmatprep.subr.mxu0 0.0
    %4612 = vmatpush2.msra.mxu0 0.0
    %4613 = vmatprep.subr.mxu0 0.0
    %4614 = vmatpush2.msra.mxu0 0.0
    %4615 = vmatprep.subr.mxu0 0.0
    %4616 = vmatpush2.msra.mxu0 0.0
    %4617 = vmatprep.subr.mxu0 0.0
    %4618 = vmatpush2.msra.mxu0 0.0
    %4619 = vmatprep.subr.mxu0 0.0
    %4620 = vmatpush2.msra.mxu0 0.0
    %4621 = vmatprep.subr.mxu0 0.0
    %4622 = vmatpush2.msra.mxu0 0.0
    %4623 = vmatprep.subr.mxu0 0.0
    %4624 = vmatpush2.msra.mxu0 0.0
    %4625 = vmatprep.subr.mxu0 0.0
    %4626 = vmatpush2.msra.mxu0 0.0
    %4627 = vmatprep.subr.mxu0 0.0
    %4628 = vmatpush2.msra.mxu0 0.0
    %4629 = vmatprep.subr.mxu0 0.0
    %4630 = vmatpush2.msra.mxu0 0.0
    %4631 = vmatprep.subr.mxu0 0.0
    %4632 = vmatpush2.msra.mxu0 0.0
    %4633 = vmatprep.subr.mxu0 0.0
    %4634 = vmatpush2.msra.mxu0 0.0
    %4635 = vmatprep.subr.mxu0 0.0
    %4636 = vmatpush2.msra.mxu0 0.0
    %4637 = vmatprep.subr.mxu0 0.0
    %4638 = vmatpush2.msra.mxu0 0.0
    %4639 = vmatprep.subr.mxu0 0.0
    %4640 = vmatpush2.msra.mxu0 0.0
    %4641 = vmatprep.subr.mxu0 0.0
    %4642 = vmatpush2.msra.mxu0 0.0
    %4643 = vmatprep.mubr.f32.mxu0 0.0
    %4644 = vmatmul.mubr.f32.gmra.mxu0 %v4574
    %v4645 = vpop.f32.mrf.mxu0
    %v4646 = vadd.f32 0.0, %v4645
    %v4647 = vpop.f32.mrf.mxu0
    %4648 = vmatprep.mubr.f32.mxu0 0.0
    %4649 = vmatmul.mubr.f32.gmra.mxu0 %v4577
    %v4650 = vpop.f32.mrf.mxu0
    %v4651 = vadd.f32 0.0, %v4650
    %v4652 = vpop.f32.mrf.mxu0
    %4653 = vdwg.mxu0
    %4654 = vrot.lane.b32.xlu0 %v4146, 112
    %v4655 = vpop.permute.xlu0 %4654
    %4656 = vrot.lane.b32.xlu0 %v4151, 112
    %v4657 = vpop.permute.xlu0 %4656
    %4658 = vrot.lane.b32.xlu0 %v4246, 112
    %v4659 = vpop.permute.xlu0 %4658
    %4660 = vrot.lane.b32.xlu0 %v4251, 112
    %v4661 = vpop.permute.xlu0 %4660
    %v4662 = vsel %vm467, %v4655, 0
    %v4664 = vsel %vm467, %v4657, 0
    %v4666 = vsel %vm467, %v4659, 0
    %v4668 = vsel %vm467, %v4661, 0
    %4670 = vmatprep.subr.mxu0 0.0
    %4671 = vmatpush1.xpose.msra.mxu0 0.0
    %4672 = vmatprep.subr.mxu0 0.0
    %4673 = vmatpush1.xpose.msra.mxu0 0.0
    %4674 = vmatprep.subr.mxu0 0.0
    %4675 = vmatpush1.xpose.msra.mxu0 0.0
    %4676 = vmatprep.subr.mxu0 0.0
    %4677 = vmatpush1.xpose.msra.mxu0 0.0
    %4678 = vmatprep.subr.mxu0 0.0
    %4679 = vmatpush1.xpose.msra.mxu0 0.0
    %4680 = vmatprep.subr.mxu0 0.0
    %4681 = vmatpush1.xpose.msra.mxu0 0.0
    %4682 = vmatprep.subr.mxu0 0.0
    %4683 = vmatpush1.xpose.msra.mxu0 0.0
    %4684 = vmatprep.subr.mxu0 0.0
    %4685 = vmatpush1.xpose.msra.mxu0 0.0
    %4686 = vmatprep.subr.mxu0 0.0
    %4687 = vmatpush1.xpose.msra.mxu0 0.0
    %4688 = vmatprep.subr.mxu0 0.0
    %4689 = vmatpush1.xpose.msra.mxu0 0.0
    %4690 = vmatprep.subr.mxu0 0.0
    %4691 = vmatpush1.xpose.msra.mxu0 0.0
    %4692 = vmatprep.subr.mxu0 0.0
    %4693 = vmatpush1.xpose.msra.mxu0 0.0
    %4694 = vmatprep.subr.mxu0 0.0
    %4695 = vmatpush1.xpose.msra.mxu0 0.0
    %4696 = vmatprep.subr.mxu0 0.0
    %4697 = vmatpush1.xpose.msra.mxu0 0.0
    %4698 = vmatprep.subr.mxu0 0.0
    %4699 = vmatpush1.xpose.msra.mxu0 %v4668
    %4700 = vmatprep.subr.mxu0 0.0
    %4701 = vmatpush1.xpose.msra.mxu0 %v4666
    %4702 = vmatprep.subr.mxu0 0.0
    %4703 = vmatpush2.xpose.msra.mxu0 0.0
    %4704 = vmatprep.subr.mxu0 0.0
    %4705 = vmatpush2.xpose.msra.mxu0 0.0
    %4706 = vmatprep.subr.mxu0 0.0
    %4707 = vmatpush2.xpose.msra.mxu0 0.0
    %4708 = vmatprep.subr.mxu0 0.0
    %4709 = vmatpush2.xpose.msra.mxu0 0.0
    %4710 = vmatprep.subr.mxu0 0.0
    %4711 = vmatpush2.xpose.msra.mxu0 0.0
    %4712 = vmatprep.subr.mxu0 0.0
    %4713 = vmatpush2.xpose.msra.mxu0 0.0
    %4714 = vmatprep.subr.mxu0 0.0
    %4715 = vmatpush2.xpose.msra.mxu0 0.0
    %4716 = vmatprep.subr.mxu0 0.0
    %4717 = vmatpush2.xpose.msra.mxu0 0.0
    %4718 = vmatprep.subr.mxu0 0.0
    %4719 = vmatpush2.xpose.msra.mxu0 0.0
    %4720 = vmatprep.subr.mxu0 0.0
    %4721 = vmatpush2.xpose.msra.mxu0 0.0
    %4722 = vmatprep.subr.mxu0 0.0
    %4723 = vmatpush2.xpose.msra.mxu0 0.0
    %4724 = vmatprep.subr.mxu0 0.0
    %4725 = vmatpush2.xpose.msra.mxu0 0.0
    %4726 = vmatprep.subr.mxu0 0.0
    %4727 = vmatpush2.xpose.msra.mxu0 0.0
    %4728 = vmatprep.subr.mxu0 0.0
    %4729 = vmatpush2.xpose.msra.mxu0 0.0
    %4730 = vmatprep.subr.mxu0 0.0
    %4731 = vmatpush2.xpose.msra.mxu0 0.0
    %4732 = vmatprep.subr.mxu0 0.0
    %4733 = vmatpush2.xpose.msra.mxu0 0.0
    %4734 = vmatprep.mubr.f32.mxu0 0.0
    %4735 = vmatmul.mubr.f32.gmra.mxu0 %v4662
    %v4736 = vpop.f32.mrf.mxu0
    %v4737 = vadd.f32 0.0, %v4736
    %v4738 = vpop.f32.mrf.mxu0
    %4739 = vmatprep.mubr.f32.mxu0 0.0
    %4740 = vmatmul.mubr.f32.gmra.mxu0 %v4664
    %v4741 = vpop.f32.mrf.mxu0
    %v4742 = vadd.f32 0.0, %v4741
    %v4743 = vpop.f32.mrf.mxu0
    %4744 = vdwg.mxu0
    %v4745 = vsel %vm551, %v4737, %v149
    %v4746 = vsel %vm552, %v4742, %v150
    %v4747 = vsel %vm555, %v4745, -inf
    %4748 = vmax.xlane.f32.xlu0 %v4747
    %v4749 = vpop.xlane.xlu0 %4748
    %v4750 = vsel %vm555, %v4746, -inf
    %4751 = vmax.xlane.f32.xlu0 %v4750
    %v4752 = vpop.xlane.xlu0 %4751
    %v4753 = vsub.f32 %v4745, %v4749
    %v4754 = vsub.f32 %v4746, %v4752
    %v4755 = vmul.f32 %v4753, 1.442695
    %v4756 = vpow.pop %v4755
    %v4757 = vmul.f32 %v4754, 1.442695
    %v4758 = vpow.pop %v4757
    %v4759 = vsel %vm555, %v4756, 0.0
    %4760 = vadd.xlane.f32.xlu0 %v4759
    %v4761 = vpop.xlane.xlu0 %4760
    %v4762 = vsel %vm555, %v4758, 0.0
    %4763 = vadd.xlane.f32.xlu0 %v4762
    %v4764 = vpop.xlane.xlu0 %4763
    %v4765 = vrcp.pop %v4761
    %v4766 = vmul.f32 %v4756, %v4765
    %v4767 = vrcp.pop %v4764
    %v4768 = vmul.f32 %v4758, %v4767
    %4769 = vrot.lane.b32.xlu0 %v4246, 80
    %v4770 = vpop.permute.xlu0 %4769
    %4771 = vrot.lane.b32.xlu0 %v4251, 80
    %v4772 = vpop.permute.xlu0 %4771
    %v4776 = vsel %vm555, %v4766, 0
    %v4779 = vsel %vm555, %v4768, 0
    %4781 = vmatprep.subr.mxu0 0.0
    %4782 = vmatpush1.msra.mxu0 0.0
    %4783 = vmatprep.subr.mxu0 0.0
    %4784 = vmatpush1.msra.mxu0 0.0
    %4785 = vmatprep.subr.mxu0 0.0
    %4786 = vmatpush1.msra.mxu0 0.0
    %4787 = vmatprep.subr.mxu0 0.0
    %4788 = vmatpush1.msra.mxu0 0.0
    %4789 = vmatprep.subr.mxu0 0.0
    %4790 = vmatpush1.msra.mxu0 0.0
    %4791 = vmatprep.subr.mxu0 0.0
    %4792 = vmatpush1.msra.mxu0 0.0
    %4793 = vmatprep.subr.mxu0 0.0
    %4794 = vmatpush1.msra.mxu0 0.0
    %4795 = vmatprep.subr.mxu0 0.0
    %4796 = vmatpush1.msra.mxu0 0.0
    %4797 = vmatprep.subr.mxu0 0.0
    %4798 = vmatpush1.msra.mxu0 0.0
    %4799 = vmatprep.subr.mxu0 0.0
    %4800 = vmatpush1.msra.mxu0 0.0
    %4801 = vmatprep.subr.mxu0 0.0
    %4802 = vmatpush1.msra.mxu0 0.0
    %4803 = vmatprep.subr.mxu0 0.0
    %4804 = vmatpush1.msra.mxu0 0.0
    %4805 = vmatprep.subr.mxu0 0.0
    %4806 = vmatpush1.msra.mxu0 0.0
    %4807 = vmatprep.subr.mxu0 0.0
    %4808 = vmatpush1.msra.mxu0 0.0
    %4809 = vmatprep.subr.mxu0 0.0
    %4810 = vmatpush1.msra.mxu0 %v4772
    %4811 = vmatprep.subr.mxu0 0.0
    %4812 = vmatpush1.msra.mxu0 %v4770
    %4813 = vmatprep.subr.mxu0 0.0
    %4814 = vmatpush2.msra.mxu0 0.0
    %4815 = vmatprep.subr.mxu0 0.0
    %4816 = vmatpush2.msra.mxu0 0.0
    %4817 = vmatprep.subr.mxu0 0.0
    %4818 = vmatpush2.msra.mxu0 0.0
    %4819 = vmatprep.subr.mxu0 0.0
    %4820 = vmatpush2.msra.mxu0 0.0
    %4821 = vmatprep.subr.mxu0 0.0
    %4822 = vmatpush2.msra.mxu0 0.0
    %4823 = vmatprep.subr.mxu0 0.0
    %4824 = vmatpush2.msra.mxu0 0.0
    %4825 = vmatprep.subr.mxu0 0.0
    %4826 = vmatpush2.msra.mxu0 0.0
    %4827 = vmatprep.subr.mxu0 0.0
    %4828 = vmatpush2.msra.mxu0 0.0
    %4829 = vmatprep.subr.mxu0 0.0
    %4830 = vmatpush2.msra.mxu0 0.0
    %4831 = vmatprep.subr.mxu0 0.0
    %4832 = vmatpush2.msra.mxu0 0.0
    %4833 = vmatprep.subr.mxu0 0.0
    %4834 = vmatpush2.msra.mxu0 0.0
    %4835 = vmatprep.subr.mxu0 0.0
    %4836 = vmatpush2.msra.mxu0 0.0
    %4837 = vmatprep.subr.mxu0 0.0
    %4838 = vmatpush2.msra.mxu0 0.0
    %4839 = vmatprep.subr.mxu0 0.0
    %4840 = vmatpush2.msra.mxu0 0.0
    %4841 = vmatprep.subr.mxu0 0.0
    %4842 = vmatpush2.msra.mxu0 0.0
    %4843 = vmatprep.subr.mxu0 0.0
    %4844 = vmatpush2.msra.mxu0 0.0
    %4845 = vmatprep.mubr.f32.mxu0 0.0
    %4846 = vmatmul.mubr.f32.gmra.mxu0 %v4776
    %v4847 = vpop.f32.mrf.mxu0
    %v4848 = vadd.f32 0.0, %v4847
    %v4849 = vpop.f32.mrf.mxu0
    %4850 = vmatprep.mubr.f32.mxu0 0.0
    %4851 = vmatmul.mubr.f32.gmra.mxu0 %v4779
    %v4852 = vpop.f32.mrf.mxu0
    %v4853 = vadd.f32 0.0, %v4852
    %v4854 = vpop.f32.mrf.mxu0
    %4855 = vdwg.mxu0
    %4856 = vrot.lane.b32.xlu0 %v4146, 104
    %v4857 = vpop.permute.xlu0 %4856
    %4858 = vrot.lane.b32.xlu0 %v4151, 104
    %v4859 = vpop.permute.xlu0 %4858
    %4860 = vrot.lane.b32.xlu0 %v4246, 104
    %v4861 = vpop.permute.xlu0 %4860
    %4862 = vrot.lane.b32.xlu0 %v4251, 104
    %v4863 = vpop.permute.xlu0 %4862
    %v4864 = vsel %vm467, %v4857, 0
    %v4866 = vsel %vm467, %v4859, 0
    %v4868 = vsel %vm467, %v4861, 0
    %v4870 = vsel %vm467, %v4863, 0
    %4872 = vmatprep.subr.mxu0 0.0
    %4873 = vmatpush1.xpose.msra.mxu0 0.0
    %4874 = vmatprep.subr.mxu0 0.0
    %4875 = vmatpush1.xpose.msra.mxu0 0.0
    %4876 = vmatprep.subr.mxu0 0.0
    %4877 = vmatpush1.xpose.msra.mxu0 0.0
    %4878 = vmatprep.subr.mxu0 0.0
    %4879 = vmatpush1.xpose.msra.mxu0 0.0
    %4880 = vmatprep.subr.mxu0 0.0
    %4881 = vmatpush1.xpose.msra.mxu0 0.0
    %4882 = vmatprep.subr.mxu0 0.0
    %4883 = vmatpush1.xpose.msra.mxu0 0.0
    %4884 = vmatprep.subr.mxu0 0.0
    %4885 = vmatpush1.xpose.msra.mxu0 0.0
    %4886 = vmatprep.subr.mxu0 0.0
    %4887 = vmatpush1.xpose.msra.mxu0 0.0
    %4888 = vmatprep.subr.mxu0 0.0
    %4889 = vmatpush1.xpose.msra.mxu0 0.0
    %4890 = vmatprep.subr.mxu0 0.0
    %4891 = vmatpush1.xpose.msra.mxu0 0.0
    %4892 = vmatprep.subr.mxu0 0.0
    %4893 = vmatpush1.xpose.msra.mxu0 0.0
    %4894 = vmatprep.subr.mxu0 0.0
    %4895 = vmatpush1.xpose.msra.mxu0 0.0
    %4896 = vmatprep.subr.mxu0 0.0
    %4897 = vmatpush1.xpose.msra.mxu0 0.0
    %4898 = vmatprep.subr.mxu0 0.0
    %4899 = vmatpush1.xpose.msra.mxu0 0.0
    %4900 = vmatprep.subr.mxu0 0.0
    %4901 = vmatpush1.xpose.msra.mxu0 %v4870
    %4902 = vmatprep.subr.mxu0 0.0
    %4903 = vmatpush1.xpose.msra.mxu0 %v4868
    %4904 = vmatprep.subr.mxu0 0.0
    %4905 = vmatpush2.xpose.msra.mxu0 0.0
    %4906 = vmatprep.subr.mxu0 0.0
    %4907 = vmatpush2.xpose.msra.mxu0 0.0
    %4908 = vmatprep.subr.mxu0 0.0
    %4909 = vmatpush2.xpose.msra.mxu0 0.0
    %4910 = vmatprep.subr.mxu0 0.0
    %4911 = vmatpush2.xpose.msra.mxu0 0.0
    %4912 = vmatprep.subr.mxu0 0.0
    %4913 = vmatpush2.xpose.msra.mxu0 0.0
    %4914 = vmatprep.subr.mxu0 0.0
    %4915 = vmatpush2.xpose.msra.mxu0 0.0
    %4916 = vmatprep.subr.mxu0 0.0
    %4917 = vmatpush2.xpose.msra.mxu0 0.0
    %4918 = vmatprep.subr.mxu0 0.0
    %4919 = vmatpush2.xpose.msra.mxu0 0.0
    %4920 = vmatprep.subr.mxu0 0.0
    %4921 = vmatpush2.xpose.msra.mxu0 0.0
    %4922 = vmatprep.subr.mxu0 0.0
    %4923 = vmatpush2.xpose.msra.mxu0 0.0
    %4924 = vmatprep.subr.mxu0 0.0
    %4925 = vmatpush2.xpose.msra.mxu0 0.0
    %4926 = vmatprep.subr.mxu0 0.0
    %4927 = vmatpush2.xpose.msra.mxu0 0.0
    %4928 = vmatprep.subr.mxu0 0.0
    %4929 = vmatpush2.xpose.msra.mxu0 0.0
    %4930 = vmatprep.subr.mxu0 0.0
    %4931 = vmatpush2.xpose.msra.mxu0 0.0
    %4932 = vmatprep.subr.mxu0 0.0
    %4933 = vmatpush2.xpose.msra.mxu0 0.0
    %4934 = vmatprep.subr.mxu0 0.0
    %4935 = vmatpush2.xpose.msra.mxu0 0.0
    %4936 = vmatprep.mubr.f32.mxu0 0.0
    %4937 = vmatmul.mubr.f32.gmra.mxu0 %v4864
    %v4938 = vpop.f32.mrf.mxu0
    %v4939 = vadd.f32 0.0, %v4938
    %v4940 = vpop.f32.mrf.mxu0
    %4941 = vmatprep.mubr.f32.mxu0 0.0
    %4942 = vmatmul.mubr.f32.gmra.mxu0 %v4866
    %v4943 = vpop.f32.mrf.mxu0
    %v4944 = vadd.f32 0.0, %v4943
    %v4945 = vpop.f32.mrf.mxu0
    %4946 = vdwg.mxu0
    %v4947 = vsel %vm551, %v4939, %v149
    %v4948 = vsel %vm552, %v4944, %v150
    %v4949 = vsel %vm555, %v4947, -inf
    %4950 = vmax.xlane.f32.xlu0 %v4949
    %v4951 = vpop.xlane.xlu0 %4950
    %v4952 = vsel %vm555, %v4948, -inf
    %4953 = vmax.xlane.f32.xlu0 %v4952
    %v4954 = vpop.xlane.xlu0 %4953
    %v4955 = vsub.f32 %v4947, %v4951
    %v4956 = vsub.f32 %v4948, %v4954
    %v4957 = vmul.f32 %v4955, 1.442695
    %v4958 = vpow.pop %v4957
    %v4959 = vmul.f32 %v4956, 1.442695
    %v4960 = vpow.pop %v4959
    %v4961 = vsel %vm555, %v4958, 0.0
    %4962 = vadd.xlane.f32.xlu0 %v4961
    %v4963 = vpop.xlane.xlu0 %4962
    %v4964 = vsel %vm555, %v4960, 0.0
    %4965 = vadd.xlane.f32.xlu0 %v4964
    %v4966 = vpop.xlane.xlu0 %4965
    %v4967 = vrcp.pop %v4963
    %v4968 = vmul.f32 %v4958, %v4967
    %v4969 = vrcp.pop %v4966
    %v4970 = vmul.f32 %v4960, %v4969
    %4971 = vrot.lane.b32.xlu0 %v4246, 72
    %v4972 = vpop.permute.xlu0 %4971
    %4973 = vrot.lane.b32.xlu0 %v4251, 72
    %v4974 = vpop.permute.xlu0 %4973
    %v4978 = vsel %vm555, %v4968, 0
    %v4981 = vsel %vm555, %v4970, 0
    %4983 = vmatprep.subr.mxu0 0.0
    %4984 = vmatpush1.msra.mxu0 0.0
    %4985 = vmatprep.subr.mxu0 0.0
    %4986 = vmatpush1.msra.mxu0 0.0
    %4987 = vmatprep.subr.mxu0 0.0
    %4988 = vmatpush1.msra.mxu0 0.0
    %4989 = vmatprep.subr.mxu0 0.0
    %4990 = vmatpush1.msra.mxu0 0.0
    %4991 = vmatprep.subr.mxu0 0.0
    %4992 = vmatpush1.msra.mxu0 0.0
    %4993 = vmatprep.subr.mxu0 0.0
    %4994 = vmatpush1.msra.mxu0 0.0
    %4995 = vmatprep.subr.mxu0 0.0
    %4996 = vmatpush1.msra.mxu0 0.0
    %4997 = vmatprep.subr.mxu0 0.0
    %4998 = vmatpush1.msra.mxu0 0.0
    %4999 = vmatprep.subr.mxu0 0.0
    %5000 = vmatpush1.msra.mxu0 0.0
    %5001 = vmatprep.subr.mxu0 0.0
    %5002 = vmatpush1.msra.mxu0 0.0
    %5003 = vmatprep.subr.mxu0 0.0
    %5004 = vmatpush1.msra.mxu0 0.0
    %5005 = vmatprep.subr.mxu0 0.0
    %5006 = vmatpush1.msra.mxu0 0.0
    %5007 = vmatprep.subr.mxu0 0.0
    %5008 = vmatpush1.msra.mxu0 0.0
    %5009 = vmatprep.subr.mxu0 0.0
    %5010 = vmatpush1.msra.mxu0 0.0
    %5011 = vmatprep.subr.mxu0 0.0
    %5012 = vmatpush1.msra.mxu0 %v4974
    %5013 = vmatprep.subr.mxu0 0.0
    %5014 = vmatpush1.msra.mxu0 %v4972
    %5015 = vmatprep.subr.mxu0 0.0
    %5016 = vmatpush2.msra.mxu0 0.0
    %5017 = vmatprep.subr.mxu0 0.0
    %5018 = vmatpush2.msra.mxu0 0.0
    %5019 = vmatprep.subr.mxu0 0.0
    %5020 = vmatpush2.msra.mxu0 0.0
    %5021 = vmatprep.subr.mxu0 0.0
    %5022 = vmatpush2.msra.mxu0 0.0
    %5023 = vmatprep.subr.mxu0 0.0
    %5024 = vmatpush2.msra.mxu0 0.0
    %5025 = vmatprep.subr.mxu0 0.0
    %5026 = vmatpush2.msra.mxu0 0.0
    %5027 = vmatprep.subr.mxu0 0.0
    %5028 = vmatpush2.msra.mxu0 0.0
    %5029 = vmatprep.subr.mxu0 0.0
    %5030 = vmatpush2.msra.mxu0 0.0
    %5031 = vmatprep.subr.mxu0 0.0
    %5032 = vmatpush2.msra.mxu0 0.0
    %5033 = vmatprep.subr.mxu0 0.0
    %5034 = vmatpush2.msra.mxu0 0.0
    %5035 = vmatprep.subr.mxu0 0.0
    %5036 = vmatpush2.msra.mxu0 0.0
    %5037 = vmatprep.subr.mxu0 0.0
    %5038 = vmatpush2.msra.mxu0 0.0
    %5039 = vmatprep.subr.mxu0 0.0
    %5040 = vmatpush2.msra.mxu0 0.0
    %5041 = vmatprep.subr.mxu0 0.0
    %5042 = vmatpush2.msra.mxu0 0.0
    %5043 = vmatprep.subr.mxu0 0.0
    %5044 = vmatpush2.msra.mxu0 0.0
    %5045 = vmatprep.subr.mxu0 0.0
    %5046 = vmatpush2.msra.mxu0 0.0
    %5047 = vmatprep.mubr.f32.mxu0 0.0
    %5048 = vmatmul.mubr.f32.gmra.mxu0 %v4978
    %v5049 = vpop.f32.mrf.mxu0
    %v5050 = vadd.f32 0.0, %v5049
    %v5051 = vpop.f32.mrf.mxu0
    %5052 = vmatprep.mubr.f32.mxu0 0.0
    %5053 = vmatmul.mubr.f32.gmra.mxu0 %v4981
    %v5054 = vpop.f32.mrf.mxu0
    %v5055 = vadd.f32 0.0, %v5054
    %v5056 = vpop.f32.mrf.mxu0
    %5057 = vdwg.mxu0
    %5060 = vrot.lane.b32.xlu0 %v4646, 8
    %v5061 = vpop.permute.xlu0 %5060
    %5062 = vrot.lane.b32.xlu0 %v4651, 8
    %v5063 = vpop.permute.xlu0 %5062
    %5068 = vrot.lane.b32.xlu0 %v4848, 16
    %v5069 = vpop.permute.xlu0 %5068
    %5070 = vrot.lane.b32.xlu0 %v4853, 16
    %v5071 = vpop.permute.xlu0 %5070
    %5076 = vrot.lane.b32.xlu0 %v5050, 24
    %v5077 = vpop.permute.xlu0 %5076
    %5078 = vrot.lane.b32.xlu0 %v5055, 24
    %v5079 = vpop.permute.xlu0 %5078
    %v5082 = vsel %vm467, %v4444, %v5061
    %v5083 = vsel %vm467, %v4449, %v5063
    %v5084 = vsel %vm555, %v5082, %v5069
    %v5085 = vsel %vm555, %v5083, %v5071
    %v5086 = vsel %vm1299, %v5084, %v5077
    %v5087 = vsel %vm1299, %v5085, %v5079
    %v5089 = vlaneseq
    %v5090 = vshrl.u32 %v5089, 7
    %v5091 = vsub.s32 0, %v5090
    %v5092 = vrot.slane %v4066, %v5091
    %v5095 = vsel %vm379, %v5086, 0
    %v5098 = vsel %vm379, %v5087, 0
    %5100 = vmatprep.subr.mxu0 0.0
    %5101 = vmatpush1.msra.mxu0 0.0
    %5102 = vmatprep.subr.mxu0 0.0
    %5103 = vmatpush1.msra.mxu0 0.0
    %5104 = vmatprep.subr.mxu0 0.0
    %5105 = vmatpush1.msra.mxu0 0.0
    %5106 = vmatprep.subr.mxu0 0.0
    %5107 = vmatpush1.msra.mxu0 0.0
    %5108 = vmatprep.subr.mxu0 0.0
    %5109 = vmatpush1.msra.mxu0 0.0
    %5110 = vmatprep.subr.mxu0 0.0
    %5111 = vmatpush1.msra.mxu0 0.0
    %5112 = vmatprep.subr.mxu0 0.0
    %5113 = vmatpush1.msra.mxu0 0.0
    %5114 = vmatprep.subr.mxu0 0.0
    %5115 = vmatpush1.msra.mxu0 0.0
    %5116 = vmatprep.subr.mxu0 0.0
    %5117 = vmatpush1.msra.mxu0 0.0
    %5118 = vmatprep.subr.mxu0 0.0
    %5119 = vmatpush1.msra.mxu0 0.0
    %5120 = vmatprep.subr.mxu0 0.0
    %5121 = vmatpush1.msra.mxu0 0.0
    %5122 = vmatprep.subr.mxu0 0.0
    %5123 = vmatpush1.msra.mxu0 0.0
    %5124 = vmatprep.subr.mxu0 0.0
    %5125 = vmatpush1.msra.mxu0 %v4065
    %5126 = vmatprep.subr.mxu0 0.0
    %5127 = vmatpush1.msra.mxu0 %v4064
    %5128 = vmatprep.subr.mxu0 0.0
    %5129 = vmatpush1.msra.mxu0 %v4063
    %5130 = vmatprep.subr.mxu0 0.0
    %5131 = vmatpush1.msra.mxu0 %v4062
    %5132 = vmatprep.subr.mxu0 0.0
    %5133 = vmatpush2.msra.mxu0 0.0
    %5134 = vmatprep.subr.mxu0 0.0
    %5135 = vmatpush2.msra.mxu0 0.0
    %5136 = vmatprep.subr.mxu0 0.0
    %5137 = vmatpush2.msra.mxu0 0.0
    %5138 = vmatprep.subr.mxu0 0.0
    %5139 = vmatpush2.msra.mxu0 0.0
    %5140 = vmatprep.subr.mxu0 0.0
    %5141 = vmatpush2.msra.mxu0 0.0
    %5142 = vmatprep.subr.mxu0 0.0
    %5143 = vmatpush2.msra.mxu0 0.0
    %5144 = vmatprep.subr.mxu0 0.0
    %5145 = vmatpush2.msra.mxu0 0.0
    %5146 = vmatprep.subr.mxu0 0.0
    %5147 = vmatpush2.msra.mxu0 0.0
    %5148 = vmatprep.subr.mxu0 0.0
    %5149 = vmatpush2.msra.mxu0 0.0
    %5150 = vmatprep.subr.mxu0 0.0
    %5151 = vmatpush2.msra.mxu0 0.0
    %5152 = vmatprep.subr.mxu0 0.0
    %5153 = vmatpush2.msra.mxu0 0.0
    %5154 = vmatprep.subr.mxu0 0.0
    %5155 = vmatpush2.msra.mxu0 0.0
    %5156 = vmatprep.subr.mxu0 0.0
    %5157 = vmatpush2.msra.mxu0 0.0
    %5158 = vmatprep.subr.mxu0 0.0
    %5159 = vmatpush2.msra.mxu0 0.0
    %5160 = vmatprep.subr.mxu0 0.0
    %5161 = vmatpush2.msra.mxu0 0.0
    %5162 = vmatprep.subr.mxu0 0.0
    %5163 = vmatpush2.msra.mxu0 0.0
    %5164 = vmatprep.mubr.f32.mxu0 0.0
    %5165 = vmatmul.mubr.f32.gmra.mxu0 %v5095
    %v5166 = vpop.f32.mrf.mxu0
    %v5167 = vadd.f32 %v5092, %v5166
    %v5168 = vpop.f32.mrf.mxu0
    %5169 = vmatprep.mubr.f32.mxu0 0.0
    %5170 = vmatmul.mubr.f32.gmra.mxu0 %v5098
    %v5171 = vpop.f32.mrf.mxu0
    %v5172 = vadd.f32 %v5092, %v5171
    %v5173 = vpop.f32.mrf.mxu0
    %5174 = vdwg.mxu0
    %v5175 = vadd.f32 %v4055, %v5167
    %v5176 = vadd.f32 %v4056, %v5172
    %s5177 = scalar_lea.vmem %s53, 1
    %v5178 = vld [vmem:[%s5177] sm:$0x1]
    %s5179 = scalar_lea.vmem %s55, 1
    %v5180 = vld [vmem:[%s5179] sm:$0x1]
    %v5181 = vsel %vm379, %v5175, 0.0
    %5182 = vadd.xlane.f32.xlu0 %v5181
    %v5183 = vpop.xlane.xlu0 %5182
    %v5184 = vsel %vm379, %v5176, 0.0
    %5185 = vadd.xlane.f32.xlu0 %v5184
    %v5186 = vpop.xlane.xlu0 %5185
    %v5187 = vmul.f32 %v5183, %v1399
    %v5188 = vmul.f32 %v5186, %v1399
    %v5189 = vsub.f32 %v5175, %v5187
    %v5190 = vsub.f32 %v5176, %v5188
    %v5191 = vmul.f32 %v5189, %v5189
    %v5192 = vmul.f32 %v5190, %v5190
    %v5193 = vsel %vm379, %v5191, 0.0
    %5194 = vadd.xlane.f32.xlu0 %v5193
    %v5195 = vpop.xlane.xlu0 %5194
    %v5196 = vsel %vm379, %v5192, 0.0
    %5197 = vadd.xlane.f32.xlu0 %v5196
    %v5198 = vpop.xlane.xlu0 %5197
    %v5199 = vmul.f32 %v5195, %v1399
    %v5200 = vmul.f32 %v5198, %v1399
    %v5201 = vadd.f32 %v5199, 1e-05
    %v5202 = vadd.f32 %v5200, 1e-05
    %v5203 = vrsqrt.pop %v5201
    %v5204 = vrsqrt.pop %v5202
    %v5205 = vmul.f32 %v5189, %v5203
    %v5206 = vmul.f32 %v5190, %v5204
    %v5208 = vlaneseq
    %v5209 = vshrl.u32 %v5208, 7
    %v5210 = vsub.s32 0, %v5209
    %v5211 = vrot.slane %v5178, %v5210
    %v5213 = vmul.f32 %v5205, %v5211
    %v5214 = vmul.f32 %v5206, %v5211
    %v5216 = vlaneseq
    %v5217 = vshrl.u32 %v5216, 7
    %v5218 = vsub.s32 0, %v5217
    %v5219 = vrot.slane %v5180, %v5218
    %v5221 = vadd.f32 %v5213, %v5219
    %v5222 = vadd.f32 %v5214, %v5219
    %v5223 = vld [vmem:[%s57] sm:$0xff]
    %v5224 = vld [vmem:[%s57 + $0x8] sm:$0xff]
    %v5225 = vld [vmem:[%s57 + $0x10] sm:$0xff]
    %v5226 = vld [vmem:[%s57 + $0x18] sm:$0xff]
    %v5227 = vld [vmem:[%s59] sm:$0x1]
    %v5228 = vld [vmem:[%s61] sm:$0xff]
    %v5229 = vld [vmem:[%s61 + $0x8] sm:$0xff]
    %v5230 = vld [vmem:[%s61 + $0x10] sm:$0xff]
    %v5231 = vld [vmem:[%s61 + $0x18] sm:$0xff]
    %v5232 = vld [vmem:[%s61 + $0x20] sm:$0xff]
    %v5233 = vld [vmem:[%s61 + $0x28] sm:$0xff]
    %v5234 = vld [vmem:[%s61 + $0x30] sm:$0xff]
    %v5235 = vld [vmem:[%s61 + $0x38] sm:$0xff]
    %v5236 = vld [vmem:[%s63] sm:$0x1]
    %v5238 = vlaneseq
    %v5239 = vshrl.u32 %v5238, 7
    %v5240 = vsub.s32 0, %v5239
    %v5241 = vrot.slane %v5227, %v5240
    %v5244 = vsel %vm379, %v5221, 0
    %v5247 = vsel %vm379, %v5222, 0
    %5249 = vmatprep.subr.mxu0 0.0
    %5250 = vmatpush1.msra.mxu0 0.0
    %5251 = vmatprep.subr.mxu0 0.0
    %5252 = vmatpush1.msra.mxu0 0.0
    %5253 = vmatprep.subr.mxu0 0.0
    %5254 = vmatpush1.msra.mxu0 0.0
    %5255 = vmatprep.subr.mxu0 0.0
    %5256 = vmatpush1.msra.mxu0 0.0
    %5257 = vmatprep.subr.mxu0 0.0
    %5258 = vmatpush1.msra.mxu0 0.0
    %5259 = vmatprep.subr.mxu0 0.0
    %5260 = vmatpush1.msra.mxu0 0.0
    %5261 = vmatprep.subr.mxu0 0.0
    %5262 = vmatpush1.msra.mxu0 0.0
    %5263 = vmatprep.subr.mxu0 0.0
    %5264 = vmatpush1.msra.mxu0 0.0
    %5265 = vmatprep.subr.mxu0 0.0
    %5266 = vmatpush1.msra.mxu0 0.0
    %5267 = vmatprep.subr.mxu0 0.0
    %5268 = vmatpush1.msra.mxu0 0.0
    %5269 = vmatprep.subr.mxu0 0.0
    %5270 = vmatpush1.msra.mxu0 0.0
    %5271 = vmatprep.subr.mxu0 0.0
    %5272 = vmatpush1.msra.mxu0 0.0
    %5273 = vmatprep.subr.mxu0 0.0
    %5274 = vmatpush1.msra.mxu0 %v5226
    %5275 = vmatprep.subr.mxu0 0.0
    %5276 = vmatpush1.msra.mxu0 %v5225
    %5277 = vmatprep.subr.mxu0 0.0
    %5278 = vmatpush1.msra.mxu0 %v5224
    %5279 = vmatprep.subr.mxu0 0.0
    %5280 = vmatpush1.msra.mxu0 %v5223
    %5281 = vmatprep.subr.mxu0 0.0
    %5282 = vmatpush2.msra.mxu0 0.0
    %5283 = vmatprep.subr.mxu0 0.0
    %5284 = vmatpush2.msra.mxu0 0.0
    %5285 = vmatprep.subr.mxu0 0.0
    %5286 = vmatpush2.msra.mxu0 0.0
    %5287 = vmatprep.subr.mxu0 0.0
    %5288 = vmatpush2.msra.mxu0 0.0
    %5289 = vmatprep.subr.mxu0 0.0
    %5290 = vmatpush2.msra.mxu0 0.0
    %5291 = vmatprep.subr.mxu0 0.0
    %5292 = vmatpush2.msra.mxu0 0.0
    %5293 = vmatprep.subr.mxu0 0.0
    %5294 = vmatpush2.msra.mxu0 0.0
    %5295 = vmatprep.subr.mxu0 0.0
    %5296 = vmatpush2.msra.mxu0 0.0
    %5297 = vmatprep.subr.mxu0 0.0
    %5298 = vmatpush2.msra.mxu0 0.0
    %5299 = vmatprep.subr.mxu0 0.0
    %5300 = vmatpush2.msra.mxu0 0.0
    %5301 = vmatprep.subr.mxu0 0.0
    %5302 = vmatpush2.msra.mxu0 0.0
    %5303 = vmatprep.subr.mxu0 0.0
    %5304 = vmatpush2.msra.mxu0 0.0
    %5305 = vmatprep.subr.mxu0 0.0
    %5306 = vmatpush2.msra.mxu0 0.0
    %5307 = vmatprep.subr.mxu0 0.0
    %5308 = vmatpush2.msra.mxu0 0.0
    %5309 = vmatprep.subr.mxu0 0.0
    %5310 = vmatpush2.msra.mxu0 0.0
    %5311 = vmatprep.subr.mxu0 0.0
    %5312 = vmatpush2.msra.mxu0 0.0
    %5313 = vmatprep.mubr.f32.mxu0 0.0
    %5314 = vmatmul.mubr.f32.gmra.mxu0 %v5244
    %v5315 = vpop.f32.mrf.mxu0
    %v5316 = vadd.f32 %v5241, %v5315
    %v5317 = vpop.f32.mrf.mxu0
    %5318 = vmatprep.mubr.f32.mxu0 0.0
    %5319 = vmatmul.mubr.f32.gmra.mxu0 %v5247
    %v5320 = vpop.f32.mrf.mxu0
    %v5321 = vadd.f32 %v5241, %v5320
    %v5322 = vpop.f32.mrf.mxu0
    %5323 = vdwg.mxu0
    %v5324 = vmax.f32 %v5316, 0.0
    %v5325 = vmax.f32 %v5321, 0.0
    %v5327 = vlaneseq
    %v5328 = vshrl.u32 %v5327, 7
    %v5329 = vsub.s32 0, %v5328
    %v5330 = vrot.slane %v5236, %v5329
    %v5333 = vsel %vm1545, %v5324, 0
    %v5336 = vsel %vm1545, %v5325, 0
    %5338 = vmatprep.subr.mxu0 0.0
    %5339 = vmatpush1.msra.mxu0 0.0
    %5340 = vmatprep.subr.mxu0 0.0
    %5341 = vmatpush1.msra.mxu0 0.0
    %5342 = vmatprep.subr.mxu0 0.0
    %5343 = vmatpush1.msra.mxu0 0.0
    %5344 = vmatprep.subr.mxu0 0.0
    %5345 = vmatpush1.msra.mxu0 0.0
    %5346 = vmatprep.subr.mxu0 0.0
    %5347 = vmatpush1.msra.mxu0 0.0
    %5348 = vmatprep.subr.mxu0 0.0
    %5349 = vmatpush1.msra.mxu0 0.0
    %5350 = vmatprep.subr.mxu0 0.0
    %5351 = vmatpush1.msra.mxu0 0.0
    %5352 = vmatprep.subr.mxu0 0.0
    %5353 = vmatpush1.msra.mxu0 0.0
    %5354 = vmatprep.subr.mxu0 0.0
    %5355 = vmatpush1.msra.mxu0 %v5235
    %5356 = vmatprep.subr.mxu0 0.0
    %5357 = vmatpush1.msra.mxu0 %v5234
    %5358 = vmatprep.subr.mxu0 0.0
    %5359 = vmatpush1.msra.mxu0 %v5233
    %5360 = vmatprep.subr.mxu0 0.0
    %5361 = vmatpush1.msra.mxu0 %v5232
    %5362 = vmatprep.subr.mxu0 0.0
    %5363 = vmatpush1.msra.mxu0 %v5231
    %5364 = vmatprep.subr.mxu0 0.0
    %5365 = vmatpush1.msra.mxu0 %v5230
    %5366 = vmatprep.subr.mxu0 0.0
    %5367 = vmatpush1.msra.mxu0 %v5229
    %5368 = vmatprep.subr.mxu0 0.0
    %5369 = vmatpush1.msra.mxu0 %v5228
    %5370 = vmatprep.subr.mxu0 0.0
    %5371 = vmatpush2.msra.mxu0 0.0
    %5372 = vmatprep.subr.mxu0 0.0
    %5373 = vmatpush2.msra.mxu0 0.0
    %5374 = vmatprep.subr.mxu0 0.0
    %5375 = vmatpush2.msra.mxu0 0.0
    %5376 = vmatprep.subr.mxu0 0.0
    %5377 = vmatpush2.msra.mxu0 0.0
    %5378 = vmatprep.subr.mxu0 0.0
    %5379 = vmatpush2.msra.mxu0 0.0
    %5380 = vmatprep.subr.mxu0 0.0
    %5381 = vmatpush2.msra.mxu0 0.0
    %5382 = vmatprep.subr.mxu0 0.0
    %5383 = vmatpush2.msra.mxu0 0.0
    %5384 = vmatprep.subr.mxu0 0.0
    %5385 = vmatpush2.msra.mxu0 0.0
    %5386 = vmatprep.subr.mxu0 0.0
    %5387 = vmatpush2.msra.mxu0 0.0
    %5388 = vmatprep.subr.mxu0 0.0
    %5389 = vmatpush2.msra.mxu0 0.0
    %5390 = vmatprep.subr.mxu0 0.0
    %5391 = vmatpush2.msra.mxu0 0.0
    %5392 = vmatprep.subr.mxu0 0.0
    %5393 = vmatpush2.msra.mxu0 0.0
    %5394 = vmatprep.subr.mxu0 0.0
    %5395 = vmatpush2.msra.mxu0 0.0
    %5396 = vmatprep.subr.mxu0 0.0
    %5397 = vmatpush2.msra.mxu0 0.0
    %5398 = vmatprep.subr.mxu0 0.0
    %5399 = vmatpush2.msra.mxu0 0.0
    %5400 = vmatprep.subr.mxu0 0.0
    %5401 = vmatpush2.msra.mxu0 0.0
    %5402 = vmatprep.mubr.f32.mxu0 0.0
    %5403 = vmatmul.mubr.f32.gmra.mxu0 %v5333
    %v5404 = vpop.f32.mrf.mxu0
    %v5405 = vadd.f32 %v5330, %v5404
    %v5406 = vpop.f32.mrf.mxu0
    %5407 = vmatprep.mubr.f32.mxu0 0.0
    %5408 = vmatmul.mubr.f32.gmra.mxu0 %v5336
    %v5409 = vpop.f32.mrf.mxu0
    %v5410 = vadd.f32 %v5330, %v5409
    %v5411 = vpop.f32.mrf.mxu0
    %5412 = vdwg.mxu0
    %v5413 = vadd.f32 %v5221, %v5405
    %v5414 = vadd.f32 %v5222, %v5410
    %s5415 = scalar_lea.vmem %s53, 2
    %v5416 = vld [vmem:[%s5415] sm:$0x1]
    %s5417 = scalar_lea.vmem %s55, 2
    %v5418 = vld [vmem:[%s5417] sm:$0x1]
    %v5419 = vsel %vm379, %v5413, 0.0
    %5420 = vadd.xlane.f32.xlu0 %v5419
    %v5421 = vpop.xlane.xlu0 %5420
    %v5422 = vsel %vm379, %v5414, 0.0
    %5423 = vadd.xlane.f32.xlu0 %v5422
    %v5424 = vpop.xlane.xlu0 %5423
    %v5425 = vmul.f32 %v5421, %v1399
    %v5426 = vmul.f32 %v5424, %v1399
    %v5427 = vsub.f32 %v5413, %v5425
    %v5428 = vsub.f32 %v5414, %v5426
    %v5429 = vmul.f32 %v5427, %v5427
    %v5430 = vmul.f32 %v5428, %v5428
    %v5431 = vsel %vm379, %v5429, 0.0
    %5432 = vadd.xlane.f32.xlu0 %v5431
    %v5433 = vpop.xlane.xlu0 %5432
    %v5434 = vsel %vm379, %v5430, 0.0
    %5435 = vadd.xlane.f32.xlu0 %v5434
    %v5436 = vpop.xlane.xlu0 %5435
    %v5437 = vmul.f32 %v5433, %v1399
    %v5438 = vmul.f32 %v5436, %v1399
    %v5439 = vadd.f32 %v5437, 1e-05
    %v5440 = vadd.f32 %v5438, 1e-05
    %v5441 = vrsqrt.pop %v5439
    %v5442 = vrsqrt.pop %v5440
    %v5443 = vmul.f32 %v5427, %v5441
    %v5444 = vmul.f32 %v5428, %v5442
    %v5446 = vlaneseq
    %v5447 = vshrl.u32 %v5446, 7
    %v5448 = vsub.s32 0, %v5447
    %v5449 = vrot.slane %v5416, %v5448
    %v5451 = vmul.f32 %v5443, %v5449
    %v5452 = vmul.f32 %v5444, %v5449
    %v5454 = vlaneseq
    %v5455 = vshrl.u32 %v5454, 7
    %v5456 = vsub.s32 0, %v5455
    %v5457 = vrot.slane %v5418, %v5456
    %v5459 = vadd.f32 %v5451, %v5457
    %v5460 = vadd.f32 %v5452, %v5457
    %s5461 = scalar_lea.vmem %s37, 32
    %v5462 = vld [vmem:[%s5461] sm:$0xff]
    %v5463 = vld [vmem:[%s5461 + $0x8] sm:$0xff]
    %v5464 = vld [vmem:[%s5461 + $0x10] sm:$0xff]
    %v5465 = vld [vmem:[%s5461 + $0x18] sm:$0xff]
    %s5466 = scalar_lea.vmem %s39, 1
    %v5467 = vld [vmem:[%s5466] sm:$0x1]
    %s5468 = scalar_lea.vmem %s41, 32
    %v5469 = vld [vmem:[%s5468] sm:$0xff]
    %v5470 = vld [vmem:[%s5468 + $0x8] sm:$0xff]
    %v5471 = vld [vmem:[%s5468 + $0x10] sm:$0xff]
    %v5472 = vld [vmem:[%s5468 + $0x18] sm:$0xff]
    %s5473 = scalar_lea.vmem %s43, 1
    %v5474 = vld [vmem:[%s5473] sm:$0x1]
    %v5476 = vlaneseq
    %v5477 = vshrl.u32 %v5476, 7
    %v5478 = vsub.s32 0, %v5477
    %v5479 = vrot.slane %v5467, %v5478
    %v5482 = vsel %vm379, %v5459, 0
    %v5485 = vsel %vm379, %v5460, 0
    %5487 = vmatprep.subr.mxu0 0.0
    %5488 = vmatpush1.msra.mxu0 0.0
    %5489 = vmatprep.subr.mxu0 0.0
    %5490 = vmatpush1.msra.mxu0 0.0
    %5491 = vmatprep.subr.mxu0 0.0
    %5492 = vmatpush1.msra.mxu0 0.0
    %5493 = vmatprep.subr.mxu0 0.0
    %5494 = vmatpush1.msra.mxu0 0.0
    %5495 = vmatprep.subr.mxu0 0.0
    %5496 = vmatpush1.msra.mxu0 0.0
    %5497 = vmatprep.subr.mxu0 0.0
    %5498 = vmatpush1.msra.mxu0 0.0
    %5499 = vmatprep.subr.mxu0 0.0
    %5500 = vmatpush1.msra.mxu0 0.0
    %5501 = vmatprep.subr.mxu0 0.0
    %5502 = vmatpush1.msra.mxu0 0.0
    %5503 = vmatprep.subr.mxu0 0.0
    %5504 = vmatpush1.msra.mxu0 0.0
    %5505 = vmatprep.subr.mxu0 0.0
    %5506 = vmatpush1.msra.mxu0 0.0
    %5507 = vmatprep.subr.mxu0 0.0
    %5508 = vmatpush1.msra.mxu0 0.0
    %5509 = vmatprep.subr.mxu0 0.0
    %5510 = vmatpush1.msra.mxu0 0.0
    %5511 = vmatprep.subr.mxu0 0.0
    %5512 = vmatpush1.msra.mxu0 %v5465
    %5513 = vmatprep.subr.mxu0 0.0
    %5514 = vmatpush1.msra.mxu0 %v5464
    %5515 = vmatprep.subr.mxu0 0.0
    %5516 = vmatpush1.msra.mxu0 %v5463
    %5517 = vmatprep.subr.mxu0 0.0
    %5518 = vmatpush1.msra.mxu0 %v5462
    %5519 = vmatprep.subr.mxu0 0.0
    %5520 = vmatpush2.msra.mxu0 0.0
    %5521 = vmatprep.subr.mxu0 0.0
    %5522 = vmatpush2.msra.mxu0 0.0
    %5523 = vmatprep.subr.mxu0 0.0
    %5524 = vmatpush2.msra.mxu0 0.0
    %5525 = vmatprep.subr.mxu0 0.0
    %5526 = vmatpush2.msra.mxu0 0.0
    %5527 = vmatprep.subr.mxu0 0.0
    %5528 = vmatpush2.msra.mxu0 0.0
    %5529 = vmatprep.subr.mxu0 0.0
    %5530 = vmatpush2.msra.mxu0 0.0
    %5531 = vmatprep.subr.mxu0 0.0
    %5532 = vmatpush2.msra.mxu0 0.0
    %5533 = vmatprep.subr.mxu0 0.0
    %5534 = vmatpush2.msra.mxu0 0.0
    %5535 = vmatprep.subr.mxu0 0.0
    %5536 = vmatpush2.msra.mxu0 0.0
    %5537 = vmatprep.subr.mxu0 0.0
    %5538 = vmatpush2.msra.mxu0 0.0
    %5539 = vmatprep.subr.mxu0 0.0
    %5540 = vmatpush2.msra.mxu0 0.0
    %5541 = vmatprep.subr.mxu0 0.0
    %5542 = vmatpush2.msra.mxu0 0.0
    %5543 = vmatprep.subr.mxu0 0.0
    %5544 = vmatpush2.msra.mxu0 0.0
    %5545 = vmatprep.subr.mxu0 0.0
    %5546 = vmatpush2.msra.mxu0 0.0
    %5547 = vmatprep.subr.mxu0 0.0
    %5548 = vmatpush2.msra.mxu0 0.0
    %5549 = vmatprep.subr.mxu0 0.0
    %5550 = vmatpush2.msra.mxu0 0.0
    %5551 = vmatprep.mubr.f32.mxu0 0.0
    %5552 = vmatmul.mubr.f32.gmra.mxu0 %v5482
    %v5553 = vpop.f32.mrf.mxu0
    %v5554 = vadd.f32 %v5479, %v5553
    %v5555 = vpop.f32.mrf.mxu0
    %5556 = vmatprep.mubr.f32.mxu0 0.0
    %5557 = vmatmul.mubr.f32.gmra.mxu0 %v5485
    %v5558 = vpop.f32.mrf.mxu0
    %v5559 = vadd.f32 %v5479, %v5558
    %v5560 = vpop.f32.mrf.mxu0
    %5561 = vdwg.mxu0
    %5564 = vrot.lane.b32.xlu0 %v5554, 96
    %v5565 = vpop.permute.xlu0 %5564
    %5566 = vrot.lane.b32.xlu0 %v5559, 96
    %v5567 = vpop.permute.xlu0 %5566
    %v5568 = vsel %vm467, %v5554, 0
    %v5570 = vsel %vm467, %v5559, 0
    %v5572 = vsel %vm467, %v5565, 0
    %v5574 = vsel %vm467, %v5567, 0
    %5576 = vmatprep.subr.mxu0 0.0
    %5577 = vmatpush1.xpose.msra.mxu0 0.0
    %5578 = vmatprep.subr.mxu0 0.0
    %5579 = vmatpush1.xpose.msra.mxu0 0.0
    %5580 = vmatprep.subr.mxu0 0.0
    %5581 = vmatpush1.xpose.msra.mxu0 0.0
    %5582 = vmatprep.subr.mxu0 0.0
    %5583 = vmatpush1.xpose.msra.mxu0 0.0
    %5584 = vmatprep.subr.mxu0 0.0
    %5585 = vmatpush1.xpose.msra.mxu0 0.0
    %5586 = vmatprep.subr.mxu0 0.0
    %5587 = vmatpush1.xpose.msra.mxu0 0.0
    %5588 = vmatprep.subr.mxu0 0.0
    %5589 = vmatpush1.xpose.msra.mxu0 0.0
    %5590 = vmatprep.subr.mxu0 0.0
    %5591 = vmatpush1.xpose.msra.mxu0 0.0
    %5592 = vmatprep.subr.mxu0 0.0
    %5593 = vmatpush1.xpose.msra.mxu0 0.0
    %5594 = vmatprep.subr.mxu0 0.0
    %5595 = vmatpush1.xpose.msra.mxu0 0.0
    %5596 = vmatprep.subr.mxu0 0.0
    %5597 = vmatpush1.xpose.msra.mxu0 0.0
    %5598 = vmatprep.subr.mxu0 0.0
    %5599 = vmatpush1.xpose.msra.mxu0 0.0
    %5600 = vmatprep.subr.mxu0 0.0
    %5601 = vmatpush1.xpose.msra.mxu0 0.0
    %5602 = vmatprep.subr.mxu0 0.0
    %5603 = vmatpush1.xpose.msra.mxu0 0.0
    %5604 = vmatprep.subr.mxu0 0.0
    %5605 = vmatpush1.xpose.msra.mxu0 %v5574
    %5606 = vmatprep.subr.mxu0 0.0
    %5607 = vmatpush1.xpose.msra.mxu0 %v5572
    %5608 = vmatprep.subr.mxu0 0.0
    %5609 = vmatpush2.xpose.msra.mxu0 0.0
    %5610 = vmatprep.subr.mxu0 0.0
    %5611 = vmatpush2.xpose.msra.mxu0 0.0
    %5612 = vmatprep.subr.mxu0 0.0
    %5613 = vmatpush2.xpose.msra.mxu0 0.0
    %5614 = vmatprep.subr.mxu0 0.0
    %5615 = vmatpush2.xpose.msra.mxu0 0.0
    %5616 = vmatprep.subr.mxu0 0.0
    %5617 = vmatpush2.xpose.msra.mxu0 0.0
    %5618 = vmatprep.subr.mxu0 0.0
    %5619 = vmatpush2.xpose.msra.mxu0 0.0
    %5620 = vmatprep.subr.mxu0 0.0
    %5621 = vmatpush2.xpose.msra.mxu0 0.0
    %5622 = vmatprep.subr.mxu0 0.0
    %5623 = vmatpush2.xpose.msra.mxu0 0.0
    %5624 = vmatprep.subr.mxu0 0.0
    %5625 = vmatpush2.xpose.msra.mxu0 0.0
    %5626 = vmatprep.subr.mxu0 0.0
    %5627 = vmatpush2.xpose.msra.mxu0 0.0
    %5628 = vmatprep.subr.mxu0 0.0
    %5629 = vmatpush2.xpose.msra.mxu0 0.0
    %5630 = vmatprep.subr.mxu0 0.0
    %5631 = vmatpush2.xpose.msra.mxu0 0.0
    %5632 = vmatprep.subr.mxu0 0.0
    %5633 = vmatpush2.xpose.msra.mxu0 0.0
    %5634 = vmatprep.subr.mxu0 0.0
    %5635 = vmatpush2.xpose.msra.mxu0 0.0
    %5636 = vmatprep.subr.mxu0 0.0
    %5637 = vmatpush2.xpose.msra.mxu0 0.0
    %5638 = vmatprep.subr.mxu0 0.0
    %5639 = vmatpush2.xpose.msra.mxu0 0.0
    %5640 = vmatprep.mubr.f32.mxu0 0.0
    %5641 = vmatmul.mubr.f32.gmra.mxu0 %v5568
    %v5642 = vpop.f32.mrf.mxu0
    %v5643 = vadd.f32 0.0, %v5642
    %v5644 = vpop.f32.mrf.mxu0
    %5645 = vmatprep.mubr.f32.mxu0 0.0
    %5646 = vmatmul.mubr.f32.gmra.mxu0 %v5570
    %v5647 = vpop.f32.mrf.mxu0
    %v5648 = vadd.f32 0.0, %v5647
    %v5649 = vpop.f32.mrf.mxu0
    %5650 = vdwg.mxu0
    %v5651 = vsel %vm3175, %v5643, %v149
    %v5652 = vsel %vm3176, %v5648, %v150
    %v5653 = vsel %vm555, %v5651, -inf
    %5654 = vmax.xlane.f32.xlu0 %v5653
    %v5655 = vpop.xlane.xlu0 %5654
    %v5656 = vsel %vm555, %v5652, -inf
    %5657 = vmax.xlane.f32.xlu0 %v5656
    %v5658 = vpop.xlane.xlu0 %5657
    %v5659 = vsub.f32 %v5651, %v5655
    %v5660 = vsub.f32 %v5652, %v5658
    %v5661 = vmul.f32 %v5659, 1.442695
    %v5662 = vpow.pop %v5661
    %v5663 = vmul.f32 %v5660, 1.442695
    %v5664 = vpow.pop %v5663
    %v5665 = vsel %vm555, %v5662, 0.0
    %5666 = vadd.xlane.f32.xlu0 %v5665
    %v5667 = vpop.xlane.xlu0 %5666
    %v5668 = vsel %vm555, %v5664, 0.0
    %5669 = vadd.xlane.f32.xlu0 %v5668
    %v5670 = vpop.xlane.xlu0 %5669
    %v5671 = vrcp.pop %v5667
    %v5672 = vmul.f32 %v5662, %v5671
    %v5673 = vrcp.pop %v5670
    %v5674 = vmul.f32 %v5664, %v5673
    %5675 = vrot.lane.b32.xlu0 %v5554, 64
    %v5676 = vpop.permute.xlu0 %5675
    %5677 = vrot.lane.b32.xlu0 %v5559, 64
    %v5678 = vpop.permute.xlu0 %5677
    %v5682 = vsel %vm555, %v5672, 0
    %v5685 = vsel %vm555, %v5674, 0
    %5687 = vmatprep.subr.mxu0 0.0
    %5688 = vmatpush1.msra.mxu0 0.0
    %5689 = vmatprep.subr.mxu0 0.0
    %5690 = vmatpush1.msra.mxu0 0.0
    %5691 = vmatprep.subr.mxu0 0.0
    %5692 = vmatpush1.msra.mxu0 0.0
    %5693 = vmatprep.subr.mxu0 0.0
    %5694 = vmatpush1.msra.mxu0 0.0
    %5695 = vmatprep.subr.mxu0 0.0
    %5696 = vmatpush1.msra.mxu0 0.0
    %5697 = vmatprep.subr.mxu0 0.0
    %5698 = vmatpush1.msra.mxu0 0.0
    %5699 = vmatprep.subr.mxu0 0.0
    %5700 = vmatpush1.msra.mxu0 0.0
    %5701 = vmatprep.subr.mxu0 0.0
    %5702 = vmatpush1.msra.mxu0 0.0
    %5703 = vmatprep.subr.mxu0 0.0
    %5704 = vmatpush1.msra.mxu0 0.0
    %5705 = vmatprep.subr.mxu0 0.0
    %5706 = vmatpush1.msra.mxu0 0.0
    %5707 = vmatprep.subr.mxu0 0.0
    %5708 = vmatpush1.msra.mxu0 0.0
    %5709 = vmatprep.subr.mxu0 0.0
    %5710 = vmatpush1.msra.mxu0 0.0
    %5711 = vmatprep.subr.mxu0 0.0
    %5712 = vmatpush1.msra.mxu0 0.0
    %5713 = vmatprep.subr.mxu0 0.0
    %5714 = vmatpush1.msra.mxu0 0.0
    %5715 = vmatprep.subr.mxu0 0.0
    %5716 = vmatpush1.msra.mxu0 %v5678
    %5717 = vmatprep.subr.mxu0 0.0
    %5718 = vmatpush1.msra.mxu0 %v5676
    %5719 = vmatprep.subr.mxu0 0.0
    %5720 = vmatpush2.msra.mxu0 0.0
    %5721 = vmatprep.subr.mxu0 0.0
    %5722 = vmatpush2.msra.mxu0 0.0
    %5723 = vmatprep.subr.mxu0 0.0
    %5724 = vmatpush2.msra.mxu0 0.0
    %5725 = vmatprep.subr.mxu0 0.0
    %5726 = vmatpush2.msra.mxu0 0.0
    %5727 = vmatprep.subr.mxu0 0.0
    %5728 = vmatpush2.msra.mxu0 0.0
    %5729 = vmatprep.subr.mxu0 0.0
    %5730 = vmatpush2.msra.mxu0 0.0
    %5731 = vmatprep.subr.mxu0 0.0
    %5732 = vmatpush2.msra.mxu0 0.0
    %5733 = vmatprep.subr.mxu0 0.0
    %5734 = vmatpush2.msra.mxu0 0.0
    %5735 = vmatprep.subr.mxu0 0.0
    %5736 = vmatpush2.msra.mxu0 0.0
    %5737 = vmatprep.subr.mxu0 0.0
    %5738 = vmatpush2.msra.mxu0 0.0
    %5739 = vmatprep.subr.mxu0 0.0
    %5740 = vmatpush2.msra.mxu0 0.0
    %5741 = vmatprep.subr.mxu0 0.0
    %5742 = vmatpush2.msra.mxu0 0.0
    %5743 = vmatprep.subr.mxu0 0.0
    %5744 = vmatpush2.msra.mxu0 0.0
    %5745 = vmatprep.subr.mxu0 0.0
    %5746 = vmatpush2.msra.mxu0 0.0
    %5747 = vmatprep.subr.mxu0 0.0
    %5748 = vmatpush2.msra.mxu0 0.0
    %5749 = vmatprep.subr.mxu0 0.0
    %5750 = vmatpush2.msra.mxu0 0.0
    %5751 = vmatprep.mubr.f32.mxu0 0.0
    %5752 = vmatmul.mubr.f32.gmra.mxu0 %v5682
    %v5753 = vpop.f32.mrf.mxu0
    %v5754 = vadd.f32 0.0, %v5753
    %v5755 = vpop.f32.mrf.mxu0
    %5756 = vmatprep.mubr.f32.mxu0 0.0
    %5757 = vmatmul.mubr.f32.gmra.mxu0 %v5685
    %v5758 = vpop.f32.mrf.mxu0
    %v5759 = vadd.f32 0.0, %v5758
    %v5760 = vpop.f32.mrf.mxu0
    %5761 = vdwg.mxu0
    %5762 = vrot.lane.b32.xlu0 %v5554, 120
    %v5763 = vpop.permute.xlu0 %5762
    %5764 = vrot.lane.b32.xlu0 %v5559, 120
    %v5765 = vpop.permute.xlu0 %5764
    %5766 = vrot.lane.b32.xlu0 %v5554, 88
    %v5767 = vpop.permute.xlu0 %5766
    %5768 = vrot.lane.b32.xlu0 %v5559, 88
    %v5769 = vpop.permute.xlu0 %5768
    %v5770 = vsel %vm467, %v5763, 0
    %v5772 = vsel %vm467, %v5765, 0
    %v5774 = vsel %vm467, %v5767, 0
    %v5776 = vsel %vm467, %v5769, 0
    %5778 = vmatprep.subr.mxu0 0.0
    %5779 = vmatpush1.xpose.msra.mxu0 0.0
    %5780 = vmatprep.subr.mxu0 0.0
    %5781 = vmatpush1.xpose.msra.mxu0 0.0
    %5782 = vmatprep.subr.mxu0 0.0
    %5783 = vmatpush1.xpose.msra.mxu0 0.0
    %5784 = vmatprep.subr.mxu0 0.0
    %5785 = vmatpush1.xpose.msra.mxu0 0.0
    %5786 = vmatprep.subr.mxu0 0.0
    %5787 = vmatpush1.xpose.msra.mxu0 0.0
    %5788 = vmatprep.subr.mxu0 0.0
    %5789 = vmatpush1.xpose.msra.mxu0 0.0
    %5790 = vmatprep.subr.mxu0 0.0
    %5791 = vmatpush1.xpose.msra.mxu0 0.0
    %5792 = vmatprep.subr.mxu0 0.0
    %5793 = vmatpush1.xpose.msra.mxu0 0.0
    %5794 = vmatprep.subr.mxu0 0.0
    %5795 = vmatpush1.xpose.msra.mxu0 0.0
    %5796 = vmatprep.subr.mxu0 0.0
    %5797 = vmatpush1.xpose.msra.mxu0 0.0
    %5798 = vmatprep.subr.mxu0 0.0
    %5799 = vmatpush1.xpose.msra.mxu0 0.0
    %5800 = vmatprep.subr.mxu0 0.0
    %5801 = vmatpush1.xpose.msra.mxu0 0.0
    %5802 = vmatprep.subr.mxu0 0.0
    %5803 = vmatpush1.xpose.msra.mxu0 0.0
    %5804 = vmatprep.subr.mxu0 0.0
    %5805 = vmatpush1.xpose.msra.mxu0 0.0
    %5806 = vmatprep.subr.mxu0 0.0
    %5807 = vmatpush1.xpose.msra.mxu0 %v5776
    %5808 = vmatprep.subr.mxu0 0.0
    %5809 = vmatpush1.xpose.msra.mxu0 %v5774
    %5810 = vmatprep.subr.mxu0 0.0
    %5811 = vmatpush2.xpose.msra.mxu0 0.0
    %5812 = vmatprep.subr.mxu0 0.0
    %5813 = vmatpush2.xpose.msra.mxu0 0.0
    %5814 = vmatprep.subr.mxu0 0.0
    %5815 = vmatpush2.xpose.msra.mxu0 0.0
    %5816 = vmatprep.subr.mxu0 0.0
    %5817 = vmatpush2.xpose.msra.mxu0 0.0
    %5818 = vmatprep.subr.mxu0 0.0
    %5819 = vmatpush2.xpose.msra.mxu0 0.0
    %5820 = vmatprep.subr.mxu0 0.0
    %5821 = vmatpush2.xpose.msra.mxu0 0.0
    %5822 = vmatprep.subr.mxu0 0.0
    %5823 = vmatpush2.xpose.msra.mxu0 0.0
    %5824 = vmatprep.subr.mxu0 0.0
    %5825 = vmatpush2.xpose.msra.mxu0 0.0
    %5826 = vmatprep.subr.mxu0 0.0
    %5827 = vmatpush2.xpose.msra.mxu0 0.0
    %5828 = vmatprep.subr.mxu0 0.0
    %5829 = vmatpush2.xpose.msra.mxu0 0.0
    %5830 = vmatprep.subr.mxu0 0.0
    %5831 = vmatpush2.xpose.msra.mxu0 0.0
    %5832 = vmatprep.subr.mxu0 0.0
    %5833 = vmatpush2.xpose.msra.mxu0 0.0
    %5834 = vmatprep.subr.mxu0 0.0
    %5835 = vmatpush2.xpose.msra.mxu0 0.0
    %5836 = vmatprep.subr.mxu0 0.0
    %5837 = vmatpush2.xpose.msra.mxu0 0.0
    %5838 = vmatprep.subr.mxu0 0.0
    %5839 = vmatpush2.xpose.msra.mxu0 0.0
    %5840 = vmatprep.subr.mxu0 0.0
    %5841 = vmatpush2.xpose.msra.mxu0 0.0
    %5842 = vmatprep.mubr.f32.mxu0 0.0
    %5843 = vmatmul.mubr.f32.gmra.mxu0 %v5770
    %v5844 = vpop.f32.mrf.mxu0
    %v5845 = vadd.f32 0.0, %v5844
    %v5846 = vpop.f32.mrf.mxu0
    %5847 = vmatprep.mubr.f32.mxu0 0.0
    %5848 = vmatmul.mubr.f32.gmra.mxu0 %v5772
    %v5849 = vpop.f32.mrf.mxu0
    %v5850 = vadd.f32 0.0, %v5849
    %v5851 = vpop.f32.mrf.mxu0
    %5852 = vdwg.mxu0
    %v5853 = vsel %vm3175, %v5845, %v149
    %v5854 = vsel %vm3176, %v5850, %v150
    %v5855 = vsel %vm555, %v5853, -inf
    %5856 = vmax.xlane.f32.xlu0 %v5855
    %v5857 = vpop.xlane.xlu0 %5856
    %v5858 = vsel %vm555, %v5854, -inf
    %5859 = vmax.xlane.f32.xlu0 %v5858
    %v5860 = vpop.xlane.xlu0 %5859
    %v5861 = vsub.f32 %v5853, %v5857
    %v5862 = vsub.f32 %v5854, %v5860
    %v5863 = vmul.f32 %v5861, 1.442695
    %v5864 = vpow.pop %v5863
    %v5865 = vmul.f32 %v5862, 1.442695
    %v5866 = vpow.pop %v5865
    %v5867 = vsel %vm555, %v5864, 0.0
    %5868 = vadd.xlane.f32.xlu0 %v5867
    %v5869 = vpop.xlane.xlu0 %5868
    %v5870 = vsel %vm555, %v5866, 0.0
    %5871 = vadd.xlane.f32.xlu0 %v5870
    %v5872 = vpop.xlane.xlu0 %5871
    %v5873 = vrcp.pop %v5869
    %v5874 = vmul.f32 %v5864, %v5873
    %v5875 = vrcp.pop %v5872
    %v5876 = vmul.f32 %v5866, %v5875
    %5877 = vrot.lane.b32.xlu0 %v5554, 56
    %v5878 = vpop.permute.xlu0 %5877
    %5879 = vrot.lane.b32.xlu0 %v5559, 56
    %v5880 = vpop.permute.xlu0 %5879
    %v5884 = vsel %vm555, %v5874, 0
    %v5887 = vsel %vm555, %v5876, 0
    %5889 = vmatprep.subr.mxu0 0.0
    %5890 = vmatpush1.msra.mxu0 0.0
    %5891 = vmatprep.subr.mxu0 0.0
    %5892 = vmatpush1.msra.mxu0 0.0
    %5893 = vmatprep.subr.mxu0 0.0
    %5894 = vmatpush1.msra.mxu0 0.0
    %5895 = vmatprep.subr.mxu0 0.0
    %5896 = vmatpush1.msra.mxu0 0.0
    %5897 = vmatprep.subr.mxu0 0.0
    %5898 = vmatpush1.msra.mxu0 0.0
    %5899 = vmatprep.subr.mxu0 0.0
    %5900 = vmatpush1.msra.mxu0 0.0
    %5901 = vmatprep.subr.mxu0 0.0
    %5902 = vmatpush1.msra.mxu0 0.0
    %5903 = vmatprep.subr.mxu0 0.0
    %5904 = vmatpush1.msra.mxu0 0.0
    %5905 = vmatprep.subr.mxu0 0.0
    %5906 = vmatpush1.msra.mxu0 0.0
    %5907 = vmatprep.subr.mxu0 0.0
    %5908 = vmatpush1.msra.mxu0 0.0
    %5909 = vmatprep.subr.mxu0 0.0
    %5910 = vmatpush1.msra.mxu0 0.0
    %5911 = vmatprep.subr.mxu0 0.0
    %5912 = vmatpush1.msra.mxu0 0.0
    %5913 = vmatprep.subr.mxu0 0.0
    %5914 = vmatpush1.msra.mxu0 0.0
    %5915 = vmatprep.subr.mxu0 0.0
    %5916 = vmatpush1.msra.mxu0 0.0
    %5917 = vmatprep.subr.mxu0 0.0
    %5918 = vmatpush1.msra.mxu0 %v5880
    %5919 = vmatprep.subr.mxu0 0.0
    %5920 = vmatpush1.msra.mxu0 %v5878
    %5921 = vmatprep.subr.mxu0 0.0
    %5922 = vmatpush2.msra.mxu0 0.0
    %5923 = vmatprep.subr.mxu0 0.0
    %5924 = vmatpush2.msra.mxu0 0.0
    %5925 = vmatprep.subr.mxu0 0.0
    %5926 = vmatpush2.msra.mxu0 0.0
    %5927 = vmatprep.subr.mxu0 0.0
    %5928 = vmatpush2.msra.mxu0 0.0
    %5929 = vmatprep.subr.mxu0 0.0
    %5930 = vmatpush2.msra.mxu0 0.0
    %5931 = vmatprep.subr.mxu0 0.0
    %5932 = vmatpush2.msra.mxu0 0.0
    %5933 = vmatprep.subr.mxu0 0.0
    %5934 = vmatpush2.msra.mxu0 0.0
    %5935 = vmatprep.subr.mxu0 0.0
    %5936 = vmatpush2.msra.mxu0 0.0
    %5937 = vmatprep.subr.mxu0 0.0
    %5938 = vmatpush2.msra.mxu0 0.0
    %5939 = vmatprep.subr.mxu0 0.0
    %5940 = vmatpush2.msra.mxu0 0.0
    %5941 = vmatprep.subr.mxu0 0.0
    %5942 = vmatpush2.msra.mxu0 0.0
    %5943 = vmatprep.subr.mxu0 0.0
    %5944 = vmatpush2.msra.mxu0 0.0
    %5945 = vmatprep.subr.mxu0 0.0
    %5946 = vmatpush2.msra.mxu0 0.0
    %5947 = vmatprep.subr.mxu0 0.0
    %5948 = vmatpush2.msra.mxu0 0.0
    %5949 = vmatprep.subr.mxu0 0.0
    %5950 = vmatpush2.msra.mxu0 0.0
    %5951 = vmatprep.subr.mxu0 0.0
    %5952 = vmatpush2.msra.mxu0 0.0
    %5953 = vmatprep.mubr.f32.mxu0 0.0
    %5954 = vmatmul.mubr.f32.gmra.mxu0 %v5884
    %v5955 = vpop.f32.mrf.mxu0
    %v5956 = vadd.f32 0.0, %v5955
    %v5957 = vpop.f32.mrf.mxu0
    %5958 = vmatprep.mubr.f32.mxu0 0.0
    %5959 = vmatmul.mubr.f32.gmra.mxu0 %v5887
    %v5960 = vpop.f32.mrf.mxu0
    %v5961 = vadd.f32 0.0, %v5960
    %v5962 = vpop.f32.mrf.mxu0
    %5963 = vdwg.mxu0
    %5964 = vrot.lane.b32.xlu0 %v5554, 112
    %v5965 = vpop.permute.xlu0 %5964
    %5966 = vrot.lane.b32.xlu0 %v5559, 112
    %v5967 = vpop.permute.xlu0 %5966
    %5968 = vrot.lane.b32.xlu0 %v5554, 80
    %v5969 = vpop.permute.xlu0 %5968
    %5970 = vrot.lane.b32.xlu0 %v5559, 80
    %v5971 = vpop.permute.xlu0 %5970
    %v5972 = vsel %vm467, %v5965, 0
    %v5974 = vsel %vm467, %v5967, 0
    %v5976 = vsel %vm467, %v5969, 0
    %v5978 = vsel %vm467, %v5971, 0
    %5980 = vmatprep.subr.mxu0 0.0
    %5981 = vmatpush1.xpose.msra.mxu0 0.0
    %5982 = vmatprep.subr.mxu0 0.0
    %5983 = vmatpush1.xpose.msra.mxu0 0.0
    %5984 = vmatprep.subr.mxu0 0.0
    %5985 = vmatpush1.xpose.msra.mxu0 0.0
    %5986 = vmatprep.subr.mxu0 0.0
    %5987 = vmatpush1.xpose.msra.mxu0 0.0
    %5988 = vmatprep.subr.mxu0 0.0
    %5989 = vmatpush1.xpose.msra.mxu0 0.0
    %5990 = vmatprep.subr.mxu0 0.0
    %5991 = vmatpush1.xpose.msra.mxu0 0.0
    %5992 = vmatprep.subr.mxu0 0.0
    %5993 = vmatpush1.xpose.msra.mxu0 0.0
    %5994 = vmatprep.subr.mxu0 0.0
    %5995 = vmatpush1.xpose.msra.mxu0 0.0
    %5996 = vmatprep.subr.mxu0 0.0
    %5997 = vmatpush1.xpose.msra.mxu0 0.0
    %5998 = vmatprep.subr.mxu0 0.0
    %5999 = vmatpush1.xpose.msra.mxu0 0.0
    %6000 = vmatprep.subr.mxu0 0.0
    %6001 = vmatpush1.xpose.msra.mxu0 0.0
    %6002 = vmatprep.subr.mxu0 0.0
    %6003 = vmatpush1.xpose.msra.mxu0 0.0
    %6004 = vmatprep.subr.mxu0 0.0
    %6005 = vmatpush1.xpose.msra.mxu0 0.0
    %6006 = vmatprep.subr.mxu0 0.0
    %6007 = vmatpush1.xpose.msra.mxu0 0.0
    %6008 = vmatprep.subr.mxu0 0.0
    %6009 = vmatpush1.xpose.msra.mxu0 %v5978
    %6010 = vmatprep.subr.mxu0 0.0
    %6011 = vmatpush1.xpose.msra.mxu0 %v5976
    %6012 = vmatprep.subr.mxu0 0.0
    %6013 = vmatpush2.xpose.msra.mxu0 0.0
    %6014 = vmatprep.subr.mxu0 0.0
    %6015 = vmatpush2.xpose.msra.mxu0 0.0
    %6016 = vmatprep.subr.mxu0 0.0
    %6017 = vmatpush2.xpose.msra.mxu0 0.0
    %6018 = vmatprep.subr.mxu0 0.0
    %6019 = vmatpush2.xpose.msra.mxu0 0.0
    %6020 = vmatprep.subr.mxu0 0.0
    %6021 = vmatpush2.xpose.msra.mxu0 0.0
    %6022 = vmatprep.subr.mxu0 0.0
    %6023 = vmatpush2.xpose.msra.mxu0 0.0
    %6024 = vmatprep.subr.mxu0 0.0
    %6025 = vmatpush2.xpose.msra.mxu0 0.0
    %6026 = vmatprep.subr.mxu0 0.0
    %6027 = vmatpush2.xpose.msra.mxu0 0.0
    %6028 = vmatprep.subr.mxu0 0.0
    %6029 = vmatpush2.xpose.msra.mxu0 0.0
    %6030 = vmatprep.subr.mxu0 0.0
    %6031 = vmatpush2.xpose.msra.mxu0 0.0
    %6032 = vmatprep.subr.mxu0 0.0
    %6033 = vmatpush2.xpose.msra.mxu0 0.0
    %6034 = vmatprep.subr.mxu0 0.0
    %6035 = vmatpush2.xpose.msra.mxu0 0.0
    %6036 = vmatprep.subr.mxu0 0.0
    %6037 = vmatpush2.xpose.msra.mxu0 0.0
    %6038 = vmatprep.subr.mxu0 0.0
    %6039 = vmatpush2.xpose.msra.mxu0 0.0
    %6040 = vmatprep.subr.mxu0 0.0
    %6041 = vmatpush2.xpose.msra.mxu0 0.0
    %6042 = vmatprep.subr.mxu0 0.0
    %6043 = vmatpush2.xpose.msra.mxu0 0.0
    %6044 = vmatprep.mubr.f32.mxu0 0.0
    %6045 = vmatmul.mubr.f32.gmra.mxu0 %v5972
    %v6046 = vpop.f32.mrf.mxu0
    %v6047 = vadd.f32 0.0, %v6046
    %v6048 = vpop.f32.mrf.mxu0
    %6049 = vmatprep.mubr.f32.mxu0 0.0
    %6050 = vmatmul.mubr.f32.gmra.mxu0 %v5974
    %v6051 = vpop.f32.mrf.mxu0
    %v6052 = vadd.f32 0.0, %v6051
    %v6053 = vpop.f32.mrf.mxu0
    %6054 = vdwg.mxu0
    %v6055 = vsel %vm3175, %v6047, %v149
    %v6056 = vsel %vm3176, %v6052, %v150
    %v6057 = vsel %vm555, %v6055, -inf
    %6058 = vmax.xlane.f32.xlu0 %v6057
    %v6059 = vpop.xlane.xlu0 %6058
    %v6060 = vsel %vm555, %v6056, -inf
    %6061 = vmax.xlane.f32.xlu0 %v6060
    %v6062 = vpop.xlane.xlu0 %6061
    %v6063 = vsub.f32 %v6055, %v6059
    %v6064 = vsub.f32 %v6056, %v6062
    %v6065 = vmul.f32 %v6063, 1.442695
    %v6066 = vpow.pop %v6065
    %v6067 = vmul.f32 %v6064, 1.442695
    %v6068 = vpow.pop %v6067
    %v6069 = vsel %vm555, %v6066, 0.0
    %6070 = vadd.xlane.f32.xlu0 %v6069
    %v6071 = vpop.xlane.xlu0 %6070
    %v6072 = vsel %vm555, %v6068, 0.0
    %6073 = vadd.xlane.f32.xlu0 %v6072
    %v6074 = vpop.xlane.xlu0 %6073
    %v6075 = vrcp.pop %v6071
    %v6076 = vmul.f32 %v6066, %v6075
    %v6077 = vrcp.pop %v6074
    %v6078 = vmul.f32 %v6068, %v6077
    %6079 = vrot.lane.b32.xlu0 %v5554, 48
    %v6080 = vpop.permute.xlu0 %6079
    %6081 = vrot.lane.b32.xlu0 %v5559, 48
    %v6082 = vpop.permute.xlu0 %6081
    %v6086 = vsel %vm555, %v6076, 0
    %v6089 = vsel %vm555, %v6078, 0
    %6091 = vmatprep.subr.mxu0 0.0
    %6092 = vmatpush1.msra.mxu0 0.0
    %6093 = vmatprep.subr.mxu0 0.0
    %6094 = vmatpush1.msra.mxu0 0.0
    %6095 = vmatprep.subr.mxu0 0.0
    %6096 = vmatpush1.msra.mxu0 0.0
    %6097 = vmatprep.subr.mxu0 0.0
    %6098 = vmatpush1.msra.mxu0 0.0
    %6099 = vmatprep.subr.mxu0 0.0
    %6100 = vmatpush1.msra.mxu0 0.0
    %6101 = vmatprep.subr.mxu0 0.0
    %6102 = vmatpush1.msra.mxu0 0.0
    %6103 = vmatprep.subr.mxu0 0.0
    %6104 = vmatpush1.msra.mxu0 0.0
    %6105 = vmatprep.subr.mxu0 0.0
    %6106 = vmatpush1.msra.mxu0 0.0
    %6107 = vmatprep.subr.mxu0 0.0
    %6108 = vmatpush1.msra.mxu0 0.0
    %6109 = vmatprep.subr.mxu0 0.0
    %6110 = vmatpush1.msra.mxu0 0.0
    %6111 = vmatprep.subr.mxu0 0.0
    %6112 = vmatpush1.msra.mxu0 0.0
    %6113 = vmatprep.subr.mxu0 0.0
    %6114 = vmatpush1.msra.mxu0 0.0
    %6115 = vmatprep.subr.mxu0 0.0
    %6116 = vmatpush1.msra.mxu0 0.0
    %6117 = vmatprep.subr.mxu0 0.0
    %6118 = vmatpush1.msra.mxu0 0.0
    %6119 = vmatprep.subr.mxu0 0.0
    %6120 = vmatpush1.msra.mxu0 %v6082
    %6121 = vmatprep.subr.mxu0 0.0
    %6122 = vmatpush1.msra.mxu0 %v6080
    %6123 = vmatprep.subr.mxu0 0.0
    %6124 = vmatpush2.msra.mxu0 0.0
    %6125 = vmatprep.subr.mxu0 0.0
    %6126 = vmatpush2.msra.mxu0 0.0
    %6127 = vmatprep.subr.mxu0 0.0
    %6128 = vmatpush2.msra.mxu0 0.0
    %6129 = vmatprep.subr.mxu0 0.0
    %6130 = vmatpush2.msra.mxu0 0.0
    %6131 = vmatprep.subr.mxu0 0.0
    %6132 = vmatpush2.msra.mxu0 0.0
    %6133 = vmatprep.subr.mxu0 0.0
    %6134 = vmatpush2.msra.mxu0 0.0
    %6135 = vmatprep.subr.mxu0 0.0
    %6136 = vmatpush2.msra.mxu0 0.0
    %6137 = vmatprep.subr.mxu0 0.0
    %6138 = vmatpush2.msra.mxu0 0.0
    %6139 = vmatprep.subr.mxu0 0.0
    %6140 = vmatpush2.msra.mxu0 0.0
    %6141 = vmatprep.subr.mxu0 0.0
    %6142 = vmatpush2.msra.mxu0 0.0
    %6143 = vmatprep.subr.mxu0 0.0
    %6144 = vmatpush2.msra.mxu0 0.0
    %6145 = vmatprep.subr.mxu0 0.0
    %6146 = vmatpush2.msra.mxu0 0.0
    %6147 = vmatprep.subr.mxu0 0.0
    %6148 = vmatpush2.msra.mxu0 0.0
    %6149 = vmatprep.subr.mxu0 0.0
    %6150 = vmatpush2.msra.mxu0 0.0
    %6151 = vmatprep.subr.mxu0 0.0
    %6152 = vmatpush2.msra.mxu0 0.0
    %6153 = vmatprep.subr.mxu0 0.0
    %6154 = vmatpush2.msra.mxu0 0.0
    %6155 = vmatprep.mubr.f32.mxu0 0.0
    %6156 = vmatmul.mubr.f32.gmra.mxu0 %v6086
    %v6157 = vpop.f32.mrf.mxu0
    %v6158 = vadd.f32 0.0, %v6157
    %v6159 = vpop.f32.mrf.mxu0
    %6160 = vmatprep.mubr.f32.mxu0 0.0
    %6161 = vmatmul.mubr.f32.gmra.mxu0 %v6089
    %v6162 = vpop.f32.mrf.mxu0
    %v6163 = vadd.f32 0.0, %v6162
    %v6164 = vpop.f32.mrf.mxu0
    %6165 = vdwg.mxu0
    %6166 = vrot.lane.b32.xlu0 %v5554, 104
    %v6167 = vpop.permute.xlu0 %6166
    %6168 = vrot.lane.b32.xlu0 %v5559, 104
    %v6169 = vpop.permute.xlu0 %6168
    %6170 = vrot.lane.b32.xlu0 %v5554, 72
    %v6171 = vpop.permute.xlu0 %6170
    %6172 = vrot.lane.b32.xlu0 %v5559, 72
    %v6173 = vpop.permute.xlu0 %6172
    %v6174 = vsel %vm467, %v6167, 0
    %v6176 = vsel %vm467, %v6169, 0
    %v6178 = vsel %vm467, %v6171, 0
    %v6180 = vsel %vm467, %v6173, 0
    %6182 = vmatprep.subr.mxu0 0.0
    %6183 = vmatpush1.xpose.msra.mxu0 0.0
    %6184 = vmatprep.subr.mxu0 0.0
    %6185 = vmatpush1.xpose.msra.mxu0 0.0
    %6186 = vmatprep.subr.mxu0 0.0
    %6187 = vmatpush1.xpose.msra.mxu0 0.0
    %6188 = vmatprep.subr.mxu0 0.0
    %6189 = vmatpush1.xpose.msra.mxu0 0.0
    %6190 = vmatprep.subr.mxu0 0.0
    %6191 = vmatpush1.xpose.msra.mxu0 0.0
    %6192 = vmatprep.subr.mxu0 0.0
    %6193 = vmatpush1.xpose.msra.mxu0 0.0
    %6194 = vmatprep.subr.mxu0 0.0
    %6195 = vmatpush1.xpose.msra.mxu0 0.0
    %6196 = vmatprep.subr.mxu0 0.0
    %6197 = vmatpush1.xpose.msra.mxu0 0.0
    %6198 = vmatprep.subr.mxu0 0.0
    %6199 = vmatpush1.xpose.msra.mxu0 0.0
    %6200 = vmatprep.subr.mxu0 0.0
    %6201 = vmatpush1.xpose.msra.mxu0 0.0
    %6202 = vmatprep.subr.mxu0 0.0
    %6203 = vmatpush1.xpose.msra.mxu0 0.0
    %6204 = vmatprep.subr.mxu0 0.0
    %6205 = vmatpush1.xpose.msra.mxu0 0.0
    %6206 = vmatprep.subr.mxu0 0.0
    %6207 = vmatpush1.xpose.msra.mxu0 0.0
    %6208 = vmatprep.subr.mxu0 0.0
    %6209 = vmatpush1.xpose.msra.mxu0 0.0
    %6210 = vmatprep.subr.mxu0 0.0
    %6211 = vmatpush1.xpose.msra.mxu0 %v6180
    %6212 = vmatprep.subr.mxu0 0.0
    %6213 = vmatpush1.xpose.msra.mxu0 %v6178
    %6214 = vmatprep.subr.mxu0 0.0
    %6215 = vmatpush2.xpose.msra.mxu0 0.0
    %6216 = vmatprep.subr.mxu0 0.0
    %6217 = vmatpush2.xpose.msra.mxu0 0.0
    %6218 = vmatprep.subr.mxu0 0.0
    %6219 = vmatpush2.xpose.msra.mxu0 0.0
    %6220 = vmatprep.subr.mxu0 0.0
    %6221 = vmatpush2.xpose.msra.mxu0 0.0
    %6222 = vmatprep.subr.mxu0 0.0
    %6223 = vmatpush2.xpose.msra.mxu0 0.0
    %6224 = vmatprep.subr.mxu0 0.0
    %6225 = vmatpush2.xpose.msra.mxu0 0.0
    %6226 = vmatprep.subr.mxu0 0.0
    %6227 = vmatpush2.xpose.msra.mxu0 0.0
    %6228 = vmatprep.subr.mxu0 0.0
    %6229 = vmatpush2.xpose.msra.mxu0 0.0
    %6230 = vmatprep.subr.mxu0 0.0
    %6231 = vmatpush2.xpose.msra.mxu0 0.0
    %6232 = vmatprep.subr.mxu0 0.0
    %6233 = vmatpush2.xpose.msra.mxu0 0.0
    %6234 = vmatprep.subr.mxu0 0.0
    %6235 = vmatpush2.xpose.msra.mxu0 0.0
    %6236 = vmatprep.subr.mxu0 0.0
    %6237 = vmatpush2.xpose.msra.mxu0 0.0
    %6238 = vmatprep.subr.mxu0 0.0
    %6239 = vmatpush2.xpose.msra.mxu0 0.0
    %6240 = vmatprep.subr.mxu0 0.0
    %6241 = vmatpush2.xpose.msra.mxu0 0.0
    %6242 = vmatprep.subr.mxu0 0.0
    %6243 = vmatpush2.xpose.msra.mxu0 0.0
    %6244 = vmatprep.subr.mxu0 0.0
    %6245 = vmatpush2.xpose.msra.mxu0 0.0
    %6246 = vmatprep.mubr.f32.mxu0 0.0
    %6247 = vmatmul.mubr.f32.gmra.mxu0 %v6174
    %v6248 = vpop.f32.mrf.mxu0
    %v6249 = vadd.f32 0.0, %v6248
    %v6250 = vpop.f32.mrf.mxu0
    %6251 = vmatprep.mubr.f32.mxu0 0.0
    %6252 = vmatmul.mubr.f32.gmra.mxu0 %v6176
    %v6253 = vpop.f32.mrf.mxu0
    %v6254 = vadd.f32 0.0, %v6253
    %v6255 = vpop.f32.mrf.mxu0
    %6256 = vdwg.mxu0
    %v6257 = vsel %vm3175, %v6249, %v149
    %v6258 = vsel %vm3176, %v6254, %v150
    %v6259 = vsel %vm555, %v6257, -inf
    %6260 = vmax.xlane.f32.xlu0 %v6259
    %v6261 = vpop.xlane.xlu0 %6260
    %v6262 = vsel %vm555, %v6258, -inf
    %6263 = vmax.xlane.f32.xlu0 %v6262
    %v6264 = vpop.xlane.xlu0 %6263
    %v6265 = vsub.f32 %v6257, %v6261
    %v6266 = vsub.f32 %v6258, %v6264
    %v6267 = vmul.f32 %v6265, 1.442695
    %v6268 = vpow.pop %v6267
    %v6269 = vmul.f32 %v6266, 1.442695
    %v6270 = vpow.pop %v6269
    %v6271 = vsel %vm555, %v6268, 0.0
    %6272 = vadd.xlane.f32.xlu0 %v6271
    %v6273 = vpop.xlane.xlu0 %6272
    %v6274 = vsel %vm555, %v6270, 0.0
    %6275 = vadd.xlane.f32.xlu0 %v6274
    %v6276 = vpop.xlane.xlu0 %6275
    %v6277 = vrcp.pop %v6273
    %v6278 = vmul.f32 %v6268, %v6277
    %v6279 = vrcp.pop %v6276
    %v6280 = vmul.f32 %v6270, %v6279
    %6281 = vrot.lane.b32.xlu0 %v5554, 40
    %v6282 = vpop.permute.xlu0 %6281
    %6283 = vrot.lane.b32.xlu0 %v5559, 40
    %v6284 = vpop.permute.xlu0 %6283
    %v6288 = vsel %vm555, %v6278, 0
    %v6291 = vsel %vm555, %v6280, 0
    %6293 = vmatprep.subr.mxu0 0.0
    %6294 = vmatpush1.msra.mxu0 0.0
    %6295 = vmatprep.subr.mxu0 0.0
    %6296 = vmatpush1.msra.mxu0 0.0
    %6297 = vmatprep.subr.mxu0 0.0
    %6298 = vmatpush1.msra.mxu0 0.0
    %6299 = vmatprep.subr.mxu0 0.0
    %6300 = vmatpush1.msra.mxu0 0.0
    %6301 = vmatprep.subr.mxu0 0.0
    %6302 = vmatpush1.msra.mxu0 0.0
    %6303 = vmatprep.subr.mxu0 0.0
    %6304 = vmatpush1.msra.mxu0 0.0
    %6305 = vmatprep.subr.mxu0 0.0
    %6306 = vmatpush1.msra.mxu0 0.0
    %6307 = vmatprep.subr.mxu0 0.0
    %6308 = vmatpush1.msra.mxu0 0.0
    %6309 = vmatprep.subr.mxu0 0.0
    %6310 = vmatpush1.msra.mxu0 0.0
    %6311 = vmatprep.subr.mxu0 0.0
    %6312 = vmatpush1.msra.mxu0 0.0
    %6313 = vmatprep.subr.mxu0 0.0
    %6314 = vmatpush1.msra.mxu0 0.0
    %6315 = vmatprep.subr.mxu0 0.0
    %6316 = vmatpush1.msra.mxu0 0.0
    %6317 = vmatprep.subr.mxu0 0.0
    %6318 = vmatpush1.msra.mxu0 0.0
    %6319 = vmatprep.subr.mxu0 0.0
    %6320 = vmatpush1.msra.mxu0 0.0
    %6321 = vmatprep.subr.mxu0 0.0
    %6322 = vmatpush1.msra.mxu0 %v6284
    %6323 = vmatprep.subr.mxu0 0.0
    %6324 = vmatpush1.msra.mxu0 %v6282
    %6325 = vmatprep.subr.mxu0 0.0
    %6326 = vmatpush2.msra.mxu0 0.0
    %6327 = vmatprep.subr.mxu0 0.0
    %6328 = vmatpush2.msra.mxu0 0.0
    %6329 = vmatprep.subr.mxu0 0.0
    %6330 = vmatpush2.msra.mxu0 0.0
    %6331 = vmatprep.subr.mxu0 0.0
    %6332 = vmatpush2.msra.mxu0 0.0
    %6333 = vmatprep.subr.mxu0 0.0
    %6334 = vmatpush2.msra.mxu0 0.0
    %6335 = vmatprep.subr.mxu0 0.0
    %6336 = vmatpush2.msra.mxu0 0.0
    %6337 = vmatprep.subr.mxu0 0.0
    %6338 = vmatpush2.msra.mxu0 0.0
    %6339 = vmatprep.subr.mxu0 0.0
    %6340 = vmatpush2.msra.mxu0 0.0
    %6341 = vmatprep.subr.mxu0 0.0
    %6342 = vmatpush2.msra.mxu0 0.0
    %6343 = vmatprep.subr.mxu0 0.0
    %6344 = vmatpush2.msra.mxu0 0.0
    %6345 = vmatprep.subr.mxu0 0.0
    %6346 = vmatpush2.msra.mxu0 0.0
    %6347 = vmatprep.subr.mxu0 0.0
    %6348 = vmatpush2.msra.mxu0 0.0
    %6349 = vmatprep.subr.mxu0 0.0
    %6350 = vmatpush2.msra.mxu0 0.0
    %6351 = vmatprep.subr.mxu0 0.0
    %6352 = vmatpush2.msra.mxu0 0.0
    %6353 = vmatprep.subr.mxu0 0.0
    %6354 = vmatpush2.msra.mxu0 0.0
    %6355 = vmatprep.subr.mxu0 0.0
    %6356 = vmatpush2.msra.mxu0 0.0
    %6357 = vmatprep.mubr.f32.mxu0 0.0
    %6358 = vmatmul.mubr.f32.gmra.mxu0 %v6288
    %v6359 = vpop.f32.mrf.mxu0
    %v6360 = vadd.f32 0.0, %v6359
    %v6361 = vpop.f32.mrf.mxu0
    %6362 = vmatprep.mubr.f32.mxu0 0.0
    %6363 = vmatmul.mubr.f32.gmra.mxu0 %v6291
    %v6364 = vpop.f32.mrf.mxu0
    %v6365 = vadd.f32 0.0, %v6364
    %v6366 = vpop.f32.mrf.mxu0
    %6367 = vdwg.mxu0
    %6370 = vrot.lane.b32.xlu0 %v5956, 8
    %v6371 = vpop.permute.xlu0 %6370
    %6372 = vrot.lane.b32.xlu0 %v5961, 8
    %v6373 = vpop.permute.xlu0 %6372
    %6378 = vrot.lane.b32.xlu0 %v6158, 16
    %v6379 = vpop.permute.xlu0 %6378
    %6380 = vrot.lane.b32.xlu0 %v6163, 16
    %v6381 = vpop.permute.xlu0 %6380
    %6386 = vrot.lane.b32.xlu0 %v6360, 24
    %v6387 = vpop.permute.xlu0 %6386
    %6388 = vrot.lane.b32.xlu0 %v6365, 24
    %v6389 = vpop.permute.xlu0 %6388
    %v6392 = vsel %vm467, %v5754, %v6371
    %v6393 = vsel %vm467, %v5759, %v6373
    %v6394 = vsel %vm555, %v6392, %v6379
    %v6395 = vsel %vm555, %v6393, %v6381
    %v6396 = vsel %vm1299, %v6394, %v6387
    %v6397 = vsel %vm1299, %v6395, %v6389
    %v6399 = vlaneseq
    %v6400 = vshrl.u32 %v6399, 7
    %v6401 = vsub.s32 0, %v6400
    %v6402 = vrot.slane %v5474, %v6401
    %v6405 = vsel %vm379, %v6396, 0
    %v6408 = vsel %vm379, %v6397, 0
    %6410 = vmatprep.subr.mxu0 0.0
    %6411 = vmatpush1.msra.mxu0 0.0
    %6412 = vmatprep.subr.mxu0 0.0
    %6413 = vmatpush1.msra.mxu0 0.0
    %6414 = vmatprep.subr.mxu0 0.0
    %6415 = vmatpush1.msra.mxu0 0.0
    %6416 = vmatprep.subr.mxu0 0.0
    %6417 = vmatpush1.msra.mxu0 0.0
    %6418 = vmatprep.subr.mxu0 0.0
    %6419 = vmatpush1.msra.mxu0 0.0
    %6420 = vmatprep.subr.mxu0 0.0
    %6421 = vmatpush1.msra.mxu0 0.0
    %6422 = vmatprep.subr.mxu0 0.0
    %6423 = vmatpush1.msra.mxu0 0.0
    %6424 = vmatprep.subr.mxu0 0.0
    %6425 = vmatpush1.msra.mxu0 0.0
    %6426 = vmatprep.subr.mxu0 0.0
    %6427 = vmatpush1.msra.mxu0 0.0
    %6428 = vmatprep.subr.mxu0 0.0
    %6429 = vmatpush1.msra.mxu0 0.0
    %6430 = vmatprep.subr.mxu0 0.0
    %6431 = vmatpush1.msra.mxu0 0.0
    %6432 = vmatprep.subr.mxu0 0.0
    %6433 = vmatpush1.msra.mxu0 0.0
    %6434 = vmatprep.subr.mxu0 0.0
    %6435 = vmatpush1.msra.mxu0 %v5472
    %6436 = vmatprep.subr.mxu0 0.0
    %6437 = vmatpush1.msra.mxu0 %v5471
    %6438 = vmatprep.subr.mxu0 0.0
    %6439 = vmatpush1.msra.mxu0 %v5470
    %6440 = vmatprep.subr.mxu0 0.0
    %6441 = vmatpush1.msra.mxu0 %v5469
    %6442 = vmatprep.subr.mxu0 0.0
    %6443 = vmatpush2.msra.mxu0 0.0
    %6444 = vmatprep.subr.mxu0 0.0
    %6445 = vmatpush2.msra.mxu0 0.0
    %6446 = vmatprep.subr.mxu0 0.0
    %6447 = vmatpush2.msra.mxu0 0.0
    %6448 = vmatprep.subr.mxu0 0.0
    %6449 = vmatpush2.msra.mxu0 0.0
    %6450 = vmatprep.subr.mxu0 0.0
    %6451 = vmatpush2.msra.mxu0 0.0
    %6452 = vmatprep.subr.mxu0 0.0
    %6453 = vmatpush2.msra.mxu0 0.0
    %6454 = vmatprep.subr.mxu0 0.0
    %6455 = vmatpush2.msra.mxu0 0.0
    %6456 = vmatprep.subr.mxu0 0.0
    %6457 = vmatpush2.msra.mxu0 0.0
    %6458 = vmatprep.subr.mxu0 0.0
    %6459 = vmatpush2.msra.mxu0 0.0
    %6460 = vmatprep.subr.mxu0 0.0
    %6461 = vmatpush2.msra.mxu0 0.0
    %6462 = vmatprep.subr.mxu0 0.0
    %6463 = vmatpush2.msra.mxu0 0.0
    %6464 = vmatprep.subr.mxu0 0.0
    %6465 = vmatpush2.msra.mxu0 0.0
    %6466 = vmatprep.subr.mxu0 0.0
    %6467 = vmatpush2.msra.mxu0 0.0
    %6468 = vmatprep.subr.mxu0 0.0
    %6469 = vmatpush2.msra.mxu0 0.0
    %6470 = vmatprep.subr.mxu0 0.0
    %6471 = vmatpush2.msra.mxu0 0.0
    %6472 = vmatprep.subr.mxu0 0.0
    %6473 = vmatpush2.msra.mxu0 0.0
    %6474 = vmatprep.mubr.f32.mxu0 0.0
    %6475 = vmatmul.mubr.f32.gmra.mxu0 %v6405
    %v6476 = vpop.f32.mrf.mxu0
    %v6477 = vadd.f32 %v6402, %v6476
    %v6478 = vpop.f32.mrf.mxu0
    %6479 = vmatprep.mubr.f32.mxu0 0.0
    %6480 = vmatmul.mubr.f32.gmra.mxu0 %v6408
    %v6481 = vpop.f32.mrf.mxu0
    %v6482 = vadd.f32 %v6402, %v6481
    %v6483 = vpop.f32.mrf.mxu0
    %6484 = vdwg.mxu0
    %v6485 = vadd.f32 %v5459, %v6477
    %v6486 = vadd.f32 %v5460, %v6482
    %s6487 = scalar_lea.vmem %s53, 3
    %v6488 = vld [vmem:[%s6487] sm:$0x1]
    %s6489 = scalar_lea.vmem %s55, 3
    %v6490 = vld [vmem:[%s6489] sm:$0x1]
    %v6491 = vsel %vm379, %v6485, 0.0
    %6492 = vadd.xlane.f32.xlu0 %v6491
    %v6493 = vpop.xlane.xlu0 %6492
    %v6494 = vsel %vm379, %v6486, 0.0
    %6495 = vadd.xlane.f32.xlu0 %v6494
    %v6496 = vpop.xlane.xlu0 %6495
    %v6497 = vmul.f32 %v6493, %v1399
    %v6498 = vmul.f32 %v6496, %v1399
    %v6499 = vsub.f32 %v6485, %v6497
    %v6500 = vsub.f32 %v6486, %v6498
    %v6501 = vmul.f32 %v6499, %v6499
    %v6502 = vmul.f32 %v6500, %v6500
    %v6503 = vsel %vm379, %v6501, 0.0
    %6504 = vadd.xlane.f32.xlu0 %v6503
    %v6505 = vpop.xlane.xlu0 %6504
    %v6506 = vsel %vm379, %v6502, 0.0
    %6507 = vadd.xlane.f32.xlu0 %v6506
    %v6508 = vpop.xlane.xlu0 %6507
    %v6509 = vmul.f32 %v6505, %v1399
    %v6510 = vmul.f32 %v6508, %v1399
    %v6511 = vadd.f32 %v6509, 1e-05
    %v6512 = vadd.f32 %v6510, 1e-05
    %v6513 = vrsqrt.pop %v6511
    %v6514 = vrsqrt.pop %v6512
    %v6515 = vmul.f32 %v6499, %v6513
    %v6516 = vmul.f32 %v6500, %v6514
    %v6518 = vlaneseq
    %v6519 = vshrl.u32 %v6518, 7
    %v6520 = vsub.s32 0, %v6519
    %v6521 = vrot.slane %v6488, %v6520
    %v6523 = vmul.f32 %v6515, %v6521
    %v6524 = vmul.f32 %v6516, %v6521
    %v6526 = vlaneseq
    %v6527 = vshrl.u32 %v6526, 7
    %v6528 = vsub.s32 0, %v6527
    %v6529 = vrot.slane %v6490, %v6528
    %v6531 = vadd.f32 %v6523, %v6529
    %v6532 = vadd.f32 %v6524, %v6529
    %s6533 = scalar_lea.vmem %s45, 32
    %v6534 = vld [vmem:[%s6533] sm:$0xff]
    %v6535 = vld [vmem:[%s6533 + $0x8] sm:$0xff]
    %v6536 = vld [vmem:[%s6533 + $0x10] sm:$0xff]
    %v6537 = vld [vmem:[%s6533 + $0x18] sm:$0xff]
    %s6538 = scalar_lea.vmem %s47, 1
    %v6539 = vld [vmem:[%s6538] sm:$0x1]
    %s6540 = scalar_lea.vmem %s49, 32
    %v6541 = vld [vmem:[%s6540] sm:$0xff]
    %v6542 = vld [vmem:[%s6540 + $0x8] sm:$0xff]
    %v6543 = vld [vmem:[%s6540 + $0x10] sm:$0xff]
    %v6544 = vld [vmem:[%s6540 + $0x18] sm:$0xff]
    %s6545 = scalar_lea.vmem %s51, 1
    %v6546 = vld [vmem:[%s6545] sm:$0x1]
    %v6548 = vlaneseq
    %v6549 = vshrl.u32 %v6548, 7
    %v6550 = vsub.s32 0, %v6549
    %v6551 = vrot.slane %v6539, %v6550
    %v6554 = vsel %vm379, %v6531, 0
    %v6557 = vsel %vm379, %v6532, 0
    %6559 = vmatprep.subr.mxu0 0.0
    %6560 = vmatpush1.msra.mxu0 0.0
    %6561 = vmatprep.subr.mxu0 0.0
    %6562 = vmatpush1.msra.mxu0 0.0
    %6563 = vmatprep.subr.mxu0 0.0
    %6564 = vmatpush1.msra.mxu0 0.0
    %6565 = vmatprep.subr.mxu0 0.0
    %6566 = vmatpush1.msra.mxu0 0.0
    %6567 = vmatprep.subr.mxu0 0.0
    %6568 = vmatpush1.msra.mxu0 0.0
    %6569 = vmatprep.subr.mxu0 0.0
    %6570 = vmatpush1.msra.mxu0 0.0
    %6571 = vmatprep.subr.mxu0 0.0
    %6572 = vmatpush1.msra.mxu0 0.0
    %6573 = vmatprep.subr.mxu0 0.0
    %6574 = vmatpush1.msra.mxu0 0.0
    %6575 = vmatprep.subr.mxu0 0.0
    %6576 = vmatpush1.msra.mxu0 0.0
    %6577 = vmatprep.subr.mxu0 0.0
    %6578 = vmatpush1.msra.mxu0 0.0
    %6579 = vmatprep.subr.mxu0 0.0
    %6580 = vmatpush1.msra.mxu0 0.0
    %6581 = vmatprep.subr.mxu0 0.0
    %6582 = vmatpush1.msra.mxu0 0.0
    %6583 = vmatprep.subr.mxu0 0.0
    %6584 = vmatpush1.msra.mxu0 %v6537
    %6585 = vmatprep.subr.mxu0 0.0
    %6586 = vmatpush1.msra.mxu0 %v6536
    %6587 = vmatprep.subr.mxu0 0.0
    %6588 = vmatpush1.msra.mxu0 %v6535
    %6589 = vmatprep.subr.mxu0 0.0
    %6590 = vmatpush1.msra.mxu0 %v6534
    %6591 = vmatprep.subr.mxu0 0.0
    %6592 = vmatpush2.msra.mxu0 0.0
    %6593 = vmatprep.subr.mxu0 0.0
    %6594 = vmatpush2.msra.mxu0 0.0
    %6595 = vmatprep.subr.mxu0 0.0
    %6596 = vmatpush2.msra.mxu0 0.0
    %6597 = vmatprep.subr.mxu0 0.0
    %6598 = vmatpush2.msra.mxu0 0.0
    %6599 = vmatprep.subr.mxu0 0.0
    %6600 = vmatpush2.msra.mxu0 0.0
    %6601 = vmatprep.subr.mxu0 0.0
    %6602 = vmatpush2.msra.mxu0 0.0
    %6603 = vmatprep.subr.mxu0 0.0
    %6604 = vmatpush2.msra.mxu0 0.0
    %6605 = vmatprep.subr.mxu0 0.0
    %6606 = vmatpush2.msra.mxu0 0.0
    %6607 = vmatprep.subr.mxu0 0.0
    %6608 = vmatpush2.msra.mxu0 0.0
    %6609 = vmatprep.subr.mxu0 0.0
    %6610 = vmatpush2.msra.mxu0 0.0
    %6611 = vmatprep.subr.mxu0 0.0
    %6612 = vmatpush2.msra.mxu0 0.0
    %6613 = vmatprep.subr.mxu0 0.0
    %6614 = vmatpush2.msra.mxu0 0.0
    %6615 = vmatprep.subr.mxu0 0.0
    %6616 = vmatpush2.msra.mxu0 0.0
    %6617 = vmatprep.subr.mxu0 0.0
    %6618 = vmatpush2.msra.mxu0 0.0
    %6619 = vmatprep.subr.mxu0 0.0
    %6620 = vmatpush2.msra.mxu0 0.0
    %6621 = vmatprep.subr.mxu0 0.0
    %6622 = vmatpush2.msra.mxu0 0.0
    %6623 = vmatprep.mubr.f32.mxu0 0.0
    %6624 = vmatmul.mubr.f32.gmra.mxu0 %v6554
    %v6625 = vpop.f32.mrf.mxu0
    %v6626 = vadd.f32 %v6551, %v6625
    %v6627 = vpop.f32.mrf.mxu0
    %6628 = vmatprep.mubr.f32.mxu0 0.0
    %6629 = vmatmul.mubr.f32.gmra.mxu0 %v6557
    %v6630 = vpop.f32.mrf.mxu0
    %v6631 = vadd.f32 %v6551, %v6630
    %v6632 = vpop.f32.mrf.mxu0
    %6633 = vdwg.mxu0
    %6638 = vrot.lane.b32.xlu0 %v6534, 96
    %v6639 = vpop.permute.xlu0 %6638
    %6640 = vrot.lane.b32.xlu0 %v6535, 96
    %v6641 = vpop.permute.xlu0 %6640
    %6642 = vrot.lane.b32.xlu0 %v6536, 96
    %v6643 = vpop.permute.xlu0 %6642
    %6644 = vrot.lane.b32.xlu0 %v6537, 96
    %v6645 = vpop.permute.xlu0 %6644
    %6650 = vrot.lane.b32.xlu0 %v6551, 96
    %v6651 = vpop.permute.xlu0 %6650
    %6653 = vmatprep.subr.mxu0 0.0
    %6654 = vmatpush1.msra.mxu0 0.0
    %6655 = vmatprep.subr.mxu0 0.0
    %6656 = vmatpush1.msra.mxu0 0.0
    %6657 = vmatprep.subr.mxu0 0.0
    %6658 = vmatpush1.msra.mxu0 0.0
    %6659 = vmatprep.subr.mxu0 0.0
    %6660 = vmatpush1.msra.mxu0 0.0
    %6661 = vmatprep.subr.mxu0 0.0
    %6662 = vmatpush1.msra.mxu0 0.0
    %6663 = vmatprep.subr.mxu0 0.0
    %6664 = vmatpush1.msra.mxu0 0.0
    %6665 = vmatprep.subr.mxu0 0.0
    %6666 = vmatpush1.msra.mxu0 0.0
    %6667 = vmatprep.subr.mxu0 0.0
    %6668 = vmatpush1.msra.mxu0 0.0
    %6669 = vmatprep.subr.mxu0 0.0
    %6670 = vmatpush1.msra.mxu0 0.0
    %6671 = vmatprep.subr.mxu0 0.0
    %6672 = vmatpush1.msra.mxu0 0.0
    %6673 = vmatprep.subr.mxu0 0.0
    %6674 = vmatpush1.msra.mxu0 0.0
    %6675 = vmatprep.subr.mxu0 0.0
    %6676 = vmatpush1.msra.mxu0 0.0
    %6677 = vmatprep.subr.mxu0 0.0
    %6678 = vmatpush1.msra.mxu0 %v6645
    %6679 = vmatprep.subr.mxu0 0.0
    %6680 = vmatpush1.msra.mxu0 %v6643
    %6681 = vmatprep.subr.mxu0 0.0
    %6682 = vmatpush1.msra.mxu0 %v6641
    %6683 = vmatprep.subr.mxu0 0.0
    %6684 = vmatpush1.msra.mxu0 %v6639
    %6685 = vmatprep.subr.mxu0 0.0
    %6686 = vmatpush2.msra.mxu0 0.0
    %6687 = vmatprep.subr.mxu0 0.0
    %6688 = vmatpush2.msra.mxu0 0.0
    %6689 = vmatprep.subr.mxu0 0.0
    %6690 = vmatpush2.msra.mxu0 0.0
    %6691 = vmatprep.subr.mxu0 0.0
    %6692 = vmatpush2.msra.mxu0 0.0
    %6693 = vmatprep.subr.mxu0 0.0
    %6694 = vmatpush2.msra.mxu0 0.0
    %6695 = vmatprep.subr.mxu0 0.0
    %6696 = vmatpush2.msra.mxu0 0.0
    %6697 = vmatprep.subr.mxu0 0.0
    %6698 = vmatpush2.msra.mxu0 0.0
    %6699 = vmatprep.subr.mxu0 0.0
    %6700 = vmatpush2.msra.mxu0 0.0
    %6701 = vmatprep.subr.mxu0 0.0
    %6702 = vmatpush2.msra.mxu0 0.0
    %6703 = vmatprep.subr.mxu0 0.0
    %6704 = vmatpush2.msra.mxu0 0.0
    %6705 = vmatprep.subr.mxu0 0.0
    %6706 = vmatpush2.msra.mxu0 0.0
    %6707 = vmatprep.subr.mxu0 0.0
    %6708 = vmatpush2.msra.mxu0 0.0
    %6709 = vmatprep.subr.mxu0 0.0
    %6710 = vmatpush2.msra.mxu0 0.0
    %6711 = vmatprep.subr.mxu0 0.0
    %6712 = vmatpush2.msra.mxu0 0.0
    %6713 = vmatprep.subr.mxu0 0.0
    %6714 = vmatpush2.msra.mxu0 0.0
    %6715 = vmatprep.subr.mxu0 0.0
    %6716 = vmatpush2.msra.mxu0 0.0
    %6717 = vmatprep.mubr.f32.mxu0 0.0
    %6718 = vmatmul.mubr.f32.gmra.mxu0 %v4174
    %v6719 = vpop.f32.mrf.mxu0
    %v6720 = vadd.f32 %v6651, %v6719
    %v6721 = vpop.f32.mrf.mxu0
    %6722 = vmatprep.mubr.f32.mxu0 0.0
    %6723 = vmatmul.mubr.f32.gmra.mxu0 %v4177
    %v6724 = vpop.f32.mrf.mxu0
    %v6725 = vadd.f32 %v6651, %v6724
    %v6726 = vpop.f32.mrf.mxu0
    %6727 = vdwg.mxu0
    %v6729 = vsel %vm467, %v6626, 0
    %v6732 = vsel %vm467, %v6631, 0
    %v6735 = vsel %vm467, %v6720, 0
    %v6738 = vsel %vm467, %v6725, 0
    %6740 = vmatprep.subr.mxu0 0.0
    %6741 = vmatpush1.xpose.msra.mxu0 0.0
    %6742 = vmatprep.subr.mxu0 0.0
    %6743 = vmatpush1.xpose.msra.mxu0 0.0
    %6744 = vmatprep.subr.mxu0 0.0
    %6745 = vmatpush1.xpose.msra.mxu0 0.0
    %6746 = vmatprep.subr.mxu0 0.0
    %6747 = vmatpush1.xpose.msra.mxu0 0.0
    %6748 = vmatprep.subr.mxu0 0.0
    %6749 = vmatpush1.xpose.msra.mxu0 0.0
    %6750 = vmatprep.subr.mxu0 0.0
    %6751 = vmatpush1.xpose.msra.mxu0 0.0
    %6752 = vmatprep.subr.mxu0 0.0
    %6753 = vmatpush1.xpose.msra.mxu0 0.0
    %6754 = vmatprep.subr.mxu0 0.0
    %6755 = vmatpush1.xpose.msra.mxu0 0.0
    %6756 = vmatprep.subr.mxu0 0.0
    %6757 = vmatpush1.xpose.msra.mxu0 0.0
    %6758 = vmatprep.subr.mxu0 0.0
    %6759 = vmatpush1.xpose.msra.mxu0 0.0
    %6760 = vmatprep.subr.mxu0 0.0
    %6761 = vmatpush1.xpose.msra.mxu0 0.0
    %6762 = vmatprep.subr.mxu0 0.0
    %6763 = vmatpush1.xpose.msra.mxu0 0.0
    %6764 = vmatprep.subr.mxu0 0.0
    %6765 = vmatpush1.xpose.msra.mxu0 0.0
    %6766 = vmatprep.subr.mxu0 0.0
    %6767 = vmatpush1.xpose.msra.mxu0 0.0
    %6768 = vmatprep.subr.mxu0 0.0
    %6769 = vmatpush1.xpose.msra.mxu0 %v6738
    %6770 = vmatprep.subr.mxu0 0.0
    %6771 = vmatpush1.xpose.msra.mxu0 %v6735
    %6772 = vmatprep.subr.mxu0 0.0
    %6773 = vmatpush2.xpose.msra.mxu0 0.0
    %6774 = vmatprep.subr.mxu0 0.0
    %6775 = vmatpush2.xpose.msra.mxu0 0.0
    %6776 = vmatprep.subr.mxu0 0.0
    %6777 = vmatpush2.xpose.msra.mxu0 0.0
    %6778 = vmatprep.subr.mxu0 0.0
    %6779 = vmatpush2.xpose.msra.mxu0 0.0
    %6780 = vmatprep.subr.mxu0 0.0
    %6781 = vmatpush2.xpose.msra.mxu0 0.0
    %6782 = vmatprep.subr.mxu0 0.0
    %6783 = vmatpush2.xpose.msra.mxu0 0.0
    %6784 = vmatprep.subr.mxu0 0.0
    %6785 = vmatpush2.xpose.msra.mxu0 0.0
    %6786 = vmatprep.subr.mxu0 0.0
    %6787 = vmatpush2.xpose.msra.mxu0 0.0
    %6788 = vmatprep.subr.mxu0 0.0
    %6789 = vmatpush2.xpose.msra.mxu0 0.0
    %6790 = vmatprep.subr.mxu0 0.0
    %6791 = vmatpush2.xpose.msra.mxu0 0.0
    %6792 = vmatprep.subr.mxu0 0.0
    %6793 = vmatpush2.xpose.msra.mxu0 0.0
    %6794 = vmatprep.subr.mxu0 0.0
    %6795 = vmatpush2.xpose.msra.mxu0 0.0
    %6796 = vmatprep.subr.mxu0 0.0
    %6797 = vmatpush2.xpose.msra.mxu0 0.0
    %6798 = vmatprep.subr.mxu0 0.0
    %6799 = vmatpush2.xpose.msra.mxu0 0.0
    %6800 = vmatprep.subr.mxu0 0.0
    %6801 = vmatpush2.xpose.msra.mxu0 0.0
    %6802 = vmatprep.subr.mxu0 0.0
    %6803 = vmatpush2.xpose.msra.mxu0 0.0
    %6804 = vmatprep.mubr.f32.mxu0 0.0
    %6805 = vmatmul.mubr.f32.gmra.mxu0 %v6729
    %v6806 = vpop.f32.mrf.mxu0
    %v6807 = vadd.f32 0.0, %v6806
    %v6808 = vpop.f32.mrf.mxu0
    %6809 = vmatprep.mubr.f32.mxu0 0.0
    %6810 = vmatmul.mubr.f32.gmra.mxu0 %v6732
    %v6811 = vpop.f32.mrf.mxu0
    %v6812 = vadd.f32 0.0, %v6811
    %v6813 = vpop.f32.mrf.mxu0
    %6814 = vdwg.mxu0
    %v6815 = vsel %vm551, %v6807, %v149
    %v6816 = vsel %vm552, %v6812, %v150
    %v6817 = vsel %vm555, %v6815, -inf
    %6818 = vmax.xlane.f32.xlu0 %v6817
    %v6819 = vpop.xlane.xlu0 %6818
    %v6820 = vsel %vm555, %v6816, -inf
    %6821 = vmax.xlane.f32.xlu0 %v6820
    %v6822 = vpop.xlane.xlu0 %6821
    %v6823 = vsub.f32 %v6815, %v6819
    %v6824 = vsub.f32 %v6816, %v6822
    %v6825 = vmul.f32 %v6823, 1.442695
    %v6826 = vpow.pop %v6825
    %v6827 = vmul.f32 %v6824, 1.442695
    %v6828 = vpow.pop %v6827
    %v6829 = vsel %vm555, %v6826, 0.0
    %6830 = vadd.xlane.f32.xlu0 %v6829
    %v6831 = vpop.xlane.xlu0 %6830
    %v6832 = vsel %vm555, %v6828, 0.0
    %6833 = vadd.xlane.f32.xlu0 %v6832
    %v6834 = vpop.xlane.xlu0 %6833
    %v6835 = vrcp.pop %v6831
    %v6836 = vmul.f32 %v6826, %v6835
    %v6837 = vrcp.pop %v6834
    %v6838 = vmul.f32 %v6828, %v6837
    %6839 = vrot.lane.b32.xlu0 %v6720, 96
    %v6840 = vpop.permute.xlu0 %6839
    %6841 = vrot.lane.b32.xlu0 %v6725, 96
    %v6842 = vpop.permute.xlu0 %6841
    %v6846 = vsel %vm555, %v6836, 0
    %v6849 = vsel %vm555, %v6838, 0
    %6851 = vmatprep.subr.mxu0 0.0
    %6852 = vmatpush1.msra.mxu0 0.0
    %6853 = vmatprep.subr.mxu0 0.0
    %6854 = vmatpush1.msra.mxu0 0.0
    %6855 = vmatprep.subr.mxu0 0.0
    %6856 = vmatpush1.msra.mxu0 0.0
    %6857 = vmatprep.subr.mxu0 0.0
    %6858 = vmatpush1.msra.mxu0 0.0
    %6859 = vmatprep.subr.mxu0 0.0
    %6860 = vmatpush1.msra.mxu0 0.0
    %6861 = vmatprep.subr.mxu0 0.0
    %6862 = vmatpush1.msra.mxu0 0.0
    %6863 = vmatprep.subr.mxu0 0.0
    %6864 = vmatpush1.msra.mxu0 0.0
    %6865 = vmatprep.subr.mxu0 0.0
    %6866 = vmatpush1.msra.mxu0 0.0
    %6867 = vmatprep.subr.mxu0 0.0
    %6868 = vmatpush1.msra.mxu0 0.0
    %6869 = vmatprep.subr.mxu0 0.0
    %6870 = vmatpush1.msra.mxu0 0.0
    %6871 = vmatprep.subr.mxu0 0.0
    %6872 = vmatpush1.msra.mxu0 0.0
    %6873 = vmatprep.subr.mxu0 0.0
    %6874 = vmatpush1.msra.mxu0 0.0
    %6875 = vmatprep.subr.mxu0 0.0
    %6876 = vmatpush1.msra.mxu0 0.0
    %6877 = vmatprep.subr.mxu0 0.0
    %6878 = vmatpush1.msra.mxu0 0.0
    %6879 = vmatprep.subr.mxu0 0.0
    %6880 = vmatpush1.msra.mxu0 %v6842
    %6881 = vmatprep.subr.mxu0 0.0
    %6882 = vmatpush1.msra.mxu0 %v6840
    %6883 = vmatprep.subr.mxu0 0.0
    %6884 = vmatpush2.msra.mxu0 0.0
    %6885 = vmatprep.subr.mxu0 0.0
    %6886 = vmatpush2.msra.mxu0 0.0
    %6887 = vmatprep.subr.mxu0 0.0
    %6888 = vmatpush2.msra.mxu0 0.0
    %6889 = vmatprep.subr.mxu0 0.0
    %6890 = vmatpush2.msra.mxu0 0.0
    %6891 = vmatprep.subr.mxu0 0.0
    %6892 = vmatpush2.msra.mxu0 0.0
    %6893 = vmatprep.subr.mxu0 0.0
    %6894 = vmatpush2.msra.mxu0 0.0
    %6895 = vmatprep.subr.mxu0 0.0
    %6896 = vmatpush2.msra.mxu0 0.0
    %6897 = vmatprep.subr.mxu0 0.0
    %6898 = vmatpush2.msra.mxu0 0.0
    %6899 = vmatprep.subr.mxu0 0.0
    %6900 = vmatpush2.msra.mxu0 0.0
    %6901 = vmatprep.subr.mxu0 0.0
    %6902 = vmatpush2.msra.mxu0 0.0
    %6903 = vmatprep.subr.mxu0 0.0
    %6904 = vmatpush2.msra.mxu0 0.0
    %6905 = vmatprep.subr.mxu0 0.0
    %6906 = vmatpush2.msra.mxu0 0.0
    %6907 = vmatprep.subr.mxu0 0.0
    %6908 = vmatpush2.msra.mxu0 0.0
    %6909 = vmatprep.subr.mxu0 0.0
    %6910 = vmatpush2.msra.mxu0 0.0
    %6911 = vmatprep.subr.mxu0 0.0
    %6912 = vmatpush2.msra.mxu0 0.0
    %6913 = vmatprep.subr.mxu0 0.0
    %6914 = vmatpush2.msra.mxu0 0.0
    %6915 = vmatprep.mubr.f32.mxu0 0.0
    %6916 = vmatmul.mubr.f32.gmra.mxu0 %v6846
    %v6917 = vpop.f32.mrf.mxu0
    %v6918 = vadd.f32 0.0, %v6917
    %v6919 = vpop.f32.mrf.mxu0
    %6920 = vmatprep.mubr.f32.mxu0 0.0
    %6921 = vmatmul.mubr.f32.gmra.mxu0 %v6849
    %v6922 = vpop.f32.mrf.mxu0
    %v6923 = vadd.f32 0.0, %v6922
    %v6924 = vpop.f32.mrf.mxu0
    %6925 = vdwg.mxu0
    %6926 = vrot.lane.b32.xlu0 %v6626, 120
    %v6927 = vpop.permute.xlu0 %6926
    %6928 = vrot.lane.b32.xlu0 %v6631, 120
    %v6929 = vpop.permute.xlu0 %6928
    %6930 = vrot.lane.b32.xlu0 %v6720, 120
    %v6931 = vpop.permute.xlu0 %6930
    %6932 = vrot.lane.b32.xlu0 %v6725, 120
    %v6933 = vpop.permute.xlu0 %6932
    %v6934 = vsel %vm467, %v6927, 0
    %v6936 = vsel %vm467, %v6929, 0
    %v6938 = vsel %vm467, %v6931, 0
    %v6940 = vsel %vm467, %v6933, 0
    %6942 = vmatprep.subr.mxu0 0.0
    %6943 = vmatpush1.xpose.msra.mxu0 0.0
    %6944 = vmatprep.subr.mxu0 0.0
    %6945 = vmatpush1.xpose.msra.mxu0 0.0
    %6946 = vmatprep.subr.mxu0 0.0
    %6947 = vmatpush1.xpose.msra.mxu0 0.0
    %6948 = vmatprep.subr.mxu0 0.0
    %6949 = vmatpush1.xpose.msra.mxu0 0.0
    %6950 = vmatprep.subr.mxu0 0.0
    %6951 = vmatpush1.xpose.msra.mxu0 0.0
    %6952 = vmatprep.subr.mxu0 0.0
    %6953 = vmatpush1.xpose.msra.mxu0 0.0
    %6954 = vmatprep.subr.mxu0 0.0
    %6955 = vmatpush1.xpose.msra.mxu0 0.0
    %6956 = vmatprep.subr.mxu0 0.0
    %6957 = vmatpush1.xpose.msra.mxu0 0.0
    %6958 = vmatprep.subr.mxu0 0.0
    %6959 = vmatpush1.xpose.msra.mxu0 0.0
    %6960 = vmatprep.subr.mxu0 0.0
    %6961 = vmatpush1.xpose.msra.mxu0 0.0
    %6962 = vmatprep.subr.mxu0 0.0
    %6963 = vmatpush1.xpose.msra.mxu0 0.0
    %6964 = vmatprep.subr.mxu0 0.0
    %6965 = vmatpush1.xpose.msra.mxu0 0.0
    %6966 = vmatprep.subr.mxu0 0.0
    %6967 = vmatpush1.xpose.msra.mxu0 0.0
    %6968 = vmatprep.subr.mxu0 0.0
    %6969 = vmatpush1.xpose.msra.mxu0 0.0
    %6970 = vmatprep.subr.mxu0 0.0
    %6971 = vmatpush1.xpose.msra.mxu0 %v6940
    %6972 = vmatprep.subr.mxu0 0.0
    %6973 = vmatpush1.xpose.msra.mxu0 %v6938
    %6974 = vmatprep.subr.mxu0 0.0
    %6975 = vmatpush2.xpose.msra.mxu0 0.0
    %6976 = vmatprep.subr.mxu0 0.0
    %6977 = vmatpush2.xpose.msra.mxu0 0.0
    %6978 = vmatprep.subr.mxu0 0.0
    %6979 = vmatpush2.xpose.msra.mxu0 0.0
    %6980 = vmatprep.subr.mxu0 0.0
    %6981 = vmatpush2.xpose.msra.mxu0 0.0
    %6982 = vmatprep.subr.mxu0 0.0
    %6983 = vmatpush2.xpose.msra.mxu0 0.0
    %6984 = vmatprep.subr.mxu0 0.0
    %6985 = vmatpush2.xpose.msra.mxu0 0.0
    %6986 = vmatprep.subr.mxu0 0.0
    %6987 = vmatpush2.xpose.msra.mxu0 0.0
    %6988 = vmatprep.subr.mxu0 0.0
    %6989 = vmatpush2.xpose.msra.mxu0 0.0
    %6990 = vmatprep.subr.mxu0 0.0
    %6991 = vmatpush2.xpose.msra.mxu0 0.0
    %6992 = vmatprep.subr.mxu0 0.0
    %6993 = vmatpush2.xpose.msra.mxu0 0.0
    %6994 = vmatprep.subr.mxu0 0.0
    %6995 = vmatpush2.xpose.msra.mxu0 0.0
    %6996 = vmatprep.subr.mxu0 0.0
    %6997 = vmatpush2.xpose.msra.mxu0 0.0
    %6998 = vmatprep.subr.mxu0 0.0
    %6999 = vmatpush2.xpose.msra.mxu0 0.0
    %7000 = vmatprep.subr.mxu0 0.0
    %7001 = vmatpush2.xpose.msra.mxu0 0.0
    %7002 = vmatprep.subr.mxu0 0.0
    %7003 = vmatpush2.xpose.msra.mxu0 0.0
    %7004 = vmatprep.subr.mxu0 0.0
    %7005 = vmatpush2.xpose.msra.mxu0 0.0
    %7006 = vmatprep.mubr.f32.mxu0 0.0
    %7007 = vmatmul.mubr.f32.gmra.mxu0 %v6934
    %v7008 = vpop.f32.mrf.mxu0
    %v7009 = vadd.f32 0.0, %v7008
    %v7010 = vpop.f32.mrf.mxu0
    %7011 = vmatprep.mubr.f32.mxu0 0.0
    %7012 = vmatmul.mubr.f32.gmra.mxu0 %v6936
    %v7013 = vpop.f32.mrf.mxu0
    %v7014 = vadd.f32 0.0, %v7013
    %v7015 = vpop.f32.mrf.mxu0
    %7016 = vdwg.mxu0
    %v7017 = vsel %vm551, %v7009, %v149
    %v7018 = vsel %vm552, %v7014, %v150
    %v7019 = vsel %vm555, %v7017, -inf
    %7020 = vmax.xlane.f32.xlu0 %v7019
    %v7021 = vpop.xlane.xlu0 %7020
    %v7022 = vsel %vm555, %v7018, -inf
    %7023 = vmax.xlane.f32.xlu0 %v7022
    %v7024 = vpop.xlane.xlu0 %7023
    %v7025 = vsub.f32 %v7017, %v7021
    %v7026 = vsub.f32 %v7018, %v7024
    %v7027 = vmul.f32 %v7025, 1.442695
    %v7028 = vpow.pop %v7027
    %v7029 = vmul.f32 %v7026, 1.442695
    %v7030 = vpow.pop %v7029
    %v7031 = vsel %vm555, %v7028, 0.0
    %7032 = vadd.xlane.f32.xlu0 %v7031
    %v7033 = vpop.xlane.xlu0 %7032
    %v7034 = vsel %vm555, %v7030, 0.0
    %7035 = vadd.xlane.f32.xlu0 %v7034
    %v7036 = vpop.xlane.xlu0 %7035
    %v7037 = vrcp.pop %v7033
    %v7038 = vmul.f32 %v7028, %v7037
    %v7039 = vrcp.pop %v7036
    %v7040 = vmul.f32 %v7030, %v7039
    %7041 = vrot.lane.b32.xlu0 %v6720, 88
    %v7042 = vpop.permute.xlu0 %7041
    %7043 = vrot.lane.b32.xlu0 %v6725, 88
    %v7044 = vpop.permute.xlu0 %7043
    %v7048 = vsel %vm555, %v7038, 0
    %v7051 = vsel %vm555, %v7040, 0
    %7053 = vmatprep.subr.mxu0 0.0
    %7054 = vmatpush1.msra.mxu0 0.0
    %7055 = vmatprep.subr.mxu0 0.0
    %7056 = vmatpush1.msra.mxu0 0.0
    %7057 = vmatprep.subr.mxu0 0.0
    %7058 = vmatpush1.msra.mxu0 0.0
    %7059 = vmatprep.subr.mxu0 0.0
    %7060 = vmatpush1.msra.mxu0 0.0
    %7061 = vmatprep.subr.mxu0 0.0
    %7062 = vmatpush1.msra.mxu0 0.0
    %7063 = vmatprep.subr.mxu0 0.0
    %7064 = vmatpush1.msra.mxu0 0.0
    %7065 = vmatprep.subr.mxu0 0.0
    %7066 = vmatpush1.msra.mxu0 0.0
    %7067 = vmatprep.subr.mxu0 0.0
    %7068 = vmatpush1.msra.mxu0 0.0
    %7069 = vmatprep.subr.mxu0 0.0
    %7070 = vmatpush1.msra.mxu0 0.0
    %7071 = vmatprep.subr.mxu0 0.0
    %7072 = vmatpush1.msra.mxu0 0.0
    %7073 = vmatprep.subr.mxu0 0.0
    %7074 = vmatpush1.msra.mxu0 0.0
    %7075 = vmatprep.subr.mxu0 0.0
    %7076 = vmatpush1.msra.mxu0 0.0
    %7077 = vmatprep.subr.mxu0 0.0
    %7078 = vmatpush1.msra.mxu0 0.0
    %7079 = vmatprep.subr.mxu0 0.0
    %7080 = vmatpush1.msra.mxu0 0.0
    %7081 = vmatprep.subr.mxu0 0.0
    %7082 = vmatpush1.msra.mxu0 %v7044
    %7083 = vmatprep.subr.mxu0 0.0
    %7084 = vmatpush1.msra.mxu0 %v7042
    %7085 = vmatprep.subr.mxu0 0.0
    %7086 = vmatpush2.msra.mxu0 0.0
    %7087 = vmatprep.subr.mxu0 0.0
    %7088 = vmatpush2.msra.mxu0 0.0
    %7089 = vmatprep.subr.mxu0 0.0
    %7090 = vmatpush2.msra.mxu0 0.0
    %7091 = vmatprep.subr.mxu0 0.0
    %7092 = vmatpush2.msra.mxu0 0.0
    %7093 = vmatprep.subr.mxu0 0.0
    %7094 = vmatpush2.msra.mxu0 0.0
    %7095 = vmatprep.subr.mxu0 0.0
    %7096 = vmatpush2.msra.mxu0 0.0
    %7097 = vmatprep.subr.mxu0 0.0
    %7098 = vmatpush2.msra.mxu0 0.0
    %7099 = vmatprep.subr.mxu0 0.0
    %7100 = vmatpush2.msra.mxu0 0.0
    %7101 = vmatprep.subr.mxu0 0.0
    %7102 = vmatpush2.msra.mxu0 0.0
    %7103 = vmatprep.subr.mxu0 0.0
    %7104 = vmatpush2.msra.mxu0 0.0
    %7105 = vmatprep.subr.mxu0 0.0
    %7106 = vmatpush2.msra.mxu0 0.0
    %7107 = vmatprep.subr.mxu0 0.0
    %7108 = vmatpush2.msra.mxu0 0.0
    %7109 = vmatprep.subr.mxu0 0.0
    %7110 = vmatpush2.msra.mxu0 0.0
    %7111 = vmatprep.subr.mxu0 0.0
    %7112 = vmatpush2.msra.mxu0 0.0
    %7113 = vmatprep.subr.mxu0 0.0
    %7114 = vmatpush2.msra.mxu0 0.0
    %7115 = vmatprep.subr.mxu0 0.0
    %7116 = vmatpush2.msra.mxu0 0.0
    %7117 = vmatprep.mubr.f32.mxu0 0.0
    %7118 = vmatmul.mubr.f32.gmra.mxu0 %v7048
    %v7119 = vpop.f32.mrf.mxu0
    %v7120 = vadd.f32 0.0, %v7119
    %v7121 = vpop.f32.mrf.mxu0
    %7122 = vmatprep.mubr.f32.mxu0 0.0
    %7123 = vmatmul.mubr.f32.gmra.mxu0 %v7051
    %v7124 = vpop.f32.mrf.mxu0
    %v7125 = vadd.f32 0.0, %v7124
    %v7126 = vpop.f32.mrf.mxu0
    %7127 = vdwg.mxu0
    %7128 = vrot.lane.b32.xlu0 %v6626, 112
    %v7129 = vpop.permute.xlu0 %7128
    %7130 = vrot.lane.b32.xlu0 %v6631, 112
    %v7131 = vpop.permute.xlu0 %7130
    %7132 = vrot.lane.b32.xlu0 %v6720, 112
    %v7133 = vpop.permute.xlu0 %7132
    %7134 = vrot.lane.b32.xlu0 %v6725, 112
    %v7135 = vpop.permute.xlu0 %7134
    %v7136 = vsel %vm467, %v7129, 0
    %v7138 = vsel %vm467, %v7131, 0
    %v7140 = vsel %vm467, %v7133, 0
    %v7142 = vsel %vm467, %v7135, 0
    %7144 = vmatprep.subr.mxu0 0.0
    %7145 = vmatpush1.xpose.msra.mxu0 0.0
    %7146 = vmatprep.subr.mxu0 0.0
    %7147 = vmatpush1.xpose.msra.mxu0 0.0
    %7148 = vmatprep.subr.mxu0 0.0
    %7149 = vmatpush1.xpose.msra.mxu0 0.0
    %7150 = vmatprep.subr.mxu0 0.0
    %7151 = vmatpush1.xpose.msra.mxu0 0.0
    %7152 = vmatprep.subr.mxu0 0.0
    %7153 = vmatpush1.xpose.msra.mxu0 0.0
    %7154 = vmatprep.subr.mxu0 0.0
    %7155 = vmatpush1.xpose.msra.mxu0 0.0
    %7156 = vmatprep.subr.mxu0 0.0
    %7157 = vmatpush1.xpose.msra.mxu0 0.0
    %7158 = vmatprep.subr.mxu0 0.0
    %7159 = vmatpush1.xpose.msra.mxu0 0.0
    %7160 = vmatprep.subr.mxu0 0.0
    %7161 = vmatpush1.xpose.msra.mxu0 0.0
    %7162 = vmatprep.subr.mxu0 0.0
    %7163 = vmatpush1.xpose.msra.mxu0 0.0
    %7164 = vmatprep.subr.mxu0 0.0
    %7165 = vmatpush1.xpose.msra.mxu0 0.0
    %7166 = vmatprep.subr.mxu0 0.0
    %7167 = vmatpush1.xpose.msra.mxu0 0.0
    %7168 = vmatprep.subr.mxu0 0.0
    %7169 = vmatpush1.xpose.msra.mxu0 0.0
    %7170 = vmatprep.subr.mxu0 0.0
    %7171 = vmatpush1.xpose.msra.mxu0 0.0
    %7172 = vmatprep.subr.mxu0 0.0
    %7173 = vmatpush1.xpose.msra.mxu0 %v7142
    %7174 = vmatprep.subr.mxu0 0.0
    %7175 = vmatpush1.xpose.msra.mxu0 %v7140
    %7176 = vmatprep.subr.mxu0 0.0
    %7177 = vmatpush2.xpose.msra.mxu0 0.0
    %7178 = vmatprep.subr.mxu0 0.0
    %7179 = vmatpush2.xpose.msra.mxu0 0.0
    %7180 = vmatprep.subr.mxu0 0.0
    %7181 = vmatpush2.xpose.msra.mxu0 0.0
    %7182 = vmatprep.subr.mxu0 0.0
    %7183 = vmatpush2.xpose.msra.mxu0 0.0
    %7184 = vmatprep.subr.mxu0 0.0
    %7185 = vmatpush2.xpose.msra.mxu0 0.0
    %7186 = vmatprep.subr.mxu0 0.0
    %7187 = vmatpush2.xpose.msra.mxu0 0.0
    %7188 = vmatprep.subr.mxu0 0.0
    %7189 = vmatpush2.xpose.msra.mxu0 0.0
    %7190 = vmatprep.subr.mxu0 0.0
    %7191 = vmatpush2.xpose.msra.mxu0 0.0
    %7192 = vmatprep.subr.mxu0 0.0
    %7193 = vmatpush2.xpose.msra.mxu0 0.0
    %7194 = vmatprep.subr.mxu0 0.0
    %7195 = vmatpush2.xpose.msra.mxu0 0.0
    %7196 = vmatprep.subr.mxu0 0.0
    %7197 = vmatpush2.xpose.msra.mxu0 0.0
    %7198 = vmatprep.subr.mxu0 0.0
    %7199 = vmatpush2.xpose.msra.mxu0 0.0
    %7200 = vmatprep.subr.mxu0 0.0
    %7201 = vmatpush2.xpose.msra.mxu0 0.0
    %7202 = vmatprep.subr.mxu0 0.0
    %7203 = vmatpush2.xpose.msra.mxu0 0.0
    %7204 = vmatprep.subr.mxu0 0.0
    %7205 = vmatpush2.xpose.msra.mxu0 0.0
    %7206 = vmatprep.subr.mxu0 0.0
    %7207 = vmatpush2.xpose.msra.mxu0 0.0
    %7208 = vmatprep.mubr.f32.mxu0 0.0
    %7209 = vmatmul.mubr.f32.gmra.mxu0 %v7136
    %v7210 = vpop.f32.mrf.mxu0
    %v7211 = vadd.f32 0.0, %v7210
    %v7212 = vpop.f32.mrf.mxu0
    %7213 = vmatprep.mubr.f32.mxu0 0.0
    %7214 = vmatmul.mubr.f32.gmra.mxu0 %v7138
    %v7215 = vpop.f32.mrf.mxu0
    %v7216 = vadd.f32 0.0, %v7215
    %v7217 = vpop.f32.mrf.mxu0
    %7218 = vdwg.mxu0
    %v7219 = vsel %vm551, %v7211, %v149
    %v7220 = vsel %vm552, %v7216, %v150
    %v7221 = vsel %vm555, %v7219, -inf
    %7222 = vmax.xlane.f32.xlu0 %v7221
    %v7223 = vpop.xlane.xlu0 %7222
    %v7224 = vsel %vm555, %v7220, -inf
    %7225 = vmax.xlane.f32.xlu0 %v7224
    %v7226 = vpop.xlane.xlu0 %7225
    %v7227 = vsub.f32 %v7219, %v7223
    %v7228 = vsub.f32 %v7220, %v7226
    %v7229 = vmul.f32 %v7227, 1.442695
    %v7230 = vpow.pop %v7229
    %v7231 = vmul.f32 %v7228, 1.442695
    %v7232 = vpow.pop %v7231
    %v7233 = vsel %vm555, %v7230, 0.0
    %7234 = vadd.xlane.f32.xlu0 %v7233
    %v7235 = vpop.xlane.xlu0 %7234
    %v7236 = vsel %vm555, %v7232, 0.0
    %7237 = vadd.xlane.f32.xlu0 %v7236
    %v7238 = vpop.xlane.xlu0 %7237
    %v7239 = vrcp.pop %v7235
    %v7240 = vmul.f32 %v7230, %v7239
    %v7241 = vrcp.pop %v7238
    %v7242 = vmul.f32 %v7232, %v7241
    %7243 = vrot.lane.b32.xlu0 %v6720, 80
    %v7244 = vpop.permute.xlu0 %7243
    %7245 = vrot.lane.b32.xlu0 %v6725, 80
    %v7246 = vpop.permute.xlu0 %7245
    %v7250 = vsel %vm555, %v7240, 0
    %v7253 = vsel %vm555, %v7242, 0
    %7255 = vmatprep.subr.mxu0 0.0
    %7256 = vmatpush1.msra.mxu0 0.0
    %7257 = vmatprep.subr.mxu0 0.0
    %7258 = vmatpush1.msra.mxu0 0.0
    %7259 = vmatprep.subr.mxu0 0.0
    %7260 = vmatpush1.msra.mxu0 0.0
    %7261 = vmatprep.subr.mxu0 0.0
    %7262 = vmatpush1.msra.mxu0 0.0
    %7263 = vmatprep.subr.mxu0 0.0
    %7264 = vmatpush1.msra.mxu0 0.0
    %7265 = vmatprep.subr.mxu0 0.0
    %7266 = vmatpush1.msra.mxu0 0.0
    %7267 = vmatprep.subr.mxu0 0.0
    %7268 = vmatpush1.msra.mxu0 0.0
    %7269 = vmatprep.subr.mxu0 0.0
    %7270 = vmatpush1.msra.mxu0 0.0
    %7271 = vmatprep.subr.mxu0 0.0
    %7272 = vmatpush1.msra.mxu0 0.0
    %7273 = vmatprep.subr.mxu0 0.0
    %7274 = vmatpush1.msra.mxu0 0.0
    %7275 = vmatprep.subr.mxu0 0.0
    %7276 = vmatpush1.msra.mxu0 0.0
    %7277 = vmatprep.subr.mxu0 0.0
    %7278 = vmatpush1.msra.mxu0 0.0
    %7279 = vmatprep.subr.mxu0 0.0
    %7280 = vmatpush1.msra.mxu0 0.0
    %7281 = vmatprep.subr.mxu0 0.0
    %7282 = vmatpush1.msra.mxu0 0.0
    %7283 = vmatprep.subr.mxu0 0.0
    %7284 = vmatpush1.msra.mxu0 %v7246
    %7285 = vmatprep.subr.mxu0 0.0
    %7286 = vmatpush1.msra.mxu0 %v7244
    %7287 = vmatprep.subr.mxu0 0.0
    %7288 = vmatpush2.msra.mxu0 0.0
    %7289 = vmatprep.subr.mxu0 0.0
    %7290 = vmatpush2.msra.mxu0 0.0
    %7291 = vmatprep.subr.mxu0 0.0
    %7292 = vmatpush2.msra.mxu0 0.0
    %7293 = vmatprep.subr.mxu0 0.0
    %7294 = vmatpush2.msra.mxu0 0.0
    %7295 = vmatprep.subr.mxu0 0.0
    %7296 = vmatpush2.msra.mxu0 0.0
    %7297 = vmatprep.subr.mxu0 0.0
    %7298 = vmatpush2.msra.mxu0 0.0
    %7299 = vmatprep.subr.mxu0 0.0
    %7300 = vmatpush2.msra.mxu0 0.0
    %7301 = vmatprep.subr.mxu0 0.0
    %7302 = vmatpush2.msra.mxu0 0.0
    %7303 = vmatprep.subr.mxu0 0.0
    %7304 = vmatpush2.msra.mxu0 0.0
    %7305 = vmatprep.subr.mxu0 0.0
    %7306 = vmatpush2.msra.mxu0 0.0
    %7307 = vmatprep.subr.mxu0 0.0
    %7308 = vmatpush2.msra.mxu0 0.0
    %7309 = vmatprep.subr.mxu0 0.0
    %7310 = vmatpush2.msra.mxu0 0.0
    %7311 = vmatprep.subr.mxu0 0.0
    %7312 = vmatpush2.msra.mxu0 0.0
    %7313 = vmatprep.subr.mxu0 0.0
    %7314 = vmatpush2.msra.mxu0 0.0
    %7315 = vmatprep.subr.mxu0 0.0
    %7316 = vmatpush2.msra.mxu0 0.0
    %7317 = vmatprep.subr.mxu0 0.0
    %7318 = vmatpush2.msra.mxu0 0.0
    %7319 = vmatprep.mubr.f32.mxu0 0.0
    %7320 = vmatmul.mubr.f32.gmra.mxu0 %v7250
    %v7321 = vpop.f32.mrf.mxu0
    %v7322 = vadd.f32 0.0, %v7321
    %v7323 = vpop.f32.mrf.mxu0
    %7324 = vmatprep.mubr.f32.mxu0 0.0
    %7325 = vmatmul.mubr.f32.gmra.mxu0 %v7253
    %v7326 = vpop.f32.mrf.mxu0
    %v7327 = vadd.f32 0.0, %v7326
    %v7328 = vpop.f32.mrf.mxu0
    %7329 = vdwg.mxu0
    %7330 = vrot.lane.b32.xlu0 %v6626, 104
    %v7331 = vpop.permute.xlu0 %7330
    %7332 = vrot.lane.b32.xlu0 %v6631, 104
    %v7333 = vpop.permute.xlu0 %7332
    %7334 = vrot.lane.b32.xlu0 %v6720, 104
    %v7335 = vpop.permute.xlu0 %7334
    %7336 = vrot.lane.b32.xlu0 %v6725, 104
    %v7337 = vpop.permute.xlu0 %7336
    %v7338 = vsel %vm467, %v7331, 0
    %v7340 = vsel %vm467, %v7333, 0
    %v7342 = vsel %vm467, %v7335, 0
    %v7344 = vsel %vm467, %v7337, 0
    %7346 = vmatprep.subr.mxu0 0.0
    %7347 = vmatpush1.xpose.msra.mxu0 0.0
    %7348 = vmatprep.subr.mxu0 0.0
    %7349 = vmatpush1.xpose.msra.mxu0 0.0
    %7350 = vmatprep.subr.mxu0 0.0
    %7351 = vmatpush1.xpose.msra.mxu0 0.0
    %7352 = vmatprep.subr.mxu0 0.0
    %7353 = vmatpush1.xpose.msra.mxu0 0.0
    %7354 = vmatprep.subr.mxu0 0.0
    %7355 = vmatpush1.xpose.msra.mxu0 0.0
    %7356 = vmatprep.subr.mxu0 0.0
    %7357 = vmatpush1.xpose.msra.mxu0 0.0
    %7358 = vmatprep.subr.mxu0 0.0
    %7359 = vmatpush1.xpose.msra.mxu0 0.0
    %7360 = vmatprep.subr.mxu0 0.0
    %7361 = vmatpush1.xpose.msra.mxu0 0.0
    %7362 = vmatprep.subr.mxu0 0.0
    %7363 = vmatpush1.xpose.msra.mxu0 0.0
    %7364 = vmatprep.subr.mxu0 0.0
    %7365 = vmatpush1.xpose.msra.mxu0 0.0
    %7366 = vmatprep.subr.mxu0 0.0
    %7367 = vmatpush1.xpose.msra.mxu0 0.0
    %7368 = vmatprep.subr.mxu0 0.0
    %7369 = vmatpush1.xpose.msra.mxu0 0.0
    %7370 = vmatprep.subr.mxu0 0.0
    %7371 = vmatpush1.xpose.msra.mxu0 0.0
    %7372 = vmatprep.subr.mxu0 0.0
    %7373 = vmatpush1.xpose.msra.mxu0 0.0
    %7374 = vmatprep.subr.mxu0 0.0
    %7375 = vmatpush1.xpose.msra.mxu0 %v7344
    %7376 = vmatprep.subr.mxu0 0.0
    %7377 = vmatpush1.xpose.msra.mxu0 %v7342
    %7378 = vmatprep.subr.mxu0 0.0
    %7379 = vmatpush2.xpose.msra.mxu0 0.0
    %7380 = vmatprep.subr.mxu0 0.0
    %7381 = vmatpush2.xpose.msra.mxu0 0.0
    %7382 = vmatprep.subr.mxu0 0.0
    %7383 = vmatpush2.xpose.msra.mxu0 0.0
    %7384 = vmatprep.subr.mxu0 0.0
    %7385 = vmatpush2.xpose.msra.mxu0 0.0
    %7386 = vmatprep.subr.mxu0 0.0
    %7387 = vmatpush2.xpose.msra.mxu0 0.0
    %7388 = vmatprep.subr.mxu0 0.0
    %7389 = vmatpush2.xpose.msra.mxu0 0.0
    %7390 = vmatprep.subr.mxu0 0.0
    %7391 = vmatpush2.xpose.msra.mxu0 0.0
    %7392 = vmatprep.subr.mxu0 0.0
    %7393 = vmatpush2.xpose.msra.mxu0 0.0
    %7394 = vmatprep.subr.mxu0 0.0
    %7395 = vmatpush2.xpose.msra.mxu0 0.0
    %7396 = vmatprep.subr.mxu0 0.0
    %7397 = vmatpush2.xpose.msra.mxu0 0.0
    %7398 = vmatprep.subr.mxu0 0.0
    %7399 = vmatpush2.xpose.msra.mxu0 0.0
    %7400 = vmatprep.subr.mxu0 0.0
    %7401 = vmatpush2.xpose.msra.mxu0 0.0
    %7402 = vmatprep.subr.mxu0 0.0
    %7403 = vmatpush2.xpose.msra.mxu0 0.0
    %7404 = vmatprep.subr.mxu0 0.0
    %7405 = vmatpush2.xpose.msra.mxu0 0.0
    %7406 = vmatprep.subr.mxu0 0.0
    %7407 = vmatpush2.xpose.msra.mxu0 0.0
    %7408 = vmatprep.subr.mxu0 0.0
    %7409 = vmatpush2.xpose.msra.mxu0 0.0
    %7410 = vmatprep.mubr.f32.mxu0 0.0
    %7411 = vmatmul.mubr.f32.gmra.mxu0 %v7338
    %v7412 = vpop.f32.mrf.mxu0
    %v7413 = vadd.f32 0.0, %v7412
    %v7414 = vpop.f32.mrf.mxu0
    %7415 = vmatprep.mubr.f32.mxu0 0.0
    %7416 = vmatmul.mubr.f32.gmra.mxu0 %v7340
    %v7417 = vpop.f32.mrf.mxu0
    %v7418 = vadd.f32 0.0, %v7417
    %v7419 = vpop.f32.mrf.mxu0
    %7420 = vdwg.mxu0
    %v7421 = vsel %vm551, %v7413, %v149
    %v7422 = vsel %vm552, %v7418, %v150
    %v7423 = vsel %vm555, %v7421, -inf
    %7424 = vmax.xlane.f32.xlu0 %v7423
    %v7425 = vpop.xlane.xlu0 %7424
    %v7426 = vsel %vm555, %v7422, -inf
    %7427 = vmax.xlane.f32.xlu0 %v7426
    %v7428 = vpop.xlane.xlu0 %7427
    %v7429 = vsub.f32 %v7421, %v7425
    %v7430 = vsub.f32 %v7422, %v7428
    %v7431 = vmul.f32 %v7429, 1.442695
    %v7432 = vpow.pop %v7431
    %v7433 = vmul.f32 %v7430, 1.442695
    %v7434 = vpow.pop %v7433
    %v7435 = vsel %vm555, %v7432, 0.0
    %7436 = vadd.xlane.f32.xlu0 %v7435
    %v7437 = vpop.xlane.xlu0 %7436
    %v7438 = vsel %vm555, %v7434, 0.0
    %7439 = vadd.xlane.f32.xlu0 %v7438
    %v7440 = vpop.xlane.xlu0 %7439
    %v7441 = vrcp.pop %v7437
    %v7442 = vmul.f32 %v7432, %v7441
    %v7443 = vrcp.pop %v7440
    %v7444 = vmul.f32 %v7434, %v7443
    %7445 = vrot.lane.b32.xlu0 %v6720, 72
    %v7446 = vpop.permute.xlu0 %7445
    %7447 = vrot.lane.b32.xlu0 %v6725, 72
    %v7448 = vpop.permute.xlu0 %7447
    %v7452 = vsel %vm555, %v7442, 0
    %v7455 = vsel %vm555, %v7444, 0
    %7457 = vmatprep.subr.mxu0 0.0
    %7458 = vmatpush1.msra.mxu0 0.0
    %7459 = vmatprep.subr.mxu0 0.0
    %7460 = vmatpush1.msra.mxu0 0.0
    %7461 = vmatprep.subr.mxu0 0.0
    %7462 = vmatpush1.msra.mxu0 0.0
    %7463 = vmatprep.subr.mxu0 0.0
    %7464 = vmatpush1.msra.mxu0 0.0
    %7465 = vmatprep.subr.mxu0 0.0
    %7466 = vmatpush1.msra.mxu0 0.0
    %7467 = vmatprep.subr.mxu0 0.0
    %7468 = vmatpush1.msra.mxu0 0.0
    %7469 = vmatprep.subr.mxu0 0.0
    %7470 = vmatpush1.msra.mxu0 0.0
    %7471 = vmatprep.subr.mxu0 0.0
    %7472 = vmatpush1.msra.mxu0 0.0
    %7473 = vmatprep.subr.mxu0 0.0
    %7474 = vmatpush1.msra.mxu0 0.0
    %7475 = vmatprep.subr.mxu0 0.0
    %7476 = vmatpush1.msra.mxu0 0.0
    %7477 = vmatprep.subr.mxu0 0.0
    %7478 = vmatpush1.msra.mxu0 0.0
    %7479 = vmatprep.subr.mxu0 0.0
    %7480 = vmatpush1.msra.mxu0 0.0
    %7481 = vmatprep.subr.mxu0 0.0
    %7482 = vmatpush1.msra.mxu0 0.0
    %7483 = vmatprep.subr.mxu0 0.0
    %7484 = vmatpush1.msra.mxu0 0.0
    %7485 = vmatprep.subr.mxu0 0.0
    %7486 = vmatpush1.msra.mxu0 %v7448
    %7487 = vmatprep.subr.mxu0 0.0
    %7488 = vmatpush1.msra.mxu0 %v7446
    %7489 = vmatprep.subr.mxu0 0.0
    %7490 = vmatpush2.msra.mxu0 0.0
    %7491 = vmatprep.subr.mxu0 0.0
    %7492 = vmatpush2.msra.mxu0 0.0
    %7493 = vmatprep.subr.mxu0 0.0
    %7494 = vmatpush2.msra.mxu0 0.0
    %7495 = vmatprep.subr.mxu0 0.0
    %7496 = vmatpush2.msra.mxu0 0.0
    %7497 = vmatprep.subr.mxu0 0.0
    %7498 = vmatpush2.msra.mxu0 0.0
    %7499 = vmatprep.subr.mxu0 0.0
    %7500 = vmatpush2.msra.mxu0 0.0
    %7501 = vmatprep.subr.mxu0 0.0
    %7502 = vmatpush2.msra.mxu0 0.0
    %7503 = vmatprep.subr.mxu0 0.0
    %7504 = vmatpush2.msra.mxu0 0.0
    %7505 = vmatprep.subr.mxu0 0.0
    %7506 = vmatpush2.msra.mxu0 0.0
    %7507 = vmatprep.subr.mxu0 0.0
    %7508 = vmatpush2.msra.mxu0 0.0
    %7509 = vmatprep.subr.mxu0 0.0
    %7510 = vmatpush2.msra.mxu0 0.0
    %7511 = vmatprep.subr.mxu0 0.0
    %7512 = vmatpush2.msra.mxu0 0.0
    %7513 = vmatprep.subr.mxu0 0.0
    %7514 = vmatpush2.msra.mxu0 0.0
    %7515 = vmatprep.subr.mxu0 0.0
    %7516 = vmatpush2.msra.mxu0 0.0
    %7517 = vmatprep.subr.mxu0 0.0
    %7518 = vmatpush2.msra.mxu0 0.0
    %7519 = vmatprep.subr.mxu0 0.0
    %7520 = vmatpush2.msra.mxu0 0.0
    %7521 = vmatprep.mubr.f32.mxu0 0.0
    %7522 = vmatmul.mubr.f32.gmra.mxu0 %v7452
    %v7523 = vpop.f32.mrf.mxu0
    %v7524 = vadd.f32 0.0, %v7523
    %v7525 = vpop.f32.mrf.mxu0
    %7526 = vmatprep.mubr.f32.mxu0 0.0
    %7527 = vmatmul.mubr.f32.gmra.mxu0 %v7455
    %v7528 = vpop.f32.mrf.mxu0
    %v7529 = vadd.f32 0.0, %v7528
    %v7530 = vpop.f32.mrf.mxu0
    %7531 = vdwg.mxu0
    %7534 = vrot.lane.b32.xlu0 %v7120, 8
    %v7535 = vpop.permute.xlu0 %7534
    %7536 = vrot.lane.b32.xlu0 %v7125, 8
    %v7537 = vpop.permute.xlu0 %7536
    %7542 = vrot.lane.b32.xlu0 %v7322, 16
    %v7543 = vpop.permute.xlu0 %7542
    %7544 = vrot.lane.b32.xlu0 %v7327, 16
    %v7545 = vpop.permute.xlu0 %7544
    %7550 = vrot.lane.b32.xlu0 %v7524, 24
    %v7551 = vpop.permute.xlu0 %7550
    %7552 = vrot.lane.b32.xlu0 %v7529, 24
    %v7553 = vpop.permute.xlu0 %7552
    %v7556 = vsel %vm467, %v6918, %v7535
    %v7557 = vsel %vm467, %v6923, %v7537
    %v7558 = vsel %vm555, %v7556, %v7543
    %v7559 = vsel %vm555, %v7557, %v7545
    %v7560 = vsel %vm1299, %v7558, %v7551
    %v7561 = vsel %vm1299, %v7559, %v7553
    %v7563 = vlaneseq
    %v7564 = vshrl.u32 %v7563, 7
    %v7565 = vsub.s32 0, %v7564
    %v7566 = vrot.slane %v6546, %v7565
    %v7569 = vsel %vm379, %v7560, 0
    %v7572 = vsel %vm379, %v7561, 0
    %7574 = vmatprep.subr.mxu0 0.0
    %7575 = vmatpush1.msra.mxu0 0.0
    %7576 = vmatprep.subr.mxu0 0.0
    %7577 = vmatpush1.msra.mxu0 0.0
    %7578 = vmatprep.subr.mxu0 0.0
    %7579 = vmatpush1.msra.mxu0 0.0
    %7580 = vmatprep.subr.mxu0 0.0
    %7581 = vmatpush1.msra.mxu0 0.0
    %7582 = vmatprep.subr.mxu0 0.0
    %7583 = vmatpush1.msra.mxu0 0.0
    %7584 = vmatprep.subr.mxu0 0.0
    %7585 = vmatpush1.msra.mxu0 0.0
    %7586 = vmatprep.subr.mxu0 0.0
    %7587 = vmatpush1.msra.mxu0 0.0
    %7588 = vmatprep.subr.mxu0 0.0
    %7589 = vmatpush1.msra.mxu0 0.0
    %7590 = vmatprep.subr.mxu0 0.0
    %7591 = vmatpush1.msra.mxu0 0.0
    %7592 = vmatprep.subr.mxu0 0.0
    %7593 = vmatpush1.msra.mxu0 0.0
    %7594 = vmatprep.subr.mxu0 0.0
    %7595 = vmatpush1.msra.mxu0 0.0
    %7596 = vmatprep.subr.mxu0 0.0
    %7597 = vmatpush1.msra.mxu0 0.0
    %7598 = vmatprep.subr.mxu0 0.0
    %7599 = vmatpush1.msra.mxu0 %v6544
    %7600 = vmatprep.subr.mxu0 0.0
    %7601 = vmatpush1.msra.mxu0 %v6543
    %7602 = vmatprep.subr.mxu0 0.0
    %7603 = vmatpush1.msra.mxu0 %v6542
    %7604 = vmatprep.subr.mxu0 0.0
    %7605 = vmatpush1.msra.mxu0 %v6541
    %7606 = vmatprep.subr.mxu0 0.0
    %7607 = vmatpush2.msra.mxu0 0.0
    %7608 = vmatprep.subr.mxu0 0.0
    %7609 = vmatpush2.msra.mxu0 0.0
    %7610 = vmatprep.subr.mxu0 0.0
    %7611 = vmatpush2.msra.mxu0 0.0
    %7612 = vmatprep.subr.mxu0 0.0
    %7613 = vmatpush2.msra.mxu0 0.0
    %7614 = vmatprep.subr.mxu0 0.0
    %7615 = vmatpush2.msra.mxu0 0.0
    %7616 = vmatprep.subr.mxu0 0.0
    %7617 = vmatpush2.msra.mxu0 0.0
    %7618 = vmatprep.subr.mxu0 0.0
    %7619 = vmatpush2.msra.mxu0 0.0
    %7620 = vmatprep.subr.mxu0 0.0
    %7621 = vmatpush2.msra.mxu0 0.0
    %7622 = vmatprep.subr.mxu0 0.0
    %7623 = vmatpush2.msra.mxu0 0.0
    %7624 = vmatprep.subr.mxu0 0.0
    %7625 = vmatpush2.msra.mxu0 0.0
    %7626 = vmatprep.subr.mxu0 0.0
    %7627 = vmatpush2.msra.mxu0 0.0
    %7628 = vmatprep.subr.mxu0 0.0
    %7629 = vmatpush2.msra.mxu0 0.0
    %7630 = vmatprep.subr.mxu0 0.0
    %7631 = vmatpush2.msra.mxu0 0.0
    %7632 = vmatprep.subr.mxu0 0.0
    %7633 = vmatpush2.msra.mxu0 0.0
    %7634 = vmatprep.subr.mxu0 0.0
    %7635 = vmatpush2.msra.mxu0 0.0
    %7636 = vmatprep.subr.mxu0 0.0
    %7637 = vmatpush2.msra.mxu0 0.0
    %7638 = vmatprep.mubr.f32.mxu0 0.0
    %7639 = vmatmul.mubr.f32.gmra.mxu0 %v7569
    %v7640 = vpop.f32.mrf.mxu0
    %v7641 = vadd.f32 %v7566, %v7640
    %v7642 = vpop.f32.mrf.mxu0
    %7643 = vmatprep.mubr.f32.mxu0 0.0
    %7644 = vmatmul.mubr.f32.gmra.mxu0 %v7572
    %v7645 = vpop.f32.mrf.mxu0
    %v7646 = vadd.f32 %v7566, %v7645
    %v7647 = vpop.f32.mrf.mxu0
    %7648 = vdwg.mxu0
    %v7649 = vadd.f32 %v6531, %v7641
    %v7650 = vadd.f32 %v6532, %v7646
    %s7651 = scalar_lea.vmem %s53, 4
    %v7652 = vld [vmem:[%s7651] sm:$0x1]
    %s7653 = scalar_lea.vmem %s55, 4
    %v7654 = vld [vmem:[%s7653] sm:$0x1]
    %v7655 = vsel %vm379, %v7649, 0.0
    %7656 = vadd.xlane.f32.xlu0 %v7655
    %v7657 = vpop.xlane.xlu0 %7656
    %v7658 = vsel %vm379, %v7650, 0.0
    %7659 = vadd.xlane.f32.xlu0 %v7658
    %v7660 = vpop.xlane.xlu0 %7659
    %v7661 = vmul.f32 %v7657, %v1399
    %v7662 = vmul.f32 %v7660, %v1399
    %v7663 = vsub.f32 %v7649, %v7661
    %v7664 = vsub.f32 %v7650, %v7662
    %v7665 = vmul.f32 %v7663, %v7663
    %v7666 = vmul.f32 %v7664, %v7664
    %v7667 = vsel %vm379, %v7665, 0.0
    %7668 = vadd.xlane.f32.xlu0 %v7667
    %v7669 = vpop.xlane.xlu0 %7668
    %v7670 = vsel %vm379, %v7666, 0.0
    %7671 = vadd.xlane.f32.xlu0 %v7670
    %v7672 = vpop.xlane.xlu0 %7671
    %v7673 = vmul.f32 %v7669, %v1399
    %v7674 = vmul.f32 %v7672, %v1399
    %v7675 = vadd.f32 %v7673, 1e-05
    %v7676 = vadd.f32 %v7674, 1e-05
    %v7677 = vrsqrt.pop %v7675
    %v7678 = vrsqrt.pop %v7676
    %v7679 = vmul.f32 %v7663, %v7677
    %v7680 = vmul.f32 %v7664, %v7678
    %v7682 = vlaneseq
    %v7683 = vshrl.u32 %v7682, 7
    %v7684 = vsub.s32 0, %v7683
    %v7685 = vrot.slane %v7652, %v7684
    %v7687 = vmul.f32 %v7679, %v7685
    %v7688 = vmul.f32 %v7680, %v7685
    %v7690 = vlaneseq
    %v7691 = vshrl.u32 %v7690, 7
    %v7692 = vsub.s32 0, %v7691
    %v7693 = vrot.slane %v7654, %v7692
    %v7695 = vadd.f32 %v7687, %v7693
    %v7696 = vadd.f32 %v7688, %v7693
    %s7697 = scalar_lea.vmem %s57, 32
    %v7698 = vld [vmem:[%s7697] sm:$0xff]
    %v7699 = vld [vmem:[%s7697 + $0x8] sm:$0xff]
    %v7700 = vld [vmem:[%s7697 + $0x10] sm:$0xff]
    %v7701 = vld [vmem:[%s7697 + $0x18] sm:$0xff]
    %s7702 = scalar_lea.vmem %s59, 1
    %v7703 = vld [vmem:[%s7702] sm:$0x1]
    %s7704 = scalar_lea.vmem %s61, 64
    %v7705 = vld [vmem:[%s7704] sm:$0xff]
    %v7706 = vld [vmem:[%s7704 + $0x8] sm:$0xff]
    %v7707 = vld [vmem:[%s7704 + $0x10] sm:$0xff]
    %v7708 = vld [vmem:[%s7704 + $0x18] sm:$0xff]
    %v7709 = vld [vmem:[%s7704 + $0x20] sm:$0xff]
    %v7710 = vld [vmem:[%s7704 + $0x28] sm:$0xff]
    %v7711 = vld [vmem:[%s7704 + $0x30] sm:$0xff]
    %v7712 = vld [vmem:[%s7704 + $0x38] sm:$0xff]
    %s7713 = scalar_lea.vmem %s63, 1
    %v7714 = vld [vmem:[%s7713] sm:$0x1]
    %v7716 = vlaneseq
    %v7717 = vshrl.u32 %v7716, 7
    %v7718 = vsub.s32 0, %v7717
    %v7719 = vrot.slane %v7703, %v7718
    %v7722 = vsel %vm379, %v7695, 0
    %v7725 = vsel %vm379, %v7696, 0
    %7727 = vmatprep.subr.mxu0 0.0
    %7728 = vmatpush1.msra.mxu0 0.0
    %7729 = vmatprep.subr.mxu0 0.0
    %7730 = vmatpush1.msra.mxu0 0.0
    %7731 = vmatprep.subr.mxu0 0.0
    %7732 = vmatpush1.msra.mxu0 0.0
    %7733 = vmatprep.subr.mxu0 0.0
    %7734 = vmatpush1.msra.mxu0 0.0
    %7735 = vmatprep.subr.mxu0 0.0
    %7736 = vmatpush1.msra.mxu0 0.0
    %7737 = vmatprep.subr.mxu0 0.0
    %7738 = vmatpush1.msra.mxu0 0.0
    %7739 = vmatprep.subr.mxu0 0.0
    %7740 = vmatpush1.msra.mxu0 0.0
    %7741 = vmatprep.subr.mxu0 0.0
    %7742 = vmatpush1.msra.mxu0 0.0
    %7743 = vmatprep.subr.mxu0 0.0
    %7744 = vmatpush1.msra.mxu0 0.0
    %7745 = vmatprep.subr.mxu0 0.0
    %7746 = vmatpush1.msra.mxu0 0.0
    %7747 = vmatprep.subr.mxu0 0.0
    %7748 = vmatpush1.msra.mxu0 0.0
    %7749 = vmatprep.subr.mxu0 0.0
    %7750 = vmatpush1.msra.mxu0 0.0
    %7751 = vmatprep.subr.mxu0 0.0
    %7752 = vmatpush1.msra.mxu0 %v7701
    %7753 = vmatprep.subr.mxu0 0.0
    %7754 = vmatpush1.msra.mxu0 %v7700
    %7755 = vmatprep.subr.mxu0 0.0
    %7756 = vmatpush1.msra.mxu0 %v7699
    %7757 = vmatprep.subr.mxu0 0.0
    %7758 = vmatpush1.msra.mxu0 %v7698
    %7759 = vmatprep.subr.mxu0 0.0
    %7760 = vmatpush2.msra.mxu0 0.0
    %7761 = vmatprep.subr.mxu0 0.0
    %7762 = vmatpush2.msra.mxu0 0.0
    %7763 = vmatprep.subr.mxu0 0.0
    %7764 = vmatpush2.msra.mxu0 0.0
    %7765 = vmatprep.subr.mxu0 0.0
    %7766 = vmatpush2.msra.mxu0 0.0
    %7767 = vmatprep.subr.mxu0 0.0
    %7768 = vmatpush2.msra.mxu0 0.0
    %7769 = vmatprep.subr.mxu0 0.0
    %7770 = vmatpush2.msra.mxu0 0.0
    %7771 = vmatprep.subr.mxu0 0.0
    %7772 = vmatpush2.msra.mxu0 0.0
    %7773 = vmatprep.subr.mxu0 0.0
    %7774 = vmatpush2.msra.mxu0 0.0
    %7775 = vmatprep.subr.mxu0 0.0
    %7776 = vmatpush2.msra.mxu0 0.0
    %7777 = vmatprep.subr.mxu0 0.0
    %7778 = vmatpush2.msra.mxu0 0.0
    %7779 = vmatprep.subr.mxu0 0.0
    %7780 = vmatpush2.msra.mxu0 0.0
    %7781 = vmatprep.subr.mxu0 0.0
    %7782 = vmatpush2.msra.mxu0 0.0
    %7783 = vmatprep.subr.mxu0 0.0
    %7784 = vmatpush2.msra.mxu0 0.0
    %7785 = vmatprep.subr.mxu0 0.0
    %7786 = vmatpush2.msra.mxu0 0.0
    %7787 = vmatprep.subr.mxu0 0.0
    %7788 = vmatpush2.msra.mxu0 0.0
    %7789 = vmatprep.subr.mxu0 0.0
    %7790 = vmatpush2.msra.mxu0 0.0
    %7791 = vmatprep.mubr.f32.mxu0 0.0
    %7792 = vmatmul.mubr.f32.gmra.mxu0 %v7722
    %v7793 = vpop.f32.mrf.mxu0
    %v7794 = vadd.f32 %v7719, %v7793
    %v7795 = vpop.f32.mrf.mxu0
    %7796 = vmatprep.mubr.f32.mxu0 0.0
    %7797 = vmatmul.mubr.f32.gmra.mxu0 %v7725
    %v7798 = vpop.f32.mrf.mxu0
    %v7799 = vadd.f32 %v7719, %v7798
    %v7800 = vpop.f32.mrf.mxu0
    %7801 = vdwg.mxu0
    %v7802 = vmax.f32 %v7794, 0.0
    %v7803 = vmax.f32 %v7799, 0.0
    %v7805 = vlaneseq
    %v7806 = vshrl.u32 %v7805, 7
    %v7807 = vsub.s32 0, %v7806
    %v7808 = vrot.slane %v7714, %v7807
    %v7811 = vsel %vm1545, %v7802, 0
    %v7814 = vsel %vm1545, %v7803, 0
    %7816 = vmatprep.subr.mxu0 0.0
    %7817 = vmatpush1.msra.mxu0 0.0
    %7818 = vmatprep.subr.mxu0 0.0
    %7819 = vmatpush1.msra.mxu0 0.0
    %7820 = vmatprep.subr.mxu0 0.0
    %7821 = vmatpush1.msra.mxu0 0.0
    %7822 = vmatprep.subr.mxu0 0.0
    %7823 = vmatpush1.msra.mxu0 0.0
    %7824 = vmatprep.subr.mxu0 0.0
    %7825 = vmatpush1.msra.mxu0 0.0
    %7826 = vmatprep.subr.mxu0 0.0
    %7827 = vmatpush1.msra.mxu0 0.0
    %7828 = vmatprep.subr.mxu0 0.0
    %7829 = vmatpush1.msra.mxu0 0.0
    %7830 = vmatprep.subr.mxu0 0.0
    %7831 = vmatpush1.msra.mxu0 0.0
    %7832 = vmatprep.subr.mxu0 0.0
    %7833 = vmatpush1.msra.mxu0 %v7712
    %7834 = vmatprep.subr.mxu0 0.0
    %7835 = vmatpush1.msra.mxu0 %v7711
    %7836 = vmatprep.subr.mxu0 0.0
    %7837 = vmatpush1.msra.mxu0 %v7710
    %7838 = vmatprep.subr.mxu0 0.0
    %7839 = vmatpush1.msra.mxu0 %v7709
    %7840 = vmatprep.subr.mxu0 0.0
    %7841 = vmatpush1.msra.mxu0 %v7708
    %7842 = vmatprep.subr.mxu0 0.0
    %7843 = vmatpush1.msra.mxu0 %v7707
    %7844 = vmatprep.subr.mxu0 0.0
    %7845 = vmatpush1.msra.mxu0 %v7706
    %7846 = vmatprep.subr.mxu0 0.0
    %7847 = vmatpush1.msra.mxu0 %v7705
    %7848 = vmatprep.subr.mxu0 0.0
    %7849 = vmatpush2.msra.mxu0 0.0
    %7850 = vmatprep.subr.mxu0 0.0
    %7851 = vmatpush2.msra.mxu0 0.0
    %7852 = vmatprep.subr.mxu0 0.0
    %7853 = vmatpush2.msra.mxu0 0.0
    %7854 = vmatprep.subr.mxu0 0.0
    %7855 = vmatpush2.msra.mxu0 0.0
    %7856 = vmatprep.subr.mxu0 0.0
    %7857 = vmatpush2.msra.mxu0 0.0
    %7858 = vmatprep.subr.mxu0 0.0
    %7859 = vmatpush2.msra.mxu0 0.0
    %7860 = vmatprep.subr.mxu0 0.0
    %7861 = vmatpush2.msra.mxu0 0.0
    %7862 = vmatprep.subr.mxu0 0.0
    %7863 = vmatpush2.msra.mxu0 0.0
    %7864 = vmatprep.subr.mxu0 0.0
    %7865 = vmatpush2.msra.mxu0 0.0
    %7866 = vmatprep.subr.mxu0 0.0
    %7867 = vmatpush2.msra.mxu0 0.0
    %7868 = vmatprep.subr.mxu0 0.0
    %7869 = vmatpush2.msra.mxu0 0.0
    %7870 = vmatprep.subr.mxu0 0.0
    %7871 = vmatpush2.msra.mxu0 0.0
    %7872 = vmatprep.subr.mxu0 0.0
    %7873 = vmatpush2.msra.mxu0 0.0
    %7874 = vmatprep.subr.mxu0 0.0
    %7875 = vmatpush2.msra.mxu0 0.0
    %7876 = vmatprep.subr.mxu0 0.0
    %7877 = vmatpush2.msra.mxu0 0.0
    %7878 = vmatprep.subr.mxu0 0.0
    %7879 = vmatpush2.msra.mxu0 0.0
    %7880 = vmatprep.mubr.f32.mxu0 0.0
    %7881 = vmatmul.mubr.f32.gmra.mxu0 %v7811
    %v7882 = vpop.f32.mrf.mxu0
    %v7883 = vadd.f32 %v7808, %v7882
    %v7884 = vpop.f32.mrf.mxu0
    %7885 = vmatprep.mubr.f32.mxu0 0.0
    %7886 = vmatmul.mubr.f32.gmra.mxu0 %v7814
    %v7887 = vpop.f32.mrf.mxu0
    %v7888 = vadd.f32 %v7808, %v7887
    %v7889 = vpop.f32.mrf.mxu0
    %7890 = vdwg.mxu0
    %v7891 = vadd.f32 %v7695, %v7883
    %v7892 = vadd.f32 %v7696, %v7888
    %s7893 = scalar_lea.vmem %s53, 5
    %v7894 = vld [vmem:[%s7893] sm:$0x1]
    %s7895 = scalar_lea.vmem %s55, 5
    %v7896 = vld [vmem:[%s7895] sm:$0x1]
    %v7897 = vsel %vm379, %v7891, 0.0
    %7898 = vadd.xlane.f32.xlu0 %v7897
    %v7899 = vpop.xlane.xlu0 %7898
    %v7900 = vsel %vm379, %v7892, 0.0
    %7901 = vadd.xlane.f32.xlu0 %v7900
    %v7902 = vpop.xlane.xlu0 %7901
    %v7903 = vmul.f32 %v7899, %v1399
    %v7904 = vmul.f32 %v7902, %v1399
    %v7905 = vsub.f32 %v7891, %v7903
    %v7906 = vsub.f32 %v7892, %v7904
    %v7907 = vmul.f32 %v7905, %v7905
    %v7908 = vmul.f32 %v7906, %v7906
    %v7909 = vsel %vm379, %v7907, 0.0
    %7910 = vadd.xlane.f32.xlu0 %v7909
    %v7911 = vpop.xlane.xlu0 %7910
    %v7912 = vsel %vm379, %v7908, 0.0
    %7913 = vadd.xlane.f32.xlu0 %v7912
    %v7914 = vpop.xlane.xlu0 %7913
    %v7915 = vmul.f32 %v7911, %v1399
    %v7916 = vmul.f32 %v7914, %v1399
    %v7917 = vadd.f32 %v7915, 1e-05
    %v7918 = vadd.f32 %v7916, 1e-05
    %v7919 = vrsqrt.pop %v7917
    %v7920 = vrsqrt.pop %v7918
    %v7921 = vmul.f32 %v7905, %v7919
    %v7922 = vmul.f32 %v7906, %v7920
    %v7924 = vlaneseq
    %v7925 = vshrl.u32 %v7924, 7
    %v7926 = vsub.s32 0, %v7925
    %v7927 = vrot.slane %v7894, %v7926
    %v7929 = vmul.f32 %v7921, %v7927
    %v7930 = vmul.f32 %v7922, %v7927
    %v7932 = vlaneseq
    %v7933 = vshrl.u32 %v7932, 7
    %v7934 = vsub.s32 0, %v7933
    %v7935 = vrot.slane %v7896, %v7934
    %v7937 = vadd.f32 %v7929, %v7935
    %v7938 = vadd.f32 %v7930, %v7935
    %v7939 = vld [vmem:[%s65] sm:$0xff]
    %v7940 = vld [vmem:[%s65 + $0x8] sm:$0xff]
    %v7941 = vld [vmem:[%s65 + $0x10] sm:$0xff]
    %v7942 = vld [vmem:[%s65 + $0x18] sm:$0xff]
    %v7943 = vld [vmem:[%s67] sm:$0x1]
    %v7945 = vlaneseq
    %v7946 = vshrl.u32 %v7945, 7
    %v7947 = vsub.s32 0, %v7946
    %v7948 = vrot.slane %v7943, %v7947
    %v7951 = vsel %vm379, %v7937, 0
    %v7954 = vsel %vm379, %v7938, 0
    %7956 = vmatprep.subr.mxu0 0.0
    %7957 = vmatpush1.msra.mxu0 0.0
    %7958 = vmatprep.subr.mxu0 0.0
    %7959 = vmatpush1.msra.mxu0 0.0
    %7960 = vmatprep.subr.mxu0 0.0
    %7961 = vmatpush1.msra.mxu0 0.0
    %7962 = vmatprep.subr.mxu0 0.0
    %7963 = vmatpush1.msra.mxu0 0.0
    %7964 = vmatprep.subr.mxu0 0.0
    %7965 = vmatpush1.msra.mxu0 0.0
    %7966 = vmatprep.subr.mxu0 0.0
    %7967 = vmatpush1.msra.mxu0 0.0
    %7968 = vmatprep.subr.mxu0 0.0
    %7969 = vmatpush1.msra.mxu0 0.0
    %7970 = vmatprep.subr.mxu0 0.0
    %7971 = vmatpush1.msra.mxu0 0.0
    %7972 = vmatprep.subr.mxu0 0.0
    %7973 = vmatpush1.msra.mxu0 0.0
    %7974 = vmatprep.subr.mxu0 0.0
    %7975 = vmatpush1.msra.mxu0 0.0
    %7976 = vmatprep.subr.mxu0 0.0
    %7977 = vmatpush1.msra.mxu0 0.0
    %7978 = vmatprep.subr.mxu0 0.0
    %7979 = vmatpush1.msra.mxu0 0.0
    %7980 = vmatprep.subr.mxu0 0.0
    %7981 = vmatpush1.msra.mxu0 %v7942
    %7982 = vmatprep.subr.mxu0 0.0
    %7983 = vmatpush1.msra.mxu0 %v7941
    %7984 = vmatprep.subr.mxu0 0.0
    %7985 = vmatpush1.msra.mxu0 %v7940
    %7986 = vmatprep.subr.mxu0 0.0
    %7987 = vmatpush1.msra.mxu0 %v7939
    %7988 = vmatprep.subr.mxu0 0.0
    %7989 = vmatpush2.msra.mxu0 0.0
    %7990 = vmatprep.subr.mxu0 0.0
    %7991 = vmatpush2.msra.mxu0 0.0
    %7992 = vmatprep.subr.mxu0 0.0
    %7993 = vmatpush2.msra.mxu0 0.0
    %7994 = vmatprep.subr.mxu0 0.0
    %7995 = vmatpush2.msra.mxu0 0.0
    %7996 = vmatprep.subr.mxu0 0.0
    %7997 = vmatpush2.msra.mxu0 0.0
    %7998 = vmatprep.subr.mxu0 0.0
    %7999 = vmatpush2.msra.mxu0 0.0
    %8000 = vmatprep.subr.mxu0 0.0
    %8001 = vmatpush2.msra.mxu0 0.0
    %8002 = vmatprep.subr.mxu0 0.0
    %8003 = vmatpush2.msra.mxu0 0.0
    %8004 = vmatprep.subr.mxu0 0.0
    %8005 = vmatpush2.msra.mxu0 0.0
    %8006 = vmatprep.subr.mxu0 0.0
    %8007 = vmatpush2.msra.mxu0 0.0
    %8008 = vmatprep.subr.mxu0 0.0
    %8009 = vmatpush2.msra.mxu0 0.0
    %8010 = vmatprep.subr.mxu0 0.0
    %8011 = vmatpush2.msra.mxu0 0.0
    %8012 = vmatprep.subr.mxu0 0.0
    %8013 = vmatpush2.msra.mxu0 0.0
    %8014 = vmatprep.subr.mxu0 0.0
    %8015 = vmatpush2.msra.mxu0 0.0
    %8016 = vmatprep.subr.mxu0 0.0
    %8017 = vmatpush2.msra.mxu0 0.0
    %8018 = vmatprep.subr.mxu0 0.0
    %8019 = vmatpush2.msra.mxu0 0.0
    %8020 = vmatprep.mubr.f32.mxu0 0.0
    %8021 = vmatmul.mubr.f32.gmra.mxu0 %v7951
    %v8022 = vpop.f32.mrf.mxu0
    %v8023 = vadd.f32 %v7948, %v8022
    %v8024 = vpop.f32.mrf.mxu0
    %8025 = vmatprep.mubr.f32.mxu0 0.0
    %8026 = vmatmul.mubr.f32.gmra.mxu0 %v7954
    %v8027 = vpop.f32.mrf.mxu0
    %v8028 = vadd.f32 %v7948, %v8027
    %v8029 = vpop.f32.mrf.mxu0
    %8030 = vdwg.mxu0
    %8031 = vst [vmem:[#allocation2] sm:$0xff] %v8023
    %8032 = vst [vmem:[#allocation2 + $0x8] sm:$0xff] %v8028
    // Predicated region
    $region138: #{transformer_forward.1} parent=1 // pred_check
      _
    $region139: #{transformer_forward.1} parent=1 // pred_check_branch
      %8034 = sbr.rel (0) target = $region141
    $region140: #{transformer_forward.1} parent=1 // pred_region
      %s8036 = ssub.s32 256, 256
      %8037 = vsyncadd [#allocation3], %s8036
      %s8038 = sshll.u32 [#allocation2], 4
      %s8039 = int_to_ptr.vmem [resolvable:$true] %s8038
      %8044 = dma.vmem_to_hbm [thread:$0]  %s8039, 256, %s69, [#allocation3], 128, 128, 8
    $region141: #{transformer_forward.1} parent=1 // pred_fallthru
      _
    // Predicated region
    $region142: #{transformer_forward.1} parent=1 // pred_check
      _
    $region143: #{transformer_forward.1} parent=1 // pred_check_branch
      %8046 = sbr.rel (0) target = $region145
    $region144: #{transformer_forward.1} parent=1 // pred_region
      %8047 = dma.done [#allocation3], 256
    $region145: #{transformer_forward.1} parent=1 // pred_fallthru
      _
    %8048 = vsyncpa [#allocation3], 1

</llo_original>
